<compile_context>
chip_gen: v6e
topology: v6e:2x2x1
jax: 0.10.0
libtpu: 0.0.40
codegen_flags: <defaults>
</compile_context>

<pallas_src>
import functools

import jax
import jax.numpy as jnp
from jax.experimental import pallas as pl
from jax.experimental.pallas import tpu as pltpu

EPS = 1e-5


# ----------------------------------------------------------------------------
# Small helpers
# ----------------------------------------------------------------------------
def _vmem_limit_bytes():
    """Per-generation scoped-VMEM limit (v5e/v6e 128 MiB phys, v7x 64 MiB)."""
    cap = 64 * 1024 * 1024
    try:
        info_cap = int(pltpu.get_tpu_info().vmem_capacity_bytes)
        if info_cap > 0:
            cap = info_cap
    except Exception:
        pass
    return min(cap * 3 // 4, 100 * 1024 * 1024)


def _spatial_coords(P, H, W):
    """Per-row (y, x) spatial coordinates of a flattened [P, C] tile of whole
    images (P a multiple of H*W)."""
    pidx = jax.lax.broadcasted_iota(jnp.int32, (P, 1), 0)
    if (W & (W - 1)) == 0 and (H & (H - 1)) == 0:
        xx = jnp.bitwise_and(pidx, W - 1)
        yy = jnp.bitwise_and(jnp.right_shift(pidx, W.bit_length() - 1), H - 1)
    else:
        xx = pidx % W
        yy = (pidx // W) % H
    return yy, xx


def _accumulate_stats(stats_ref, y):
    """Per-channel running [sum; sum-of-squares] across the P-tile grid.

    stats_ref is a resident output block (constant index_map, grid axis
    'arbitrary'): zeroed on the first grid step, written back once at the end.
    """
    @pl.when(pl.program_id(0) == 0)
    def _init():
        stats_ref[...] = jnp.zeros_like(stats_ref)

    stats_ref[...] += jnp.concatenate(
        [jnp.sum(y, axis=0, keepdims=True),
         jnp.sum(y * y, axis=0, keepdims=True)], axis=0)


def _finalize_bn(stats, gamma, beta, count):
    """Fold batch stats + BN affine into per-channel scale/shift (wrapper side)."""
    mean = stats[0] / count
    var = jnp.maximum(stats[1] / count - mean * mean, 0.0)
    scale = jax.lax.rsqrt(var + EPS) * gamma.reshape(-1)
    shift = beta.reshape(-1) - mean * scale
    return scale.reshape(1, -1), shift.reshape(1, -1)


# ----------------------------------------------------------------------------
# Stage kernels
# ----------------------------------------------------------------------------
def _conv1_kernel(x_ref, w_ref, o_ref, stats_ref):
    """Stage 1: conv1 (1x1).  x tile already bf16; f32 MXU accumulation."""
    y = jnp.dot(x_ref[...], w_ref[...], preferred_element_type=jnp.float32)
    o_ref[...] = y
    _accumulate_stats(stats_ref, y)


def _bn_conv3x3_kernel(x_ref, scale_ref, shift_ref, w_ref, o_ref, stats_ref,
                       *, H, W):
    """Stage 2: bn1+relu then 3x3 conv (stride 1, pad 1) as ONE im2col matmul.

    The tile holds whole images, so the nine roll+mask taps (mask derived from
    per-row (y, x) inside the tile) are exact; wrapped rows are always masked.
    """
    Pt, width = x_ref.shape
    a = jnp.maximum(x_ref[...] * scale_ref[...] + shift_ref[...], 0.0)  # f32
    yy, xx = _spatial_coords(Pt, H, W)

    taps = []
    for dy in range(3):
        sy = dy - 1
        for dx in range(3):
            sx = dx - 1
            off = sy * W + sx              # tap[p] = a[p + off], image-masked
            if off == 0:
                tap = a
            else:
                tap = pltpu.roll(a, shift=(-off) % Pt, axis=0)
                valid = ((yy + sy >= 0) & (yy + sy < H) &
                         (xx + sx >= 0) & (xx + sx < W))
                tap = jnp.where(valid, tap, 0.0)
            taps.append(tap.astype(jnp.bfloat16))

    t = jnp.concatenate(taps, axis=1)                   # [Pt, 9*width] bf16
    y = jnp.dot(t, w_ref[...], preferred_element_type=jnp.float32)
    o_ref[...] = y
    _accumulate_stats(stats_ref, y)


def _bn_conv1x1_kernel(x_ref, scale_ref, shift_ref, w_ref, o_ref, stats_ref):
    """Stage 3: bn2+relu then conv3 (1x1)."""
    a = jnp.maximum(x_ref[...] * scale_ref[...] + shift_ref[...], 0.0)
    y = jnp.dot(a.astype(jnp.bfloat16), w_ref[...],
                preferred_element_type=jnp.float32)
    o_ref[...] = y
    _accumulate_stats(stats_ref, y)


def _bn_add_relu_kernel(x_ref, scale_ref, shift_ref, res_ref, out_ref):
    """Stage 4: bn3 + identity residual + relu (tiles fully independent)."""
    y = x_ref[...] * scale_ref[...] + shift_ref[...]
    out_ref[...] = jnp.maximum(y + res_ref[...].astype(jnp.float32), 0.0)


# ----------------------------------------------------------------------------
# Forward wrapper
# ----------------------------------------------------------------------------
def bottleneck_forward(x_nchw, params, *, target_tile_rows=1024):
    """x_nchw: [N, Cin, H, W] float32.  Returns [N, Cout, H, W] float32."""
    w1, w2, w3, g1, b1, g2, b2, g3, b3 = params
    N, Cin, H, W = x_nchw.shape
    width = w1.shape[1]
    Cout = w3.shape[1]
    assert Cin == Cout, "downsample=None requires inplanes == planes * 4"

    PI = H * W                         # rows per image in the flattened slab
    P = N * PI

    # Whole-image tiles keep the 3x3 halos (and BN mask derivation) inside a
    # tile; pick the largest image count per tile under the row target that
    # divides N.
    imgs = max(1, min(N, target_tile_rows // PI))
    while N % imgs:
        imgs -= 1
    Pt = imgs * PI
    ntiles = N // imgs
    assert Pt % 8 == 0, "row tile must be sublane-aligned"
    # TODO(synk): pad rows for spatial sizes where H*W % 8 != 0 (e.g. 7x7).

    vmem_limit = _vmem_limit_bytes()

    # Wrapper-side layout plumbing (XLA): NCHW -> lane-dense bf16 [P, C] slab.
    x2d = jnp.transpose(x_nchw, (0, 2, 3, 1)).reshape(P, Cin).astype(jnp.bfloat16)
    w1b = w1.astype(jnp.bfloat16)                               # [Cin, width]
    w2b = w2.reshape(9 * width, width).astype(jnp.bfloat16)     # [9*width, width]
    w3b = w3.astype(jnp.bfloat16)                               # [width, Cout]

    def tile(c):
        return pl.BlockSpec((Pt, c), lambda i: (i, 0))

    def resident(shape):
        return pl.BlockSpec(shape, lambda i: (0,) * len(shape))

    def stage(kernel, ins, in_specs, out_ch, flops, extra_bytes):
        """One gridded conv stage that also accumulates per-channel stats."""
        grid_spec = pltpu.PrefetchScalarGridSpec(
            num_scalar_prefetch=0,
            grid=(ntiles,),
            in_specs=in_specs,
            out_specs=[tile(out_ch), resident((2, out_ch))])
        return pl.pallas_call(
            kernel,
            grid_spec=grid_spec,
            out_shape=(jax.ShapeDtypeStruct((P, out_ch), jnp.float32),
                       jax.ShapeDtypeStruct((2, out_ch), jnp.float32)),
            compiler_params=pltpu.CompilerParams(
                # stats accumulator => reduction-style axis (sequential).
                dimension_semantics=("arbitrary",),
                vmem_limit_bytes=vmem_limit),
            cost_estimate=pl.CostEstimate(
                flops=int(flops), transcendentals=0,
                bytes_accessed=int(extra_bytes + 4 * P * out_ch)),
        )(*ins)

    # ---- stage 1: conv1 (1x1) + stats ---------------------------------------
    o1, s1 = stage(_conv1_kernel, (x2d, w1b),
                   [tile(Cin), resident((Cin, width))], width,
                   flops=2 * P * Cin * width,
                   extra_bytes=2 * P * Cin + 2 * Cin * width)
    sc1, sh1 = _finalize_bn(s1, g1, b1, P)

    # ---- stage 2: bn1 + relu -> conv2 (3x3 im2col) + stats ------------------
    o2, s2 = stage(functools.partial(_bn_conv3x3_kernel, H=H, W=W),
                   (o1, sc1, sh1, w2b),
                   [tile(width), resident((1, width)), resident((1, width)),
                    resident((9 * width, width))], width,
                   flops=2 * P * 9 * width * width,
                   extra_bytes=4 * P * width + 2 * 9 * width * width)
    sc2, sh2 = _finalize_bn(s2, g2, b2, P)

    # ---- stage 3: bn2 + relu -> conv3 (1x1) + stats --------------------------
    o3, s3 = stage(_bn_conv1x1_kernel, (o2, sc2, sh2, w3b),
                   [tile(width), resident((1, width)), resident((1, width)),
                    resident((width, Cout))], Cout,
                   flops=2 * P * width * Cout,
                   extra_bytes=4 * P * width + 2 * width * Cout)
    sc3, sh3 = _finalize_bn(s3, g3, b3, P)

    # ---- stage 4: bn3 + identity + relu (no coupling -> "parallel") ---------
    out2d = pl.pallas_call(
        _bn_add_relu_kernel,
        grid_spec=pltpu.PrefetchScalarGridSpec(
            num_scalar_prefetch=0,
            grid=(ntiles,),
            in_specs=[tile(Cout), resident((1, Cout)), resident((1, Cout)),
                      tile(Cin)],
            out_specs=tile(Cout)),
        out_shape=jax.ShapeDtypeStruct((P, Cout), jnp.float32),
        compiler_params=pltpu.CompilerParams(
            dimension_semantics=("parallel",),
            vmem_limit_bytes=vmem_limit),
        cost_estimate=pl.CostEstimate(
            flops=3 * P * Cout, transcendentals=0,
            bytes_accessed=8 * P * Cout + 2 * P * Cin),
    )(o3, sc3, sh3, x2d)

    return jnp.transpose(out2d.reshape(N, H, W, Cout), (0, 3, 1, 2))


# ----------------------------------------------------------------------------
# Parameters and pure-JAX reference
# ----------------------------------------------------------------------------
def init_params(key, inplanes, planes, base_width=64, groups=1):
    width = int(planes * (base_width / 64.0)) * groups
    cout = planes * 4  # expansion = 4
    k1, k2, k3 = jax.random.split(key, 3)
    w1 = jax.random.normal(k1, (inplanes, width), jnp.float32) / jnp.sqrt(inplanes)
    w2 = jax.random.normal(k2, (3, 3, width, width), jnp.float32) / jnp.sqrt(9 * width)
    w3 = jax.random.normal(k3, (width, cout), jnp.float32) / jnp.sqrt(width)
    g1, b1 = jnp.ones((1, width), jnp.float32), jnp.zeros((1, width), jnp.float32)
    g2, b2 = jnp.ones((1, width), jnp.float32), jnp.zeros((1, width), jnp.float32)
    g3, b3 = jnp.ones((1, cout), jnp.float32), jnp.zeros((1, cout), jnp.float32)
    return (w1, w2, w3, g1, b1, g2, b2, g3, b3)


def reference_forward(x_nchw, params):
    """Pure-JAX reference (lax.conv, bf16 matmul inputs, f32 accumulation)."""
    w1, w2, w3, g1, b1, g2, b2, g3, b3 = params

    def conv(x, w_hwio, padding):
        return jax.lax.conv_general_dilated(
            x.astype(jnp.bfloat16), w_hwio.astype(jnp.bfloat16), (1, 1), padding,
            dimension_numbers=("NHWC", "HWIO", "NHWC"),
            preferred_element_type=jnp.float32)

    def bn(x, g, b, relu):
        mean = jnp.mean(x, axis=(0, 1, 2), keepdims=True)
        var = jnp.mean((x - mean) ** 2, axis=(0, 1, 2), keepdims=True)
        out = (x - mean) * jax.lax.rsqrt(var + EPS) * g.reshape(1, 1, 1, -1) \
            + b.reshape(1, 1, 1, -1)
        return jnp.maximum(out, 0.0) if relu else out

    x = jnp.transpose(x_nchw, (0, 2, 3, 1))
    o = bn(conv(x, w1.reshape(1, 1, *w1.shape), "VALID"), g1, b1, True)
    o = bn(conv(o, w2, ((1, 1), (1, 1))), g2, b2, True)
    o = bn(conv(o, w3.reshape(1, 1, *w3.shape), "VALID"), g3, b3, False)
    o = jnp.maximum(o + x, 0.0)
    return jnp.transpose(o, (0, 3, 1, 2))


if __name__ == "__main__":
    # Bottleneck(inplanes=512, planes=128): width=128, out channels=512,
    # stride=1, downsample=None (identity residual) — a real ResNet-50
    # conv3_x block at a small spatial size.  All channel dims are multiples
    # of the 128-lane vreg width.
    N, inplanes, planes, H, W = 2, 512, 128, 16, 16

    key = jax.random.PRNGKey(0)
    kx, kp = jax.random.split(key)
    x = jax.random.normal(kx, (N, inplanes, H, W), jnp.float32)
    params = init_params(kp, inplanes, planes)

    # target_tile_rows=256 -> one image per grid step (a 2-step grid) at this
    # toy shape, so the accumulator / pipelining path is actually exercised.
    fwd = jax.jit(lambda xx, pp: bottleneck_forward(xx, pp, target_tile_rows=256))
    out = jax.block_until_ready(fwd(x, params))
    ref = jax.block_until_ready(reference_forward(x, params))

    assert out.shape == (N, planes * 4, H, W)
    err = jnp.max(jnp.abs(out - ref))
    assert jnp.allclose(out, ref, atol=2e-2, rtol=2e-2), f"max abs diff {err}"

    print("KERNEL_OK")
</pallas_src>

<mosaic_0001>
module attributes {stable_mosaic.version = 11 : i64} {
  func.func @_bn_conv3x3_kernel(%arg0: i32, %arg1: memref<256x128xf32, #tpu.memory_space<vmem>>, %arg2: memref<1x128xf32, #tpu.memory_space<vmem>>, %arg3: memref<1x128xf32, #tpu.memory_space<vmem>>, %arg4: memref<1152x128xbf16, #tpu.memory_space<vmem>>, %arg5: memref<256x128xf32, #tpu.memory_space<vmem>>, %arg6: memref<2x128xf32, #tpu.memory_space<vmem>>) attributes {dimension_semantics = [#tpu.dimension_semantics<arbitrary>], iteration_bounds = array<i64: 2>, scalar_prefetch = 0 : i64, scratch_operands = 0 : i64, tpu.core_type = #tpu.core_type<tc>, window_params = [{transform_indices = @transform_0, window_bounds = array<i64: 256, 128>}, {pipeline_mode = #tpu.pipeline_mode<synchronous>, transform_indices = @transform_1, window_bounds = array<i64: 1, 128>}, {pipeline_mode = #tpu.pipeline_mode<synchronous>, transform_indices = @transform_2, window_bounds = array<i64: 1, 128>}, {pipeline_mode = #tpu.pipeline_mode<synchronous>, transform_indices = @transform_3, window_bounds = array<i64: 1152, 128>}, {transform_indices = @transform_4, window_bounds = array<i64: 256, 128>}, {pipeline_mode = #tpu.pipeline_mode<synchronous>, transform_indices = @transform_5, window_bounds = array<i64: 2, 128>}]} {
    %c0 = arith.constant 0 : index
    %c0_0 = arith.constant 0 : index
    %0 = vector.load %arg1[%c0, %c0_0] : memref<256x128xf32, #tpu.memory_space<vmem>>, vector<256x128xf32>
    %c0_1 = arith.constant 0 : index
    %c0_2 = arith.constant 0 : index
    %1 = vector.load %arg2[%c0_1, %c0_2] : memref<1x128xf32, #tpu.memory_space<vmem>>, vector<1x128xf32>
    %2 = vector.broadcast %1 : vector<1x128xf32> to vector<256x128xf32>
    %3 = arith.mulf %0, %2 : vector<256x128xf32>
    %c0_3 = arith.constant 0 : index
    %c0_4 = arith.constant 0 : index
    %4 = vector.load %arg3[%c0_3, %c0_4] : memref<1x128xf32, #tpu.memory_space<vmem>>, vector<1x128xf32>
    %5 = vector.broadcast %4 : vector<1x128xf32> to vector<256x128xf32>
    %6 = arith.addf %3, %5 : vector<256x128xf32>
    %cst = arith.constant 0.000000e+00 : f32
    %7 = vector.broadcast %cst : f32 to vector<256x128xf32>
    %8 = arith.maximumf %6, %7 : vector<256x128xf32>
    %9 = tpu.iota {dimensions = array<i32: 0>} : vector<256x1xi32>
    %c15_i32 = arith.constant 15 : i32
    %10 = vector.broadcast %c15_i32 : i32 to vector<256x1xi32>
    %11 = arith.andi %9, %10 : vector<256x1xi32>
    %c4_i32 = arith.constant 4 : i32
    %12 = vector.broadcast %c4_i32 : i32 to vector<256x1xi32>
    %13 = arith.shrsi %9, %12 : vector<256x1xi32>
    %c15_i32_5 = arith.constant 15 : i32
    %14 = vector.broadcast %c15_i32_5 : i32 to vector<256x1xi32>
    %15 = arith.andi %13, %14 : vector<256x1xi32>
    %c17_i32 = arith.constant 17 : i32
    %16 = tpu.dynamic_rotate %8 by %c17_i32 dim 0 : vector<256x128xf32>, i32 -> vector<256x128xf32>
    %c-1_i32 = arith.constant -1 : i32
    %17 = vector.broadcast %c-1_i32 : i32 to vector<256x1xi32>
    %18 = arith.addi %15, %17 : vector<256x1xi32>
    %c0_i32 = arith.constant 0 : i32
    %19 = vector.broadcast %c0_i32 : i32 to vector<256x1xi32>
    %20 = arith.cmpi sge, %18, %19 : vector<256x1xi32>
    %c-1_i32_6 = arith.constant -1 : i32
    %21 = vector.broadcast %c-1_i32_6 : i32 to vector<256x1xi32>
    %22 = arith.addi %15, %21 : vector<256x1xi32>
    %c16_i32 = arith.constant 16 : i32
    %23 = vector.broadcast %c16_i32 : i32 to vector<256x1xi32>
    %24 = arith.cmpi slt, %22, %23 : vector<256x1xi32>
    %25 = arith.andi %20, %24 : vector<256x1xi1>
    %c-1_i32_7 = arith.constant -1 : i32
    %26 = vector.broadcast %c-1_i32_7 : i32 to vector<256x1xi32>
    %27 = arith.addi %11, %26 : vector<256x1xi32>
    %c0_i32_8 = arith.constant 0 : i32
    %28 = vector.broadcast %c0_i32_8 : i32 to vector<256x1xi32>
    %29 = arith.cmpi sge, %27, %28 : vector<256x1xi32>
    %30 = arith.andi %25, %29 : vector<256x1xi1>
    %c-1_i32_9 = arith.constant -1 : i32
    %31 = vector.broadcast %c-1_i32_9 : i32 to vector<256x1xi32>
    %32 = arith.addi %11, %31 : vector<256x1xi32>
    %c16_i32_10 = arith.constant 16 : i32
    %33 = vector.broadcast %c16_i32_10 : i32 to vector<256x1xi32>
    %34 = arith.cmpi slt, %32, %33 : vector<256x1xi32>
    %35 = arith.andi %30, %34 : vector<256x1xi1>
    %cst_11 = arith.constant 0.000000e+00 : f32
    %36 = vector.shape_cast %35 : vector<256x1xi1> to vector<256x1xi1>
    %37 = vector.broadcast %36 : vector<256x1xi1> to vector<256x128xi1>
    %38 = vector.broadcast %cst_11 : f32 to vector<256x128xf32>
    %39 = arith.select %37, %16, %38 : vector<256x128xi1>, vector<256x128xf32>
    %40 = arith.truncf %39 : vector<256x128xf32> to vector<256x128xbf16>
    %c16_i32_12 = arith.constant 16 : i32
    %41 = tpu.dynamic_rotate %8 by %c16_i32_12 dim 0 : vector<256x128xf32>, i32 -> vector<256x128xf32>
    %c-1_i32_13 = arith.constant -1 : i32
    %42 = vector.broadcast %c-1_i32_13 : i32 to vector<256x1xi32>
    %43 = arith.addi %15, %42 : vector<256x1xi32>
    %c0_i32_14 = arith.constant 0 : i32
    %44 = vector.broadcast %c0_i32_14 : i32 to vector<256x1xi32>
    %45 = arith.cmpi sge, %43, %44 : vector<256x1xi32>
    %c-1_i32_15 = arith.constant -1 : i32
    %46 = vector.broadcast %c-1_i32_15 : i32 to vector<256x1xi32>
    %47 = arith.addi %15, %46 : vector<256x1xi32>
    %c16_i32_16 = arith.constant 16 : i32
    %48 = vector.broadcast %c16_i32_16 : i32 to vector<256x1xi32>
    %49 = arith.cmpi slt, %47, %48 : vector<256x1xi32>
    %50 = arith.andi %45, %49 : vector<256x1xi1>
    %c0_i32_17 = arith.constant 0 : i32
    %51 = vector.broadcast %c0_i32_17 : i32 to vector<256x1xi32>
    %52 = arith.addi %11, %51 : vector<256x1xi32>
    %c0_i32_18 = arith.constant 0 : i32
    %53 = vector.broadcast %c0_i32_18 : i32 to vector<256x1xi32>
    %54 = arith.cmpi sge, %52, %53 : vector<256x1xi32>
    %55 = arith.andi %50, %54 : vector<256x1xi1>
    %c0_i32_19 = arith.constant 0 : i32
    %56 = vector.broadcast %c0_i32_19 : i32 to vector<256x1xi32>
    %57 = arith.addi %11, %56 : vector<256x1xi32>
    %c16_i32_20 = arith.constant 16 : i32
    %58 = vector.broadcast %c16_i32_20 : i32 to vector<256x1xi32>
    %59 = arith.cmpi slt, %57, %58 : vector<256x1xi32>
    %60 = arith.andi %55, %59 : vector<256x1xi1>
    %cst_21 = arith.constant 0.000000e+00 : f32
    %61 = vector.shape_cast %60 : vector<256x1xi1> to vector<256x1xi1>
    %62 = vector.broadcast %61 : vector<256x1xi1> to vector<256x128xi1>
    %63 = vector.broadcast %cst_21 : f32 to vector<256x128xf32>
    %64 = arith.select %62, %41, %63 : vector<256x128xi1>, vector<256x128xf32>
    %65 = arith.truncf %64 : vector<256x128xf32> to vector<256x128xbf16>
    %c15_i32_22 = arith.constant 15 : i32
    %66 = tpu.dynamic_rotate %8 by %c15_i32_22 dim 0 : vector<256x128xf32>, i32 -> vector<256x128xf32>
    %c-1_i32_23 = arith.constant -1 : i32
    %67 = vector.broadcast %c-1_i32_23 : i32 to vector<256x1xi32>
    %68 = arith.addi %15, %67 : vector<256x1xi32>
    %c0_i32_24 = arith.constant 0 : i32
    %69 = vector.broadcast %c0_i32_24 : i32 to vector<256x1xi32>
    %70 = arith.cmpi sge, %68, %69 : vector<256x1xi32>
    %c-1_i32_25 = arith.constant -1 : i32
    %71 = vector.broadcast %c-1_i32_25 : i32 to vector<256x1xi32>
    %72 = arith.addi %15, %71 : vector<256x1xi32>
    %c16_i32_26 = arith.constant 16 : i32
    %73 = vector.broadcast %c16_i32_26 : i32 to vector<256x1xi32>
    %74 = arith.cmpi slt, %72, %73 : vector<256x1xi32>
    %75 = arith.andi %70, %74 : vector<256x1xi1>
    %c1_i32 = arith.constant 1 : i32
    %76 = vector.broadcast %c1_i32 : i32 to vector<256x1xi32>
    %77 = arith.addi %11, %76 : vector<256x1xi32>
    %c0_i32_27 = arith.constant 0 : i32
    %78 = vector.broadcast %c0_i32_27 : i32 to vector<256x1xi32>
    %79 = arith.cmpi sge, %77, %78 : vector<256x1xi32>
    %80 = arith.andi %75, %79 : vector<256x1xi1>
    %c1_i32_28 = arith.constant 1 : i32
    %81 = vector.broadcast %c1_i32_28 : i32 to vector<256x1xi32>
    %82 = arith.addi %11, %81 : vector<256x1xi32>
    %c16_i32_29 = arith.constant 16 : i32
    %83 = vector.broadcast %c16_i32_29 : i32 to vector<256x1xi32>
    %84 = arith.cmpi slt, %82, %83 : vector<256x1xi32>
    %85 = arith.andi %80, %84 : vector<256x1xi1>
    %cst_30 = arith.constant 0.000000e+00 : f32
    %86 = vector.shape_cast %85 : vector<256x1xi1> to vector<256x1xi1>
    %87 = vector.broadcast %86 : vector<256x1xi1> to vector<256x128xi1>
    %88 = vector.broadcast %cst_30 : f32 to vector<256x128xf32>
    %89 = arith.select %87, %66, %88 : vector<256x128xi1>, vector<256x128xf32>
    %90 = arith.truncf %89 : vector<256x128xf32> to vector<256x128xbf16>
    %c1_i32_31 = arith.constant 1 : i32
    %91 = tpu.dynamic_rotate %8 by %c1_i32_31 dim 0 : vector<256x128xf32>, i32 -> vector<256x128xf32>
    %c0_i32_32 = arith.constant 0 : i32
    %92 = vector.broadcast %c0_i32_32 : i32 to vector<256x1xi32>
    %93 = arith.addi %15, %92 : vector<256x1xi32>
    %c0_i32_33 = arith.constant 0 : i32
    %94 = vector.broadcast %c0_i32_33 : i32 to vector<256x1xi32>
    %95 = arith.cmpi sge, %93, %94 : vector<256x1xi32>
    %c0_i32_34 = arith.constant 0 : i32
    %96 = vector.broadcast %c0_i32_34 : i32 to vector<256x1xi32>
    %97 = arith.addi %15, %96 : vector<256x1xi32>
    %c16_i32_35 = arith.constant 16 : i32
    %98 = vector.broadcast %c16_i32_35 : i32 to vector<256x1xi32>
    %99 = arith.cmpi slt, %97, %98 : vector<256x1xi32>
    %100 = arith.andi %95, %99 : vector<256x1xi1>
    %c-1_i32_36 = arith.constant -1 : i32
    %101 = vector.broadcast %c-1_i32_36 : i32 to vector<256x1xi32>
    %102 = arith.addi %11, %101 : vector<256x1xi32>
    %c0_i32_37 = arith.constant 0 : i32
    %103 = vector.broadcast %c0_i32_37 : i32 to vector<256x1xi32>
    %104 = arith.cmpi sge, %102, %103 : vector<256x1xi32>
    %105 = arith.andi %100, %104 : vector<256x1xi1>
    %c-1_i32_38 = arith.constant -1 : i32
    %106 = vector.broadcast %c-1_i32_38 : i32 to vector<256x1xi32>
    %107 = arith.addi %11, %106 : vector<256x1xi32>
    %c16_i32_39 = arith.constant 16 : i32
    %108 = vector.broadcast %c16_i32_39 : i32 to vector<256x1xi32>
    %109 = arith.cmpi slt, %107, %108 : vector<256x1xi32>
    %110 = arith.andi %105, %109 : vector<256x1xi1>
    %cst_40 = arith.constant 0.000000e+00 : f32
    %111 = vector.shape_cast %110 : vector<256x1xi1> to vector<256x1xi1>
    %112 = vector.broadcast %111 : vector<256x1xi1> to vector<256x128xi1>
    %113 = vector.broadcast %cst_40 : f32 to vector<256x128xf32>
    %114 = arith.select %112, %91, %113 : vector<256x128xi1>, vector<256x128xf32>
    %115 = arith.truncf %114 : vector<256x128xf32> to vector<256x128xbf16>
    %116 = arith.truncf %8 : vector<256x128xf32> to vector<256x128xbf16>
    %c255_i32 = arith.constant 255 : i32
    %117 = tpu.dynamic_rotate %8 by %c255_i32 dim 0 : vector<256x128xf32>, i32 -> vector<256x128xf32>
    %c0_i32_41 = arith.constant 0 : i32
    %118 = vector.broadcast %c0_i32_41 : i32 to vector<256x1xi32>
    %119 = arith.addi %15, %118 : vector<256x1xi32>
    %c0_i32_42 = arith.constant 0 : i32
    %120 = vector.broadcast %c0_i32_42 : i32 to vector<256x1xi32>
    %121 = arith.cmpi sge, %119, %120 : vector<256x1xi32>
    %c0_i32_43 = arith.constant 0 : i32
    %122 = vector.broadcast %c0_i32_43 : i32 to vector<256x1xi32>
    %123 = arith.addi %15, %122 : vector<256x1xi32>
    %c16_i32_44 = arith.constant 16 : i32
    %124 = vector.broadcast %c16_i32_44 : i32 to vector<256x1xi32>
    %125 = arith.cmpi slt, %123, %124 : vector<256x1xi32>
    %126 = arith.andi %121, %125 : vector<256x1xi1>
    %c1_i32_45 = arith.constant 1 : i32
    %127 = vector.broadcast %c1_i32_45 : i32 to vector<256x1xi32>
    %128 = arith.addi %11, %127 : vector<256x1xi32>
    %c0_i32_46 = arith.constant 0 : i32
    %129 = vector.broadcast %c0_i32_46 : i32 to vector<256x1xi32>
    %130 = arith.cmpi sge, %128, %129 : vector<256x1xi32>
    %131 = arith.andi %126, %130 : vector<256x1xi1>
    %c1_i32_47 = arith.constant 1 : i32
    %132 = vector.broadcast %c1_i32_47 : i32 to vector<256x1xi32>
    %133 = arith.addi %11, %132 : vector<256x1xi32>
    %c16_i32_48 = arith.constant 16 : i32
    %134 = vector.broadcast %c16_i32_48 : i32 to vector<256x1xi32>
    %135 = arith.cmpi slt, %133, %134 : vector<256x1xi32>
    %136 = arith.andi %131, %135 : vector<256x1xi1>
    %cst_49 = arith.constant 0.000000e+00 : f32
    %137 = vector.shape_cast %136 : vector<256x1xi1> to vector<256x1xi1>
    %138 = vector.broadcast %137 : vector<256x1xi1> to vector<256x128xi1>
    %139 = vector.broadcast %cst_49 : f32 to vector<256x128xf32>
    %140 = arith.select %138, %117, %139 : vector<256x128xi1>, vector<256x128xf32>
    %141 = arith.truncf %140 : vector<256x128xf32> to vector<256x128xbf16>
    %c241_i32 = arith.constant 241 : i32
    %142 = tpu.dynamic_rotate %8 by %c241_i32 dim 0 : vector<256x128xf32>, i32 -> vector<256x128xf32>
    %c1_i32_50 = arith.constant 1 : i32
    %143 = vector.broadcast %c1_i32_50 : i32 to vector<256x1xi32>
    %144 = arith.addi %15, %143 : vector<256x1xi32>
    %c0_i32_51 = arith.constant 0 : i32
    %145 = vector.broadcast %c0_i32_51 : i32 to vector<256x1xi32>
    %146 = arith.cmpi sge, %144, %145 : vector<256x1xi32>
    %c1_i32_52 = arith.constant 1 : i32
    %147 = vector.broadcast %c1_i32_52 : i32 to vector<256x1xi32>
    %148 = arith.addi %15, %147 : vector<256x1xi32>
    %c16_i32_53 = arith.constant 16 : i32
    %149 = vector.broadcast %c16_i32_53 : i32 to vector<256x1xi32>
    %150 = arith.cmpi slt, %148, %149 : vector<256x1xi32>
    %151 = arith.andi %146, %150 : vector<256x1xi1>
    %c-1_i32_54 = arith.constant -1 : i32
    %152 = vector.broadcast %c-1_i32_54 : i32 to vector<256x1xi32>
    %153 = arith.addi %11, %152 : vector<256x1xi32>
    %c0_i32_55 = arith.constant 0 : i32
    %154 = vector.broadcast %c0_i32_55 : i32 to vector<256x1xi32>
    %155 = arith.cmpi sge, %153, %154 : vector<256x1xi32>
    %156 = arith.andi %151, %155 : vector<256x1xi1>
    %c-1_i32_56 = arith.constant -1 : i32
    %157 = vector.broadcast %c-1_i32_56 : i32 to vector<256x1xi32>
    %158 = arith.addi %11, %157 : vector<256x1xi32>
    %c16_i32_57 = arith.constant 16 : i32
    %159 = vector.broadcast %c16_i32_57 : i32 to vector<256x1xi32>
    %160 = arith.cmpi slt, %158, %159 : vector<256x1xi32>
    %161 = arith.andi %156, %160 : vector<256x1xi1>
    %cst_58 = arith.constant 0.000000e+00 : f32
    %162 = vector.shape_cast %161 : vector<256x1xi1> to vector<256x1xi1>
    %163 = vector.broadcast %162 : vector<256x1xi1> to vector<256x128xi1>
    %164 = vector.broadcast %cst_58 : f32 to vector<256x128xf32>
    %165 = arith.select %163, %142, %164 : vector<256x128xi1>, vector<256x128xf32>
    %166 = arith.truncf %165 : vector<256x128xf32> to vector<256x128xbf16>
    %c240_i32 = arith.constant 240 : i32
    %167 = tpu.dynamic_rotate %8 by %c240_i32 dim 0 : vector<256x128xf32>, i32 -> vector<256x128xf32>
    %c1_i32_59 = arith.constant 1 : i32
    %168 = vector.broadcast %c1_i32_59 : i32 to vector<256x1xi32>
    %169 = arith.addi %15, %168 : vector<256x1xi32>
    %c0_i32_60 = arith.constant 0 : i32
    %170 = vector.broadcast %c0_i32_60 : i32 to vector<256x1xi32>
    %171 = arith.cmpi sge, %169, %170 : vector<256x1xi32>
    %c1_i32_61 = arith.constant 1 : i32
    %172 = vector.broadcast %c1_i32_61 : i32 to vector<256x1xi32>
    %173 = arith.addi %15, %172 : vector<256x1xi32>
    %c16_i32_62 = arith.constant 16 : i32
    %174 = vector.broadcast %c16_i32_62 : i32 to vector<256x1xi32>
    %175 = arith.cmpi slt, %173, %174 : vector<256x1xi32>
    %176 = arith.andi %171, %175 : vector<256x1xi1>
    %c0_i32_63 = arith.constant 0 : i32
    %177 = vector.broadcast %c0_i32_63 : i32 to vector<256x1xi32>
    %178 = arith.addi %11, %177 : vector<256x1xi32>
    %c0_i32_64 = arith.constant 0 : i32
    %179 = vector.broadcast %c0_i32_64 : i32 to vector<256x1xi32>
    %180 = arith.cmpi sge, %178, %179 : vector<256x1xi32>
    %181 = arith.andi %176, %180 : vector<256x1xi1>
    %c0_i32_65 = arith.constant 0 : i32
    %182 = vector.broadcast %c0_i32_65 : i32 to vector<256x1xi32>
    %183 = arith.addi %11, %182 : vector<256x1xi32>
    %c16_i32_66 = arith.constant 16 : i32
    %184 = vector.broadcast %c16_i32_66 : i32 to vector<256x1xi32>
    %185 = arith.cmpi slt, %183, %184 : vector<256x1xi32>
    %186 = arith.andi %181, %185 : vector<256x1xi1>
    %cst_67 = arith.constant 0.000000e+00 : f32
    %187 = vector.shape_cast %186 : vector<256x1xi1> to vector<256x1xi1>
    %188 = vector.broadcast %187 : vector<256x1xi1> to vector<256x128xi1>
    %189 = vector.broadcast %cst_67 : f32 to vector<256x128xf32>
    %190 = arith.select %188, %167, %189 : vector<256x128xi1>, vector<256x128xf32>
    %191 = arith.truncf %190 : vector<256x128xf32> to vector<256x128xbf16>
    %c239_i32 = arith.constant 239 : i32
    %192 = tpu.dynamic_rotate %8 by %c239_i32 dim 0 : vector<256x128xf32>, i32 -> vector<256x128xf32>
    %c1_i32_68 = arith.constant 1 : i32
    %193 = vector.broadcast %c1_i32_68 : i32 to vector<256x1xi32>
    %194 = arith.addi %15, %193 : vector<256x1xi32>
    %c0_i32_69 = arith.constant 0 : i32
    %195 = vector.broadcast %c0_i32_69 : i32 to vector<256x1xi32>
    %196 = arith.cmpi sge, %194, %195 : vector<256x1xi32>
    %c1_i32_70 = arith.constant 1 : i32
    %197 = vector.broadcast %c1_i32_70 : i32 to vector<256x1xi32>
    %198 = arith.addi %15, %197 : vector<256x1xi32>
    %c16_i32_71 = arith.constant 16 : i32
    %199 = vector.broadcast %c16_i32_71 : i32 to vector<256x1xi32>
    %200 = arith.cmpi slt, %198, %199 : vector<256x1xi32>
    %201 = arith.andi %196, %200 : vector<256x1xi1>
    %c1_i32_72 = arith.constant 1 : i32
    %202 = vector.broadcast %c1_i32_72 : i32 to vector<256x1xi32>
    %203 = arith.addi %11, %202 : vector<256x1xi32>
    %c0_i32_73 = arith.constant 0 : i32
    %204 = vector.broadcast %c0_i32_73 : i32 to vector<256x1xi32>
    %205 = arith.cmpi sge, %203, %204 : vector<256x1xi32>
    %206 = arith.andi %201, %205 : vector<256x1xi1>
    %c1_i32_74 = arith.constant 1 : i32
    %207 = vector.broadcast %c1_i32_74 : i32 to vector<256x1xi32>
    %208 = arith.addi %11, %207 : vector<256x1xi32>
    %c16_i32_75 = arith.constant 16 : i32
    %209 = vector.broadcast %c16_i32_75 : i32 to vector<256x1xi32>
    %210 = arith.cmpi slt, %208, %209 : vector<256x1xi32>
    %211 = arith.andi %206, %210 : vector<256x1xi1>
    %cst_76 = arith.constant 0.000000e+00 : f32
    %212 = vector.shape_cast %211 : vector<256x1xi1> to vector<256x1xi1>
    %213 = vector.broadcast %212 : vector<256x1xi1> to vector<256x128xi1>
    %214 = vector.broadcast %cst_76 : f32 to vector<256x128xf32>
    %215 = arith.select %213, %192, %214 : vector<256x128xi1>, vector<256x128xf32>
    %216 = arith.truncf %215 : vector<256x128xf32> to vector<256x128xbf16>
    %217 = tpu.concatenate %40, %65, %90, %115, %116, %141, %166, %191, %216 in 1 : vector<256x128xbf16>, vector<256x128xbf16>, vector<256x128xbf16>, vector<256x128xbf16>, vector<256x128xbf16>, vector<256x128xbf16>, vector<256x128xbf16>, vector<256x128xbf16>, vector<256x128xbf16> -> vector<256x1152xbf16>
    %c0_77 = arith.constant 0 : index
    %c0_78 = arith.constant 0 : index
    %218 = vector.load %arg4[%c0_77, %c0_78] : memref<1152x128xbf16, #tpu.memory_space<vmem>>, vector<1152x128xbf16>
    %cst_79 = arith.constant dense<0.000000e+00> : vector<256x128xf32>
    %219 = tpu.matmul %217, %218, %cst_79 {dimension_numbers = #tpu.dot_dimension_numbers<[1], [0], [0], [1], [0, 0, 1, 1], [], []>} : vector<256x1152xbf16>, vector<1152x128xbf16>, vector<256x128xf32> -> vector<256x128xf32>
    %c0_80 = arith.constant 0 : index
    %c0_81 = arith.constant 0 : index
    %220 = vector.load %arg5[%c0_80, %c0_81] : memref<256x128xf32, #tpu.memory_space<vmem>>, vector<256x128xf32>
    tpu.vector_store %arg5[%c0_80, %c0_81], %219 {strides = array<i32>} : memref<256x128xf32, #tpu.memory_space<vmem>>, vector<256x128xf32>,
    %c0_i32_82 = arith.constant 0 : i32
    %221 = arith.cmpi eq, %arg0, %c0_i32_82 : i32
    %222 = arith.extui %221 : i1 to i32
    %c0_i32_83 = arith.constant 0 : i32
    %223 = arith.cmpi ne, %222, %c0_i32_83 : i32
    scf.if %223 {
      %cst_90 = arith.constant 0.000000e+00 : f32
      %233 = vector.broadcast %cst_90 : f32 to vector<2x128xf32>
      %c0_91 = arith.constant 0 : index
      %c0_92 = arith.constant 0 : index
      %234 = vector.load %arg6[%c0_91, %c0_92] : memref<2x128xf32, #tpu.memory_space<vmem>>, vector<2x128xf32>
      tpu.vector_store %arg6[%c0_91, %c0_92], %233 {strides = array<i32>} : memref<2x128xf32, #tpu.memory_space<vmem>>, vector<2x128xf32>,
    } else {
    }
    %c0_84 = arith.constant 0 : index
    %c0_85 = arith.constant 0 : index
    %224 = vector.load %arg6[%c0_84, %c0_85] : memref<2x128xf32, #tpu.memory_space<vmem>>, vector<2x128xf32>
    %cst_86 = arith.constant dense<0.000000e+00> : vector<128xf32>
    %225 = vector.multi_reduction <add>, %219, %cst_86 [0] : vector<256x128xf32> to vector<128xf32>
    %226 = vector.shape_cast %225 : vector<128xf32> to vector<1x128xf32>
    %227 = arith.mulf %219, %219 : vector<256x128xf32>
    %cst_87 = arith.constant dense<0.000000e+00> : vector<128xf32>
    %228 = vector.multi_reduction <add>, %227, %cst_87 [0] : vector<256x128xf32> to vector<128xf32>
    %229 = vector.shape_cast %228 : vector<128xf32> to vector<1x128xf32>
    %230 = tpu.concatenate %226, %229 in 0 : vector<1x128xf32>, vector<1x128xf32> -> vector<2x128xf32>
    %231 = arith.addf %224, %230 : vector<2x128xf32>
    %c0_88 = arith.constant 0 : index
    %c0_89 = arith.constant 0 : index
    %232 = vector.load %arg6[%c0_88, %c0_89] : memref<2x128xf32, #tpu.memory_space<vmem>>, vector<2x128xf32>
    tpu.vector_store %arg6[%c0_88, %c0_89], %231 {strides = array<i32>} : memref<2x128xf32, #tpu.memory_space<vmem>>, vector<2x128xf32>,
    return
  }
  func.func @transform_0(%arg0: i32) -> (i32, i32) {
    %c0_i32 = arith.constant 0 : i32
    %c0_i32_0 = arith.constant 0 : i32
    return %arg0, %c0_i32 : i32, i32
  }
  func.func @transform_1(%arg0: i32) -> (i32, i32) {
    %c0_i32 = arith.constant 0 : i32
    %c0_i32_0 = arith.constant 0 : i32
    %c0_i32_1 = arith.constant 0 : i32
    return %c0_i32, %c0_i32_0 : i32, i32
  }
  func.func @transform_2(%arg0: i32) -> (i32, i32) {
    %c0_i32 = arith.constant 0 : i32
    %c0_i32_0 = arith.constant 0 : i32
    %c0_i32_1 = arith.constant 0 : i32
    return %c0_i32, %c0_i32_0 : i32, i32
  }
  func.func @transform_3(%arg0: i32) -> (i32, i32) {
    %c0_i32 = arith.constant 0 : i32
    %c0_i32_0 = arith.constant 0 : i32
    %c0_i32_1 = arith.constant 0 : i32
    return %c0_i32, %c0_i32_0 : i32, i32
  }
  func.func @transform_4(%arg0: i32) -> (i32, i32) {
    %c0_i32 = arith.constant 0 : i32
    %c0_i32_0 = arith.constant 0 : i32
    return %arg0, %c0_i32 : i32, i32
  }
  func.func @transform_5(%arg0: i32) -> (i32, i32) {
    %c0_i32 = arith.constant 0 : i32
    %c0_i32_0 = arith.constant 0 : i32
    %c0_i32_1 = arith.constant 0 : i32
    return %c0_i32, %c0_i32_0 : i32, i32
  }
}

module attributes {stable_mosaic.version = 11 : i64} {
  func.func @_conv1_kernel(%arg0: i32, %arg1: memref<256x512xbf16, #tpu.memory_space<vmem>>, %arg2: memref<512x128xbf16, #tpu.memory_space<vmem>>, %arg3: memref<256x128xf32, #tpu.memory_space<vmem>>, %arg4: memref<2x128xf32, #tpu.memory_space<vmem>>) attributes {dimension_semantics = [#tpu.dimension_semantics<arbitrary>], iteration_bounds = array<i64: 2>, scalar_prefetch = 0 : i64, scratch_operands = 0 : i64, tpu.core_type = #tpu.core_type<tc>, window_params = [{transform_indices = @transform_0, window_bounds = array<i64: 256, 512>}, {pipeline_mode = #tpu.pipeline_mode<synchronous>, transform_indices = @transform_1, window_bounds = array<i64: 512, 128>}, {transform_indices = @transform_2, window_bounds = array<i64: 256, 128>}, {pipeline_mode = #tpu.pipeline_mode<synchronous>, transform_indices = @transform_3, window_bounds = array<i64: 2, 128>}]} {
    %c0 = arith.constant 0 : index
    %c0_0 = arith.constant 0 : index
    %0 = vector.load %arg1[%c0, %c0_0] : memref<256x512xbf16, #tpu.memory_space<vmem>>, vector<256x512xbf16>
    %c0_1 = arith.constant 0 : index
    %c0_2 = arith.constant 0 : index
    %1 = vector.load %arg2[%c0_1, %c0_2] : memref<512x128xbf16, #tpu.memory_space<vmem>>, vector<512x128xbf16>
    %cst = arith.constant dense<0.000000e+00> : vector<256x128xf32>
    %2 = tpu.matmul %0, %1, %cst {dimension_numbers = #tpu.dot_dimension_numbers<[1], [0], [0], [1], [0, 0, 1, 1], [], []>} : vector<256x512xbf16>, vector<512x128xbf16>, vector<256x128xf32> -> vector<256x128xf32>
    %c0_3 = arith.constant 0 : index
    %c0_4 = arith.constant 0 : index
    %3 = vector.load %arg3[%c0_3, %c0_4] : memref<256x128xf32, #tpu.memory_space<vmem>>, vector<256x128xf32>
    tpu.vector_store %arg3[%c0_3, %c0_4], %2 {strides = array<i32>} : memref<256x128xf32, #tpu.memory_space<vmem>>, vector<256x128xf32>,
    %c0_i32 = arith.constant 0 : i32
    %4 = arith.cmpi eq, %arg0, %c0_i32 : i32
    %5 = arith.extui %4 : i1 to i32
    %c0_i32_5 = arith.constant 0 : i32
    %6 = arith.cmpi ne, %5, %c0_i32_5 : i32
    scf.if %6 {
      %cst_12 = arith.constant 0.000000e+00 : f32
      %16 = vector.broadcast %cst_12 : f32 to vector<2x128xf32>
      %c0_13 = arith.constant 0 : index
      %c0_14 = arith.constant 0 : index
      %17 = vector.load %arg4[%c0_13, %c0_14] : memref<2x128xf32, #tpu.memory_space<vmem>>, vector<2x128xf32>
      tpu.vector_store %arg4[%c0_13, %c0_14], %16 {strides = array<i32>} : memref<2x128xf32, #tpu.memory_space<vmem>>, vector<2x128xf32>,
    } else {
    }
    %c0_6 = arith.constant 0 : index
    %c0_7 = arith.constant 0 : index
    %7 = vector.load %arg4[%c0_6, %c0_7] : memref<2x128xf32, #tpu.memory_space<vmem>>, vector<2x128xf32>
    %cst_8 = arith.constant dense<0.000000e+00> : vector<128xf32>
    %8 = vector.multi_reduction <add>, %2, %cst_8 [0] : vector<256x128xf32> to vector<128xf32>
    %9 = vector.shape_cast %8 : vector<128xf32> to vector<1x128xf32>
    %10 = arith.mulf %2, %2 : vector<256x128xf32>
    %cst_9 = arith.constant dense<0.000000e+00> : vector<128xf32>
    %11 = vector.multi_reduction <add>, %10, %cst_9 [0] : vector<256x128xf32> to vector<128xf32>
    %12 = vector.shape_cast %11 : vector<128xf32> to vector<1x128xf32>
    %13 = tpu.concatenate %9, %12 in 0 : vector<1x128xf32>, vector<1x128xf32> -> vector<2x128xf32>
    %14 = arith.addf %7, %13 : vector<2x128xf32>
    %c0_10 = arith.constant 0 : index
    %c0_11 = arith.constant 0 : index
    %15 = vector.load %arg4[%c0_10, %c0_11] : memref<2x128xf32, #tpu.memory_space<vmem>>, vector<2x128xf32>
    tpu.vector_store %arg4[%c0_10, %c0_11], %14 {strides = array<i32>} : memref<2x128xf32, #tpu.memory_space<vmem>>, vector<2x128xf32>,
    return
  }
  func.func @transform_0(%arg0: i32) -> (i32, i32) {
    %c0_i32 = arith.constant 0 : i32
    %c0_i32_0 = arith.constant 0 : i32
    return %arg0, %c0_i32 : i32, i32
  }
  func.func @transform_1(%arg0: i32) -> (i32, i32) {
    %c0_i32 = arith.constant 0 : i32
    %c0_i32_0 = arith.constant 0 : i32
    %c0_i32_1 = arith.constant 0 : i32
    return %c0_i32, %c0_i32_0 : i32, i32
  }
  func.func @transform_2(%arg0: i32) -> (i32, i32) {
    %c0_i32 = arith.constant 0 : i32
    %c0_i32_0 = arith.constant 0 : i32
    return %arg0, %c0_i32 : i32, i32
  }
  func.func @transform_3(%arg0: i32) -> (i32, i32) {
    %c0_i32 = arith.constant 0 : i32
    %c0_i32_0 = arith.constant 0 : i32
    %c0_i32_1 = arith.constant 0 : i32
    return %c0_i32, %c0_i32_0 : i32, i32
  }
}

module attributes {stable_mosaic.version = 11 : i64} {
  func.func @_bn_conv1x1_kernel(%arg0: i32, %arg1: memref<256x128xf32, #tpu.memory_space<vmem>>, %arg2: memref<1x128xf32, #tpu.memory_space<vmem>>, %arg3: memref<1x128xf32, #tpu.memory_space<vmem>>, %arg4: memref<128x512xbf16, #tpu.memory_space<vmem>>, %arg5: memref<256x512xf32, #tpu.memory_space<vmem>>, %arg6: memref<2x512xf32, #tpu.memory_space<vmem>>) attributes {dimension_semantics = [#tpu.dimension_semantics<arbitrary>], iteration_bounds = array<i64: 2>, scalar_prefetch = 0 : i64, scratch_operands = 0 : i64, tpu.core_type = #tpu.core_type<tc>, window_params = [{transform_indices = @transform_0, window_bounds = array<i64: 256, 128>}, {pipeline_mode = #tpu.pipeline_mode<synchronous>, transform_indices = @transform_1, window_bounds = array<i64: 1, 128>}, {pipeline_mode = #tpu.pipeline_mode<synchronous>, transform_indices = @transform_2, window_bounds = array<i64: 1, 128>}, {pipeline_mode = #tpu.pipeline_mode<synchronous>, transform_indices = @transform_3, window_bounds = array<i64: 128, 512>}, {transform_indices = @transform_4, window_bounds = array<i64: 256, 512>}, {pipeline_mode = #tpu.pipeline_mode<synchronous>, transform_indices = @transform_5, window_bounds = array<i64: 2, 512>}]} {
    %c0 = arith.constant 0 : index
    %c0_0 = arith.constant 0 : index
    %0 = vector.load %arg1[%c0, %c0_0] : memref<256x128xf32, #tpu.memory_space<vmem>>, vector<256x128xf32>
    %c0_1 = arith.constant 0 : index
    %c0_2 = arith.constant 0 : index
    %1 = vector.load %arg2[%c0_1, %c0_2] : memref<1x128xf32, #tpu.memory_space<vmem>>, vector<1x128xf32>
    %2 = vector.broadcast %1 : vector<1x128xf32> to vector<256x128xf32>
    %3 = arith.mulf %0, %2 : vector<256x128xf32>
    %c0_3 = arith.constant 0 : index
    %c0_4 = arith.constant 0 : index
    %4 = vector.load %arg3[%c0_3, %c0_4] : memref<1x128xf32, #tpu.memory_space<vmem>>, vector<1x128xf32>
    %5 = vector.broadcast %4 : vector<1x128xf32> to vector<256x128xf32>
    %6 = arith.addf %3, %5 : vector<256x128xf32>
    %cst = arith.constant 0.000000e+00 : f32
    %7 = vector.broadcast %cst : f32 to vector<256x128xf32>
    %8 = arith.maximumf %6, %7 : vector<256x128xf32>
    %9 = arith.truncf %8 : vector<256x128xf32> to vector<256x128xbf16>
    %c0_5 = arith.constant 0 : index
    %c0_6 = arith.constant 0 : index
    %10 = vector.load %arg4[%c0_5, %c0_6] : memref<128x512xbf16, #tpu.memory_space<vmem>>, vector<128x512xbf16>
    %cst_7 = arith.constant dense<0.000000e+00> : vector<256x512xf32>
    %11 = tpu.matmul %9, %10, %cst_7 {dimension_numbers = #tpu.dot_dimension_numbers<[1], [0], [0], [1], [0, 0, 1, 1], [], []>} : vector<256x128xbf16>, vector<128x512xbf16>, vector<256x512xf32> -> vector<256x512xf32>
    %c0_8 = arith.constant 0 : index
    %c0_9 = arith.constant 0 : index
    %12 = vector.load %arg5[%c0_8, %c0_9] : memref<256x512xf32, #tpu.memory_space<vmem>>, vector<256x512xf32>
    tpu.vector_store %arg5[%c0_8, %c0_9], %11 {strides = array<i32>} : memref<256x512xf32, #tpu.memory_space<vmem>>, vector<256x512xf32>,
    %c0_i32 = arith.constant 0 : i32
    %13 = arith.cmpi eq, %arg0, %c0_i32 : i32
    %14 = arith.extui %13 : i1 to i32
    %c0_i32_10 = arith.constant 0 : i32
    %15 = arith.cmpi ne, %14, %c0_i32_10 : i32
    scf.if %15 {
      %cst_17 = arith.constant 0.000000e+00 : f32
      %25 = vector.broadcast %cst_17 : f32 to vector<2x512xf32>
      %c0_18 = arith.constant 0 : index
      %c0_19 = arith.constant 0 : index
      %26 = vector.load %arg6[%c0_18, %c0_19] : memref<2x512xf32, #tpu.memory_space<vmem>>, vector<2x512xf32>
      tpu.vector_store %arg6[%c0_18, %c0_19], %25 {strides = array<i32>} : memref<2x512xf32, #tpu.memory_space<vmem>>, vector<2x512xf32>,
    } else {
    }
    %c0_11 = arith.constant 0 : index
    %c0_12 = arith.constant 0 : index
    %16 = vector.load %arg6[%c0_11, %c0_12] : memref<2x512xf32, #tpu.memory_space<vmem>>, vector<2x512xf32>
    %cst_13 = arith.constant dense<0.000000e+00> : vector<512xf32>
    %17 = vector.multi_reduction <add>, %11, %cst_13 [0] : vector<256x512xf32> to vector<512xf32>
    %18 = vector.shape_cast %17 : vector<512xf32> to vector<1x512xf32>
    %19 = arith.mulf %11, %11 : vector<256x512xf32>
    %cst_14 = arith.constant dense<0.000000e+00> : vector<512xf32>
    %20 = vector.multi_reduction <add>, %19, %cst_14 [0] : vector<256x512xf32> to vector<512xf32>
    %21 = vector.shape_cast %20 : vector<512xf32> to vector<1x512xf32>
    %22 = tpu.concatenate %18, %21 in 0 : vector<1x512xf32>, vector<1x512xf32> -> vector<2x512xf32>
    %23 = arith.addf %16, %22 : vector<2x512xf32>
    %c0_15 = arith.constant 0 : index
    %c0_16 = arith.constant 0 : index
    %24 = vector.load %arg6[%c0_15, %c0_16] : memref<2x512xf32, #tpu.memory_space<vmem>>, vector<2x512xf32>
    tpu.vector_store %arg6[%c0_15, %c0_16], %23 {strides = array<i32>} : memref<2x512xf32, #tpu.memory_space<vmem>>, vector<2x512xf32>,
    return
  }
  func.func @transform_0(%arg0: i32) -> (i32, i32) {
    %c0_i32 = arith.constant 0 : i32
    %c0_i32_0 = arith.constant 0 : i32
    return %arg0, %c0_i32 : i32, i32
  }
  func.func @transform_1(%arg0: i32) -> (i32, i32) {
    %c0_i32 = arith.constant 0 : i32
    %c0_i32_0 = arith.constant 0 : i32
    %c0_i32_1 = arith.constant 0 : i32
    return %c0_i32, %c0_i32_0 : i32, i32
  }
  func.func @transform_2(%arg0: i32) -> (i32, i32) {
    %c0_i32 = arith.constant 0 : i32
    %c0_i32_0 = arith.constant 0 : i32
    %c0_i32_1 = arith.constant 0 : i32
    return %c0_i32, %c0_i32_0 : i32, i32
  }
  func.func @transform_3(%arg0: i32) -> (i32, i32) {
    %c0_i32 = arith.constant 0 : i32
    %c0_i32_0 = arith.constant 0 : i32
    %c0_i32_1 = arith.constant 0 : i32
    return %c0_i32, %c0_i32_0 : i32, i32
  }
  func.func @transform_4(%arg0: i32) -> (i32, i32) {
    %c0_i32 = arith.constant 0 : i32
    %c0_i32_0 = arith.constant 0 : i32
    return %arg0, %c0_i32 : i32, i32
  }
  func.func @transform_5(%arg0: i32) -> (i32, i32) {
    %c0_i32 = arith.constant 0 : i32
    %c0_i32_0 = arith.constant 0 : i32
    %c0_i32_1 = arith.constant 0 : i32
    return %c0_i32, %c0_i32_0 : i32, i32
  }
}

module attributes {stable_mosaic.version = 11 : i64} {
  func.func @_bn_add_relu_kernel(%arg0: i32, %arg1: memref<256x512xf32, #tpu.memory_space<vmem>>, %arg2: memref<1x512xf32, #tpu.memory_space<vmem>>, %arg3: memref<1x512xf32, #tpu.memory_space<vmem>>, %arg4: memref<256x512xbf16, #tpu.memory_space<vmem>>, %arg5: memref<256x512xf32, #tpu.memory_space<vmem>>) attributes {dimension_semantics = [#tpu.dimension_semantics<parallel>], iteration_bounds = array<i64: 2>, scalar_prefetch = 0 : i64, scratch_operands = 0 : i64, tpu.core_type = #tpu.core_type<tc>, window_params = [{transform_indices = @transform_0, window_bounds = array<i64: 256, 512>}, {pipeline_mode = #tpu.pipeline_mode<synchronous>, transform_indices = @transform_1, window_bounds = array<i64: 1, 512>}, {pipeline_mode = #tpu.pipeline_mode<synchronous>, transform_indices = @transform_2, window_bounds = array<i64: 1, 512>}, {transform_indices = @transform_3, window_bounds = array<i64: 256, 512>}, {transform_indices = @transform_4, window_bounds = array<i64: 256, 512>}]} {
    %c0 = arith.constant 0 : index
    %c0_0 = arith.constant 0 : index
    %0 = vector.load %arg1[%c0, %c0_0] : memref<256x512xf32, #tpu.memory_space<vmem>>, vector<256x512xf32>
    %c0_1 = arith.constant 0 : index
    %c0_2 = arith.constant 0 : index
    %1 = vector.load %arg2[%c0_1, %c0_2] : memref<1x512xf32, #tpu.memory_space<vmem>>, vector<1x512xf32>
    %2 = vector.broadcast %1 : vector<1x512xf32> to vector<256x512xf32>
    %3 = arith.mulf %0, %2 : vector<256x512xf32>
    %c0_3 = arith.constant 0 : index
    %c0_4 = arith.constant 0 : index
    %4 = vector.load %arg3[%c0_3, %c0_4] : memref<1x512xf32, #tpu.memory_space<vmem>>, vector<1x512xf32>
    %5 = vector.broadcast %4 : vector<1x512xf32> to vector<256x512xf32>
    %6 = arith.addf %3, %5 : vector<256x512xf32>
    %c0_5 = arith.constant 0 : index
    %c0_6 = arith.constant 0 : index
    %7 = vector.load %arg4[%c0_5, %c0_6] : memref<256x512xbf16, #tpu.memory_space<vmem>>, vector<256x512xbf16>
    %8 = arith.extf %7 : vector<256x512xbf16> to vector<256x512xf32>
    %9 = arith.addf %6, %8 : vector<256x512xf32>
    %cst = arith.constant 0.000000e+00 : f32
    %10 = vector.broadcast %cst : f32 to vector<256x512xf32>
    %11 = arith.maximumf %9, %10 : vector<256x512xf32>
    %c0_7 = arith.constant 0 : index
    %c0_8 = arith.constant 0 : index
    %12 = vector.load %arg5[%c0_7, %c0_8] : memref<256x512xf32, #tpu.memory_space<vmem>>, vector<256x512xf32>
    tpu.vector_store %arg5[%c0_7, %c0_8], %11 {strides = array<i32>} : memref<256x512xf32, #tpu.memory_space<vmem>>, vector<256x512xf32>,
    return
  }
  func.func @transform_0(%arg0: i32) -> (i32, i32) {
    %c0_i32 = arith.constant 0 : i32
    %c0_i32_0 = arith.constant 0 : i32
    return %arg0, %c0_i32 : i32, i32
  }
  func.func @transform_1(%arg0: i32) -> (i32, i32) {
    %c0_i32 = arith.constant 0 : i32
    %c0_i32_0 = arith.constant 0 : i32
    %c0_i32_1 = arith.constant 0 : i32
    return %c0_i32, %c0_i32_0 : i32, i32
  }
  func.func @transform_2(%arg0: i32) -> (i32, i32) {
    %c0_i32 = arith.constant 0 : i32
    %c0_i32_0 = arith.constant 0 : i32
    %c0_i32_1 = arith.constant 0 : i32
    return %c0_i32, %c0_i32_0 : i32, i32
  }
  func.func @transform_3(%arg0: i32) -> (i32, i32) {
    %c0_i32 = arith.constant 0 : i32
    %c0_i32_0 = arith.constant 0 : i32
    return %arg0, %c0_i32 : i32, i32
  }
  func.func @transform_4(%arg0: i32) -> (i32, i32) {
    %c0_i32 = arith.constant 0 : i32
    %c0_i32_0 = arith.constant 0 : i32
    return %arg0, %c0_i32 : i32, i32
  }
}

</mosaic_0001>

<llo_original>
// kernel: _lambda_.4
$region0: #{_lambda_.4}
  #allocation0 [shape = 'u32[]', space=smem, size = 0x4, offset = 0x4, fixed_abs, tag = 'smem constant byte address 0x4 - core index']
  #allocation1 [shape = 'u32[144,128]{1,0:T(1,128)}', space=vmem, size = 0x12000, scoped, tag = 'internal scratch']
  %s0 = inlined_call_operand.vmem [shape: bf16[512,512], index: 0, kind: input, shape index: {}]
  %s1 = inlined_call_operand.vmem [shape: bf16[512,128], index: 1, kind: input, shape index: {}]
  %s2 = inlined_call_operand.vmem [shape: f32[512,128], index: 2, kind: output, shape index: {0}]
  %s3 = inlined_call_operand.vmem [shape: f32[2,128], index: 3, kind: output, shape index: {1}]
  %4 = xla_tuple %s2, %s3
  %s5 = sld [smem:[#allocation0]]
  $region53: #{_lambda_.4} parent=0
    _
  %s7 = ssub.s32 1, %s5
  %s8 = scalar_select 0, %s7, %s5
  loop: start=0, step=1, limit=4
  $region2: #{_lambda_.4} parent=0 // loop_pre_header
    _
  $region3: #{_lambda_.4} parent=0 // loop_header
    %s10 = sphi 0, %s14
    %p11 = scmp.ge.s32.totalorder %s10, 4
    %s20 = sphi 0, %s22
    %s23 = sphi 0, %s20
    %s24 = sphi 0, %s23
    %s40 = sphi 0, %s24
    %s44 = sphi 0, %s44
    %s46 = sphi 0, %s44
    %s47 = sphi 0, %s46
    %s61 = sphi 0, %s47
    %s67 = sphi 0, %s69
    %s70 = sphi 0, %s67
    %s71 = sphi 0, %s70
    %s87 = sphi 0, %s71
    %s91 = sphi 0, %s91
    %s93 = sphi 0, %s91
    %s94 = sphi 0, %s93
    %s108 = sphi 0, %s94
  $region4: #{_lambda_.4} parent=0 // loop_header_branch
    %13 = sbr.rel (%p11) target = $region8
  $region5: #{_lambda_.4} parent=0 // loop_body
    %s15 = ssub.s32 %s10, 1
    %s16 = ssub.s32 %s10, 2
    %s17 = sadd.s32 %s10, 1
    %s18 = ssub.s32 %s10, %s17
    %p19 = scmp.eq.s32.totalorder %s18, 0
    %s21 = sadd.s32 %s20, 1
    %s22 = scalar_select %p19, %s20, %s21
    %p25 = pneg %p19
    %p26 = scmp.eq.s32.totalorder %s10, 1
    %p27 = por %p25, %p26
    %p28 = scmp.ne.s32.totalorder %s20, %s23
    %p29 = scmp.eq.s32.totalorder %s10, 0
    %p30 = por %p28, %p29
    %p31 = scmp.ne.s32.totalorder %s20, %s23
    %p32 = scmp.eq.s32.totalorder %s15, 1
    %p33 = por %p31, %p32
    %p34 = scmp.ne.s32.totalorder %s23, %s24
    %p35 = scmp.eq.s32.totalorder %s15, 0
    %p36 = por %p34, %p35
    %p37 = scmp.ne.s32.totalorder %s23, %s24
    %p38 = scmp.eq.s32.totalorder %s16, 1
    %p39 = por %p37, %p38
    %p41 = scmp.ne.s32.totalorder %s24, %s40
    %p42 = scmp.eq.s32.totalorder %s16, 0
    %p43 = por %p41, %p42
    %s45 = sadd.s32 %s44, 1
    %p48 = scmp.eq.s32.totalorder %s10, 1
    %p49 = scmp.ne.s32.totalorder %s44, %s46
    %p50 = scmp.eq.s32.totalorder %s10, 0
    %p51 = por %p49, %p50
    %p52 = scmp.ne.s32.totalorder %s44, %s46
    %p53 = scmp.eq.s32.totalorder %s15, 1
    %p54 = por %p52, %p53
    %p55 = scmp.ne.s32.totalorder %s46, %s47
    %p56 = scmp.eq.s32.totalorder %s15, 0
    %p57 = por %p55, %p56
    %p58 = scmp.ne.s32.totalorder %s46, %s47
    %p59 = scmp.eq.s32.totalorder %s16, 1
    %p60 = por %p58, %p59
    %p62 = scmp.ne.s32.totalorder %s47, %s61
    %p63 = scmp.eq.s32.totalorder %s16, 0
    %p64 = por %p62, %p63
    %s65 = ssub.s32 %s10, %s17
    %p66 = scmp.eq.s32.totalorder %s65, 0
    %s68 = sadd.s32 %s67, 1
    %s69 = scalar_select %p66, %s67, %s68
    %p72 = pneg %p66
    %p73 = scmp.eq.s32.totalorder %s10, 1
    %p74 = por %p72, %p73
    %p75 = scmp.ne.s32.totalorder %s67, %s70
    %p76 = scmp.eq.s32.totalorder %s10, 0
    %p77 = por %p75, %p76
    %p78 = scmp.ne.s32.totalorder %s67, %s70
    %p79 = scmp.eq.s32.totalorder %s15, 1
    %p80 = por %p78, %p79
    %p81 = scmp.ne.s32.totalorder %s70, %s71
    %p82 = scmp.eq.s32.totalorder %s15, 0
    %p83 = por %p81, %p82
    %p84 = scmp.ne.s32.totalorder %s70, %s71
    %p85 = scmp.eq.s32.totalorder %s16, 1
    %p86 = por %p84, %p85
    %p88 = scmp.ne.s32.totalorder %s71, %s87
    %p89 = scmp.eq.s32.totalorder %s16, 0
    %p90 = por %p88, %p89
    %s92 = sadd.s32 %s91, 1
    %p95 = scmp.eq.s32.totalorder %s10, 1
    %p96 = scmp.ne.s32.totalorder %s91, %s93
    %p97 = scmp.eq.s32.totalorder %s10, 0
    %p98 = por %p96, %p97
    %p99 = scmp.ne.s32.totalorder %s91, %s93
    %p100 = scmp.eq.s32.totalorder %s15, 1
    %p101 = por %p99, %p100
    %p102 = scmp.ne.s32.totalorder %s93, %s94
    %p103 = scmp.eq.s32.totalorder %s15, 0
    %p104 = por %p102, %p103
    %p105 = scmp.ne.s32.totalorder %s93, %s94
    %p106 = scmp.eq.s32.totalorder %s16, 1
    %p107 = por %p105, %p106
    %p109 = scmp.ne.s32.totalorder %s94, %s108
    %p110 = scmp.eq.s32.totalorder %s16, 0
    %p111 = por %p109, %p110
    %p112 = scmp.le.s32.totalorder 1, %s10
    %p113 = scmp.lt.s32.totalorder %s10, 3
    %p114 = pnand %p112, %p113
    %p115 = pneg %p114
    // Predicated region
    $region9: #{_lambda_.4} parent=5 // pred_check
      _
    $region10: #{_lambda_.4} parent=5 // pred_check_branch
      %117 = sbr.rel (%p114) target = $region12
    $region11: #{_lambda_.4} parent=5 // pred_region
      %s118 = ssub.s32 %s10, 1
      // Predicated region
      $region13: #{_lambda_.4} parent=11 // pred_check
        %p119 = pneg %p57
      $region14: #{_lambda_.4} parent=11 // pred_check_branch
        %121 = sbr.rel (%p119) target = $region16
      $region15: #{_lambda_.4} parent=11 // pred_region
        _
      $region16: #{_lambda_.4} parent=11 // pred_fallthru
        _
    $region12: #{_lambda_.4} parent=5 // pred_fallthru
      _
    %p122 = scmp.lt.s32.totalorder %s10, 2
    // Predicated region
    $region17: #{_lambda_.4} parent=5 // pred_check
      %p123 = pneg %p122
    $region18: #{_lambda_.4} parent=5 // pred_check_branch
      %125 = sbr.rel (%p123) target = $region20
    $region19: #{_lambda_.4} parent=5 // pred_region
      // Predicated region
      $region21: #{_lambda_.4} parent=19 // pred_check
        %p126 = pneg %p30
      $region22: #{_lambda_.4} parent=19 // pred_check_branch
        %128 = sbr.rel (%p126) target = $region24
      $region23: #{_lambda_.4} parent=19 // pred_region
        %s129 = smul.u32 32, %s10
        %p130 = scmp.lt.s32.totalorder %s129, 63
        %s131 = scalar_select %p130, %s129, 63
        %s132 = smul.addr %s131, 4
        %s133 = smul.addr %s132, 4
        %s134 = scalar_lea.vmem %s0, %s133
        %s135 = smul.u32 32, %s10
      $region24: #{_lambda_.4} parent=19 // pred_fallthru
        _
    $region20: #{_lambda_.4} parent=5 // pred_fallthru
      _
    %p136 = scmp.le.s32.totalorder 1, %s10
    %p137 = scmp.lt.s32.totalorder %s10, 3
    %p138 = pnand %p136, %p137
    %p139 = pneg %p138
    // Predicated region
    $region25: #{_lambda_.4} parent=5 // pred_check
      _
    $region26: #{_lambda_.4} parent=5 // pred_check_branch
      %141 = sbr.rel (%p138) target = $region28
    $region27: #{_lambda_.4} parent=5 // pred_region
      %s142 = ssub.s32 %s10, 1
      %s143 = smul.u32 32, %s15
      %p144 = scmp.lt.s32.totalorder %s143, 63
      %s145 = scalar_select %p144, %s143, 63
      %s146 = smul.addr %s145, 4
      %s147 = smul.addr %s146, 4
      %s148 = scalar_lea.vmem %s0, %s147
      %p149 = pneg %p36
      %p150 = pneg %p33
      %p151 = pneg %p57
      %p152 = pneg %p54
      %p153 = pneg %p83
      %p154 = pneg %p80
      %s155 = smul.u32 32, %s15
      %p156 = scmp.lt.s32.totalorder %s155, 63
      %s157 = scalar_select %p156, %s155, 63
      %s158 = smul.addr %s157, 8
      %s159 = scalar_lea.vmem %s2, %s158
      %p160 = pneg %p104
      %p161 = pneg %p101
      %s162 = smul.u32 32, %s15
      %p163 = scmp.lt.s32.totalorder %s162, 63
      %s164 = scalar_select %p163, %s162, 63
      %s165 = smul.addr %s164, 4
      %s166 = smul.addr %s165, 4
      %s167 = scalar_lea.vmem %s0, %s166
      %s168 = smul.u32 32, %s15
      %s169 = smul.u32 32, %s15
      %p170 = scmp.lt.s32.totalorder %s169, 63
      %s171 = scalar_select %p170, %s169, 63
      %s172 = smul.addr %s171, 8
      %s173 = scalar_lea.vmem %s2, %s172
      %s174 = smul.u32 32, %s15
      %v176 = vld [vmem:[%s167] sm:$0xff]
      %v177 = vld [vmem:[%s167 + $0x8] sm:$0xff]
      %v178 = vld [vmem:[%s167 + $0x10] sm:$0xff]
      %v179 = vld [vmem:[%s167 + $0x18] sm:$0xff]
      %v180 = vld [vmem:[%s167 + $0x20] sm:$0xff]
      %v181 = vld [vmem:[%s167 + $0x28] sm:$0xff]
      %v182 = vld [vmem:[%s167 + $0x30] sm:$0xff]
      %v183 = vld [vmem:[%s167 + $0x38] sm:$0xff]
      %v184 = vld [vmem:[%s167 + $0x40] sm:$0xff]
      %v185 = vld [vmem:[%s167 + $0x48] sm:$0xff]
      %v186 = vld [vmem:[%s167 + $0x50] sm:$0xff]
      %v187 = vld [vmem:[%s167 + $0x58] sm:$0xff]
      %v188 = vld [vmem:[%s167 + $0x60] sm:$0xff]
      %v189 = vld [vmem:[%s167 + $0x68] sm:$0xff]
      %v190 = vld [vmem:[%s167 + $0x70] sm:$0xff]
      %v191 = vld [vmem:[%s167 + $0x78] sm:$0xff]
      %v192 = vld [vmem:[%s167 + $0x80] sm:$0xff]
      %v193 = vld [vmem:[%s167 + $0x88] sm:$0xff]
      %v194 = vld [vmem:[%s167 + $0x90] sm:$0xff]
      %v195 = vld [vmem:[%s167 + $0x98] sm:$0xff]
      %v196 = vld [vmem:[%s167 + $0xa0] sm:$0xff]
      %v197 = vld [vmem:[%s167 + $0xa8] sm:$0xff]
      %v198 = vld [vmem:[%s167 + $0xb0] sm:$0xff]
      %v199 = vld [vmem:[%s167 + $0xb8] sm:$0xff]
      %v200 = vld [vmem:[%s167 + $0xc0] sm:$0xff]
      %v201 = vld [vmem:[%s167 + $0xc8] sm:$0xff]
      %v202 = vld [vmem:[%s167 + $0xd0] sm:$0xff]
      %v203 = vld [vmem:[%s167 + $0xd8] sm:$0xff]
      %v204 = vld [vmem:[%s167 + $0xe0] sm:$0xff]
      %v205 = vld [vmem:[%s167 + $0xe8] sm:$0xff]
      %v206 = vld [vmem:[%s167 + $0xf0] sm:$0xff]
      %v207 = vld [vmem:[%s167 + $0xf8] sm:$0xff]
      %v208 = vld [vmem:[%s167 + $0x100] sm:$0xff]
      %v209 = vld [vmem:[%s167 + $0x108] sm:$0xff]
      %v210 = vld [vmem:[%s167 + $0x110] sm:$0xff]
      %v211 = vld [vmem:[%s167 + $0x118] sm:$0xff]
      %v212 = vld [vmem:[%s167 + $0x120] sm:$0xff]
      %v213 = vld [vmem:[%s167 + $0x128] sm:$0xff]
      %v214 = vld [vmem:[%s167 + $0x130] sm:$0xff]
      %v215 = vld [vmem:[%s167 + $0x138] sm:$0xff]
      %v216 = vld [vmem:[%s167 + $0x140] sm:$0xff]
      %v217 = vld [vmem:[%s167 + $0x148] sm:$0xff]
      %v218 = vld [vmem:[%s167 + $0x150] sm:$0xff]
      %v219 = vld [vmem:[%s167 + $0x158] sm:$0xff]
      %v220 = vld [vmem:[%s167 + $0x160] sm:$0xff]
      %v221 = vld [vmem:[%s167 + $0x168] sm:$0xff]
      %v222 = vld [vmem:[%s167 + $0x170] sm:$0xff]
      %v223 = vld [vmem:[%s167 + $0x178] sm:$0xff]
      %v224 = vld [vmem:[%s167 + $0x180] sm:$0xff]
      %v225 = vld [vmem:[%s167 + $0x188] sm:$0xff]
      %v226 = vld [vmem:[%s167 + $0x190] sm:$0xff]
      %v227 = vld [vmem:[%s167 + $0x198] sm:$0xff]
      %v228 = vld [vmem:[%s167 + $0x1a0] sm:$0xff]
      %v229 = vld [vmem:[%s167 + $0x1a8] sm:$0xff]
      %v230 = vld [vmem:[%s167 + $0x1b0] sm:$0xff]
      %v231 = vld [vmem:[%s167 + $0x1b8] sm:$0xff]
      %v232 = vld [vmem:[%s167 + $0x1c0] sm:$0xff]
      %v233 = vld [vmem:[%s167 + $0x1c8] sm:$0xff]
      %v234 = vld [vmem:[%s167 + $0x1d0] sm:$0xff]
      %v235 = vld [vmem:[%s167 + $0x1d8] sm:$0xff]
      %v236 = vld [vmem:[%s167 + $0x1e0] sm:$0xff]
      %v237 = vld [vmem:[%s167 + $0x1e8] sm:$0xff]
      %v238 = vld [vmem:[%s167 + $0x1f0] sm:$0xff]
      %v239 = vld [vmem:[%s167 + $0x1f8] sm:$0xff]
      %v240 = vld [vmem:[%s1] sm:$0xf]
      %v241 = vld [vmem:[%s1 + $0x4] sm:$0xf]
      %v242 = vld [vmem:[%s1 + $0x8] sm:$0xf]
      %v243 = vld [vmem:[%s1 + $0xc] sm:$0xf]
      %v244 = vld [vmem:[%s1 + $0x10] sm:$0xf]
      %v245 = vld [vmem:[%s1 + $0x14] sm:$0xf]
      %v246 = vld [vmem:[%s1 + $0x18] sm:$0xf]
      %v247 = vld [vmem:[%s1 + $0x1c] sm:$0xf]
      %v248 = vld [vmem:[%s1 + $0x20] sm:$0xf]
      %v249 = vld [vmem:[%s1 + $0x24] sm:$0xf]
      %v250 = vld [vmem:[%s1 + $0x28] sm:$0xf]
      %v251 = vld [vmem:[%s1 + $0x2c] sm:$0xf]
      %v252 = vld [vmem:[%s1 + $0x30] sm:$0xf]
      %v253 = vld [vmem:[%s1 + $0x34] sm:$0xf]
      %v254 = vld [vmem:[%s1 + $0x38] sm:$0xf]
      %v255 = vld [vmem:[%s1 + $0x3c] sm:$0xf]
      %v256 = vld [vmem:[%s1 + $0x40] sm:$0xf]
      %v257 = vld [vmem:[%s1 + $0x44] sm:$0xf]
      %v258 = vld [vmem:[%s1 + $0x48] sm:$0xf]
      %v259 = vld [vmem:[%s1 + $0x4c] sm:$0xf]
      %v260 = vld [vmem:[%s1 + $0x50] sm:$0xf]
      %v261 = vld [vmem:[%s1 + $0x54] sm:$0xf]
      %v262 = vld [vmem:[%s1 + $0x58] sm:$0xf]
      %v263 = vld [vmem:[%s1 + $0x5c] sm:$0xf]
      %v264 = vld [vmem:[%s1 + $0x60] sm:$0xf]
      %v265 = vld [vmem:[%s1 + $0x64] sm:$0xf]
      %v266 = vld [vmem:[%s1 + $0x68] sm:$0xf]
      %v267 = vld [vmem:[%s1 + $0x6c] sm:$0xf]
      %v268 = vld [vmem:[%s1 + $0x70] sm:$0xf]
      %v269 = vld [vmem:[%s1 + $0x74] sm:$0xf]
      %v270 = vld [vmem:[%s1 + $0x78] sm:$0xf]
      %v271 = vld [vmem:[%s1 + $0x7c] sm:$0xf]
      %v272 = vld [vmem:[%s1 + $0x80] sm:$0xf]
      %v273 = vld [vmem:[%s1 + $0x84] sm:$0xf]
      %v274 = vld [vmem:[%s1 + $0x88] sm:$0xf]
      %v275 = vld [vmem:[%s1 + $0x8c] sm:$0xf]
      %v276 = vld [vmem:[%s1 + $0x90] sm:$0xf]
      %v277 = vld [vmem:[%s1 + $0x94] sm:$0xf]
      %v278 = vld [vmem:[%s1 + $0x98] sm:$0xf]
      %v279 = vld [vmem:[%s1 + $0x9c] sm:$0xf]
      %v280 = vld [vmem:[%s1 + $0xa0] sm:$0xf]
      %v281 = vld [vmem:[%s1 + $0xa4] sm:$0xf]
      %v282 = vld [vmem:[%s1 + $0xa8] sm:$0xf]
      %v283 = vld [vmem:[%s1 + $0xac] sm:$0xf]
      %v284 = vld [vmem:[%s1 + $0xb0] sm:$0xf]
      %v285 = vld [vmem:[%s1 + $0xb4] sm:$0xf]
      %v286 = vld [vmem:[%s1 + $0xb8] sm:$0xf]
      %v287 = vld [vmem:[%s1 + $0xbc] sm:$0xf]
      %v288 = vld [vmem:[%s1 + $0xc0] sm:$0xf]
      %v289 = vld [vmem:[%s1 + $0xc4] sm:$0xf]
      %v290 = vld [vmem:[%s1 + $0xc8] sm:$0xf]
      %v291 = vld [vmem:[%s1 + $0xcc] sm:$0xf]
      %v292 = vld [vmem:[%s1 + $0xd0] sm:$0xf]
      %v293 = vld [vmem:[%s1 + $0xd4] sm:$0xf]
      %v294 = vld [vmem:[%s1 + $0xd8] sm:$0xf]
      %v295 = vld [vmem:[%s1 + $0xdc] sm:$0xf]
      %v296 = vld [vmem:[%s1 + $0xe0] sm:$0xf]
      %v297 = vld [vmem:[%s1 + $0xe4] sm:$0xf]
      %v298 = vld [vmem:[%s1 + $0xe8] sm:$0xf]
      %v299 = vld [vmem:[%s1 + $0xec] sm:$0xf]
      %v300 = vld [vmem:[%s1 + $0xf0] sm:$0xf]
      %v301 = vld [vmem:[%s1 + $0xf4] sm:$0xf]
      %v302 = vld [vmem:[%s1 + $0xf8] sm:$0xf]
      %v303 = vld [vmem:[%s1 + $0xfc] sm:$0xf]
      %v368 = vunpack.c.l.b16 %v176
      %v369 = vunpack.c.h.b16 %v176
      %v370 = vunpack.c.l.b16 %v177
      %v371 = vunpack.c.h.b16 %v177
      %v372 = vunpack.c.l.b16 %v178
      %v373 = vunpack.c.h.b16 %v178
      %v374 = vunpack.c.l.b16 %v179
      %v375 = vunpack.c.h.b16 %v179
      %v376 = vunpack.c.l.b16 %v180
      %v377 = vunpack.c.h.b16 %v180
      %v378 = vunpack.c.l.b16 %v181
      %v379 = vunpack.c.h.b16 %v181
      %v380 = vunpack.c.l.b16 %v182
      %v381 = vunpack.c.h.b16 %v182
      %v382 = vunpack.c.l.b16 %v183
      %v383 = vunpack.c.h.b16 %v183
      %v384 = vunpack.c.l.b16 %v184
      %v385 = vunpack.c.h.b16 %v184
      %v386 = vunpack.c.l.b16 %v185
      %v387 = vunpack.c.h.b16 %v185
      %v388 = vunpack.c.l.b16 %v186
      %v389 = vunpack.c.h.b16 %v186
      %v390 = vunpack.c.l.b16 %v187
      %v391 = vunpack.c.h.b16 %v187
      %v392 = vunpack.c.l.b16 %v188
      %v393 = vunpack.c.h.b16 %v188
      %v394 = vunpack.c.l.b16 %v189
      %v395 = vunpack.c.h.b16 %v189
      %v396 = vunpack.c.l.b16 %v190
      %v397 = vunpack.c.h.b16 %v190
      %v398 = vunpack.c.l.b16 %v191
      %v399 = vunpack.c.h.b16 %v191
      %v400 = vunpack.c.l.b16 %v192
      %v401 = vunpack.c.h.b16 %v192
      %v402 = vunpack.c.l.b16 %v193
      %v403 = vunpack.c.h.b16 %v193
      %v404 = vunpack.c.l.b16 %v194
      %v405 = vunpack.c.h.b16 %v194
      %v406 = vunpack.c.l.b16 %v195
      %v407 = vunpack.c.h.b16 %v195
      %v408 = vunpack.c.l.b16 %v196
      %v409 = vunpack.c.h.b16 %v196
      %v410 = vunpack.c.l.b16 %v197
      %v411 = vunpack.c.h.b16 %v197
      %v412 = vunpack.c.l.b16 %v198
      %v413 = vunpack.c.h.b16 %v198
      %v414 = vunpack.c.l.b16 %v199
      %v415 = vunpack.c.h.b16 %v199
      %v416 = vunpack.c.l.b16 %v200
      %v417 = vunpack.c.h.b16 %v200
      %v418 = vunpack.c.l.b16 %v201
      %v419 = vunpack.c.h.b16 %v201
      %v420 = vunpack.c.l.b16 %v202
      %v421 = vunpack.c.h.b16 %v202
      %v422 = vunpack.c.l.b16 %v203
      %v423 = vunpack.c.h.b16 %v203
      %v424 = vunpack.c.l.b16 %v204
      %v425 = vunpack.c.h.b16 %v204
      %v426 = vunpack.c.l.b16 %v205
      %v427 = vunpack.c.h.b16 %v205
      %v428 = vunpack.c.l.b16 %v206
      %v429 = vunpack.c.h.b16 %v206
      %v430 = vunpack.c.l.b16 %v207
      %v431 = vunpack.c.h.b16 %v207
      %v432 = vunpack.c.l.b16 %v208
      %v433 = vunpack.c.h.b16 %v208
      %v434 = vunpack.c.l.b16 %v209
      %v435 = vunpack.c.h.b16 %v209
      %v436 = vunpack.c.l.b16 %v210
      %v437 = vunpack.c.h.b16 %v210
      %v438 = vunpack.c.l.b16 %v211
      %v439 = vunpack.c.h.b16 %v211
      %v440 = vunpack.c.l.b16 %v212
      %v441 = vunpack.c.h.b16 %v212
      %v442 = vunpack.c.l.b16 %v213
      %v443 = vunpack.c.h.b16 %v213
      %v444 = vunpack.c.l.b16 %v214
      %v445 = vunpack.c.h.b16 %v214
      %v446 = vunpack.c.l.b16 %v215
      %v447 = vunpack.c.h.b16 %v215
      %v448 = vunpack.c.l.b16 %v216
      %v449 = vunpack.c.h.b16 %v216
      %v450 = vunpack.c.l.b16 %v217
      %v451 = vunpack.c.h.b16 %v217
      %v452 = vunpack.c.l.b16 %v218
      %v453 = vunpack.c.h.b16 %v218
      %v454 = vunpack.c.l.b16 %v219
      %v455 = vunpack.c.h.b16 %v219
      %v456 = vunpack.c.l.b16 %v220
      %v457 = vunpack.c.h.b16 %v220
      %v458 = vunpack.c.l.b16 %v221
      %v459 = vunpack.c.h.b16 %v221
      %v460 = vunpack.c.l.b16 %v222
      %v461 = vunpack.c.h.b16 %v222
      %v462 = vunpack.c.l.b16 %v223
      %v463 = vunpack.c.h.b16 %v223
      %v464 = vunpack.c.l.b16 %v224
      %v465 = vunpack.c.h.b16 %v224
      %v466 = vunpack.c.l.b16 %v225
      %v467 = vunpack.c.h.b16 %v225
      %v468 = vunpack.c.l.b16 %v226
      %v469 = vunpack.c.h.b16 %v226
      %v470 = vunpack.c.l.b16 %v227
      %v471 = vunpack.c.h.b16 %v227
      %v472 = vunpack.c.l.b16 %v228
      %v473 = vunpack.c.h.b16 %v228
      %v474 = vunpack.c.l.b16 %v229
      %v475 = vunpack.c.h.b16 %v229
      %v476 = vunpack.c.l.b16 %v230
      %v477 = vunpack.c.h.b16 %v230
      %v478 = vunpack.c.l.b16 %v231
      %v479 = vunpack.c.h.b16 %v231
      %v480 = vunpack.c.l.b16 %v232
      %v481 = vunpack.c.h.b16 %v232
      %v482 = vunpack.c.l.b16 %v233
      %v483 = vunpack.c.h.b16 %v233
      %v484 = vunpack.c.l.b16 %v234
      %v485 = vunpack.c.h.b16 %v234
      %v486 = vunpack.c.l.b16 %v235
      %v487 = vunpack.c.h.b16 %v235
      %v488 = vunpack.c.l.b16 %v236
      %v489 = vunpack.c.h.b16 %v236
      %v490 = vunpack.c.l.b16 %v237
      %v491 = vunpack.c.h.b16 %v237
      %v492 = vunpack.c.l.b16 %v238
      %v493 = vunpack.c.h.b16 %v238
      %v494 = vunpack.c.l.b16 %v239
      %v495 = vunpack.c.h.b16 %v239
      %v496 = vpack.c.b16 %v372, %v368
      %v497 = vpack.c.b16 %v373, %v369
      %v498 = vpack.c.b16 %v374, %v370
      %v499 = vpack.c.b16 %v375, %v371
      %v500 = vpack.c.b16 %v380, %v376
      %v501 = vpack.c.b16 %v381, %v377
      %v502 = vpack.c.b16 %v382, %v378
      %v503 = vpack.c.b16 %v383, %v379
      %v504 = vpack.c.b16 %v388, %v384
      %v505 = vpack.c.b16 %v389, %v385
      %v506 = vpack.c.b16 %v390, %v386
      %v507 = vpack.c.b16 %v391, %v387
      %v508 = vpack.c.b16 %v396, %v392
      %v509 = vpack.c.b16 %v397, %v393
      %v510 = vpack.c.b16 %v398, %v394
      %v511 = vpack.c.b16 %v399, %v395
      %v512 = vpack.c.b16 %v404, %v400
      %v513 = vpack.c.b16 %v405, %v401
      %v514 = vpack.c.b16 %v406, %v402
      %v515 = vpack.c.b16 %v407, %v403
      %v516 = vpack.c.b16 %v412, %v408
      %v517 = vpack.c.b16 %v413, %v409
      %v518 = vpack.c.b16 %v414, %v410
      %v519 = vpack.c.b16 %v415, %v411
      %v520 = vpack.c.b16 %v420, %v416
      %v521 = vpack.c.b16 %v421, %v417
      %v522 = vpack.c.b16 %v422, %v418
      %v523 = vpack.c.b16 %v423, %v419
      %v524 = vpack.c.b16 %v428, %v424
      %v525 = vpack.c.b16 %v429, %v425
      %v526 = vpack.c.b16 %v430, %v426
      %v527 = vpack.c.b16 %v431, %v427
      %v528 = vpack.c.b16 %v436, %v432
      %v529 = vpack.c.b16 %v437, %v433
      %v530 = vpack.c.b16 %v438, %v434
      %v531 = vpack.c.b16 %v439, %v435
      %v532 = vpack.c.b16 %v444, %v440
      %v533 = vpack.c.b16 %v445, %v441
      %v534 = vpack.c.b16 %v446, %v442
      %v535 = vpack.c.b16 %v447, %v443
      %v536 = vpack.c.b16 %v452, %v448
      %v537 = vpack.c.b16 %v453, %v449
      %v538 = vpack.c.b16 %v454, %v450
      %v539 = vpack.c.b16 %v455, %v451
      %v540 = vpack.c.b16 %v460, %v456
      %v541 = vpack.c.b16 %v461, %v457
      %v542 = vpack.c.b16 %v462, %v458
      %v543 = vpack.c.b16 %v463, %v459
      %v544 = vpack.c.b16 %v468, %v464
      %v545 = vpack.c.b16 %v469, %v465
      %v546 = vpack.c.b16 %v470, %v466
      %v547 = vpack.c.b16 %v471, %v467
      %v548 = vpack.c.b16 %v476, %v472
      %v549 = vpack.c.b16 %v477, %v473
      %v550 = vpack.c.b16 %v478, %v474
      %v551 = vpack.c.b16 %v479, %v475
      %v552 = vpack.c.b16 %v484, %v480
      %v553 = vpack.c.b16 %v485, %v481
      %v554 = vpack.c.b16 %v486, %v482
      %v555 = vpack.c.b16 %v487, %v483
      %v556 = vpack.c.b16 %v492, %v488
      %v557 = vpack.c.b16 %v493, %v489
      %v558 = vpack.c.b16 %v494, %v490
      %v559 = vpack.c.b16 %v495, %v491
      %v688 = vunpack.c.l.b16 %v240
      %v689 = vunpack.c.l.b16 %v241
      %v690 = vunpack.c.l.b16 %v242
      %v691 = vunpack.c.l.b16 %v243
      %v692 = vunpack.c.l.b16 %v244
      %v693 = vunpack.c.l.b16 %v245
      %v694 = vunpack.c.l.b16 %v246
      %v695 = vunpack.c.l.b16 %v247
      %v696 = vunpack.c.l.b16 %v248
      %v697 = vunpack.c.l.b16 %v249
      %v698 = vunpack.c.l.b16 %v250
      %v699 = vunpack.c.l.b16 %v251
      %v700 = vunpack.c.l.b16 %v252
      %v701 = vunpack.c.l.b16 %v253
      %v702 = vunpack.c.l.b16 %v254
      %v703 = vunpack.c.l.b16 %v255
      %v704 = vunpack.c.l.b16 %v256
      %v705 = vunpack.c.l.b16 %v257
      %v706 = vunpack.c.l.b16 %v258
      %v707 = vunpack.c.l.b16 %v259
      %v708 = vunpack.c.l.b16 %v260
      %v709 = vunpack.c.l.b16 %v261
      %v710 = vunpack.c.l.b16 %v262
      %v711 = vunpack.c.l.b16 %v263
      %v712 = vunpack.c.l.b16 %v264
      %v713 = vunpack.c.l.b16 %v265
      %v714 = vunpack.c.l.b16 %v266
      %v715 = vunpack.c.l.b16 %v267
      %v716 = vunpack.c.l.b16 %v268
      %v717 = vunpack.c.l.b16 %v269
      %v718 = vunpack.c.l.b16 %v270
      %v719 = vunpack.c.l.b16 %v271
      %v720 = vunpack.c.l.b16 %v272
      %v721 = vunpack.c.l.b16 %v273
      %v722 = vunpack.c.l.b16 %v274
      %v723 = vunpack.c.l.b16 %v275
      %v724 = vunpack.c.l.b16 %v276
      %v725 = vunpack.c.l.b16 %v277
      %v726 = vunpack.c.l.b16 %v278
      %v727 = vunpack.c.l.b16 %v279
      %v728 = vunpack.c.l.b16 %v280
      %v729 = vunpack.c.l.b16 %v281
      %v730 = vunpack.c.l.b16 %v282
      %v731 = vunpack.c.l.b16 %v283
      %v732 = vunpack.c.l.b16 %v284
      %v733 = vunpack.c.l.b16 %v285
      %v734 = vunpack.c.l.b16 %v286
      %v735 = vunpack.c.l.b16 %v287
      %v736 = vunpack.c.l.b16 %v288
      %v737 = vunpack.c.l.b16 %v289
      %v738 = vunpack.c.l.b16 %v290
      %v739 = vunpack.c.l.b16 %v291
      %v740 = vunpack.c.l.b16 %v292
      %v741 = vunpack.c.l.b16 %v293
      %v742 = vunpack.c.l.b16 %v294
      %v743 = vunpack.c.l.b16 %v295
      %v744 = vunpack.c.l.b16 %v296
      %v745 = vunpack.c.l.b16 %v297
      %v746 = vunpack.c.l.b16 %v298
      %v747 = vunpack.c.l.b16 %v299
      %v748 = vunpack.c.l.b16 %v300
      %v749 = vunpack.c.l.b16 %v301
      %v750 = vunpack.c.l.b16 %v302
      %v751 = vunpack.c.l.b16 %v303
      %v752 = vpack.c.b16 %v689, %v688
      %v753 = vpack.c.b16 %v691, %v690
      %v754 = vpack.c.b16 %v693, %v692
      %v755 = vpack.c.b16 %v695, %v694
      %v756 = vpack.c.b16 %v697, %v696
      %v757 = vpack.c.b16 %v699, %v698
      %v758 = vpack.c.b16 %v701, %v700
      %v759 = vpack.c.b16 %v703, %v702
      %v760 = vpack.c.b16 %v705, %v704
      %v761 = vpack.c.b16 %v707, %v706
      %v762 = vpack.c.b16 %v709, %v708
      %v763 = vpack.c.b16 %v711, %v710
      %v764 = vpack.c.b16 %v713, %v712
      %v765 = vpack.c.b16 %v715, %v714
      %v766 = vpack.c.b16 %v717, %v716
      %v767 = vpack.c.b16 %v719, %v718
      %v768 = vpack.c.b16 %v721, %v720
      %v769 = vpack.c.b16 %v723, %v722
      %v770 = vpack.c.b16 %v725, %v724
      %v771 = vpack.c.b16 %v727, %v726
      %v772 = vpack.c.b16 %v729, %v728
      %v773 = vpack.c.b16 %v731, %v730
      %v774 = vpack.c.b16 %v733, %v732
      %v775 = vpack.c.b16 %v735, %v734
      %v776 = vpack.c.b16 %v737, %v736
      %v777 = vpack.c.b16 %v739, %v738
      %v778 = vpack.c.b16 %v741, %v740
      %v779 = vpack.c.b16 %v743, %v742
      %v780 = vpack.c.b16 %v745, %v744
      %v781 = vpack.c.b16 %v747, %v746
      %v782 = vpack.c.b16 %v749, %v748
      %v783 = vpack.c.b16 %v751, %v750
      %816 = vmatprep.subr.bf16.mxu0 0
      %817 = vmatpush1.bf16.msra.mxu0 %v759
      %818 = vmatprep.subr.bf16.mxu0 0
      %819 = vmatpush1.bf16.msra.mxu0 %v758
      %820 = vmatprep.subr.bf16.mxu0 0
      %821 = vmatpush1.bf16.msra.mxu0 %v757
      %822 = vmatprep.subr.bf16.mxu0 0
      %823 = vmatpush1.bf16.msra.mxu0 %v756
      %824 = vmatprep.subr.bf16.mxu0 0
      %825 = vmatpush1.bf16.msra.mxu0 %v755
      %826 = vmatprep.subr.bf16.mxu0 0
      %827 = vmatpush1.bf16.msra.mxu0 %v754
      %828 = vmatprep.subr.bf16.mxu0 0
      %829 = vmatpush1.bf16.msra.mxu0 %v753
      %830 = vmatprep.subr.bf16.mxu0 0
      %831 = vmatpush1.bf16.msra.mxu0 %v752
      %832 = vmatprep.subr.bf16.mxu0 0
      %833 = vmatpush2.bf16.msra.mxu0 %v767
      %834 = vmatprep.subr.bf16.mxu0 0
      %835 = vmatpush2.bf16.msra.mxu0 %v766
      %836 = vmatprep.subr.bf16.mxu0 0
      %837 = vmatpush2.bf16.msra.mxu0 %v765
      %838 = vmatprep.subr.bf16.mxu0 0
      %839 = vmatpush2.bf16.msra.mxu0 %v764
      %840 = vmatprep.subr.bf16.mxu0 0
      %841 = vmatpush2.bf16.msra.mxu0 %v763
      %842 = vmatprep.subr.bf16.mxu0 0
      %843 = vmatpush2.bf16.msra.mxu0 %v762
      %844 = vmatprep.subr.bf16.mxu0 0
      %845 = vmatpush2.bf16.msra.mxu0 %v761
      %846 = vmatprep.subr.bf16.mxu0 0
      %847 = vmatpush2.bf16.msra.mxu0 %v760
      %848 = vmatprep.mubr.bf16.mxu0 %v497
      %849 = vmatmul.mubr.bf16.gmra.mxu0 %v496
      %v850 = vpop.f32.mrf.mxu0
      %v851 = vadd.f32 0.0, %v850
      %v852 = vpop.f32.mrf.mxu0
      %v853 = vpop.f32.mrf.mxu0
      %v854 = vadd.f32 0.0, %v853
      %v855 = vpop.f32.mrf.mxu0
      %856 = vmatprep.mubr.bf16.mxu0 %v501
      %857 = vmatmul.mubr.bf16.gmra.mxu0 %v500
      %v858 = vpop.f32.mrf.mxu0
      %v859 = vadd.f32 0.0, %v858
      %v860 = vpop.f32.mrf.mxu0
      %v861 = vpop.f32.mrf.mxu0
      %v862 = vadd.f32 0.0, %v861
      %v863 = vpop.f32.mrf.mxu0
      %864 = vmatprep.mubr.bf16.mxu0 %v505
      %865 = vmatmul.mubr.bf16.gmra.mxu0 %v504
      %v866 = vpop.f32.mrf.mxu0
      %v867 = vadd.f32 0.0, %v866
      %v868 = vpop.f32.mrf.mxu0
      %v869 = vpop.f32.mrf.mxu0
      %v870 = vadd.f32 0.0, %v869
      %v871 = vpop.f32.mrf.mxu0
      %872 = vmatprep.mubr.bf16.mxu0 %v509
      %873 = vmatmul.mubr.bf16.gmra.mxu0 %v508
      %v874 = vpop.f32.mrf.mxu0
      %v875 = vadd.f32 0.0, %v874
      %v876 = vpop.f32.mrf.mxu0
      %v877 = vpop.f32.mrf.mxu0
      %v878 = vadd.f32 0.0, %v877
      %v879 = vpop.f32.mrf.mxu0
      %880 = vmatprep.mubr.bf16.mxu0 %v513
      %881 = vmatmul.mubr.bf16.gmra.mxu0 %v512
      %v882 = vpop.f32.mrf.mxu0
      %v883 = vadd.f32 0.0, %v882
      %v884 = vpop.f32.mrf.mxu0
      %v885 = vpop.f32.mrf.mxu0
      %v886 = vadd.f32 0.0, %v885
      %v887 = vpop.f32.mrf.mxu0
      %888 = vmatprep.mubr.bf16.mxu0 %v517
      %889 = vmatmul.mubr.bf16.gmra.mxu0 %v516
      %v890 = vpop.f32.mrf.mxu0
      %v891 = vadd.f32 0.0, %v890
      %v892 = vpop.f32.mrf.mxu0
      %v893 = vpop.f32.mrf.mxu0
      %v894 = vadd.f32 0.0, %v893
      %v895 = vpop.f32.mrf.mxu0
      %896 = vmatprep.mubr.bf16.mxu0 %v521
      %897 = vmatmul.mubr.bf16.gmra.mxu0 %v520
      %v898 = vpop.f32.mrf.mxu0
      %v899 = vadd.f32 0.0, %v898
      %v900 = vpop.f32.mrf.mxu0
      %v901 = vpop.f32.mrf.mxu0
      %v902 = vadd.f32 0.0, %v901
      %v903 = vpop.f32.mrf.mxu0
      %904 = vmatprep.mubr.bf16.mxu0 %v525
      %905 = vmatmul.mubr.bf16.gmra.mxu0 %v524
      %v906 = vpop.f32.mrf.mxu0
      %v907 = vadd.f32 0.0, %v906
      %v908 = vpop.f32.mrf.mxu0
      %v909 = vpop.f32.mrf.mxu0
      %v910 = vadd.f32 0.0, %v909
      %v911 = vpop.f32.mrf.mxu0
      %912 = vmatprep.mubr.bf16.mxu0 %v529
      %913 = vmatmul.mubr.bf16.gmra.mxu0 %v528
      %v914 = vpop.f32.mrf.mxu0
      %v915 = vadd.f32 0.0, %v914
      %v916 = vpop.f32.mrf.mxu0
      %v917 = vpop.f32.mrf.mxu0
      %v918 = vadd.f32 0.0, %v917
      %v919 = vpop.f32.mrf.mxu0
      %920 = vmatprep.mubr.bf16.mxu0 %v533
      %921 = vmatmul.mubr.bf16.gmra.mxu0 %v532
      %v922 = vpop.f32.mrf.mxu0
      %v923 = vadd.f32 0.0, %v922
      %v924 = vpop.f32.mrf.mxu0
      %v925 = vpop.f32.mrf.mxu0
      %v926 = vadd.f32 0.0, %v925
      %v927 = vpop.f32.mrf.mxu0
      %928 = vmatprep.mubr.bf16.mxu0 %v537
      %929 = vmatmul.mubr.bf16.gmra.mxu0 %v536
      %v930 = vpop.f32.mrf.mxu0
      %v931 = vadd.f32 0.0, %v930
      %v932 = vpop.f32.mrf.mxu0
      %v933 = vpop.f32.mrf.mxu0
      %v934 = vadd.f32 0.0, %v933
      %v935 = vpop.f32.mrf.mxu0
      %936 = vmatprep.mubr.bf16.mxu0 %v541
      %937 = vmatmul.mubr.bf16.gmra.mxu0 %v540
      %v938 = vpop.f32.mrf.mxu0
      %v939 = vadd.f32 0.0, %v938
      %v940 = vpop.f32.mrf.mxu0
      %v941 = vpop.f32.mrf.mxu0
      %v942 = vadd.f32 0.0, %v941
      %v943 = vpop.f32.mrf.mxu0
      %944 = vmatprep.mubr.bf16.mxu0 %v545
      %945 = vmatmul.mubr.bf16.gmra.mxu0 %v544
      %v946 = vpop.f32.mrf.mxu0
      %v947 = vadd.f32 0.0, %v946
      %v948 = vpop.f32.mrf.mxu0
      %v949 = vpop.f32.mrf.mxu0
      %v950 = vadd.f32 0.0, %v949
      %v951 = vpop.f32.mrf.mxu0
      %952 = vmatprep.mubr.bf16.mxu0 %v549
      %953 = vmatmul.mubr.bf16.gmra.mxu0 %v548
      %v954 = vpop.f32.mrf.mxu0
      %v955 = vadd.f32 0.0, %v954
      %v956 = vpop.f32.mrf.mxu0
      %v957 = vpop.f32.mrf.mxu0
      %v958 = vadd.f32 0.0, %v957
      %v959 = vpop.f32.mrf.mxu0
      %960 = vmatprep.mubr.bf16.mxu0 %v553
      %961 = vmatmul.mubr.bf16.gmra.mxu0 %v552
      %v962 = vpop.f32.mrf.mxu0
      %v963 = vadd.f32 0.0, %v962
      %v964 = vpop.f32.mrf.mxu0
      %v965 = vpop.f32.mrf.mxu0
      %v966 = vadd.f32 0.0, %v965
      %v967 = vpop.f32.mrf.mxu0
      %968 = vmatprep.mubr.bf16.mxu0 %v557
      %969 = vmatmul.mubr.bf16.gmra.mxu0 %v556
      %v970 = vpop.f32.mrf.mxu0
      %v971 = vadd.f32 0.0, %v970
      %v972 = vpop.f32.mrf.mxu0
      %v973 = vpop.f32.mrf.mxu0
      %v974 = vadd.f32 0.0, %v973
      %v975 = vpop.f32.mrf.mxu0
      %976 = vdwg.mxu0
      %977 = vmatprep.subr.bf16.mxu0 0
      %978 = vmatpush1.bf16.msra.mxu0 %v775
      %979 = vmatprep.subr.bf16.mxu0 0
      %980 = vmatpush1.bf16.msra.mxu0 %v774
      %981 = vmatprep.subr.bf16.mxu0 0
      %982 = vmatpush1.bf16.msra.mxu0 %v773
      %983 = vmatprep.subr.bf16.mxu0 0
      %984 = vmatpush1.bf16.msra.mxu0 %v772
      %985 = vmatprep.subr.bf16.mxu0 0
      %986 = vmatpush1.bf16.msra.mxu0 %v771
      %987 = vmatprep.subr.bf16.mxu0 0
      %988 = vmatpush1.bf16.msra.mxu0 %v770
      %989 = vmatprep.subr.bf16.mxu0 0
      %990 = vmatpush1.bf16.msra.mxu0 %v769
      %991 = vmatprep.subr.bf16.mxu0 0
      %992 = vmatpush1.bf16.msra.mxu0 %v768
      %993 = vmatprep.subr.bf16.mxu0 0
      %994 = vmatpush2.bf16.msra.mxu0 %v783
      %995 = vmatprep.subr.bf16.mxu0 0
      %996 = vmatpush2.bf16.msra.mxu0 %v782
      %997 = vmatprep.subr.bf16.mxu0 0
      %998 = vmatpush2.bf16.msra.mxu0 %v781
      %999 = vmatprep.subr.bf16.mxu0 0
      %1000 = vmatpush2.bf16.msra.mxu0 %v780
      %1001 = vmatprep.subr.bf16.mxu0 0
      %1002 = vmatpush2.bf16.msra.mxu0 %v779
      %1003 = vmatprep.subr.bf16.mxu0 0
      %1004 = vmatpush2.bf16.msra.mxu0 %v778
      %1005 = vmatprep.subr.bf16.mxu0 0
      %1006 = vmatpush2.bf16.msra.mxu0 %v777
      %1007 = vmatprep.subr.bf16.mxu0 0
      %1008 = vmatpush2.bf16.msra.mxu0 %v776
      %1009 = vmatprep.mubr.bf16.mxu0 %v499
      %1010 = vmatmul.mubr.bf16.gmra.mxu0 %v498
      %v1011 = vpop.f32.mrf.mxu0
      %v1012 = vadd.f32 %v851, %v1011
      %v1013 = vpop.f32.mrf.mxu0
      %v1014 = vpop.f32.mrf.mxu0
      %v1015 = vadd.f32 %v854, %v1014
      %v1016 = vpop.f32.mrf.mxu0
      %1017 = vmatprep.mubr.bf16.mxu0 %v503
      %1018 = vmatmul.mubr.bf16.gmra.mxu0 %v502
      %v1019 = vpop.f32.mrf.mxu0
      %v1020 = vadd.f32 %v859, %v1019
      %v1021 = vpop.f32.mrf.mxu0
      %v1022 = vpop.f32.mrf.mxu0
      %v1023 = vadd.f32 %v862, %v1022
      %v1024 = vpop.f32.mrf.mxu0
      %1025 = vmatprep.mubr.bf16.mxu0 %v507
      %1026 = vmatmul.mubr.bf16.gmra.mxu0 %v506
      %v1027 = vpop.f32.mrf.mxu0
      %v1028 = vadd.f32 %v867, %v1027
      %v1029 = vpop.f32.mrf.mxu0
      %v1030 = vpop.f32.mrf.mxu0
      %v1031 = vadd.f32 %v870, %v1030
      %v1032 = vpop.f32.mrf.mxu0
      %1033 = vmatprep.mubr.bf16.mxu0 %v511
      %1034 = vmatmul.mubr.bf16.gmra.mxu0 %v510
      %v1035 = vpop.f32.mrf.mxu0
      %v1036 = vadd.f32 %v875, %v1035
      %v1037 = vpop.f32.mrf.mxu0
      %v1038 = vpop.f32.mrf.mxu0
      %v1039 = vadd.f32 %v878, %v1038
      %v1040 = vpop.f32.mrf.mxu0
      %1041 = vmatprep.mubr.bf16.mxu0 %v515
      %1042 = vmatmul.mubr.bf16.gmra.mxu0 %v514
      %v1043 = vpop.f32.mrf.mxu0
      %v1044 = vadd.f32 %v883, %v1043
      %v1045 = vpop.f32.mrf.mxu0
      %v1046 = vpop.f32.mrf.mxu0
      %v1047 = vadd.f32 %v886, %v1046
      %v1048 = vpop.f32.mrf.mxu0
      %1049 = vmatprep.mubr.bf16.mxu0 %v519
      %1050 = vmatmul.mubr.bf16.gmra.mxu0 %v518
      %v1051 = vpop.f32.mrf.mxu0
      %v1052 = vadd.f32 %v891, %v1051
      %v1053 = vpop.f32.mrf.mxu0
      %v1054 = vpop.f32.mrf.mxu0
      %v1055 = vadd.f32 %v894, %v1054
      %v1056 = vpop.f32.mrf.mxu0
      %1057 = vmatprep.mubr.bf16.mxu0 %v523
      %1058 = vmatmul.mubr.bf16.gmra.mxu0 %v522
      %v1059 = vpop.f32.mrf.mxu0
      %v1060 = vadd.f32 %v899, %v1059
      %v1061 = vpop.f32.mrf.mxu0
      %v1062 = vpop.f32.mrf.mxu0
      %v1063 = vadd.f32 %v902, %v1062
      %v1064 = vpop.f32.mrf.mxu0
      %1065 = vmatprep.mubr.bf16.mxu0 %v527
      %1066 = vmatmul.mubr.bf16.gmra.mxu0 %v526
      %v1067 = vpop.f32.mrf.mxu0
      %v1068 = vadd.f32 %v907, %v1067
      %v1069 = vpop.f32.mrf.mxu0
      %v1070 = vpop.f32.mrf.mxu0
      %v1071 = vadd.f32 %v910, %v1070
      %v1072 = vpop.f32.mrf.mxu0
      %1073 = vmatprep.mubr.bf16.mxu0 %v531
      %1074 = vmatmul.mubr.bf16.gmra.mxu0 %v530
      %v1075 = vpop.f32.mrf.mxu0
      %v1076 = vadd.f32 %v915, %v1075
      %v1077 = vpop.f32.mrf.mxu0
      %v1078 = vpop.f32.mrf.mxu0
      %v1079 = vadd.f32 %v918, %v1078
      %v1080 = vpop.f32.mrf.mxu0
      %1081 = vmatprep.mubr.bf16.mxu0 %v535
      %1082 = vmatmul.mubr.bf16.gmra.mxu0 %v534
      %v1083 = vpop.f32.mrf.mxu0
      %v1084 = vadd.f32 %v923, %v1083
      %v1085 = vpop.f32.mrf.mxu0
      %v1086 = vpop.f32.mrf.mxu0
      %v1087 = vadd.f32 %v926, %v1086
      %v1088 = vpop.f32.mrf.mxu0
      %1089 = vmatprep.mubr.bf16.mxu0 %v539
      %1090 = vmatmul.mubr.bf16.gmra.mxu0 %v538
      %v1091 = vpop.f32.mrf.mxu0
      %v1092 = vadd.f32 %v931, %v1091
      %v1093 = vpop.f32.mrf.mxu0
      %v1094 = vpop.f32.mrf.mxu0
      %v1095 = vadd.f32 %v934, %v1094
      %v1096 = vpop.f32.mrf.mxu0
      %1097 = vmatprep.mubr.bf16.mxu0 %v543
      %1098 = vmatmul.mubr.bf16.gmra.mxu0 %v542
      %v1099 = vpop.f32.mrf.mxu0
      %v1100 = vadd.f32 %v939, %v1099
      %v1101 = vpop.f32.mrf.mxu0
      %v1102 = vpop.f32.mrf.mxu0
      %v1103 = vadd.f32 %v942, %v1102
      %v1104 = vpop.f32.mrf.mxu0
      %1105 = vmatprep.mubr.bf16.mxu0 %v547
      %1106 = vmatmul.mubr.bf16.gmra.mxu0 %v546
      %v1107 = vpop.f32.mrf.mxu0
      %v1108 = vadd.f32 %v947, %v1107
      %v1109 = vpop.f32.mrf.mxu0
      %v1110 = vpop.f32.mrf.mxu0
      %v1111 = vadd.f32 %v950, %v1110
      %v1112 = vpop.f32.mrf.mxu0
      %1113 = vmatprep.mubr.bf16.mxu0 %v551
      %1114 = vmatmul.mubr.bf16.gmra.mxu0 %v550
      %v1115 = vpop.f32.mrf.mxu0
      %v1116 = vadd.f32 %v955, %v1115
      %v1117 = vpop.f32.mrf.mxu0
      %v1118 = vpop.f32.mrf.mxu0
      %v1119 = vadd.f32 %v958, %v1118
      %v1120 = vpop.f32.mrf.mxu0
      %1121 = vmatprep.mubr.bf16.mxu0 %v555
      %1122 = vmatmul.mubr.bf16.gmra.mxu0 %v554
      %v1123 = vpop.f32.mrf.mxu0
      %v1124 = vadd.f32 %v963, %v1123
      %v1125 = vpop.f32.mrf.mxu0
      %v1126 = vpop.f32.mrf.mxu0
      %v1127 = vadd.f32 %v966, %v1126
      %v1128 = vpop.f32.mrf.mxu0
      %1129 = vmatprep.mubr.bf16.mxu0 %v559
      %1130 = vmatmul.mubr.bf16.gmra.mxu0 %v558
      %v1131 = vpop.f32.mrf.mxu0
      %v1132 = vadd.f32 %v971, %v1131
      %v1133 = vpop.f32.mrf.mxu0
      %v1134 = vpop.f32.mrf.mxu0
      %v1135 = vadd.f32 %v974, %v1134
      %v1136 = vpop.f32.mrf.mxu0
      %1137 = vdwg.mxu0
      %1138 = vst [vmem:[%s173] sm:$0xff] %v1012
      %1139 = vst [vmem:[%s173 + $0x8] sm:$0xff] %v1015
      %1140 = vst [vmem:[%s173 + $0x10] sm:$0xff] %v1020
      %1141 = vst [vmem:[%s173 + $0x18] sm:$0xff] %v1023
      %1142 = vst [vmem:[%s173 + $0x20] sm:$0xff] %v1028
      %1143 = vst [vmem:[%s173 + $0x28] sm:$0xff] %v1031
      %1144 = vst [vmem:[%s173 + $0x30] sm:$0xff] %v1036
      %1145 = vst [vmem:[%s173 + $0x38] sm:$0xff] %v1039
      %1146 = vst [vmem:[%s173 + $0x40] sm:$0xff] %v1044
      %1147 = vst [vmem:[%s173 + $0x48] sm:$0xff] %v1047
      %1148 = vst [vmem:[%s173 + $0x50] sm:$0xff] %v1052
      %1149 = vst [vmem:[%s173 + $0x58] sm:$0xff] %v1055
      %1150 = vst [vmem:[%s173 + $0x60] sm:$0xff] %v1060
      %1151 = vst [vmem:[%s173 + $0x68] sm:$0xff] %v1063
      %1152 = vst [vmem:[%s173 + $0x70] sm:$0xff] %v1068
      %1153 = vst [vmem:[%s173 + $0x78] sm:$0xff] %v1071
      %1154 = vst [vmem:[%s173 + $0x80] sm:$0xff] %v1076
      %1155 = vst [vmem:[%s173 + $0x88] sm:$0xff] %v1079
      %1156 = vst [vmem:[%s173 + $0x90] sm:$0xff] %v1084
      %1157 = vst [vmem:[%s173 + $0x98] sm:$0xff] %v1087
      %1158 = vst [vmem:[%s173 + $0xa0] sm:$0xff] %v1092
      %1159 = vst [vmem:[%s173 + $0xa8] sm:$0xff] %v1095
      %1160 = vst [vmem:[%s173 + $0xb0] sm:$0xff] %v1100
      %1161 = vst [vmem:[%s173 + $0xb8] sm:$0xff] %v1103
      %1162 = vst [vmem:[%s173 + $0xc0] sm:$0xff] %v1108
      %1163 = vst [vmem:[%s173 + $0xc8] sm:$0xff] %v1111
      %1164 = vst [vmem:[%s173 + $0xd0] sm:$0xff] %v1116
      %1165 = vst [vmem:[%s173 + $0xd8] sm:$0xff] %v1119
      %1166 = vst [vmem:[%s173 + $0xe0] sm:$0xff] %v1124
      %1167 = vst [vmem:[%s173 + $0xe8] sm:$0xff] %v1127
      %1168 = vst [vmem:[%s173 + $0xf0] sm:$0xff] %v1132
      %1169 = vst [vmem:[%s173 + $0xf8] sm:$0xff] %v1135
      %p1170 = scmp.eq.s32.totalorder %s15, 0
      // Predicated region
      $region29: #{_lambda_.4} parent=27 // pred_check
        %p1171 = pneg %p1170
      $region30: #{_lambda_.4} parent=27 // pred_check_branch
        %1173 = sbr.rel (%p1171) target = $region32
      $region31: #{_lambda_.4} parent=27 // pred_region
        %1174 = vst [vmem:[%s3] sm:$0x3] 0.0
      $region32: #{_lambda_.4} parent=27 // pred_fallthru
        _
      %v1175 = vld [vmem:[%s3] sm:$0x3]
      %v1176 = vadd.f32 %v1012, %v1015
      %v1177 = vadd.f32 %v1176, %v1020
      %v1178 = vadd.f32 %v1177, %v1023
      %v1179 = vadd.f32 %v1178, %v1028
      %v1180 = vadd.f32 %v1179, %v1031
      %v1181 = vadd.f32 %v1180, %v1036
      %v1182 = vadd.f32 %v1181, %v1039
      %v1183 = vadd.f32 %v1182, %v1044
      %v1184 = vadd.f32 %v1183, %v1047
      %v1185 = vadd.f32 %v1184, %v1052
      %v1186 = vadd.f32 %v1185, %v1055
      %v1187 = vadd.f32 %v1186, %v1060
      %v1188 = vadd.f32 %v1187, %v1063
      %v1189 = vadd.f32 %v1188, %v1068
      %v1190 = vadd.f32 %v1189, %v1071
      %v1191 = vadd.f32 %v1190, %v1076
      %v1192 = vadd.f32 %v1191, %v1079
      %v1193 = vadd.f32 %v1192, %v1084
      %v1194 = vadd.f32 %v1193, %v1087
      %v1195 = vadd.f32 %v1194, %v1092
      %v1196 = vadd.f32 %v1195, %v1095
      %v1197 = vadd.f32 %v1196, %v1100
      %v1198 = vadd.f32 %v1197, %v1103
      %v1199 = vadd.f32 %v1198, %v1108
      %v1200 = vadd.f32 %v1199, %v1111
      %v1201 = vadd.f32 %v1200, %v1116
      %v1202 = vadd.f32 %v1201, %v1119
      %v1203 = vadd.f32 %v1202, %v1124
      %v1204 = vadd.f32 %v1203, %v1127
      %v1205 = vadd.f32 %v1204, %v1132
      %v1206 = vadd.f32 %v1205, %v1135
      %v1207 = vrot.slane %v1206, 4
      %v1208 = vadd.f32 %v1206, %v1207
      %v1209 = vrot.slane %v1208, 2
      %v1210 = vadd.f32 %v1208, %v1209
      %v1211 = vrot.slane %v1210, 1
      %v1212 = vadd.f32 %v1210, %v1211
      %v1213 = vmul.f32 %v1012, %v1012
      %v1214 = vmul.f32 %v1015, %v1015
      %v1215 = vmul.f32 %v1020, %v1020
      %v1216 = vmul.f32 %v1023, %v1023
      %v1217 = vmul.f32 %v1028, %v1028
      %v1218 = vmul.f32 %v1031, %v1031
      %v1219 = vmul.f32 %v1036, %v1036
      %v1220 = vmul.f32 %v1039, %v1039
      %v1221 = vmul.f32 %v1044, %v1044
      %v1222 = vmul.f32 %v1047, %v1047
      %v1223 = vmul.f32 %v1052, %v1052
      %v1224 = vmul.f32 %v1055, %v1055
      %v1225 = vmul.f32 %v1060, %v1060
      %v1226 = vmul.f32 %v1063, %v1063
      %v1227 = vmul.f32 %v1068, %v1068
      %v1228 = vmul.f32 %v1071, %v1071
      %v1229 = vmul.f32 %v1076, %v1076
      %v1230 = vmul.f32 %v1079, %v1079
      %v1231 = vmul.f32 %v1084, %v1084
      %v1232 = vmul.f32 %v1087, %v1087
      %v1233 = vmul.f32 %v1092, %v1092
      %v1234 = vmul.f32 %v1095, %v1095
      %v1235 = vmul.f32 %v1100, %v1100
      %v1236 = vmul.f32 %v1103, %v1103
      %v1237 = vmul.f32 %v1108, %v1108
      %v1238 = vmul.f32 %v1111, %v1111
      %v1239 = vmul.f32 %v1116, %v1116
      %v1240 = vmul.f32 %v1119, %v1119
      %v1241 = vmul.f32 %v1124, %v1124
      %v1242 = vmul.f32 %v1127, %v1127
      %v1243 = vmul.f32 %v1132, %v1132
      %v1244 = vmul.f32 %v1135, %v1135
      %v1245 = vadd.f32 %v1213, %v1214
      %v1246 = vadd.f32 %v1245, %v1215
      %v1247 = vadd.f32 %v1246, %v1216
      %v1248 = vadd.f32 %v1247, %v1217
      %v1249 = vadd.f32 %v1248, %v1218
      %v1250 = vadd.f32 %v1249, %v1219
      %v1251 = vadd.f32 %v1250, %v1220
      %v1252 = vadd.f32 %v1251, %v1221
      %v1253 = vadd.f32 %v1252, %v1222
      %v1254 = vadd.f32 %v1253, %v1223
      %v1255 = vadd.f32 %v1254, %v1224
      %v1256 = vadd.f32 %v1255, %v1225
      %v1257 = vadd.f32 %v1256, %v1226
      %v1258 = vadd.f32 %v1257, %v1227
      %v1259 = vadd.f32 %v1258, %v1228
      %v1260 = vadd.f32 %v1259, %v1229
      %v1261 = vadd.f32 %v1260, %v1230
      %v1262 = vadd.f32 %v1261, %v1231
      %v1263 = vadd.f32 %v1262, %v1232
      %v1264 = vadd.f32 %v1263, %v1233
      %v1265 = vadd.f32 %v1264, %v1234
      %v1266 = vadd.f32 %v1265, %v1235
      %v1267 = vadd.f32 %v1266, %v1236
      %v1268 = vadd.f32 %v1267, %v1237
      %v1269 = vadd.f32 %v1268, %v1238
      %v1270 = vadd.f32 %v1269, %v1239
      %v1271 = vadd.f32 %v1270, %v1240
      %v1272 = vadd.f32 %v1271, %v1241
      %v1273 = vadd.f32 %v1272, %v1242
      %v1274 = vadd.f32 %v1273, %v1243
      %v1275 = vadd.f32 %v1274, %v1244
      %v1276 = vrot.slane %v1275, 4
      %v1277 = vadd.f32 %v1275, %v1276
      %v1278 = vrot.slane %v1277, 2
      %v1279 = vadd.f32 %v1277, %v1278
      %v1280 = vrot.slane %v1279, 1
      %v1281 = vadd.f32 %v1279, %v1280
      %vm1282 = vcmask 1040384
      %v1283 = vsel %vm1282, %v1212, %v1281
      %v1284 = vadd.f32 %v1175, %v1283
      %1285 = vst [vmem:[%s3] sm:$0x3] %v1284
      %s1286 = smul.u32 32, %s15
      %p1287 = scmp.lt.s32.totalorder %s1286, 63
      %s1288 = scalar_select %p1287, %s1286, 63
      %s1289 = smul.addr %s1288, 8
      %s1290 = scalar_lea.vmem %s2, %s1289
      // Predicated region
      $region33: #{_lambda_.4} parent=27 // pred_check
        %p1291 = pneg %p80
      $region34: #{_lambda_.4} parent=27 // pred_check_branch
        %1293 = sbr.rel (%p1291) target = $region36
      $region35: #{_lambda_.4} parent=27 // pred_region
        %s1294 = smul.u32 32, %s15
      $region36: #{_lambda_.4} parent=27 // pred_fallthru
        _
      // Predicated region
      $region37: #{_lambda_.4} parent=27 // pred_check
        %p1295 = pneg %p101
      $region38: #{_lambda_.4} parent=27 // pred_check_branch
        %1297 = sbr.rel (%p1295) target = $region40
      $region39: #{_lambda_.4} parent=27 // pred_region
        _
      $region40: #{_lambda_.4} parent=27 // pred_fallthru
        _
      // Predicated region
      $region41: #{_lambda_.4} parent=27 // pred_check
        %p1298 = pneg %p101
      $region42: #{_lambda_.4} parent=27 // pred_check_branch
        %1300 = sbr.rel (%p1298) target = $region44
      $region43: #{_lambda_.4} parent=27 // pred_region
        _
      $region44: #{_lambda_.4} parent=27 // pred_fallthru
        _
    $region28: #{_lambda_.4} parent=5 // pred_fallthru
      _
    %p1301 = scmp.le.s32.totalorder 2, %s10
    // Predicated region
    $region45: #{_lambda_.4} parent=5 // pred_check
      %p1302 = pneg %p1301
    $region46: #{_lambda_.4} parent=5 // pred_check_branch
      %1304 = sbr.rel (%p1302) target = $region48
    $region47: #{_lambda_.4} parent=5 // pred_region
      %s1305 = ssub.s32 %s10, 2
      // Predicated region
      $region49: #{_lambda_.4} parent=47 // pred_check
        %p1306 = pneg %p86
      $region50: #{_lambda_.4} parent=47 // pred_check_branch
        %1308 = sbr.rel (%p1306) target = $region52
      $region51: #{_lambda_.4} parent=47 // pred_region
        %s1309 = smul.u32 32, %s16
        %p1310 = scmp.lt.s32.totalorder %s1309, 63
        %s1311 = scalar_select %p1310, %s1309, 63
        %s1312 = smul.addr %s1311, 8
        %s1313 = scalar_lea.vmem %s2, %s1312
      $region52: #{_lambda_.4} parent=47 // pred_fallthru
        _
    $region48: #{_lambda_.4} parent=5 // pred_fallthru
      _
  $region6: #{_lambda_.4} parent=0 // loop_footer
    %s14 = sadd.s32 1, %s10
  $region7: #{_lambda_.4} parent=0 // loop_footer_branch
    %9 = sbr.rel target = $region3
  $region8: #{_lambda_.4} parent=0 // loop_exit
    _

// kernel: _lambda_.6
$region0: #{_lambda_.6}
  #allocation0 [shape = 'u32[]', space=smem, size = 0x4, offset = 0x4, fixed_abs, tag = 'smem constant byte address 0x4 - core index']
  #allocation1 [shape = 'u32[144,128]{1,0:T(1,128)}', space=vmem, size = 0x12000, scoped, tag = 'internal scratch']
  %s0 = inlined_call_operand.vmem [shape: f32[512,128], index: 0, kind: input, shape index: {}]
  %s1 = inlined_call_operand.vmem [shape: f32[1,128], index: 1, kind: input, shape index: {}]
  %s2 = inlined_call_operand.vmem [shape: f32[1,128], index: 2, kind: input, shape index: {}]
  %s3 = inlined_call_operand.vmem [shape: bf16[128,512], index: 3, kind: input, shape index: {}]
  %s4 = inlined_call_operand.vmem [shape: f32[512,512], index: 4, kind: output, shape index: {0}]
  %s5 = inlined_call_operand.vmem [shape: f32[2,512], index: 5, kind: output, shape index: {1}]
  %6 = xla_tuple %s4, %s5
  %s7 = sld [smem:[#allocation0]]
  $region61: #{_lambda_.6} parent=0
    _
  %s9 = ssub.s32 1, %s7
  %s10 = scalar_select 0, %s9, %s7
  loop: start=0, step=1, limit=4
  $region2: #{_lambda_.6} parent=0 // loop_pre_header
    _
  $region3: #{_lambda_.6} parent=0 // loop_header
    %s12 = sphi 0, %s16
    %p13 = scmp.ge.s32.totalorder %s12, 4
    %s22 = sphi 0, %s24
    %s25 = sphi 0, %s22
    %s26 = sphi 0, %s25
    %s42 = sphi 0, %s26
    %s46 = sphi 0, %s46
    %s48 = sphi 0, %s46
    %s49 = sphi 0, %s48
    %s63 = sphi 0, %s49
    %s67 = sphi 0, %s67
    %s69 = sphi 0, %s67
    %s70 = sphi 0, %s69
    %s84 = sphi 0, %s70
    %s88 = sphi 0, %s88
    %s90 = sphi 0, %s88
    %s91 = sphi 0, %s90
    %s105 = sphi 0, %s91
    %s111 = sphi 0, %s113
    %s114 = sphi 0, %s111
    %s115 = sphi 0, %s114
    %s131 = sphi 0, %s115
    %s135 = sphi 0, %s135
    %s137 = sphi 0, %s135
    %s138 = sphi 0, %s137
    %s152 = sphi 0, %s138
  $region4: #{_lambda_.6} parent=0 // loop_header_branch
    %15 = sbr.rel (%p13) target = $region8
  $region5: #{_lambda_.6} parent=0 // loop_body
    %s17 = ssub.s32 %s12, 1
    %s18 = ssub.s32 %s12, 2
    %s19 = sadd.s32 %s12, 1
    %s20 = ssub.s32 %s12, %s19
    %p21 = scmp.eq.s32.totalorder %s20, 0
    %s23 = sadd.s32 %s22, 1
    %s24 = scalar_select %p21, %s22, %s23
    %p27 = pneg %p21
    %p28 = scmp.eq.s32.totalorder %s12, 1
    %p29 = por %p27, %p28
    %p30 = scmp.ne.s32.totalorder %s22, %s25
    %p31 = scmp.eq.s32.totalorder %s12, 0
    %p32 = por %p30, %p31
    %p33 = scmp.ne.s32.totalorder %s22, %s25
    %p34 = scmp.eq.s32.totalorder %s17, 1
    %p35 = por %p33, %p34
    %p36 = scmp.ne.s32.totalorder %s25, %s26
    %p37 = scmp.eq.s32.totalorder %s17, 0
    %p38 = por %p36, %p37
    %p39 = scmp.ne.s32.totalorder %s25, %s26
    %p40 = scmp.eq.s32.totalorder %s18, 1
    %p41 = por %p39, %p40
    %p43 = scmp.ne.s32.totalorder %s26, %s42
    %p44 = scmp.eq.s32.totalorder %s18, 0
    %p45 = por %p43, %p44
    %s47 = sadd.s32 %s46, 1
    %p50 = scmp.eq.s32.totalorder %s12, 1
    %p51 = scmp.ne.s32.totalorder %s46, %s48
    %p52 = scmp.eq.s32.totalorder %s12, 0
    %p53 = por %p51, %p52
    %p54 = scmp.ne.s32.totalorder %s46, %s48
    %p55 = scmp.eq.s32.totalorder %s17, 1
    %p56 = por %p54, %p55
    %p57 = scmp.ne.s32.totalorder %s48, %s49
    %p58 = scmp.eq.s32.totalorder %s17, 0
    %p59 = por %p57, %p58
    %p60 = scmp.ne.s32.totalorder %s48, %s49
    %p61 = scmp.eq.s32.totalorder %s18, 1
    %p62 = por %p60, %p61
    %p64 = scmp.ne.s32.totalorder %s49, %s63
    %p65 = scmp.eq.s32.totalorder %s18, 0
    %p66 = por %p64, %p65
    %s68 = sadd.s32 %s67, 1
    %p71 = scmp.eq.s32.totalorder %s12, 1
    %p72 = scmp.ne.s32.totalorder %s67, %s69
    %p73 = scmp.eq.s32.totalorder %s12, 0
    %p74 = por %p72, %p73
    %p75 = scmp.ne.s32.totalorder %s67, %s69
    %p76 = scmp.eq.s32.totalorder %s17, 1
    %p77 = por %p75, %p76
    %p78 = scmp.ne.s32.totalorder %s69, %s70
    %p79 = scmp.eq.s32.totalorder %s17, 0
    %p80 = por %p78, %p79
    %p81 = scmp.ne.s32.totalorder %s69, %s70
    %p82 = scmp.eq.s32.totalorder %s18, 1
    %p83 = por %p81, %p82
    %p85 = scmp.ne.s32.totalorder %s70, %s84
    %p86 = scmp.eq.s32.totalorder %s18, 0
    %p87 = por %p85, %p86
    %s89 = sadd.s32 %s88, 1
    %p92 = scmp.eq.s32.totalorder %s12, 1
    %p93 = scmp.ne.s32.totalorder %s88, %s90
    %p94 = scmp.eq.s32.totalorder %s12, 0
    %p95 = por %p93, %p94
    %p96 = scmp.ne.s32.totalorder %s88, %s90
    %p97 = scmp.eq.s32.totalorder %s17, 1
    %p98 = por %p96, %p97
    %p99 = scmp.ne.s32.totalorder %s90, %s91
    %p100 = scmp.eq.s32.totalorder %s17, 0
    %p101 = por %p99, %p100
    %p102 = scmp.ne.s32.totalorder %s90, %s91
    %p103 = scmp.eq.s32.totalorder %s18, 1
    %p104 = por %p102, %p103
    %p106 = scmp.ne.s32.totalorder %s91, %s105
    %p107 = scmp.eq.s32.totalorder %s18, 0
    %p108 = por %p106, %p107
    %s109 = ssub.s32 %s12, %s19
    %p110 = scmp.eq.s32.totalorder %s109, 0
    %s112 = sadd.s32 %s111, 1
    %s113 = scalar_select %p110, %s111, %s112
    %p116 = pneg %p110
    %p117 = scmp.eq.s32.totalorder %s12, 1
    %p118 = por %p116, %p117
    %p119 = scmp.ne.s32.totalorder %s111, %s114
    %p120 = scmp.eq.s32.totalorder %s12, 0
    %p121 = por %p119, %p120
    %p122 = scmp.ne.s32.totalorder %s111, %s114
    %p123 = scmp.eq.s32.totalorder %s17, 1
    %p124 = por %p122, %p123
    %p125 = scmp.ne.s32.totalorder %s114, %s115
    %p126 = scmp.eq.s32.totalorder %s17, 0
    %p127 = por %p125, %p126
    %p128 = scmp.ne.s32.totalorder %s114, %s115
    %p129 = scmp.eq.s32.totalorder %s18, 1
    %p130 = por %p128, %p129
    %p132 = scmp.ne.s32.totalorder %s115, %s131
    %p133 = scmp.eq.s32.totalorder %s18, 0
    %p134 = por %p132, %p133
    %s136 = sadd.s32 %s135, 1
    %p139 = scmp.eq.s32.totalorder %s12, 1
    %p140 = scmp.ne.s32.totalorder %s135, %s137
    %p141 = scmp.eq.s32.totalorder %s12, 0
    %p142 = por %p140, %p141
    %p143 = scmp.ne.s32.totalorder %s135, %s137
    %p144 = scmp.eq.s32.totalorder %s17, 1
    %p145 = por %p143, %p144
    %p146 = scmp.ne.s32.totalorder %s137, %s138
    %p147 = scmp.eq.s32.totalorder %s17, 0
    %p148 = por %p146, %p147
    %p149 = scmp.ne.s32.totalorder %s137, %s138
    %p150 = scmp.eq.s32.totalorder %s18, 1
    %p151 = por %p149, %p150
    %p153 = scmp.ne.s32.totalorder %s138, %s152
    %p154 = scmp.eq.s32.totalorder %s18, 0
    %p155 = por %p153, %p154
    %p156 = scmp.le.s32.totalorder 1, %s12
    %p157 = scmp.lt.s32.totalorder %s12, 3
    %p158 = pnand %p156, %p157
    %p159 = pneg %p158
    // Predicated region
    $region9: #{_lambda_.6} parent=5 // pred_check
      _
    $region10: #{_lambda_.6} parent=5 // pred_check_branch
      %161 = sbr.rel (%p158) target = $region12
    $region11: #{_lambda_.6} parent=5 // pred_region
      %s162 = ssub.s32 %s12, 1
      // Predicated region
      $region13: #{_lambda_.6} parent=11 // pred_check
        %p163 = pneg %p59
      $region14: #{_lambda_.6} parent=11 // pred_check_branch
        %165 = sbr.rel (%p163) target = $region16
      $region15: #{_lambda_.6} parent=11 // pred_region
        _
      $region16: #{_lambda_.6} parent=11 // pred_fallthru
        _
      // Predicated region
      $region17: #{_lambda_.6} parent=11 // pred_check
        %p166 = pneg %p80
      $region18: #{_lambda_.6} parent=11 // pred_check_branch
        %168 = sbr.rel (%p166) target = $region20
      $region19: #{_lambda_.6} parent=11 // pred_region
        _
      $region20: #{_lambda_.6} parent=11 // pred_fallthru
        _
      // Predicated region
      $region21: #{_lambda_.6} parent=11 // pred_check
        %p169 = pneg %p101
      $region22: #{_lambda_.6} parent=11 // pred_check_branch
        %171 = sbr.rel (%p169) target = $region24
      $region23: #{_lambda_.6} parent=11 // pred_region
        _
      $region24: #{_lambda_.6} parent=11 // pred_fallthru
        _
    $region12: #{_lambda_.6} parent=5 // pred_fallthru
      _
    %p172 = scmp.lt.s32.totalorder %s12, 2
    // Predicated region
    $region25: #{_lambda_.6} parent=5 // pred_check
      %p173 = pneg %p172
    $region26: #{_lambda_.6} parent=5 // pred_check_branch
      %175 = sbr.rel (%p173) target = $region28
    $region27: #{_lambda_.6} parent=5 // pred_region
      // Predicated region
      $region29: #{_lambda_.6} parent=27 // pred_check
        %p176 = pneg %p32
      $region30: #{_lambda_.6} parent=27 // pred_check_branch
        %178 = sbr.rel (%p176) target = $region32
      $region31: #{_lambda_.6} parent=27 // pred_region
        %s179 = smul.u32 32, %s12
        %p180 = scmp.lt.s32.totalorder %s179, 63
        %s181 = scalar_select %p180, %s179, 63
        %s182 = smul.addr %s181, 8
        %s183 = scalar_lea.vmem %s0, %s182
        %s184 = smul.u32 32, %s12
      $region32: #{_lambda_.6} parent=27 // pred_fallthru
        _
    $region28: #{_lambda_.6} parent=5 // pred_fallthru
      _
    %p185 = scmp.le.s32.totalorder 1, %s12
    %p186 = scmp.lt.s32.totalorder %s12, 3
    %p187 = pnand %p185, %p186
    %p188 = pneg %p187
    // Predicated region
    $region33: #{_lambda_.6} parent=5 // pred_check
      _
    $region34: #{_lambda_.6} parent=5 // pred_check_branch
      %190 = sbr.rel (%p187) target = $region36
    $region35: #{_lambda_.6} parent=5 // pred_region
      %s191 = ssub.s32 %s12, 1
      %s192 = smul.u32 32, %s17
      %p193 = scmp.lt.s32.totalorder %s192, 63
      %s194 = scalar_select %p193, %s192, 63
      %s195 = smul.addr %s194, 8
      %s196 = scalar_lea.vmem %s0, %s195
      %p197 = pneg %p38
      %p198 = pneg %p35
      %p199 = pneg %p59
      %p200 = pneg %p56
      %p201 = pneg %p80
      %p202 = pneg %p77
      %p203 = pneg %p101
      %p204 = pneg %p98
      %p205 = pneg %p127
      %p206 = pneg %p124
      %s207 = smul.u32 32, %s17
      %p208 = scmp.lt.s32.totalorder %s207, 63
      %s209 = scalar_select %p208, %s207, 63
      %s210 = smul.addr %s209, 4
      %s211 = smul.addr %s210, 8
      %s212 = scalar_lea.vmem %s4, %s211
      %p213 = pneg %p148
      %p214 = pneg %p145
      %s215 = smul.u32 32, %s17
      %p216 = scmp.lt.s32.totalorder %s215, 63
      %s217 = scalar_select %p216, %s215, 63
      %s218 = smul.addr %s217, 8
      %s219 = scalar_lea.vmem %s0, %s218
      %s220 = smul.u32 32, %s17
      %s221 = smul.u32 32, %s17
      %p222 = scmp.lt.s32.totalorder %s221, 63
      %s223 = scalar_select %p222, %s221, 63
      %s224 = smul.addr %s223, 4
      %s225 = smul.addr %s224, 8
      %s226 = scalar_lea.vmem %s4, %s225
      %s227 = smul.u32 32, %s17
      %v229 = vld [vmem:[%s219] sm:$0xff]
      %v230 = vld [vmem:[%s219 + $0x8] sm:$0xff]
      %v231 = vld [vmem:[%s219 + $0x10] sm:$0xff]
      %v232 = vld [vmem:[%s219 + $0x18] sm:$0xff]
      %v233 = vld [vmem:[%s219 + $0x20] sm:$0xff]
      %v234 = vld [vmem:[%s219 + $0x28] sm:$0xff]
      %v235 = vld [vmem:[%s219 + $0x30] sm:$0xff]
      %v236 = vld [vmem:[%s219 + $0x38] sm:$0xff]
      %v237 = vld [vmem:[%s219 + $0x40] sm:$0xff]
      %v238 = vld [vmem:[%s219 + $0x48] sm:$0xff]
      %v239 = vld [vmem:[%s219 + $0x50] sm:$0xff]
      %v240 = vld [vmem:[%s219 + $0x58] sm:$0xff]
      %v241 = vld [vmem:[%s219 + $0x60] sm:$0xff]
      %v242 = vld [vmem:[%s219 + $0x68] sm:$0xff]
      %v243 = vld [vmem:[%s219 + $0x70] sm:$0xff]
      %v244 = vld [vmem:[%s219 + $0x78] sm:$0xff]
      %v245 = vld [vmem:[%s219 + $0x80] sm:$0xff]
      %v246 = vld [vmem:[%s219 + $0x88] sm:$0xff]
      %v247 = vld [vmem:[%s219 + $0x90] sm:$0xff]
      %v248 = vld [vmem:[%s219 + $0x98] sm:$0xff]
      %v249 = vld [vmem:[%s219 + $0xa0] sm:$0xff]
      %v250 = vld [vmem:[%s219 + $0xa8] sm:$0xff]
      %v251 = vld [vmem:[%s219 + $0xb0] sm:$0xff]
      %v252 = vld [vmem:[%s219 + $0xb8] sm:$0xff]
      %v253 = vld [vmem:[%s219 + $0xc0] sm:$0xff]
      %v254 = vld [vmem:[%s219 + $0xc8] sm:$0xff]
      %v255 = vld [vmem:[%s219 + $0xd0] sm:$0xff]
      %v256 = vld [vmem:[%s219 + $0xd8] sm:$0xff]
      %v257 = vld [vmem:[%s219 + $0xe0] sm:$0xff]
      %v258 = vld [vmem:[%s219 + $0xe8] sm:$0xff]
      %v259 = vld [vmem:[%s219 + $0xf0] sm:$0xff]
      %v260 = vld [vmem:[%s219 + $0xf8] sm:$0xff]
      %v261 = vld [vmem:[%s1] sm:$0x1]
      %v263 = vlaneseq
      %v264 = vshrl.u32 %v263, 7
      %v265 = vsub.s32 0, %v264
      %v266 = vrot.slane %v261, %v265
      %v268 = vmul.f32 %v229, %v266
      %v269 = vmul.f32 %v230, %v266
      %v270 = vmul.f32 %v231, %v266
      %v271 = vmul.f32 %v232, %v266
      %v272 = vmul.f32 %v233, %v266
      %v273 = vmul.f32 %v234, %v266
      %v274 = vmul.f32 %v235, %v266
      %v275 = vmul.f32 %v236, %v266
      %v276 = vmul.f32 %v237, %v266
      %v277 = vmul.f32 %v238, %v266
      %v278 = vmul.f32 %v239, %v266
      %v279 = vmul.f32 %v240, %v266
      %v280 = vmul.f32 %v241, %v266
      %v281 = vmul.f32 %v242, %v266
      %v282 = vmul.f32 %v243, %v266
      %v283 = vmul.f32 %v244, %v266
      %v284 = vmul.f32 %v245, %v266
      %v285 = vmul.f32 %v246, %v266
      %v286 = vmul.f32 %v247, %v266
      %v287 = vmul.f32 %v248, %v266
      %v288 = vmul.f32 %v249, %v266
      %v289 = vmul.f32 %v250, %v266
      %v290 = vmul.f32 %v251, %v266
      %v291 = vmul.f32 %v252, %v266
      %v292 = vmul.f32 %v253, %v266
      %v293 = vmul.f32 %v254, %v266
      %v294 = vmul.f32 %v255, %v266
      %v295 = vmul.f32 %v256, %v266
      %v296 = vmul.f32 %v257, %v266
      %v297 = vmul.f32 %v258, %v266
      %v298 = vmul.f32 %v259, %v266
      %v299 = vmul.f32 %v260, %v266
      %v300 = vld [vmem:[%s2] sm:$0x1]
      %v302 = vlaneseq
      %v303 = vshrl.u32 %v302, 7
      %v304 = vsub.s32 0, %v303
      %v305 = vrot.slane %v300, %v304
      %v307 = vadd.f32 %v268, %v305
      %v308 = vadd.f32 %v269, %v305
      %v309 = vadd.f32 %v270, %v305
      %v310 = vadd.f32 %v271, %v305
      %v311 = vadd.f32 %v272, %v305
      %v312 = vadd.f32 %v273, %v305
      %v313 = vadd.f32 %v274, %v305
      %v314 = vadd.f32 %v275, %v305
      %v315 = vadd.f32 %v276, %v305
      %v316 = vadd.f32 %v277, %v305
      %v317 = vadd.f32 %v278, %v305
      %v318 = vadd.f32 %v279, %v305
      %v319 = vadd.f32 %v280, %v305
      %v320 = vadd.f32 %v281, %v305
      %v321 = vadd.f32 %v282, %v305
      %v322 = vadd.f32 %v283, %v305
      %v323 = vadd.f32 %v284, %v305
      %v324 = vadd.f32 %v285, %v305
      %v325 = vadd.f32 %v286, %v305
      %v326 = vadd.f32 %v287, %v305
      %v327 = vadd.f32 %v288, %v305
      %v328 = vadd.f32 %v289, %v305
      %v329 = vadd.f32 %v290, %v305
      %v330 = vadd.f32 %v291, %v305
      %v331 = vadd.f32 %v292, %v305
      %v332 = vadd.f32 %v293, %v305
      %v333 = vadd.f32 %v294, %v305
      %v334 = vadd.f32 %v295, %v305
      %v335 = vadd.f32 %v296, %v305
      %v336 = vadd.f32 %v297, %v305
      %v337 = vadd.f32 %v298, %v305
      %v338 = vadd.f32 %v299, %v305
      %v339 = vmax.f32 %v307, 0.0
      %v340 = vmax.f32 %v308, 0.0
      %v341 = vmax.f32 %v309, 0.0
      %v342 = vmax.f32 %v310, 0.0
      %v343 = vmax.f32 %v311, 0.0
      %v344 = vmax.f32 %v312, 0.0
      %v345 = vmax.f32 %v313, 0.0
      %v346 = vmax.f32 %v314, 0.0
      %v347 = vmax.f32 %v315, 0.0
      %v348 = vmax.f32 %v316, 0.0
      %v349 = vmax.f32 %v317, 0.0
      %v350 = vmax.f32 %v318, 0.0
      %v351 = vmax.f32 %v319, 0.0
      %v352 = vmax.f32 %v320, 0.0
      %v353 = vmax.f32 %v321, 0.0
      %v354 = vmax.f32 %v322, 0.0
      %v355 = vmax.f32 %v323, 0.0
      %v356 = vmax.f32 %v324, 0.0
      %v357 = vmax.f32 %v325, 0.0
      %v358 = vmax.f32 %v326, 0.0
      %v359 = vmax.f32 %v327, 0.0
      %v360 = vmax.f32 %v328, 0.0
      %v361 = vmax.f32 %v329, 0.0
      %v362 = vmax.f32 %v330, 0.0
      %v363 = vmax.f32 %v331, 0.0
      %v364 = vmax.f32 %v332, 0.0
      %v365 = vmax.f32 %v333, 0.0
      %v366 = vmax.f32 %v334, 0.0
      %v367 = vmax.f32 %v335, 0.0
      %v368 = vmax.f32 %v336, 0.0
      %v369 = vmax.f32 %v337, 0.0
      %v370 = vmax.f32 %v338, 0.0
      %v371 = vpack.c.bf16 %v340, %v339
      %v372 = vpack.c.bf16 %v342, %v341
      %v373 = vpack.c.bf16 %v344, %v343
      %v374 = vpack.c.bf16 %v346, %v345
      %v375 = vpack.c.bf16 %v348, %v347
      %v376 = vpack.c.bf16 %v350, %v349
      %v377 = vpack.c.bf16 %v352, %v351
      %v378 = vpack.c.bf16 %v354, %v353
      %v379 = vpack.c.bf16 %v356, %v355
      %v380 = vpack.c.bf16 %v358, %v357
      %v381 = vpack.c.bf16 %v360, %v359
      %v382 = vpack.c.bf16 %v362, %v361
      %v383 = vpack.c.bf16 %v364, %v363
      %v384 = vpack.c.bf16 %v366, %v365
      %v385 = vpack.c.bf16 %v368, %v367
      %v386 = vpack.c.bf16 %v370, %v369
      %v387 = vld [vmem:[%s3] sm:$0xff]
      %v388 = vld [vmem:[%s3 + $0x8] sm:$0xff]
      %v389 = vld [vmem:[%s3 + $0x10] sm:$0xff]
      %v390 = vld [vmem:[%s3 + $0x18] sm:$0xff]
      %v391 = vld [vmem:[%s3 + $0x20] sm:$0xff]
      %v392 = vld [vmem:[%s3 + $0x28] sm:$0xff]
      %v393 = vld [vmem:[%s3 + $0x30] sm:$0xff]
      %v394 = vld [vmem:[%s3 + $0x38] sm:$0xff]
      %v395 = vld [vmem:[%s3 + $0x40] sm:$0xff]
      %v396 = vld [vmem:[%s3 + $0x48] sm:$0xff]
      %v397 = vld [vmem:[%s3 + $0x50] sm:$0xff]
      %v398 = vld [vmem:[%s3 + $0x58] sm:$0xff]
      %v399 = vld [vmem:[%s3 + $0x60] sm:$0xff]
      %v400 = vld [vmem:[%s3 + $0x68] sm:$0xff]
      %v401 = vld [vmem:[%s3 + $0x70] sm:$0xff]
      %v402 = vld [vmem:[%s3 + $0x78] sm:$0xff]
      %v403 = vld [vmem:[%s3 + $0x80] sm:$0xff]
      %v404 = vld [vmem:[%s3 + $0x88] sm:$0xff]
      %v405 = vld [vmem:[%s3 + $0x90] sm:$0xff]
      %v406 = vld [vmem:[%s3 + $0x98] sm:$0xff]
      %v407 = vld [vmem:[%s3 + $0xa0] sm:$0xff]
      %v408 = vld [vmem:[%s3 + $0xa8] sm:$0xff]
      %v409 = vld [vmem:[%s3 + $0xb0] sm:$0xff]
      %v410 = vld [vmem:[%s3 + $0xb8] sm:$0xff]
      %v411 = vld [vmem:[%s3 + $0xc0] sm:$0xff]
      %v412 = vld [vmem:[%s3 + $0xc8] sm:$0xff]
      %v413 = vld [vmem:[%s3 + $0xd0] sm:$0xff]
      %v414 = vld [vmem:[%s3 + $0xd8] sm:$0xff]
      %v415 = vld [vmem:[%s3 + $0xe0] sm:$0xff]
      %v416 = vld [vmem:[%s3 + $0xe8] sm:$0xff]
      %v417 = vld [vmem:[%s3 + $0xf0] sm:$0xff]
      %v418 = vld [vmem:[%s3 + $0xf8] sm:$0xff]
      %v451 = vunpack.c.l.b16 %v387
      %v452 = vunpack.c.h.b16 %v387
      %v453 = vunpack.c.l.b16 %v388
      %v454 = vunpack.c.h.b16 %v388
      %v455 = vunpack.c.l.b16 %v389
      %v456 = vunpack.c.h.b16 %v389
      %v457 = vunpack.c.l.b16 %v390
      %v458 = vunpack.c.h.b16 %v390
      %v459 = vunpack.c.l.b16 %v391
      %v460 = vunpack.c.h.b16 %v391
      %v461 = vunpack.c.l.b16 %v392
      %v462 = vunpack.c.h.b16 %v392
      %v463 = vunpack.c.l.b16 %v393
      %v464 = vunpack.c.h.b16 %v393
      %v465 = vunpack.c.l.b16 %v394
      %v466 = vunpack.c.h.b16 %v394
      %v467 = vunpack.c.l.b16 %v395
      %v468 = vunpack.c.h.b16 %v395
      %v469 = vunpack.c.l.b16 %v396
      %v470 = vunpack.c.h.b16 %v396
      %v471 = vunpack.c.l.b16 %v397
      %v472 = vunpack.c.h.b16 %v397
      %v473 = vunpack.c.l.b16 %v398
      %v474 = vunpack.c.h.b16 %v398
      %v475 = vunpack.c.l.b16 %v399
      %v476 = vunpack.c.h.b16 %v399
      %v477 = vunpack.c.l.b16 %v400
      %v478 = vunpack.c.h.b16 %v400
      %v479 = vunpack.c.l.b16 %v401
      %v480 = vunpack.c.h.b16 %v401
      %v481 = vunpack.c.l.b16 %v402
      %v482 = vunpack.c.h.b16 %v402
      %v483 = vunpack.c.l.b16 %v403
      %v484 = vunpack.c.h.b16 %v403
      %v485 = vunpack.c.l.b16 %v404
      %v486 = vunpack.c.h.b16 %v404
      %v487 = vunpack.c.l.b16 %v405
      %v488 = vunpack.c.h.b16 %v405
      %v489 = vunpack.c.l.b16 %v406
      %v490 = vunpack.c.h.b16 %v406
      %v491 = vunpack.c.l.b16 %v407
      %v492 = vunpack.c.h.b16 %v407
      %v493 = vunpack.c.l.b16 %v408
      %v494 = vunpack.c.h.b16 %v408
      %v495 = vunpack.c.l.b16 %v409
      %v496 = vunpack.c.h.b16 %v409
      %v497 = vunpack.c.l.b16 %v410
      %v498 = vunpack.c.h.b16 %v410
      %v499 = vunpack.c.l.b16 %v411
      %v500 = vunpack.c.h.b16 %v411
      %v501 = vunpack.c.l.b16 %v412
      %v502 = vunpack.c.h.b16 %v412
      %v503 = vunpack.c.l.b16 %v413
      %v504 = vunpack.c.h.b16 %v413
      %v505 = vunpack.c.l.b16 %v414
      %v506 = vunpack.c.h.b16 %v414
      %v507 = vunpack.c.l.b16 %v415
      %v508 = vunpack.c.h.b16 %v415
      %v509 = vunpack.c.l.b16 %v416
      %v510 = vunpack.c.h.b16 %v416
      %v511 = vunpack.c.l.b16 %v417
      %v512 = vunpack.c.h.b16 %v417
      %v513 = vunpack.c.l.b16 %v418
      %v514 = vunpack.c.h.b16 %v418
      %v515 = vpack.c.b16 %v455, %v451
      %v516 = vpack.c.b16 %v456, %v452
      %v517 = vpack.c.b16 %v457, %v453
      %v518 = vpack.c.b16 %v458, %v454
      %v519 = vpack.c.b16 %v463, %v459
      %v520 = vpack.c.b16 %v464, %v460
      %v521 = vpack.c.b16 %v465, %v461
      %v522 = vpack.c.b16 %v466, %v462
      %v523 = vpack.c.b16 %v471, %v467
      %v524 = vpack.c.b16 %v472, %v468
      %v525 = vpack.c.b16 %v473, %v469
      %v526 = vpack.c.b16 %v474, %v470
      %v527 = vpack.c.b16 %v479, %v475
      %v528 = vpack.c.b16 %v480, %v476
      %v529 = vpack.c.b16 %v481, %v477
      %v530 = vpack.c.b16 %v482, %v478
      %v531 = vpack.c.b16 %v487, %v483
      %v532 = vpack.c.b16 %v488, %v484
      %v533 = vpack.c.b16 %v489, %v485
      %v534 = vpack.c.b16 %v490, %v486
      %v535 = vpack.c.b16 %v495, %v491
      %v536 = vpack.c.b16 %v496, %v492
      %v537 = vpack.c.b16 %v497, %v493
      %v538 = vpack.c.b16 %v498, %v494
      %v539 = vpack.c.b16 %v503, %v499
      %v540 = vpack.c.b16 %v504, %v500
      %v541 = vpack.c.b16 %v505, %v501
      %v542 = vpack.c.b16 %v506, %v502
      %v543 = vpack.c.b16 %v511, %v507
      %v544 = vpack.c.b16 %v512, %v508
      %v545 = vpack.c.b16 %v513, %v509
      %v546 = vpack.c.b16 %v514, %v510
      %579 = vmatprep.subr.bf16.mxu0 %v544
      %580 = vmatpush1.bf16.msra.mxu0 %v543
      %581 = vmatprep.subr.bf16.mxu0 %v540
      %582 = vmatpush1.bf16.msra.mxu0 %v539
      %583 = vmatprep.subr.bf16.mxu0 %v536
      %584 = vmatpush1.bf16.msra.mxu0 %v535
      %585 = vmatprep.subr.bf16.mxu0 %v532
      %586 = vmatpush1.bf16.msra.mxu0 %v531
      %587 = vmatprep.subr.bf16.mxu0 %v528
      %588 = vmatpush1.bf16.msra.mxu0 %v527
      %589 = vmatprep.subr.bf16.mxu0 %v524
      %590 = vmatpush1.bf16.msra.mxu0 %v523
      %591 = vmatprep.subr.bf16.mxu0 %v520
      %592 = vmatpush1.bf16.msra.mxu0 %v519
      %593 = vmatprep.subr.bf16.mxu0 %v516
      %594 = vmatpush1.bf16.msra.mxu0 %v515
      %595 = vmatprep.subr.bf16.mxu0 0
      %596 = vmatpush2.bf16.msra.mxu0 0
      %597 = vmatprep.subr.bf16.mxu0 0
      %598 = vmatpush2.bf16.msra.mxu0 0
      %599 = vmatprep.subr.bf16.mxu0 0
      %600 = vmatpush2.bf16.msra.mxu0 0
      %601 = vmatprep.subr.bf16.mxu0 0
      %602 = vmatpush2.bf16.msra.mxu0 0
      %603 = vmatprep.subr.bf16.mxu0 0
      %604 = vmatpush2.bf16.msra.mxu0 0
      %605 = vmatprep.subr.bf16.mxu0 0
      %606 = vmatpush2.bf16.msra.mxu0 0
      %607 = vmatprep.subr.bf16.mxu0 0
      %608 = vmatpush2.bf16.msra.mxu0 0
      %609 = vmatprep.subr.bf16.mxu0 0
      %610 = vmatpush2.bf16.msra.mxu0 0
      %611 = vmatprep.mubr.bf16.mxu0 0
      %612 = vmatmul.mubr.bf16.gmra.mxu0 %v371
      %v613 = vpop.f32.mrf.mxu0
      %v614 = vadd.f32 0.0, %v613
      %v615 = vpop.f32.mrf.mxu0
      %v616 = vadd.f32 0.0, %v615
      %v617 = vpop.f32.mrf.mxu0
      %v618 = vadd.f32 0.0, %v617
      %v619 = vpop.f32.mrf.mxu0
      %v620 = vadd.f32 0.0, %v619
      %621 = vmatprep.mubr.bf16.mxu0 0
      %622 = vmatmul.mubr.bf16.gmra.mxu0 %v372
      %v623 = vpop.f32.mrf.mxu0
      %v624 = vadd.f32 0.0, %v623
      %v625 = vpop.f32.mrf.mxu0
      %v626 = vadd.f32 0.0, %v625
      %v627 = vpop.f32.mrf.mxu0
      %v628 = vadd.f32 0.0, %v627
      %v629 = vpop.f32.mrf.mxu0
      %v630 = vadd.f32 0.0, %v629
      %631 = vmatprep.mubr.bf16.mxu0 0
      %632 = vmatmul.mubr.bf16.gmra.mxu0 %v373
      %v633 = vpop.f32.mrf.mxu0
      %v634 = vadd.f32 0.0, %v633
      %v635 = vpop.f32.mrf.mxu0
      %v636 = vadd.f32 0.0, %v635
      %v637 = vpop.f32.mrf.mxu0
      %v638 = vadd.f32 0.0, %v637
      %v639 = vpop.f32.mrf.mxu0
      %v640 = vadd.f32 0.0, %v639
      %641 = vmatprep.mubr.bf16.mxu0 0
      %642 = vmatmul.mubr.bf16.gmra.mxu0 %v374
      %v643 = vpop.f32.mrf.mxu0
      %v644 = vadd.f32 0.0, %v643
      %v645 = vpop.f32.mrf.mxu0
      %v646 = vadd.f32 0.0, %v645
      %v647 = vpop.f32.mrf.mxu0
      %v648 = vadd.f32 0.0, %v647
      %v649 = vpop.f32.mrf.mxu0
      %v650 = vadd.f32 0.0, %v649
      %651 = vmatprep.mubr.bf16.mxu0 0
      %652 = vmatmul.mubr.bf16.gmra.mxu0 %v375
      %v653 = vpop.f32.mrf.mxu0
      %v654 = vadd.f32 0.0, %v653
      %v655 = vpop.f32.mrf.mxu0
      %v656 = vadd.f32 0.0, %v655
      %v657 = vpop.f32.mrf.mxu0
      %v658 = vadd.f32 0.0, %v657
      %v659 = vpop.f32.mrf.mxu0
      %v660 = vadd.f32 0.0, %v659
      %661 = vmatprep.mubr.bf16.mxu0 0
      %662 = vmatmul.mubr.bf16.gmra.mxu0 %v376
      %v663 = vpop.f32.mrf.mxu0
      %v664 = vadd.f32 0.0, %v663
      %v665 = vpop.f32.mrf.mxu0
      %v666 = vadd.f32 0.0, %v665
      %v667 = vpop.f32.mrf.mxu0
      %v668 = vadd.f32 0.0, %v667
      %v669 = vpop.f32.mrf.mxu0
      %v670 = vadd.f32 0.0, %v669
      %671 = vmatprep.mubr.bf16.mxu0 0
      %672 = vmatmul.mubr.bf16.gmra.mxu0 %v377
      %v673 = vpop.f32.mrf.mxu0
      %v674 = vadd.f32 0.0, %v673
      %v675 = vpop.f32.mrf.mxu0
      %v676 = vadd.f32 0.0, %v675
      %v677 = vpop.f32.mrf.mxu0
      %v678 = vadd.f32 0.0, %v677
      %v679 = vpop.f32.mrf.mxu0
      %v680 = vadd.f32 0.0, %v679
      %681 = vmatprep.mubr.bf16.mxu0 0
      %682 = vmatmul.mubr.bf16.gmra.mxu0 %v378
      %v683 = vpop.f32.mrf.mxu0
      %v684 = vadd.f32 0.0, %v683
      %v685 = vpop.f32.mrf.mxu0
      %v686 = vadd.f32 0.0, %v685
      %v687 = vpop.f32.mrf.mxu0
      %v688 = vadd.f32 0.0, %v687
      %v689 = vpop.f32.mrf.mxu0
      %v690 = vadd.f32 0.0, %v689
      %691 = vmatprep.mubr.bf16.mxu0 0
      %692 = vmatmul.mubr.bf16.gmra.mxu0 %v379
      %v693 = vpop.f32.mrf.mxu0
      %v694 = vadd.f32 0.0, %v693
      %v695 = vpop.f32.mrf.mxu0
      %v696 = vadd.f32 0.0, %v695
      %v697 = vpop.f32.mrf.mxu0
      %v698 = vadd.f32 0.0, %v697
      %v699 = vpop.f32.mrf.mxu0
      %v700 = vadd.f32 0.0, %v699
      %701 = vmatprep.mubr.bf16.mxu0 0
      %702 = vmatmul.mubr.bf16.gmra.mxu0 %v380
      %v703 = vpop.f32.mrf.mxu0
      %v704 = vadd.f32 0.0, %v703
      %v705 = vpop.f32.mrf.mxu0
      %v706 = vadd.f32 0.0, %v705
      %v707 = vpop.f32.mrf.mxu0
      %v708 = vadd.f32 0.0, %v707
      %v709 = vpop.f32.mrf.mxu0
      %v710 = vadd.f32 0.0, %v709
      %711 = vmatprep.mubr.bf16.mxu0 0
      %712 = vmatmul.mubr.bf16.gmra.mxu0 %v381
      %v713 = vpop.f32.mrf.mxu0
      %v714 = vadd.f32 0.0, %v713
      %v715 = vpop.f32.mrf.mxu0
      %v716 = vadd.f32 0.0, %v715
      %v717 = vpop.f32.mrf.mxu0
      %v718 = vadd.f32 0.0, %v717
      %v719 = vpop.f32.mrf.mxu0
      %v720 = vadd.f32 0.0, %v719
      %721 = vmatprep.mubr.bf16.mxu0 0
      %722 = vmatmul.mubr.bf16.gmra.mxu0 %v382
      %v723 = vpop.f32.mrf.mxu0
      %v724 = vadd.f32 0.0, %v723
      %v725 = vpop.f32.mrf.mxu0
      %v726 = vadd.f32 0.0, %v725
      %v727 = vpop.f32.mrf.mxu0
      %v728 = vadd.f32 0.0, %v727
      %v729 = vpop.f32.mrf.mxu0
      %v730 = vadd.f32 0.0, %v729
      %731 = vmatprep.mubr.bf16.mxu0 0
      %732 = vmatmul.mubr.bf16.gmra.mxu0 %v383
      %v733 = vpop.f32.mrf.mxu0
      %v734 = vadd.f32 0.0, %v733
      %v735 = vpop.f32.mrf.mxu0
      %v736 = vadd.f32 0.0, %v735
      %v737 = vpop.f32.mrf.mxu0
      %v738 = vadd.f32 0.0, %v737
      %v739 = vpop.f32.mrf.mxu0
      %v740 = vadd.f32 0.0, %v739
      %741 = vmatprep.mubr.bf16.mxu0 0
      %742 = vmatmul.mubr.bf16.gmra.mxu0 %v384
      %v743 = vpop.f32.mrf.mxu0
      %v744 = vadd.f32 0.0, %v743
      %v745 = vpop.f32.mrf.mxu0
      %v746 = vadd.f32 0.0, %v745
      %v747 = vpop.f32.mrf.mxu0
      %v748 = vadd.f32 0.0, %v747
      %v749 = vpop.f32.mrf.mxu0
      %v750 = vadd.f32 0.0, %v749
      %751 = vmatprep.mubr.bf16.mxu0 0
      %752 = vmatmul.mubr.bf16.gmra.mxu0 %v385
      %v753 = vpop.f32.mrf.mxu0
      %v754 = vadd.f32 0.0, %v753
      %v755 = vpop.f32.mrf.mxu0
      %v756 = vadd.f32 0.0, %v755
      %v757 = vpop.f32.mrf.mxu0
      %v758 = vadd.f32 0.0, %v757
      %v759 = vpop.f32.mrf.mxu0
      %v760 = vadd.f32 0.0, %v759
      %761 = vmatprep.mubr.bf16.mxu0 0
      %762 = vmatmul.mubr.bf16.gmra.mxu0 %v386
      %v763 = vpop.f32.mrf.mxu0
      %v764 = vadd.f32 0.0, %v763
      %v765 = vpop.f32.mrf.mxu0
      %v766 = vadd.f32 0.0, %v765
      %v767 = vpop.f32.mrf.mxu0
      %v768 = vadd.f32 0.0, %v767
      %v769 = vpop.f32.mrf.mxu0
      %v770 = vadd.f32 0.0, %v769
      %771 = vdwg.mxu0
      %772 = vmatprep.subr.bf16.mxu0 %v546
      %773 = vmatpush1.bf16.msra.mxu0 %v545
      %774 = vmatprep.subr.bf16.mxu0 %v542
      %775 = vmatpush1.bf16.msra.mxu0 %v541
      %776 = vmatprep.subr.bf16.mxu0 %v538
      %777 = vmatpush1.bf16.msra.mxu0 %v537
      %778 = vmatprep.subr.bf16.mxu0 %v534
      %779 = vmatpush1.bf16.msra.mxu0 %v533
      %780 = vmatprep.subr.bf16.mxu0 %v530
      %781 = vmatpush1.bf16.msra.mxu0 %v529
      %782 = vmatprep.subr.bf16.mxu0 %v526
      %783 = vmatpush1.bf16.msra.mxu0 %v525
      %784 = vmatprep.subr.bf16.mxu0 %v522
      %785 = vmatpush1.bf16.msra.mxu0 %v521
      %786 = vmatprep.subr.bf16.mxu0 %v518
      %787 = vmatpush1.bf16.msra.mxu0 %v517
      %788 = vmatprep.subr.bf16.mxu0 0
      %789 = vmatpush2.bf16.msra.mxu0 0
      %790 = vmatprep.subr.bf16.mxu0 0
      %791 = vmatpush2.bf16.msra.mxu0 0
      %792 = vmatprep.subr.bf16.mxu0 0
      %793 = vmatpush2.bf16.msra.mxu0 0
      %794 = vmatprep.subr.bf16.mxu0 0
      %795 = vmatpush2.bf16.msra.mxu0 0
      %796 = vmatprep.subr.bf16.mxu0 0
      %797 = vmatpush2.bf16.msra.mxu0 0
      %798 = vmatprep.subr.bf16.mxu0 0
      %799 = vmatpush2.bf16.msra.mxu0 0
      %800 = vmatprep.subr.bf16.mxu0 0
      %801 = vmatpush2.bf16.msra.mxu0 0
      %802 = vmatprep.subr.bf16.mxu0 0
      %803 = vmatpush2.bf16.msra.mxu0 0
      %804 = vmatprep.mubr.bf16.mxu0 0
      %805 = vmatmul.mubr.bf16.gmra.mxu0 %v371
      %v806 = vpop.f32.mrf.mxu0
      %v807 = vadd.f32 0.0, %v806
      %v808 = vpop.f32.mrf.mxu0
      %v809 = vadd.f32 0.0, %v808
      %v810 = vpop.f32.mrf.mxu0
      %v811 = vadd.f32 0.0, %v810
      %v812 = vpop.f32.mrf.mxu0
      %v813 = vadd.f32 0.0, %v812
      %814 = vmatprep.mubr.bf16.mxu0 0
      %815 = vmatmul.mubr.bf16.gmra.mxu0 %v372
      %v816 = vpop.f32.mrf.mxu0
      %v817 = vadd.f32 0.0, %v816
      %v818 = vpop.f32.mrf.mxu0
      %v819 = vadd.f32 0.0, %v818
      %v820 = vpop.f32.mrf.mxu0
      %v821 = vadd.f32 0.0, %v820
      %v822 = vpop.f32.mrf.mxu0
      %v823 = vadd.f32 0.0, %v822
      %824 = vmatprep.mubr.bf16.mxu0 0
      %825 = vmatmul.mubr.bf16.gmra.mxu0 %v373
      %v826 = vpop.f32.mrf.mxu0
      %v827 = vadd.f32 0.0, %v826
      %v828 = vpop.f32.mrf.mxu0
      %v829 = vadd.f32 0.0, %v828
      %v830 = vpop.f32.mrf.mxu0
      %v831 = vadd.f32 0.0, %v830
      %v832 = vpop.f32.mrf.mxu0
      %v833 = vadd.f32 0.0, %v832
      %834 = vmatprep.mubr.bf16.mxu0 0
      %835 = vmatmul.mubr.bf16.gmra.mxu0 %v374
      %v836 = vpop.f32.mrf.mxu0
      %v837 = vadd.f32 0.0, %v836
      %v838 = vpop.f32.mrf.mxu0
      %v839 = vadd.f32 0.0, %v838
      %v840 = vpop.f32.mrf.mxu0
      %v841 = vadd.f32 0.0, %v840
      %v842 = vpop.f32.mrf.mxu0
      %v843 = vadd.f32 0.0, %v842
      %844 = vmatprep.mubr.bf16.mxu0 0
      %845 = vmatmul.mubr.bf16.gmra.mxu0 %v375
      %v846 = vpop.f32.mrf.mxu0
      %v847 = vadd.f32 0.0, %v846
      %v848 = vpop.f32.mrf.mxu0
      %v849 = vadd.f32 0.0, %v848
      %v850 = vpop.f32.mrf.mxu0
      %v851 = vadd.f32 0.0, %v850
      %v852 = vpop.f32.mrf.mxu0
      %v853 = vadd.f32 0.0, %v852
      %854 = vmatprep.mubr.bf16.mxu0 0
      %855 = vmatmul.mubr.bf16.gmra.mxu0 %v376
      %v856 = vpop.f32.mrf.mxu0
      %v857 = vadd.f32 0.0, %v856
      %v858 = vpop.f32.mrf.mxu0
      %v859 = vadd.f32 0.0, %v858
      %v860 = vpop.f32.mrf.mxu0
      %v861 = vadd.f32 0.0, %v860
      %v862 = vpop.f32.mrf.mxu0
      %v863 = vadd.f32 0.0, %v862
      %864 = vmatprep.mubr.bf16.mxu0 0
      %865 = vmatmul.mubr.bf16.gmra.mxu0 %v377
      %v866 = vpop.f32.mrf.mxu0
      %v867 = vadd.f32 0.0, %v866
      %v868 = vpop.f32.mrf.mxu0
      %v869 = vadd.f32 0.0, %v868
      %v870 = vpop.f32.mrf.mxu0
      %v871 = vadd.f32 0.0, %v870
      %v872 = vpop.f32.mrf.mxu0
      %v873 = vadd.f32 0.0, %v872
      %874 = vmatprep.mubr.bf16.mxu0 0
      %875 = vmatmul.mubr.bf16.gmra.mxu0 %v378
      %v876 = vpop.f32.mrf.mxu0
      %v877 = vadd.f32 0.0, %v876
      %v878 = vpop.f32.mrf.mxu0
      %v879 = vadd.f32 0.0, %v878
      %v880 = vpop.f32.mrf.mxu0
      %v881 = vadd.f32 0.0, %v880
      %v882 = vpop.f32.mrf.mxu0
      %v883 = vadd.f32 0.0, %v882
      %884 = vmatprep.mubr.bf16.mxu0 0
      %885 = vmatmul.mubr.bf16.gmra.mxu0 %v379
      %v886 = vpop.f32.mrf.mxu0
      %v887 = vadd.f32 0.0, %v886
      %v888 = vpop.f32.mrf.mxu0
      %v889 = vadd.f32 0.0, %v888
      %v890 = vpop.f32.mrf.mxu0
      %v891 = vadd.f32 0.0, %v890
      %v892 = vpop.f32.mrf.mxu0
      %v893 = vadd.f32 0.0, %v892
      %894 = vmatprep.mubr.bf16.mxu0 0
      %895 = vmatmul.mubr.bf16.gmra.mxu0 %v380
      %v896 = vpop.f32.mrf.mxu0
      %v897 = vadd.f32 0.0, %v896
      %v898 = vpop.f32.mrf.mxu0
      %v899 = vadd.f32 0.0, %v898
      %v900 = vpop.f32.mrf.mxu0
      %v901 = vadd.f32 0.0, %v900
      %v902 = vpop.f32.mrf.mxu0
      %v903 = vadd.f32 0.0, %v902
      %904 = vmatprep.mubr.bf16.mxu0 0
      %905 = vmatmul.mubr.bf16.gmra.mxu0 %v381
      %v906 = vpop.f32.mrf.mxu0
      %v907 = vadd.f32 0.0, %v906
      %v908 = vpop.f32.mrf.mxu0
      %v909 = vadd.f32 0.0, %v908
      %v910 = vpop.f32.mrf.mxu0
      %v911 = vadd.f32 0.0, %v910
      %v912 = vpop.f32.mrf.mxu0
      %v913 = vadd.f32 0.0, %v912
      %914 = vmatprep.mubr.bf16.mxu0 0
      %915 = vmatmul.mubr.bf16.gmra.mxu0 %v382
      %v916 = vpop.f32.mrf.mxu0
      %v917 = vadd.f32 0.0, %v916
      %v918 = vpop.f32.mrf.mxu0
      %v919 = vadd.f32 0.0, %v918
      %v920 = vpop.f32.mrf.mxu0
      %v921 = vadd.f32 0.0, %v920
      %v922 = vpop.f32.mrf.mxu0
      %v923 = vadd.f32 0.0, %v922
      %924 = vmatprep.mubr.bf16.mxu0 0
      %925 = vmatmul.mubr.bf16.gmra.mxu0 %v383
      %v926 = vpop.f32.mrf.mxu0
      %v927 = vadd.f32 0.0, %v926
      %v928 = vpop.f32.mrf.mxu0
      %v929 = vadd.f32 0.0, %v928
      %v930 = vpop.f32.mrf.mxu0
      %v931 = vadd.f32 0.0, %v930
      %v932 = vpop.f32.mrf.mxu0
      %v933 = vadd.f32 0.0, %v932
      %934 = vmatprep.mubr.bf16.mxu0 0
      %935 = vmatmul.mubr.bf16.gmra.mxu0 %v384
      %v936 = vpop.f32.mrf.mxu0
      %v937 = vadd.f32 0.0, %v936
      %v938 = vpop.f32.mrf.mxu0
      %v939 = vadd.f32 0.0, %v938
      %v940 = vpop.f32.mrf.mxu0
      %v941 = vadd.f32 0.0, %v940
      %v942 = vpop.f32.mrf.mxu0
      %v943 = vadd.f32 0.0, %v942
      %944 = vmatprep.mubr.bf16.mxu0 0
      %945 = vmatmul.mubr.bf16.gmra.mxu0 %v385
      %v946 = vpop.f32.mrf.mxu0
      %v947 = vadd.f32 0.0, %v946
      %v948 = vpop.f32.mrf.mxu0
      %v949 = vadd.f32 0.0, %v948
      %v950 = vpop.f32.mrf.mxu0
      %v951 = vadd.f32 0.0, %v950
      %v952 = vpop.f32.mrf.mxu0
      %v953 = vadd.f32 0.0, %v952
      %954 = vmatprep.mubr.bf16.mxu0 0
      %955 = vmatmul.mubr.bf16.gmra.mxu0 %v386
      %v956 = vpop.f32.mrf.mxu0
      %v957 = vadd.f32 0.0, %v956
      %v958 = vpop.f32.mrf.mxu0
      %v959 = vadd.f32 0.0, %v958
      %v960 = vpop.f32.mrf.mxu0
      %v961 = vadd.f32 0.0, %v960
      %v962 = vpop.f32.mrf.mxu0
      %v963 = vadd.f32 0.0, %v962
      %964 = vdwg.mxu0
      %965 = vst [vmem:[%s226] sm:$0xff] %v614
      %966 = vst [vmem:[%s226 + $0x8] sm:$0xff] %v616
      %967 = vst [vmem:[%s226 + $0x10] sm:$0xff] %v807
      %968 = vst [vmem:[%s226 + $0x18] sm:$0xff] %v809
      %969 = vst [vmem:[%s226 + $0x20] sm:$0xff] %v618
      %970 = vst [vmem:[%s226 + $0x28] sm:$0xff] %v620
      %971 = vst [vmem:[%s226 + $0x30] sm:$0xff] %v811
      %972 = vst [vmem:[%s226 + $0x38] sm:$0xff] %v813
      %973 = vst [vmem:[%s226 + $0x40] sm:$0xff] %v624
      %974 = vst [vmem:[%s226 + $0x48] sm:$0xff] %v626
      %975 = vst [vmem:[%s226 + $0x50] sm:$0xff] %v817
      %976 = vst [vmem:[%s226 + $0x58] sm:$0xff] %v819
      %977 = vst [vmem:[%s226 + $0x60] sm:$0xff] %v628
      %978 = vst [vmem:[%s226 + $0x68] sm:$0xff] %v630
      %979 = vst [vmem:[%s226 + $0x70] sm:$0xff] %v821
      %980 = vst [vmem:[%s226 + $0x78] sm:$0xff] %v823
      %981 = vst [vmem:[%s226 + $0x80] sm:$0xff] %v634
      %982 = vst [vmem:[%s226 + $0x88] sm:$0xff] %v636
      %983 = vst [vmem:[%s226 + $0x90] sm:$0xff] %v827
      %984 = vst [vmem:[%s226 + $0x98] sm:$0xff] %v829
      %985 = vst [vmem:[%s226 + $0xa0] sm:$0xff] %v638
      %986 = vst [vmem:[%s226 + $0xa8] sm:$0xff] %v640
      %987 = vst [vmem:[%s226 + $0xb0] sm:$0xff] %v831
      %988 = vst [vmem:[%s226 + $0xb8] sm:$0xff] %v833
      %989 = vst [vmem:[%s226 + $0xc0] sm:$0xff] %v644
      %990 = vst [vmem:[%s226 + $0xc8] sm:$0xff] %v646
      %991 = vst [vmem:[%s226 + $0xd0] sm:$0xff] %v837
      %992 = vst [vmem:[%s226 + $0xd8] sm:$0xff] %v839
      %993 = vst [vmem:[%s226 + $0xe0] sm:$0xff] %v648
      %994 = vst [vmem:[%s226 + $0xe8] sm:$0xff] %v650
      %995 = vst [vmem:[%s226 + $0xf0] sm:$0xff] %v841
      %996 = vst [vmem:[%s226 + $0xf8] sm:$0xff] %v843
      %997 = vst [vmem:[%s226 + $0x100] sm:$0xff] %v654
      %998 = vst [vmem:[%s226 + $0x108] sm:$0xff] %v656
      %999 = vst [vmem:[%s226 + $0x110] sm:$0xff] %v847
      %1000 = vst [vmem:[%s226 + $0x118] sm:$0xff] %v849
      %1001 = vst [vmem:[%s226 + $0x120] sm:$0xff] %v658
      %1002 = vst [vmem:[%s226 + $0x128] sm:$0xff] %v660
      %1003 = vst [vmem:[%s226 + $0x130] sm:$0xff] %v851
      %1004 = vst [vmem:[%s226 + $0x138] sm:$0xff] %v853
      %1005 = vst [vmem:[%s226 + $0x140] sm:$0xff] %v664
      %1006 = vst [vmem:[%s226 + $0x148] sm:$0xff] %v666
      %1007 = vst [vmem:[%s226 + $0x150] sm:$0xff] %v857
      %1008 = vst [vmem:[%s226 + $0x158] sm:$0xff] %v859
      %1009 = vst [vmem:[%s226 + $0x160] sm:$0xff] %v668
      %1010 = vst [vmem:[%s226 + $0x168] sm:$0xff] %v670
      %1011 = vst [vmem:[%s226 + $0x170] sm:$0xff] %v861
      %1012 = vst [vmem:[%s226 + $0x178] sm:$0xff] %v863
      %1013 = vst [vmem:[%s226 + $0x180] sm:$0xff] %v674
      %1014 = vst [vmem:[%s226 + $0x188] sm:$0xff] %v676
      %1015 = vst [vmem:[%s226 + $0x190] sm:$0xff] %v867
      %1016 = vst [vmem:[%s226 + $0x198] sm:$0xff] %v869
      %1017 = vst [vmem:[%s226 + $0x1a0] sm:$0xff] %v678
      %1018 = vst [vmem:[%s226 + $0x1a8] sm:$0xff] %v680
      %1019 = vst [vmem:[%s226 + $0x1b0] sm:$0xff] %v871
      %1020 = vst [vmem:[%s226 + $0x1b8] sm:$0xff] %v873
      %1021 = vst [vmem:[%s226 + $0x1c0] sm:$0xff] %v684
      %1022 = vst [vmem:[%s226 + $0x1c8] sm:$0xff] %v686
      %1023 = vst [vmem:[%s226 + $0x1d0] sm:$0xff] %v877
      %1024 = vst [vmem:[%s226 + $0x1d8] sm:$0xff] %v879
      %1025 = vst [vmem:[%s226 + $0x1e0] sm:$0xff] %v688
      %1026 = vst [vmem:[%s226 + $0x1e8] sm:$0xff] %v690
      %1027 = vst [vmem:[%s226 + $0x1f0] sm:$0xff] %v881
      %1028 = vst [vmem:[%s226 + $0x1f8] sm:$0xff] %v883
      %1029 = vst [vmem:[%s226 + $0x200] sm:$0xff] %v694
      %1030 = vst [vmem:[%s226 + $0x208] sm:$0xff] %v696
      %1031 = vst [vmem:[%s226 + $0x210] sm:$0xff] %v887
      %1032 = vst [vmem:[%s226 + $0x218] sm:$0xff] %v889
      %1033 = vst [vmem:[%s226 + $0x220] sm:$0xff] %v698
      %1034 = vst [vmem:[%s226 + $0x228] sm:$0xff] %v700
      %1035 = vst [vmem:[%s226 + $0x230] sm:$0xff] %v891
      %1036 = vst [vmem:[%s226 + $0x238] sm:$0xff] %v893
      %1037 = vst [vmem:[%s226 + $0x240] sm:$0xff] %v704
      %1038 = vst [vmem:[%s226 + $0x248] sm:$0xff] %v706
      %1039 = vst [vmem:[%s226 + $0x250] sm:$0xff] %v897
      %1040 = vst [vmem:[%s226 + $0x258] sm:$0xff] %v899
      %1041 = vst [vmem:[%s226 + $0x260] sm:$0xff] %v708
      %1042 = vst [vmem:[%s226 + $0x268] sm:$0xff] %v710
      %1043 = vst [vmem:[%s226 + $0x270] sm:$0xff] %v901
      %1044 = vst [vmem:[%s226 + $0x278] sm:$0xff] %v903
      %1045 = vst [vmem:[%s226 + $0x280] sm:$0xff] %v714
      %1046 = vst [vmem:[%s226 + $0x288] sm:$0xff] %v716
      %1047 = vst [vmem:[%s226 + $0x290] sm:$0xff] %v907
      %1048 = vst [vmem:[%s226 + $0x298] sm:$0xff] %v909
      %1049 = vst [vmem:[%s226 + $0x2a0] sm:$0xff] %v718
      %1050 = vst [vmem:[%s226 + $0x2a8] sm:$0xff] %v720
      %1051 = vst [vmem:[%s226 + $0x2b0] sm:$0xff] %v911
      %1052 = vst [vmem:[%s226 + $0x2b8] sm:$0xff] %v913
      %1053 = vst [vmem:[%s226 + $0x2c0] sm:$0xff] %v724
      %1054 = vst [vmem:[%s226 + $0x2c8] sm:$0xff] %v726
      %1055 = vst [vmem:[%s226 + $0x2d0] sm:$0xff] %v917
      %1056 = vst [vmem:[%s226 + $0x2d8] sm:$0xff] %v919
      %1057 = vst [vmem:[%s226 + $0x2e0] sm:$0xff] %v728
      %1058 = vst [vmem:[%s226 + $0x2e8] sm:$0xff] %v730
      %1059 = vst [vmem:[%s226 + $0x2f0] sm:$0xff] %v921
      %1060 = vst [vmem:[%s226 + $0x2f8] sm:$0xff] %v923
      %1061 = vst [vmem:[%s226 + $0x300] sm:$0xff] %v734
      %1062 = vst [vmem:[%s226 + $0x308] sm:$0xff] %v736
      %1063 = vst [vmem:[%s226 + $0x310] sm:$0xff] %v927
      %1064 = vst [vmem:[%s226 + $0x318] sm:$0xff] %v929
      %1065 = vst [vmem:[%s226 + $0x320] sm:$0xff] %v738
      %1066 = vst [vmem:[%s226 + $0x328] sm:$0xff] %v740
      %1067 = vst [vmem:[%s226 + $0x330] sm:$0xff] %v931
      %1068 = vst [vmem:[%s226 + $0x338] sm:$0xff] %v933
      %1069 = vst [vmem:[%s226 + $0x340] sm:$0xff] %v744
      %1070 = vst [vmem:[%s226 + $0x348] sm:$0xff] %v746
      %1071 = vst [vmem:[%s226 + $0x350] sm:$0xff] %v937
      %1072 = vst [vmem:[%s226 + $0x358] sm:$0xff] %v939
      %1073 = vst [vmem:[%s226 + $0x360] sm:$0xff] %v748
      %1074 = vst [vmem:[%s226 + $0x368] sm:$0xff] %v750
      %1075 = vst [vmem:[%s226 + $0x370] sm:$0xff] %v941
      %1076 = vst [vmem:[%s226 + $0x378] sm:$0xff] %v943
      %1077 = vst [vmem:[%s226 + $0x380] sm:$0xff] %v754
      %1078 = vst [vmem:[%s226 + $0x388] sm:$0xff] %v756
      %1079 = vst [vmem:[%s226 + $0x390] sm:$0xff] %v947
      %1080 = vst [vmem:[%s226 + $0x398] sm:$0xff] %v949
      %1081 = vst [vmem:[%s226 + $0x3a0] sm:$0xff] %v758
      %1082 = vst [vmem:[%s226 + $0x3a8] sm:$0xff] %v760
      %1083 = vst [vmem:[%s226 + $0x3b0] sm:$0xff] %v951
      %1084 = vst [vmem:[%s226 + $0x3b8] sm:$0xff] %v953
      %1085 = vst [vmem:[%s226 + $0x3c0] sm:$0xff] %v764
      %1086 = vst [vmem:[%s226 + $0x3c8] sm:$0xff] %v766
      %1087 = vst [vmem:[%s226 + $0x3d0] sm:$0xff] %v957
      %1088 = vst [vmem:[%s226 + $0x3d8] sm:$0xff] %v959
      %1089 = vst [vmem:[%s226 + $0x3e0] sm:$0xff] %v768
      %1090 = vst [vmem:[%s226 + $0x3e8] sm:$0xff] %v770
      %1091 = vst [vmem:[%s226 + $0x3f0] sm:$0xff] %v961
      %1092 = vst [vmem:[%s226 + $0x3f8] sm:$0xff] %v963
      %p1093 = scmp.eq.s32.totalorder %s17, 0
      // Predicated region
      $region37: #{_lambda_.6} parent=35 // pred_check
        %p1094 = pneg %p1093
      $region38: #{_lambda_.6} parent=35 // pred_check_branch
        %1096 = sbr.rel (%p1094) target = $region40
      $region39: #{_lambda_.6} parent=35 // pred_region
        %1097 = vst [vmem:[%s5] sm:$0xff] 0.0
      $region40: #{_lambda_.6} parent=35 // pred_fallthru
        _
      %v1098 = vld [vmem:[%s5] sm:$0xff]
      %v1099 = vadd.f32 %v614, %v618
      %v1100 = vadd.f32 %v1099, %v624
      %v1101 = vadd.f32 %v1100, %v628
      %v1102 = vadd.f32 %v1101, %v634
      %v1103 = vadd.f32 %v1102, %v638
      %v1104 = vadd.f32 %v1103, %v644
      %v1105 = vadd.f32 %v1104, %v648
      %v1106 = vadd.f32 %v1105, %v654
      %v1107 = vadd.f32 %v1106, %v658
      %v1108 = vadd.f32 %v1107, %v664
      %v1109 = vadd.f32 %v1108, %v668
      %v1110 = vadd.f32 %v1109, %v674
      %v1111 = vadd.f32 %v1110, %v678
      %v1112 = vadd.f32 %v1111, %v684
      %v1113 = vadd.f32 %v1112, %v688
      %v1114 = vadd.f32 %v1113, %v694
      %v1115 = vadd.f32 %v1114, %v698
      %v1116 = vadd.f32 %v1115, %v704
      %v1117 = vadd.f32 %v1116, %v708
      %v1118 = vadd.f32 %v1117, %v714
      %v1119 = vadd.f32 %v1118, %v718
      %v1120 = vadd.f32 %v1119, %v724
      %v1121 = vadd.f32 %v1120, %v728
      %v1122 = vadd.f32 %v1121, %v734
      %v1123 = vadd.f32 %v1122, %v738
      %v1124 = vadd.f32 %v1123, %v744
      %v1125 = vadd.f32 %v1124, %v748
      %v1126 = vadd.f32 %v1125, %v754
      %v1127 = vadd.f32 %v1126, %v758
      %v1128 = vadd.f32 %v1127, %v764
      %v1129 = vadd.f32 %v1128, %v768
      %v1130 = vrot.slane %v1129, 4
      %v1131 = vadd.f32 %v1129, %v1130
      %v1132 = vrot.slane %v1131, 2
      %v1133 = vadd.f32 %v1131, %v1132
      %v1134 = vrot.slane %v1133, 1
      %v1135 = vadd.f32 %v1133, %v1134
      %v1136 = vadd.f32 %v616, %v620
      %v1137 = vadd.f32 %v1136, %v626
      %v1138 = vadd.f32 %v1137, %v630
      %v1139 = vadd.f32 %v1138, %v636
      %v1140 = vadd.f32 %v1139, %v640
      %v1141 = vadd.f32 %v1140, %v646
      %v1142 = vadd.f32 %v1141, %v650
      %v1143 = vadd.f32 %v1142, %v656
      %v1144 = vadd.f32 %v1143, %v660
      %v1145 = vadd.f32 %v1144, %v666
      %v1146 = vadd.f32 %v1145, %v670
      %v1147 = vadd.f32 %v1146, %v676
      %v1148 = vadd.f32 %v1147, %v680
      %v1149 = vadd.f32 %v1148, %v686
      %v1150 = vadd.f32 %v1149, %v690
      %v1151 = vadd.f32 %v1150, %v696
      %v1152 = vadd.f32 %v1151, %v700
      %v1153 = vadd.f32 %v1152, %v706
      %v1154 = vadd.f32 %v1153, %v710
      %v1155 = vadd.f32 %v1154, %v716
      %v1156 = vadd.f32 %v1155, %v720
      %v1157 = vadd.f32 %v1156, %v726
      %v1158 = vadd.f32 %v1157, %v730
      %v1159 = vadd.f32 %v1158, %v736
      %v1160 = vadd.f32 %v1159, %v740
      %v1161 = vadd.f32 %v1160, %v746
      %v1162 = vadd.f32 %v1161, %v750
      %v1163 = vadd.f32 %v1162, %v756
      %v1164 = vadd.f32 %v1163, %v760
      %v1165 = vadd.f32 %v1164, %v766
      %v1166 = vadd.f32 %v1165, %v770
      %v1167 = vrot.slane %v1166, 4
      %v1168 = vadd.f32 %v1166, %v1167
      %v1169 = vrot.slane %v1168, 2
      %v1170 = vadd.f32 %v1168, %v1169
      %v1171 = vrot.slane %v1170, 1
      %v1172 = vadd.f32 %v1170, %v1171
      %v1173 = vadd.f32 %v807, %v811
      %v1174 = vadd.f32 %v1173, %v817
      %v1175 = vadd.f32 %v1174, %v821
      %v1176 = vadd.f32 %v1175, %v827
      %v1177 = vadd.f32 %v1176, %v831
      %v1178 = vadd.f32 %v1177, %v837
      %v1179 = vadd.f32 %v1178, %v841
      %v1180 = vadd.f32 %v1179, %v847
      %v1181 = vadd.f32 %v1180, %v851
      %v1182 = vadd.f32 %v1181, %v857
      %v1183 = vadd.f32 %v1182, %v861
      %v1184 = vadd.f32 %v1183, %v867
      %v1185 = vadd.f32 %v1184, %v871
      %v1186 = vadd.f32 %v1185, %v877
      %v1187 = vadd.f32 %v1186, %v881
      %v1188 = vadd.f32 %v1187, %v887
      %v1189 = vadd.f32 %v1188, %v891
      %v1190 = vadd.f32 %v1189, %v897
      %v1191 = vadd.f32 %v1190, %v901
      %v1192 = vadd.f32 %v1191, %v907
      %v1193 = vadd.f32 %v1192, %v911
      %v1194 = vadd.f32 %v1193, %v917
      %v1195 = vadd.f32 %v1194, %v921
      %v1196 = vadd.f32 %v1195, %v927
      %v1197 = vadd.f32 %v1196, %v931
      %v1198 = vadd.f32 %v1197, %v937
      %v1199 = vadd.f32 %v1198, %v941
      %v1200 = vadd.f32 %v1199, %v947
      %v1201 = vadd.f32 %v1200, %v951
      %v1202 = vadd.f32 %v1201, %v957
      %v1203 = vadd.f32 %v1202, %v961
      %v1204 = vrot.slane %v1203, 4
      %v1205 = vadd.f32 %v1203, %v1204
      %v1206 = vrot.slane %v1205, 2
      %v1207 = vadd.f32 %v1205, %v1206
      %v1208 = vrot.slane %v1207, 1
      %v1209 = vadd.f32 %v1207, %v1208
      %v1210 = vadd.f32 %v809, %v813
      %v1211 = vadd.f32 %v1210, %v819
      %v1212 = vadd.f32 %v1211, %v823
      %v1213 = vadd.f32 %v1212, %v829
      %v1214 = vadd.f32 %v1213, %v833
      %v1215 = vadd.f32 %v1214, %v839
      %v1216 = vadd.f32 %v1215, %v843
      %v1217 = vadd.f32 %v1216, %v849
      %v1218 = vadd.f32 %v1217, %v853
      %v1219 = vadd.f32 %v1218, %v859
      %v1220 = vadd.f32 %v1219, %v863
      %v1221 = vadd.f32 %v1220, %v869
      %v1222 = vadd.f32 %v1221, %v873
      %v1223 = vadd.f32 %v1222, %v879
      %v1224 = vadd.f32 %v1223, %v883
      %v1225 = vadd.f32 %v1224, %v889
      %v1226 = vadd.f32 %v1225, %v893
      %v1227 = vadd.f32 %v1226, %v899
      %v1228 = vadd.f32 %v1227, %v903
      %v1229 = vadd.f32 %v1228, %v909
      %v1230 = vadd.f32 %v1229, %v913
      %v1231 = vadd.f32 %v1230, %v919
      %v1232 = vadd.f32 %v1231, %v923
      %v1233 = vadd.f32 %v1232, %v929
      %v1234 = vadd.f32 %v1233, %v933
      %v1235 = vadd.f32 %v1234, %v939
      %v1236 = vadd.f32 %v1235, %v943
      %v1237 = vadd.f32 %v1236, %v949
      %v1238 = vadd.f32 %v1237, %v953
      %v1239 = vadd.f32 %v1238, %v959
      %v1240 = vadd.f32 %v1239, %v963
      %v1241 = vrot.slane %v1240, 4
      %v1242 = vadd.f32 %v1240, %v1241
      %v1243 = vrot.slane %v1242, 2
      %v1244 = vadd.f32 %v1242, %v1243
      %v1245 = vrot.slane %v1244, 1
      %v1246 = vadd.f32 %v1244, %v1245
      %v1247 = vmul.f32 %v614, %v614
      %v1248 = vmul.f32 %v616, %v616
      %v1249 = vmul.f32 %v807, %v807
      %v1250 = vmul.f32 %v809, %v809
      %v1251 = vmul.f32 %v618, %v618
      %v1252 = vmul.f32 %v620, %v620
      %v1253 = vmul.f32 %v811, %v811
      %v1254 = vmul.f32 %v813, %v813
      %v1255 = vmul.f32 %v624, %v624
      %v1256 = vmul.f32 %v626, %v626
      %v1257 = vmul.f32 %v817, %v817
      %v1258 = vmul.f32 %v819, %v819
      %v1259 = vmul.f32 %v628, %v628
      %v1260 = vmul.f32 %v630, %v630
      %v1261 = vmul.f32 %v821, %v821
      %v1262 = vmul.f32 %v823, %v823
      %v1263 = vmul.f32 %v634, %v634
      %v1264 = vmul.f32 %v636, %v636
      %v1265 = vmul.f32 %v827, %v827
      %v1266 = vmul.f32 %v829, %v829
      %v1267 = vmul.f32 %v638, %v638
      %v1268 = vmul.f32 %v640, %v640
      %v1269 = vmul.f32 %v831, %v831
      %v1270 = vmul.f32 %v833, %v833
      %v1271 = vmul.f32 %v644, %v644
      %v1272 = vmul.f32 %v646, %v646
      %v1273 = vmul.f32 %v837, %v837
      %v1274 = vmul.f32 %v839, %v839
      %v1275 = vmul.f32 %v648, %v648
      %v1276 = vmul.f32 %v650, %v650
      %v1277 = vmul.f32 %v841, %v841
      %v1278 = vmul.f32 %v843, %v843
      %v1279 = vmul.f32 %v654, %v654
      %v1280 = vmul.f32 %v656, %v656
      %v1281 = vmul.f32 %v847, %v847
      %v1282 = vmul.f32 %v849, %v849
      %v1283 = vmul.f32 %v658, %v658
      %v1284 = vmul.f32 %v660, %v660
      %v1285 = vmul.f32 %v851, %v851
      %v1286 = vmul.f32 %v853, %v853
      %v1287 = vmul.f32 %v664, %v664
      %v1288 = vmul.f32 %v666, %v666
      %v1289 = vmul.f32 %v857, %v857
      %v1290 = vmul.f32 %v859, %v859
      %v1291 = vmul.f32 %v668, %v668
      %v1292 = vmul.f32 %v670, %v670
      %v1293 = vmul.f32 %v861, %v861
      %v1294 = vmul.f32 %v863, %v863
      %v1295 = vmul.f32 %v674, %v674
      %v1296 = vmul.f32 %v676, %v676
      %v1297 = vmul.f32 %v867, %v867
      %v1298 = vmul.f32 %v869, %v869
      %v1299 = vmul.f32 %v678, %v678
      %v1300 = vmul.f32 %v680, %v680
      %v1301 = vmul.f32 %v871, %v871
      %v1302 = vmul.f32 %v873, %v873
      %v1303 = vmul.f32 %v684, %v684
      %v1304 = vmul.f32 %v686, %v686
      %v1305 = vmul.f32 %v877, %v877
      %v1306 = vmul.f32 %v879, %v879
      %v1307 = vmul.f32 %v688, %v688
      %v1308 = vmul.f32 %v690, %v690
      %v1309 = vmul.f32 %v881, %v881
      %v1310 = vmul.f32 %v883, %v883
      %v1311 = vmul.f32 %v694, %v694
      %v1312 = vmul.f32 %v696, %v696
      %v1313 = vmul.f32 %v887, %v887
      %v1314 = vmul.f32 %v889, %v889
      %v1315 = vmul.f32 %v698, %v698
      %v1316 = vmul.f32 %v700, %v700
      %v1317 = vmul.f32 %v891, %v891
      %v1318 = vmul.f32 %v893, %v893
      %v1319 = vmul.f32 %v704, %v704
      %v1320 = vmul.f32 %v706, %v706
      %v1321 = vmul.f32 %v897, %v897
      %v1322 = vmul.f32 %v899, %v899
      %v1323 = vmul.f32 %v708, %v708
      %v1324 = vmul.f32 %v710, %v710
      %v1325 = vmul.f32 %v901, %v901
      %v1326 = vmul.f32 %v903, %v903
      %v1327 = vmul.f32 %v714, %v714
      %v1328 = vmul.f32 %v716, %v716
      %v1329 = vmul.f32 %v907, %v907
      %v1330 = vmul.f32 %v909, %v909
      %v1331 = vmul.f32 %v718, %v718
      %v1332 = vmul.f32 %v720, %v720
      %v1333 = vmul.f32 %v911, %v911
      %v1334 = vmul.f32 %v913, %v913
      %v1335 = vmul.f32 %v724, %v724
      %v1336 = vmul.f32 %v726, %v726
      %v1337 = vmul.f32 %v917, %v917
      %v1338 = vmul.f32 %v919, %v919
      %v1339 = vmul.f32 %v728, %v728
      %v1340 = vmul.f32 %v730, %v730
      %v1341 = vmul.f32 %v921, %v921
      %v1342 = vmul.f32 %v923, %v923
      %v1343 = vmul.f32 %v734, %v734
      %v1344 = vmul.f32 %v736, %v736
      %v1345 = vmul.f32 %v927, %v927
      %v1346 = vmul.f32 %v929, %v929
      %v1347 = vmul.f32 %v738, %v738
      %v1348 = vmul.f32 %v740, %v740
      %v1349 = vmul.f32 %v931, %v931
      %v1350 = vmul.f32 %v933, %v933
      %v1351 = vmul.f32 %v744, %v744
      %v1352 = vmul.f32 %v746, %v746
      %v1353 = vmul.f32 %v937, %v937
      %v1354 = vmul.f32 %v939, %v939
      %v1355 = vmul.f32 %v748, %v748
      %v1356 = vmul.f32 %v750, %v750
      %v1357 = vmul.f32 %v941, %v941
      %v1358 = vmul.f32 %v943, %v943
      %v1359 = vmul.f32 %v754, %v754
      %v1360 = vmul.f32 %v756, %v756
      %v1361 = vmul.f32 %v947, %v947
      %v1362 = vmul.f32 %v949, %v949
      %v1363 = vmul.f32 %v758, %v758
      %v1364 = vmul.f32 %v760, %v760
      %v1365 = vmul.f32 %v951, %v951
      %v1366 = vmul.f32 %v953, %v953
      %v1367 = vmul.f32 %v764, %v764
      %v1368 = vmul.f32 %v766, %v766
      %v1369 = vmul.f32 %v957, %v957
      %v1370 = vmul.f32 %v959, %v959
      %v1371 = vmul.f32 %v768, %v768
      %v1372 = vmul.f32 %v770, %v770
      %v1373 = vmul.f32 %v961, %v961
      %v1374 = vmul.f32 %v963, %v963
      %v1375 = vadd.f32 %v1247, %v1251
      %v1376 = vadd.f32 %v1375, %v1255
      %v1377 = vadd.f32 %v1376, %v1259
      %v1378 = vadd.f32 %v1377, %v1263
      %v1379 = vadd.f32 %v1378, %v1267
      %v1380 = vadd.f32 %v1379, %v1271
      %v1381 = vadd.f32 %v1380, %v1275
      %v1382 = vadd.f32 %v1381, %v1279
      %v1383 = vadd.f32 %v1382, %v1283
      %v1384 = vadd.f32 %v1383, %v1287
      %v1385 = vadd.f32 %v1384, %v1291
      %v1386 = vadd.f32 %v1385, %v1295
      %v1387 = vadd.f32 %v1386, %v1299
      %v1388 = vadd.f32 %v1387, %v1303
      %v1389 = vadd.f32 %v1388, %v1307
      %v1390 = vadd.f32 %v1389, %v1311
      %v1391 = vadd.f32 %v1390, %v1315
      %v1392 = vadd.f32 %v1391, %v1319
      %v1393 = vadd.f32 %v1392, %v1323
      %v1394 = vadd.f32 %v1393, %v1327
      %v1395 = vadd.f32 %v1394, %v1331
      %v1396 = vadd.f32 %v1395, %v1335
      %v1397 = vadd.f32 %v1396, %v1339
      %v1398 = vadd.f32 %v1397, %v1343
      %v1399 = vadd.f32 %v1398, %v1347
      %v1400 = vadd.f32 %v1399, %v1351
      %v1401 = vadd.f32 %v1400, %v1355
      %v1402 = vadd.f32 %v1401, %v1359
      %v1403 = vadd.f32 %v1402, %v1363
      %v1404 = vadd.f32 %v1403, %v1367
      %v1405 = vadd.f32 %v1404, %v1371
      %v1406 = vrot.slane %v1405, 4
      %v1407 = vadd.f32 %v1405, %v1406
      %v1408 = vrot.slane %v1407, 2
      %v1409 = vadd.f32 %v1407, %v1408
      %v1410 = vrot.slane %v1409, 1
      %v1411 = vadd.f32 %v1409, %v1410
      %v1412 = vadd.f32 %v1248, %v1252
      %v1413 = vadd.f32 %v1412, %v1256
      %v1414 = vadd.f32 %v1413, %v1260
      %v1415 = vadd.f32 %v1414, %v1264
      %v1416 = vadd.f32 %v1415, %v1268
      %v1417 = vadd.f32 %v1416, %v1272
      %v1418 = vadd.f32 %v1417, %v1276
      %v1419 = vadd.f32 %v1418, %v1280
      %v1420 = vadd.f32 %v1419, %v1284
      %v1421 = vadd.f32 %v1420, %v1288
      %v1422 = vadd.f32 %v1421, %v1292
      %v1423 = vadd.f32 %v1422, %v1296
      %v1424 = vadd.f32 %v1423, %v1300
      %v1425 = vadd.f32 %v1424, %v1304
      %v1426 = vadd.f32 %v1425, %v1308
      %v1427 = vadd.f32 %v1426, %v1312
      %v1428 = vadd.f32 %v1427, %v1316
      %v1429 = vadd.f32 %v1428, %v1320
      %v1430 = vadd.f32 %v1429, %v1324
      %v1431 = vadd.f32 %v1430, %v1328
      %v1432 = vadd.f32 %v1431, %v1332
      %v1433 = vadd.f32 %v1432, %v1336
      %v1434 = vadd.f32 %v1433, %v1340
      %v1435 = vadd.f32 %v1434, %v1344
      %v1436 = vadd.f32 %v1435, %v1348
      %v1437 = vadd.f32 %v1436, %v1352
      %v1438 = vadd.f32 %v1437, %v1356
      %v1439 = vadd.f32 %v1438, %v1360
      %v1440 = vadd.f32 %v1439, %v1364
      %v1441 = vadd.f32 %v1440, %v1368
      %v1442 = vadd.f32 %v1441, %v1372
      %v1443 = vrot.slane %v1442, 4
      %v1444 = vadd.f32 %v1442, %v1443
      %v1445 = vrot.slane %v1444, 2
      %v1446 = vadd.f32 %v1444, %v1445
      %v1447 = vrot.slane %v1446, 1
      %v1448 = vadd.f32 %v1446, %v1447
      %v1449 = vadd.f32 %v1249, %v1253
      %v1450 = vadd.f32 %v1449, %v1257
      %v1451 = vadd.f32 %v1450, %v1261
      %v1452 = vadd.f32 %v1451, %v1265
      %v1453 = vadd.f32 %v1452, %v1269
      %v1454 = vadd.f32 %v1453, %v1273
      %v1455 = vadd.f32 %v1454, %v1277
      %v1456 = vadd.f32 %v1455, %v1281
      %v1457 = vadd.f32 %v1456, %v1285
      %v1458 = vadd.f32 %v1457, %v1289
      %v1459 = vadd.f32 %v1458, %v1293
      %v1460 = vadd.f32 %v1459, %v1297
      %v1461 = vadd.f32 %v1460, %v1301
      %v1462 = vadd.f32 %v1461, %v1305
      %v1463 = vadd.f32 %v1462, %v1309
      %v1464 = vadd.f32 %v1463, %v1313
      %v1465 = vadd.f32 %v1464, %v1317
      %v1466 = vadd.f32 %v1465, %v1321
      %v1467 = vadd.f32 %v1466, %v1325
      %v1468 = vadd.f32 %v1467, %v1329
      %v1469 = vadd.f32 %v1468, %v1333
      %v1470 = vadd.f32 %v1469, %v1337
      %v1471 = vadd.f32 %v1470, %v1341
      %v1472 = vadd.f32 %v1471, %v1345
      %v1473 = vadd.f32 %v1472, %v1349
      %v1474 = vadd.f32 %v1473, %v1353
      %v1475 = vadd.f32 %v1474, %v1357
      %v1476 = vadd.f32 %v1475, %v1361
      %v1477 = vadd.f32 %v1476, %v1365
      %v1478 = vadd.f32 %v1477, %v1369
      %v1479 = vadd.f32 %v1478, %v1373
      %v1480 = vrot.slane %v1479, 4
      %v1481 = vadd.f32 %v1479, %v1480
      %v1482 = vrot.slane %v1481, 2
      %v1483 = vadd.f32 %v1481, %v1482
      %v1484 = vrot.slane %v1483, 1
      %v1485 = vadd.f32 %v1483, %v1484
      %v1486 = vadd.f32 %v1250, %v1254
      %v1487 = vadd.f32 %v1486, %v1258
      %v1488 = vadd.f32 %v1487, %v1262
      %v1489 = vadd.f32 %v1488, %v1266
      %v1490 = vadd.f32 %v1489, %v1270
      %v1491 = vadd.f32 %v1490, %v1274
      %v1492 = vadd.f32 %v1491, %v1278
      %v1493 = vadd.f32 %v1492, %v1282
      %v1494 = vadd.f32 %v1493, %v1286
      %v1495 = vadd.f32 %v1494, %v1290
      %v1496 = vadd.f32 %v1495, %v1294
      %v1497 = vadd.f32 %v1496, %v1298
      %v1498 = vadd.f32 %v1497, %v1302
      %v1499 = vadd.f32 %v1498, %v1306
      %v1500 = vadd.f32 %v1499, %v1310
      %v1501 = vadd.f32 %v1500, %v1314
      %v1502 = vadd.f32 %v1501, %v1318
      %v1503 = vadd.f32 %v1502, %v1322
      %v1504 = vadd.f32 %v1503, %v1326
      %v1505 = vadd.f32 %v1504, %v1330
      %v1506 = vadd.f32 %v1505, %v1334
      %v1507 = vadd.f32 %v1506, %v1338
      %v1508 = vadd.f32 %v1507, %v1342
      %v1509 = vadd.f32 %v1508, %v1346
      %v1510 = vadd.f32 %v1509, %v1350
      %v1511 = vadd.f32 %v1510, %v1354
      %v1512 = vadd.f32 %v1511, %v1358
      %v1513 = vadd.f32 %v1512, %v1362
      %v1514 = vadd.f32 %v1513, %v1366
      %v1515 = vadd.f32 %v1514, %v1370
      %v1516 = vadd.f32 %v1515, %v1374
      %v1517 = vrot.slane %v1516, 4
      %v1518 = vadd.f32 %v1516, %v1517
      %v1519 = vrot.slane %v1518, 2
      %v1520 = vadd.f32 %v1518, %v1519
      %v1521 = vrot.slane %v1520, 1
      %v1522 = vadd.f32 %v1520, %v1521
      %vm1523 = vcmask 1040384
      %v1524 = vsel %vm1523, %v1135, %v1411
      %v1525 = vsel %vm1523, %v1172, %v1448
      %v1526 = vsel %vm1523, %v1209, %v1485
      %v1527 = vsel %vm1523, %v1246, %v1522
      %v1532 = vcombine.low %v1524, %v1525
      %v1533 = vcombine.low %v1526, %v1527
      %v1535 = vunpack.c.l.s4 1983009808
      %v1536 = vunpack.c.0.s8 %v1535
      %v1537 = vlaneseq
      %v1538 = vshrl.u32 %v1537, 7
      %v1539 = vsub.s32 %v1536, %v1538
      %v1540 = vrot.slane %v1532, %v1539
      %v1542 = vunpack.c.l.s4 1983009808
      %v1543 = vunpack.c.0.s8 %v1542
      %v1544 = vlaneseq
      %v1545 = vshrl.u32 %v1544, 7
      %v1546 = vsub.s32 %v1543, %v1545
      %v1547 = vrot.slane %v1533, %v1546
      %v1548 = vcombine.low %v1540, %v1547
      %v1550 = vadd.f32 %v1098, %v1548
      %1551 = vst [vmem:[%s5] sm:$0xff] %v1550
      %s1552 = smul.u32 32, %s17
      %p1553 = scmp.lt.s32.totalorder %s1552, 63
      %s1554 = scalar_select %p1553, %s1552, 63
      %s1555 = smul.addr %s1554, 4
      %s1556 = smul.addr %s1555, 8
      %s1557 = scalar_lea.vmem %s4, %s1556
      // Predicated region
      $region41: #{_lambda_.6} parent=35 // pred_check
        %p1558 = pneg %p124
      $region42: #{_lambda_.6} parent=35 // pred_check_branch
        %1560 = sbr.rel (%p1558) target = $region44
      $region43: #{_lambda_.6} parent=35 // pred_region
        %s1561 = smul.u32 32, %s17
      $region44: #{_lambda_.6} parent=35 // pred_fallthru
        _
      // Predicated region
      $region45: #{_lambda_.6} parent=35 // pred_check
        %p1562 = pneg %p145
      $region46: #{_lambda_.6} parent=35 // pred_check_branch
        %1564 = sbr.rel (%p1562) target = $region48
      $region47: #{_lambda_.6} parent=35 // pred_region
        _
      $region48: #{_lambda_.6} parent=35 // pred_fallthru
        _
      // Predicated region
      $region49: #{_lambda_.6} parent=35 // pred_check
        %p1565 = pneg %p145
      $region50: #{_lambda_.6} parent=35 // pred_check_branch
        %1567 = sbr.rel (%p1565) target = $region52
      $region51: #{_lambda_.6} parent=35 // pred_region
        _
      $region52: #{_lambda_.6} parent=35 // pred_fallthru
        _
    $region36: #{_lambda_.6} parent=5 // pred_fallthru
      _
    %p1568 = scmp.le.s32.totalorder 2, %s12
    // Predicated region
    $region53: #{_lambda_.6} parent=5 // pred_check
      %p1569 = pneg %p1568
    $region54: #{_lambda_.6} parent=5 // pred_check_branch
      %1571 = sbr.rel (%p1569) target = $region56
    $region55: #{_lambda_.6} parent=5 // pred_region
      %s1572 = ssub.s32 %s12, 2
      // Predicated region
      $region57: #{_lambda_.6} parent=55 // pred_check
        %p1573 = pneg %p130
      $region58: #{_lambda_.6} parent=55 // pred_check_branch
        %1575 = sbr.rel (%p1573) target = $region60
      $region59: #{_lambda_.6} parent=55 // pred_region
        %s1576 = smul.u32 32, %s18
        %p1577 = scmp.lt.s32.totalorder %s1576, 63
        %s1578 = scalar_select %p1577, %s1576, 63
        %s1579 = smul.addr %s1578, 4
        %s1580 = smul.addr %s1579, 8
        %s1581 = scalar_lea.vmem %s4, %s1580
      $region60: #{_lambda_.6} parent=55 // pred_fallthru
        _
    $region56: #{_lambda_.6} parent=5 // pred_fallthru
      _
  $region6: #{_lambda_.6} parent=0 // loop_footer
    %s16 = sadd.s32 1, %s12
  $region7: #{_lambda_.6} parent=0 // loop_footer_branch
    %11 = sbr.rel target = $region3
  $region8: #{_lambda_.6} parent=0 // loop_exit
    _

// kernel: _lambda_.7
$region0: #{_lambda_.7}
  #allocation0 [shape = 'u32[]', space=smem, size = 0x4, offset = 0x4, fixed_abs, tag = 'smem constant byte address 0x4 - core index']
  #allocation1 [shape = 'u32[144,128]{1,0:T(1,128)}', space=vmem, size = 0x12000, scoped, tag = 'internal scratch']
  %s0 = inlined_call_operand.vmem [shape: f32[512,512], index: 0, kind: input, shape index: {}]
  %s1 = inlined_call_operand.vmem [shape: f32[1,512], index: 1, kind: input, shape index: {}]
  %s2 = inlined_call_operand.vmem [shape: f32[1,512], index: 2, kind: input, shape index: {}]
  %s3 = inlined_call_operand.vmem [shape: bf16[512,512], index: 3, kind: input, shape index: {}]
  %s4 = inlined_call_operand.hbm [shape: f32[512,512], index: 4, kind: output, shape index: {}]
  %s5 = sld [smem:[#allocation0]]
  $region49: #{_lambda_.7} parent=0
    _
  %s7 = ssub.s32 1, %s5
  %s8 = scalar_select 0, %s7, %s5
  $region1: #{_lambda_.7} parent=0
    #allocation2 [shape = 'u8[1048576]{0}', space=vmem, size = 0x100000, scoped, tag = 'output window, operand 0']
    #allocation3 [shape = 's32[2]{0}', space=sflag, size = 0x8, scoped, tag = 'scoped memory for _lambda_.7']
    %9 = vsyncpa [#allocation3], 0
    %s10 = scalar_lea.sflag [#allocation3], 1
    %11 = vsyncpa %s10, 0
    loop: start=0, step=1, limit=4
    $region2: #{_lambda_.7} parent=1 // loop_pre_header
      _
    $region3: #{_lambda_.7} parent=1 // loop_header
      %s13 = sphi 0, %s17
      %p14 = scmp.ge.s32.totalorder %s13, 4
      %s23 = sphi 0, %s25
      %s26 = sphi 0, %s23
      %s27 = sphi 0, %s26
      %s43 = sphi 0, %s27
      %s47 = sphi 0, %s47
      %s49 = sphi 0, %s47
      %s50 = sphi 0, %s49
      %s64 = sphi 0, %s50
      %s68 = sphi 0, %s68
      %s70 = sphi 0, %s68
      %s71 = sphi 0, %s70
      %s85 = sphi 0, %s71
      %s91 = sphi 0, %s93
      %s94 = sphi 0, %s91
      %s95 = sphi 0, %s94
      %s111 = sphi 0, %s95
      %s117 = sphi 0, %s119
      %s120 = sphi 0, %s117
      %s121 = sphi 0, %s120
      %s137 = sphi 0, %s121
    $region4: #{_lambda_.7} parent=1 // loop_header_branch
      %16 = sbr.rel (%p14) target = $region8
    $region5: #{_lambda_.7} parent=1 // loop_body
      %s18 = ssub.s32 %s13, 1
      %s19 = ssub.s32 %s13, 2
      %s20 = sadd.s32 %s13, 1
      %s21 = ssub.s32 %s13, %s20
      %p22 = scmp.eq.s32.totalorder %s21, 0
      %s24 = sadd.s32 %s23, 1
      %s25 = scalar_select %p22, %s23, %s24
      %p28 = pneg %p22
      %p29 = scmp.eq.s32.totalorder %s13, 1
      %p30 = por %p28, %p29
      %p31 = scmp.ne.s32.totalorder %s23, %s26
      %p32 = scmp.eq.s32.totalorder %s13, 0
      %p33 = por %p31, %p32
      %p34 = scmp.ne.s32.totalorder %s23, %s26
      %p35 = scmp.eq.s32.totalorder %s18, 1
      %p36 = por %p34, %p35
      %p37 = scmp.ne.s32.totalorder %s26, %s27
      %p38 = scmp.eq.s32.totalorder %s18, 0
      %p39 = por %p37, %p38
      %p40 = scmp.ne.s32.totalorder %s26, %s27
      %p41 = scmp.eq.s32.totalorder %s19, 1
      %p42 = por %p40, %p41
      %p44 = scmp.ne.s32.totalorder %s27, %s43
      %p45 = scmp.eq.s32.totalorder %s19, 0
      %p46 = por %p44, %p45
      %s48 = sadd.s32 %s47, 1
      %p51 = scmp.eq.s32.totalorder %s13, 1
      %p52 = scmp.ne.s32.totalorder %s47, %s49
      %p53 = scmp.eq.s32.totalorder %s13, 0
      %p54 = por %p52, %p53
      %p55 = scmp.ne.s32.totalorder %s47, %s49
      %p56 = scmp.eq.s32.totalorder %s18, 1
      %p57 = por %p55, %p56
      %p58 = scmp.ne.s32.totalorder %s49, %s50
      %p59 = scmp.eq.s32.totalorder %s18, 0
      %p60 = por %p58, %p59
      %p61 = scmp.ne.s32.totalorder %s49, %s50
      %p62 = scmp.eq.s32.totalorder %s19, 1
      %p63 = por %p61, %p62
      %p65 = scmp.ne.s32.totalorder %s50, %s64
      %p66 = scmp.eq.s32.totalorder %s19, 0
      %p67 = por %p65, %p66
      %s69 = sadd.s32 %s68, 1
      %p72 = scmp.eq.s32.totalorder %s13, 1
      %p73 = scmp.ne.s32.totalorder %s68, %s70
      %p74 = scmp.eq.s32.totalorder %s13, 0
      %p75 = por %p73, %p74
      %p76 = scmp.ne.s32.totalorder %s68, %s70
      %p77 = scmp.eq.s32.totalorder %s18, 1
      %p78 = por %p76, %p77
      %p79 = scmp.ne.s32.totalorder %s70, %s71
      %p80 = scmp.eq.s32.totalorder %s18, 0
      %p81 = por %p79, %p80
      %p82 = scmp.ne.s32.totalorder %s70, %s71
      %p83 = scmp.eq.s32.totalorder %s19, 1
      %p84 = por %p82, %p83
      %p86 = scmp.ne.s32.totalorder %s71, %s85
      %p87 = scmp.eq.s32.totalorder %s19, 0
      %p88 = por %p86, %p87
      %s89 = ssub.s32 %s13, %s20
      %p90 = scmp.eq.s32.totalorder %s89, 0
      %s92 = sadd.s32 %s91, 1
      %s93 = scalar_select %p90, %s91, %s92
      %p96 = pneg %p90
      %p97 = scmp.eq.s32.totalorder %s13, 1
      %p98 = por %p96, %p97
      %p99 = scmp.ne.s32.totalorder %s91, %s94
      %p100 = scmp.eq.s32.totalorder %s13, 0
      %p101 = por %p99, %p100
      %p102 = scmp.ne.s32.totalorder %s91, %s94
      %p103 = scmp.eq.s32.totalorder %s18, 1
      %p104 = por %p102, %p103
      %p105 = scmp.ne.s32.totalorder %s94, %s95
      %p106 = scmp.eq.s32.totalorder %s18, 0
      %p107 = por %p105, %p106
      %p108 = scmp.ne.s32.totalorder %s94, %s95
      %p109 = scmp.eq.s32.totalorder %s19, 1
      %p110 = por %p108, %p109
      %p112 = scmp.ne.s32.totalorder %s95, %s111
      %p113 = scmp.eq.s32.totalorder %s19, 0
      %p114 = por %p112, %p113
      %s115 = ssub.s32 %s13, %s20
      %p116 = scmp.eq.s32.totalorder %s115, 0
      %s118 = sadd.s32 %s117, 1
      %s119 = scalar_select %p116, %s117, %s118
      %p122 = pneg %p116
      %p123 = scmp.eq.s32.totalorder %s13, 1
      %p124 = por %p122, %p123
      %p125 = scmp.ne.s32.totalorder %s117, %s120
      %p126 = scmp.eq.s32.totalorder %s13, 0
      %p127 = por %p125, %p126
      %p128 = scmp.ne.s32.totalorder %s117, %s120
      %p129 = scmp.eq.s32.totalorder %s18, 1
      %p130 = por %p128, %p129
      %p131 = scmp.ne.s32.totalorder %s120, %s121
      %p132 = scmp.eq.s32.totalorder %s18, 0
      %p133 = por %p131, %p132
      %p134 = scmp.ne.s32.totalorder %s120, %s121
      %p135 = scmp.eq.s32.totalorder %s19, 1
      %p136 = por %p134, %p135
      %p138 = scmp.ne.s32.totalorder %s121, %s137
      %p139 = scmp.eq.s32.totalorder %s19, 0
      %p140 = por %p138, %p139
      %p141 = scmp.le.s32.totalorder 1, %s13
      %p142 = scmp.lt.s32.totalorder %s13, 3
      %p143 = pnand %p141, %p142
      %p144 = pneg %p143
      // Predicated region
      $region9: #{_lambda_.7} parent=5 // pred_check
        _
      $region10: #{_lambda_.7} parent=5 // pred_check_branch
        %146 = sbr.rel (%p143) target = $region12
      $region11: #{_lambda_.7} parent=5 // pred_region
        %s147 = ssub.s32 %s13, 1
        // Predicated region
        $region13: #{_lambda_.7} parent=11 // pred_check
          %p148 = pneg %p60
        $region14: #{_lambda_.7} parent=11 // pred_check_branch
          %150 = sbr.rel (%p148) target = $region16
        $region15: #{_lambda_.7} parent=11 // pred_region
          _
        $region16: #{_lambda_.7} parent=11 // pred_fallthru
          _
        // Predicated region
        $region17: #{_lambda_.7} parent=11 // pred_check
          %p151 = pneg %p81
        $region18: #{_lambda_.7} parent=11 // pred_check_branch
          %153 = sbr.rel (%p151) target = $region20
        $region19: #{_lambda_.7} parent=11 // pred_region
          _
        $region20: #{_lambda_.7} parent=11 // pred_fallthru
          _
      $region12: #{_lambda_.7} parent=5 // pred_fallthru
        _
      %p154 = scmp.lt.s32.totalorder %s13, 2
      // Predicated region
      $region21: #{_lambda_.7} parent=5 // pred_check
        %p155 = pneg %p154
      $region22: #{_lambda_.7} parent=5 // pred_check_branch
        %157 = sbr.rel (%p155) target = $region24
      $region23: #{_lambda_.7} parent=5 // pred_region
        // Predicated region
        $region25: #{_lambda_.7} parent=23 // pred_check
          %p158 = pneg %p33
        $region26: #{_lambda_.7} parent=23 // pred_check_branch
          %160 = sbr.rel (%p158) target = $region28
        $region27: #{_lambda_.7} parent=23 // pred_region
          %s161 = smul.u32 32, %s13
          %p162 = scmp.lt.s32.totalorder %s161, 63
          %s163 = scalar_select %p162, %s161, 63
          %s164 = smul.addr %s163, 4
          %s165 = smul.addr %s164, 8
          %s166 = scalar_lea.vmem %s0, %s165
          %s167 = smul.u32 32, %s13
        $region28: #{_lambda_.7} parent=23 // pred_fallthru
          _
        // Predicated region
        $region29: #{_lambda_.7} parent=23 // pred_check
          %p168 = pneg %p101
        $region30: #{_lambda_.7} parent=23 // pred_check_branch
          %170 = sbr.rel (%p168) target = $region32
        $region31: #{_lambda_.7} parent=23 // pred_region
          %s171 = smul.u32 32, %s13
          %p172 = scmp.lt.s32.totalorder %s171, 63
          %s173 = scalar_select %p172, %s171, 63
          %s174 = smul.addr %s173, 4
          %s175 = smul.addr %s174, 4
          %s176 = scalar_lea.vmem %s3, %s175
          %s177 = smul.u32 32, %s13
        $region32: #{_lambda_.7} parent=23 // pred_fallthru
          _
      $region24: #{_lambda_.7} parent=5 // pred_fallthru
        _
      %p178 = scmp.le.s32.totalorder 1, %s13
      %p179 = scmp.lt.s32.totalorder %s13, 3
      %p180 = pnand %p178, %p179
      %p181 = pneg %p180
      // Predicated region
      $region33: #{_lambda_.7} parent=5 // pred_check
        _
      $region34: #{_lambda_.7} parent=5 // pred_check_branch
        %183 = sbr.rel (%p180) target = $region36
      $region35: #{_lambda_.7} parent=5 // pred_region
        %s184 = ssub.s32 %s13, 1
        %s185 = smul.u32 32, %s18
        %p186 = scmp.lt.s32.totalorder %s185, 63
        %s187 = scalar_select %p186, %s185, 63
        %s188 = smul.addr %s187, 4
        %s189 = smul.addr %s188, 8
        %s190 = scalar_lea.vmem %s0, %s189
        %p191 = pneg %p39
        %p192 = pneg %p36
        %p193 = pneg %p60
        %p194 = pneg %p57
        %p195 = pneg %p81
        %p196 = pneg %p78
        %s197 = smul.u32 32, %s18
        %p198 = scmp.lt.s32.totalorder %s197, 63
        %s199 = scalar_select %p198, %s197, 63
        %s200 = smul.addr %s199, 4
        %s201 = smul.addr %s200, 4
        %s202 = scalar_lea.vmem %s3, %s201
        %p203 = pneg %p107
        %p204 = pneg %p104
        %p205 = pneg %p133
        %p206 = pneg %p130
        %s207 = sand.u32 %s120, 1
        %s208 = scalar_lea.sflag [#allocation3], %s207
        %s209 = sand.u32 %s120, 1
        %s210 = smul.addr %s209, 1024
        %s211 = scalar_lea.vmem [#allocation2], %s210
        %s212 = smul.u32 32, %s18
        %p213 = scmp.lt.s32.totalorder %s212, 63
        %s214 = scalar_select %p213, %s212, 63
        %s215 = smul.addr %s214, 4
        %s216 = smul.addr %s215, 8
        %s217 = scalar_lea.vmem %s0, %s216
        %s218 = smul.u32 32, %s18
        %s219 = smul.u32 32, %s18
        %p220 = scmp.lt.s32.totalorder %s219, 63
        %s221 = scalar_select %p220, %s219, 63
        %s222 = smul.addr %s221, 4
        %s223 = smul.addr %s222, 4
        %s224 = scalar_lea.vmem %s3, %s223
        %s225 = smul.u32 32, %s18
        %s226 = smul.u32 32, %s18
        %v227 = vld [vmem:[%s217] sm:$0xff]
        %v228 = vld [vmem:[%s217 + $0x8] sm:$0xff]
        %v229 = vld [vmem:[%s217 + $0x10] sm:$0xff]
        %v230 = vld [vmem:[%s217 + $0x18] sm:$0xff]
        %v231 = vld [vmem:[%s217 + $0x20] sm:$0xff]
        %v232 = vld [vmem:[%s217 + $0x28] sm:$0xff]
        %v233 = vld [vmem:[%s217 + $0x30] sm:$0xff]
        %v234 = vld [vmem:[%s217 + $0x38] sm:$0xff]
        %v235 = vld [vmem:[%s217 + $0x40] sm:$0xff]
        %v236 = vld [vmem:[%s217 + $0x48] sm:$0xff]
        %v237 = vld [vmem:[%s217 + $0x50] sm:$0xff]
        %v238 = vld [vmem:[%s217 + $0x58] sm:$0xff]
        %v239 = vld [vmem:[%s217 + $0x60] sm:$0xff]
        %v240 = vld [vmem:[%s217 + $0x68] sm:$0xff]
        %v241 = vld [vmem:[%s217 + $0x70] sm:$0xff]
        %v242 = vld [vmem:[%s217 + $0x78] sm:$0xff]
        %v243 = vld [vmem:[%s217 + $0x80] sm:$0xff]
        %v244 = vld [vmem:[%s217 + $0x88] sm:$0xff]
        %v245 = vld [vmem:[%s217 + $0x90] sm:$0xff]
        %v246 = vld [vmem:[%s217 + $0x98] sm:$0xff]
        %v247 = vld [vmem:[%s217 + $0xa0] sm:$0xff]
        %v248 = vld [vmem:[%s217 + $0xa8] sm:$0xff]
        %v249 = vld [vmem:[%s217 + $0xb0] sm:$0xff]
        %v250 = vld [vmem:[%s217 + $0xb8] sm:$0xff]
        %v251 = vld [vmem:[%s217 + $0xc0] sm:$0xff]
        %v252 = vld [vmem:[%s217 + $0xc8] sm:$0xff]
        %v253 = vld [vmem:[%s217 + $0xd0] sm:$0xff]
        %v254 = vld [vmem:[%s217 + $0xd8] sm:$0xff]
        %v255 = vld [vmem:[%s217 + $0xe0] sm:$0xff]
        %v256 = vld [vmem:[%s217 + $0xe8] sm:$0xff]
        %v257 = vld [vmem:[%s217 + $0xf0] sm:$0xff]
        %v258 = vld [vmem:[%s217 + $0xf8] sm:$0xff]
        %v259 = vld [vmem:[%s217 + $0x100] sm:$0xff]
        %v260 = vld [vmem:[%s217 + $0x108] sm:$0xff]
        %v261 = vld [vmem:[%s217 + $0x110] sm:$0xff]
        %v262 = vld [vmem:[%s217 + $0x118] sm:$0xff]
        %v263 = vld [vmem:[%s217 + $0x120] sm:$0xff]
        %v264 = vld [vmem:[%s217 + $0x128] sm:$0xff]
        %v265 = vld [vmem:[%s217 + $0x130] sm:$0xff]
        %v266 = vld [vmem:[%s217 + $0x138] sm:$0xff]
        %v267 = vld [vmem:[%s217 + $0x140] sm:$0xff]
        %v268 = vld [vmem:[%s217 + $0x148] sm:$0xff]
        %v269 = vld [vmem:[%s217 + $0x150] sm:$0xff]
        %v270 = vld [vmem:[%s217 + $0x158] sm:$0xff]
        %v271 = vld [vmem:[%s217 + $0x160] sm:$0xff]
        %v272 = vld [vmem:[%s217 + $0x168] sm:$0xff]
        %v273 = vld [vmem:[%s217 + $0x170] sm:$0xff]
        %v274 = vld [vmem:[%s217 + $0x178] sm:$0xff]
        %v275 = vld [vmem:[%s217 + $0x180] sm:$0xff]
        %v276 = vld [vmem:[%s217 + $0x188] sm:$0xff]
        %v277 = vld [vmem:[%s217 + $0x190] sm:$0xff]
        %v278 = vld [vmem:[%s217 + $0x198] sm:$0xff]
        %v279 = vld [vmem:[%s217 + $0x1a0] sm:$0xff]
        %v280 = vld [vmem:[%s217 + $0x1a8] sm:$0xff]
        %v281 = vld [vmem:[%s217 + $0x1b0] sm:$0xff]
        %v282 = vld [vmem:[%s217 + $0x1b8] sm:$0xff]
        %v283 = vld [vmem:[%s217 + $0x1c0] sm:$0xff]
        %v284 = vld [vmem:[%s217 + $0x1c8] sm:$0xff]
        %v285 = vld [vmem:[%s217 + $0x1d0] sm:$0xff]
        %v286 = vld [vmem:[%s217 + $0x1d8] sm:$0xff]
        %v287 = vld [vmem:[%s217 + $0x1e0] sm:$0xff]
        %v288 = vld [vmem:[%s217 + $0x1e8] sm:$0xff]
        %v289 = vld [vmem:[%s217 + $0x1f0] sm:$0xff]
        %v290 = vld [vmem:[%s217 + $0x1f8] sm:$0xff]
        %v291 = vld [vmem:[%s217 + $0x200] sm:$0xff]
        %v292 = vld [vmem:[%s217 + $0x208] sm:$0xff]
        %v293 = vld [vmem:[%s217 + $0x210] sm:$0xff]
        %v294 = vld [vmem:[%s217 + $0x218] sm:$0xff]
        %v295 = vld [vmem:[%s217 + $0x220] sm:$0xff]
        %v296 = vld [vmem:[%s217 + $0x228] sm:$0xff]
        %v297 = vld [vmem:[%s217 + $0x230] sm:$0xff]
        %v298 = vld [vmem:[%s217 + $0x238] sm:$0xff]
        %v299 = vld [vmem:[%s217 + $0x240] sm:$0xff]
        %v300 = vld [vmem:[%s217 + $0x248] sm:$0xff]
        %v301 = vld [vmem:[%s217 + $0x250] sm:$0xff]
        %v302 = vld [vmem:[%s217 + $0x258] sm:$0xff]
        %v303 = vld [vmem:[%s217 + $0x260] sm:$0xff]
        %v304 = vld [vmem:[%s217 + $0x268] sm:$0xff]
        %v305 = vld [vmem:[%s217 + $0x270] sm:$0xff]
        %v306 = vld [vmem:[%s217 + $0x278] sm:$0xff]
        %v307 = vld [vmem:[%s217 + $0x280] sm:$0xff]
        %v308 = vld [vmem:[%s217 + $0x288] sm:$0xff]
        %v309 = vld [vmem:[%s217 + $0x290] sm:$0xff]
        %v310 = vld [vmem:[%s217 + $0x298] sm:$0xff]
        %v311 = vld [vmem:[%s217 + $0x2a0] sm:$0xff]
        %v312 = vld [vmem:[%s217 + $0x2a8] sm:$0xff]
        %v313 = vld [vmem:[%s217 + $0x2b0] sm:$0xff]
        %v314 = vld [vmem:[%s217 + $0x2b8] sm:$0xff]
        %v315 = vld [vmem:[%s217 + $0x2c0] sm:$0xff]
        %v316 = vld [vmem:[%s217 + $0x2c8] sm:$0xff]
        %v317 = vld [vmem:[%s217 + $0x2d0] sm:$0xff]
        %v318 = vld [vmem:[%s217 + $0x2d8] sm:$0xff]
        %v319 = vld [vmem:[%s217 + $0x2e0] sm:$0xff]
        %v320 = vld [vmem:[%s217 + $0x2e8] sm:$0xff]
        %v321 = vld [vmem:[%s217 + $0x2f0] sm:$0xff]
        %v322 = vld [vmem:[%s217 + $0x2f8] sm:$0xff]
        %v323 = vld [vmem:[%s217 + $0x300] sm:$0xff]
        %v324 = vld [vmem:[%s217 + $0x308] sm:$0xff]
        %v325 = vld [vmem:[%s217 + $0x310] sm:$0xff]
        %v326 = vld [vmem:[%s217 + $0x318] sm:$0xff]
        %v327 = vld [vmem:[%s217 + $0x320] sm:$0xff]
        %v328 = vld [vmem:[%s217 + $0x328] sm:$0xff]
        %v329 = vld [vmem:[%s217 + $0x330] sm:$0xff]
        %v330 = vld [vmem:[%s217 + $0x338] sm:$0xff]
        %v331 = vld [vmem:[%s217 + $0x340] sm:$0xff]
        %v332 = vld [vmem:[%s217 + $0x348] sm:$0xff]
        %v333 = vld [vmem:[%s217 + $0x350] sm:$0xff]
        %v334 = vld [vmem:[%s217 + $0x358] sm:$0xff]
        %v335 = vld [vmem:[%s217 + $0x360] sm:$0xff]
        %v336 = vld [vmem:[%s217 + $0x368] sm:$0xff]
        %v337 = vld [vmem:[%s217 + $0x370] sm:$0xff]
        %v338 = vld [vmem:[%s217 + $0x378] sm:$0xff]
        %v339 = vld [vmem:[%s217 + $0x380] sm:$0xff]
        %v340 = vld [vmem:[%s217 + $0x388] sm:$0xff]
        %v341 = vld [vmem:[%s217 + $0x390] sm:$0xff]
        %v342 = vld [vmem:[%s217 + $0x398] sm:$0xff]
        %v343 = vld [vmem:[%s217 + $0x3a0] sm:$0xff]
        %v344 = vld [vmem:[%s217 + $0x3a8] sm:$0xff]
        %v345 = vld [vmem:[%s217 + $0x3b0] sm:$0xff]
        %v346 = vld [vmem:[%s217 + $0x3b8] sm:$0xff]
        %v347 = vld [vmem:[%s217 + $0x3c0] sm:$0xff]
        %v348 = vld [vmem:[%s217 + $0x3c8] sm:$0xff]
        %v349 = vld [vmem:[%s217 + $0x3d0] sm:$0xff]
        %v350 = vld [vmem:[%s217 + $0x3d8] sm:$0xff]
        %v351 = vld [vmem:[%s217 + $0x3e0] sm:$0xff]
        %v352 = vld [vmem:[%s217 + $0x3e8] sm:$0xff]
        %v353 = vld [vmem:[%s217 + $0x3f0] sm:$0xff]
        %v354 = vld [vmem:[%s217 + $0x3f8] sm:$0xff]
        %v355 = vld [vmem:[%s1] sm:$0xf]
        %v357 = vlaneseq
        %v358 = vshrl.u32 %v357, 7
        %v359 = vsub.s32 0, %v358
        %v360 = vrot.slane %v355, %v359
        %v361 = vlaneseq
        %v362 = vshrl.u32 %v361, 7
        %v363 = vsub.s32 1, %v362
        %v364 = vrot.slane %v355, %v363
        %v365 = vlaneseq
        %v366 = vshrl.u32 %v365, 7
        %v367 = vsub.s32 2, %v366
        %v368 = vrot.slane %v355, %v367
        %v369 = vlaneseq
        %v370 = vshrl.u32 %v369, 7
        %v371 = vsub.s32 3, %v370
        %v372 = vrot.slane %v355, %v371
        %v377 = vmul.f32 %v227, %v360
        %v378 = vmul.f32 %v228, %v364
        %v379 = vmul.f32 %v229, %v368
        %v380 = vmul.f32 %v230, %v372
        %v381 = vmul.f32 %v231, %v360
        %v382 = vmul.f32 %v232, %v364
        %v383 = vmul.f32 %v233, %v368
        %v384 = vmul.f32 %v234, %v372
        %v385 = vmul.f32 %v235, %v360
        %v386 = vmul.f32 %v236, %v364
        %v387 = vmul.f32 %v237, %v368
        %v388 = vmul.f32 %v238, %v372
        %v389 = vmul.f32 %v239, %v360
        %v390 = vmul.f32 %v240, %v364
        %v391 = vmul.f32 %v241, %v368
        %v392 = vmul.f32 %v242, %v372
        %v393 = vmul.f32 %v243, %v360
        %v394 = vmul.f32 %v244, %v364
        %v395 = vmul.f32 %v245, %v368
        %v396 = vmul.f32 %v246, %v372
        %v397 = vmul.f32 %v247, %v360
        %v398 = vmul.f32 %v248, %v364
        %v399 = vmul.f32 %v249, %v368
        %v400 = vmul.f32 %v250, %v372
        %v401 = vmul.f32 %v251, %v360
        %v402 = vmul.f32 %v252, %v364
        %v403 = vmul.f32 %v253, %v368
        %v404 = vmul.f32 %v254, %v372
        %v405 = vmul.f32 %v255, %v360
        %v406 = vmul.f32 %v256, %v364
        %v407 = vmul.f32 %v257, %v368
        %v408 = vmul.f32 %v258, %v372
        %v409 = vmul.f32 %v259, %v360
        %v410 = vmul.f32 %v260, %v364
        %v411 = vmul.f32 %v261, %v368
        %v412 = vmul.f32 %v262, %v372
        %v413 = vmul.f32 %v263, %v360
        %v414 = vmul.f32 %v264, %v364
        %v415 = vmul.f32 %v265, %v368
        %v416 = vmul.f32 %v266, %v372
        %v417 = vmul.f32 %v267, %v360
        %v418 = vmul.f32 %v268, %v364
        %v419 = vmul.f32 %v269, %v368
        %v420 = vmul.f32 %v270, %v372
        %v421 = vmul.f32 %v271, %v360
        %v422 = vmul.f32 %v272, %v364
        %v423 = vmul.f32 %v273, %v368
        %v424 = vmul.f32 %v274, %v372
        %v425 = vmul.f32 %v275, %v360
        %v426 = vmul.f32 %v276, %v364
        %v427 = vmul.f32 %v277, %v368
        %v428 = vmul.f32 %v278, %v372
        %v429 = vmul.f32 %v279, %v360
        %v430 = vmul.f32 %v280, %v364
        %v431 = vmul.f32 %v281, %v368
        %v432 = vmul.f32 %v282, %v372
        %v433 = vmul.f32 %v283, %v360
        %v434 = vmul.f32 %v284, %v364
        %v435 = vmul.f32 %v285, %v368
        %v436 = vmul.f32 %v286, %v372
        %v437 = vmul.f32 %v287, %v360
        %v438 = vmul.f32 %v288, %v364
        %v439 = vmul.f32 %v289, %v368
        %v440 = vmul.f32 %v290, %v372
        %v441 = vmul.f32 %v291, %v360
        %v442 = vmul.f32 %v292, %v364
        %v443 = vmul.f32 %v293, %v368
        %v444 = vmul.f32 %v294, %v372
        %v445 = vmul.f32 %v295, %v360
        %v446 = vmul.f32 %v296, %v364
        %v447 = vmul.f32 %v297, %v368
        %v448 = vmul.f32 %v298, %v372
        %v449 = vmul.f32 %v299, %v360
        %v450 = vmul.f32 %v300, %v364
        %v451 = vmul.f32 %v301, %v368
        %v452 = vmul.f32 %v302, %v372
        %v453 = vmul.f32 %v303, %v360
        %v454 = vmul.f32 %v304, %v364
        %v455 = vmul.f32 %v305, %v368
        %v456 = vmul.f32 %v306, %v372
        %v457 = vmul.f32 %v307, %v360
        %v458 = vmul.f32 %v308, %v364
        %v459 = vmul.f32 %v309, %v368
        %v460 = vmul.f32 %v310, %v372
        %v461 = vmul.f32 %v311, %v360
        %v462 = vmul.f32 %v312, %v364
        %v463 = vmul.f32 %v313, %v368
        %v464 = vmul.f32 %v314, %v372
        %v465 = vmul.f32 %v315, %v360
        %v466 = vmul.f32 %v316, %v364
        %v467 = vmul.f32 %v317, %v368
        %v468 = vmul.f32 %v318, %v372
        %v469 = vmul.f32 %v319, %v360
        %v470 = vmul.f32 %v320, %v364
        %v471 = vmul.f32 %v321, %v368
        %v472 = vmul.f32 %v322, %v372
        %v473 = vmul.f32 %v323, %v360
        %v474 = vmul.f32 %v324, %v364
        %v475 = vmul.f32 %v325, %v368
        %v476 = vmul.f32 %v326, %v372
        %v477 = vmul.f32 %v327, %v360
        %v478 = vmul.f32 %v328, %v364
        %v479 = vmul.f32 %v329, %v368
        %v480 = vmul.f32 %v330, %v372
        %v481 = vmul.f32 %v331, %v360
        %v482 = vmul.f32 %v332, %v364
        %v483 = vmul.f32 %v333, %v368
        %v484 = vmul.f32 %v334, %v372
        %v485 = vmul.f32 %v335, %v360
        %v486 = vmul.f32 %v336, %v364
        %v487 = vmul.f32 %v337, %v368
        %v488 = vmul.f32 %v338, %v372
        %v489 = vmul.f32 %v339, %v360
        %v490 = vmul.f32 %v340, %v364
        %v491 = vmul.f32 %v341, %v368
        %v492 = vmul.f32 %v342, %v372
        %v493 = vmul.f32 %v343, %v360
        %v494 = vmul.f32 %v344, %v364
        %v495 = vmul.f32 %v345, %v368
        %v496 = vmul.f32 %v346, %v372
        %v497 = vmul.f32 %v347, %v360
        %v498 = vmul.f32 %v348, %v364
        %v499 = vmul.f32 %v349, %v368
        %v500 = vmul.f32 %v350, %v372
        %v501 = vmul.f32 %v351, %v360
        %v502 = vmul.f32 %v352, %v364
        %v503 = vmul.f32 %v353, %v368
        %v504 = vmul.f32 %v354, %v372
        %v505 = vld [vmem:[%s2] sm:$0xf]
        %v507 = vlaneseq
        %v508 = vshrl.u32 %v507, 7
        %v509 = vsub.s32 0, %v508
        %v510 = vrot.slane %v505, %v509
        %v511 = vlaneseq
        %v512 = vshrl.u32 %v511, 7
        %v513 = vsub.s32 1, %v512
        %v514 = vrot.slane %v505, %v513
        %v515 = vlaneseq
        %v516 = vshrl.u32 %v515, 7
        %v517 = vsub.s32 2, %v516
        %v518 = vrot.slane %v505, %v517
        %v519 = vlaneseq
        %v520 = vshrl.u32 %v519, 7
        %v521 = vsub.s32 3, %v520
        %v522 = vrot.slane %v505, %v521
        %v527 = vadd.f32 %v377, %v510
        %v528 = vadd.f32 %v378, %v514
        %v529 = vadd.f32 %v379, %v518
        %v530 = vadd.f32 %v380, %v522
        %v531 = vadd.f32 %v381, %v510
        %v532 = vadd.f32 %v382, %v514
        %v533 = vadd.f32 %v383, %v518
        %v534 = vadd.f32 %v384, %v522
        %v535 = vadd.f32 %v385, %v510
        %v536 = vadd.f32 %v386, %v514
        %v537 = vadd.f32 %v387, %v518
        %v538 = vadd.f32 %v388, %v522
        %v539 = vadd.f32 %v389, %v510
        %v540 = vadd.f32 %v390, %v514
        %v541 = vadd.f32 %v391, %v518
        %v542 = vadd.f32 %v392, %v522
        %v543 = vadd.f32 %v393, %v510
        %v544 = vadd.f32 %v394, %v514
        %v545 = vadd.f32 %v395, %v518
        %v546 = vadd.f32 %v396, %v522
        %v547 = vadd.f32 %v397, %v510
        %v548 = vadd.f32 %v398, %v514
        %v549 = vadd.f32 %v399, %v518
        %v550 = vadd.f32 %v400, %v522
        %v551 = vadd.f32 %v401, %v510
        %v552 = vadd.f32 %v402, %v514
        %v553 = vadd.f32 %v403, %v518
        %v554 = vadd.f32 %v404, %v522
        %v555 = vadd.f32 %v405, %v510
        %v556 = vadd.f32 %v406, %v514
        %v557 = vadd.f32 %v407, %v518
        %v558 = vadd.f32 %v408, %v522
        %v559 = vadd.f32 %v409, %v510
        %v560 = vadd.f32 %v410, %v514
        %v561 = vadd.f32 %v411, %v518
        %v562 = vadd.f32 %v412, %v522
        %v563 = vadd.f32 %v413, %v510
        %v564 = vadd.f32 %v414, %v514
        %v565 = vadd.f32 %v415, %v518
        %v566 = vadd.f32 %v416, %v522
        %v567 = vadd.f32 %v417, %v510
        %v568 = vadd.f32 %v418, %v514
        %v569 = vadd.f32 %v419, %v518
        %v570 = vadd.f32 %v420, %v522
        %v571 = vadd.f32 %v421, %v510
        %v572 = vadd.f32 %v422, %v514
        %v573 = vadd.f32 %v423, %v518
        %v574 = vadd.f32 %v424, %v522
        %v575 = vadd.f32 %v425, %v510
        %v576 = vadd.f32 %v426, %v514
        %v577 = vadd.f32 %v427, %v518
        %v578 = vadd.f32 %v428, %v522
        %v579 = vadd.f32 %v429, %v510
        %v580 = vadd.f32 %v430, %v514
        %v581 = vadd.f32 %v431, %v518
        %v582 = vadd.f32 %v432, %v522
        %v583 = vadd.f32 %v433, %v510
        %v584 = vadd.f32 %v434, %v514
        %v585 = vadd.f32 %v435, %v518
        %v586 = vadd.f32 %v436, %v522
        %v587 = vadd.f32 %v437, %v510
        %v588 = vadd.f32 %v438, %v514
        %v589 = vadd.f32 %v439, %v518
        %v590 = vadd.f32 %v440, %v522
        %v591 = vadd.f32 %v441, %v510
        %v592 = vadd.f32 %v442, %v514
        %v593 = vadd.f32 %v443, %v518
        %v594 = vadd.f32 %v444, %v522
        %v595 = vadd.f32 %v445, %v510
        %v596 = vadd.f32 %v446, %v514
        %v597 = vadd.f32 %v447, %v518
        %v598 = vadd.f32 %v448, %v522
        %v599 = vadd.f32 %v449, %v510
        %v600 = vadd.f32 %v450, %v514
        %v601 = vadd.f32 %v451, %v518
        %v602 = vadd.f32 %v452, %v522
        %v603 = vadd.f32 %v453, %v510
        %v604 = vadd.f32 %v454, %v514
        %v605 = vadd.f32 %v455, %v518
        %v606 = vadd.f32 %v456, %v522
        %v607 = vadd.f32 %v457, %v510
        %v608 = vadd.f32 %v458, %v514
        %v609 = vadd.f32 %v459, %v518
        %v610 = vadd.f32 %v460, %v522
        %v611 = vadd.f32 %v461, %v510
        %v612 = vadd.f32 %v462, %v514
        %v613 = vadd.f32 %v463, %v518
        %v614 = vadd.f32 %v464, %v522
        %v615 = vadd.f32 %v465, %v510
        %v616 = vadd.f32 %v466, %v514
        %v617 = vadd.f32 %v467, %v518
        %v618 = vadd.f32 %v468, %v522
        %v619 = vadd.f32 %v469, %v510
        %v620 = vadd.f32 %v470, %v514
        %v621 = vadd.f32 %v471, %v518
        %v622 = vadd.f32 %v472, %v522
        %v623 = vadd.f32 %v473, %v510
        %v624 = vadd.f32 %v474, %v514
        %v625 = vadd.f32 %v475, %v518
        %v626 = vadd.f32 %v476, %v522
        %v627 = vadd.f32 %v477, %v510
        %v628 = vadd.f32 %v478, %v514
        %v629 = vadd.f32 %v479, %v518
        %v630 = vadd.f32 %v480, %v522
        %v631 = vadd.f32 %v481, %v510
        %v632 = vadd.f32 %v482, %v514
        %v633 = vadd.f32 %v483, %v518
        %v634 = vadd.f32 %v484, %v522
        %v635 = vadd.f32 %v485, %v510
        %v636 = vadd.f32 %v486, %v514
        %v637 = vadd.f32 %v487, %v518
        %v638 = vadd.f32 %v488, %v522
        %v639 = vadd.f32 %v489, %v510
        %v640 = vadd.f32 %v490, %v514
        %v641 = vadd.f32 %v491, %v518
        %v642 = vadd.f32 %v492, %v522
        %v643 = vadd.f32 %v493, %v510
        %v644 = vadd.f32 %v494, %v514
        %v645 = vadd.f32 %v495, %v518
        %v646 = vadd.f32 %v496, %v522
        %v647 = vadd.f32 %v497, %v510
        %v648 = vadd.f32 %v498, %v514
        %v649 = vadd.f32 %v499, %v518
        %v650 = vadd.f32 %v500, %v522
        %v651 = vadd.f32 %v501, %v510
        %v652 = vadd.f32 %v502, %v514
        %v653 = vadd.f32 %v503, %v518
        %v654 = vadd.f32 %v504, %v522
        %v655 = vld [vmem:[%s224] sm:$0xff]
        %v656 = vld [vmem:[%s224 + $0x8] sm:$0xff]
        %v657 = vld [vmem:[%s224 + $0x10] sm:$0xff]
        %v658 = vld [vmem:[%s224 + $0x18] sm:$0xff]
        %v659 = vld [vmem:[%s224 + $0x20] sm:$0xff]
        %v660 = vld [vmem:[%s224 + $0x28] sm:$0xff]
        %v661 = vld [vmem:[%s224 + $0x30] sm:$0xff]
        %v662 = vld [vmem:[%s224 + $0x38] sm:$0xff]
        %v663 = vld [vmem:[%s224 + $0x40] sm:$0xff]
        %v664 = vld [vmem:[%s224 + $0x48] sm:$0xff]
        %v665 = vld [vmem:[%s224 + $0x50] sm:$0xff]
        %v666 = vld [vmem:[%s224 + $0x58] sm:$0xff]
        %v667 = vld [vmem:[%s224 + $0x60] sm:$0xff]
        %v668 = vld [vmem:[%s224 + $0x68] sm:$0xff]
        %v669 = vld [vmem:[%s224 + $0x70] sm:$0xff]
        %v670 = vld [vmem:[%s224 + $0x78] sm:$0xff]
        %v671 = vld [vmem:[%s224 + $0x80] sm:$0xff]
        %v672 = vld [vmem:[%s224 + $0x88] sm:$0xff]
        %v673 = vld [vmem:[%s224 + $0x90] sm:$0xff]
        %v674 = vld [vmem:[%s224 + $0x98] sm:$0xff]
        %v675 = vld [vmem:[%s224 + $0xa0] sm:$0xff]
        %v676 = vld [vmem:[%s224 + $0xa8] sm:$0xff]
        %v677 = vld [vmem:[%s224 + $0xb0] sm:$0xff]
        %v678 = vld [vmem:[%s224 + $0xb8] sm:$0xff]
        %v679 = vld [vmem:[%s224 + $0xc0] sm:$0xff]
        %v680 = vld [vmem:[%s224 + $0xc8] sm:$0xff]
        %v681 = vld [vmem:[%s224 + $0xd0] sm:$0xff]
        %v682 = vld [vmem:[%s224 + $0xd8] sm:$0xff]
        %v683 = vld [vmem:[%s224 + $0xe0] sm:$0xff]
        %v684 = vld [vmem:[%s224 + $0xe8] sm:$0xff]
        %v685 = vld [vmem:[%s224 + $0xf0] sm:$0xff]
        %v686 = vld [vmem:[%s224 + $0xf8] sm:$0xff]
        %v687 = vld [vmem:[%s224 + $0x100] sm:$0xff]
        %v688 = vld [vmem:[%s224 + $0x108] sm:$0xff]
        %v689 = vld [vmem:[%s224 + $0x110] sm:$0xff]
        %v690 = vld [vmem:[%s224 + $0x118] sm:$0xff]
        %v691 = vld [vmem:[%s224 + $0x120] sm:$0xff]
        %v692 = vld [vmem:[%s224 + $0x128] sm:$0xff]
        %v693 = vld [vmem:[%s224 + $0x130] sm:$0xff]
        %v694 = vld [vmem:[%s224 + $0x138] sm:$0xff]
        %v695 = vld [vmem:[%s224 + $0x140] sm:$0xff]
        %v696 = vld [vmem:[%s224 + $0x148] sm:$0xff]
        %v697 = vld [vmem:[%s224 + $0x150] sm:$0xff]
        %v698 = vld [vmem:[%s224 + $0x158] sm:$0xff]
        %v699 = vld [vmem:[%s224 + $0x160] sm:$0xff]
        %v700 = vld [vmem:[%s224 + $0x168] sm:$0xff]
        %v701 = vld [vmem:[%s224 + $0x170] sm:$0xff]
        %v702 = vld [vmem:[%s224 + $0x178] sm:$0xff]
        %v703 = vld [vmem:[%s224 + $0x180] sm:$0xff]
        %v704 = vld [vmem:[%s224 + $0x188] sm:$0xff]
        %v705 = vld [vmem:[%s224 + $0x190] sm:$0xff]
        %v706 = vld [vmem:[%s224 + $0x198] sm:$0xff]
        %v707 = vld [vmem:[%s224 + $0x1a0] sm:$0xff]
        %v708 = vld [vmem:[%s224 + $0x1a8] sm:$0xff]
        %v709 = vld [vmem:[%s224 + $0x1b0] sm:$0xff]
        %v710 = vld [vmem:[%s224 + $0x1b8] sm:$0xff]
        %v711 = vld [vmem:[%s224 + $0x1c0] sm:$0xff]
        %v712 = vld [vmem:[%s224 + $0x1c8] sm:$0xff]
        %v713 = vld [vmem:[%s224 + $0x1d0] sm:$0xff]
        %v714 = vld [vmem:[%s224 + $0x1d8] sm:$0xff]
        %v715 = vld [vmem:[%s224 + $0x1e0] sm:$0xff]
        %v716 = vld [vmem:[%s224 + $0x1e8] sm:$0xff]
        %v717 = vld [vmem:[%s224 + $0x1f0] sm:$0xff]
        %v718 = vld [vmem:[%s224 + $0x1f8] sm:$0xff]
        %v719 = vunpack.c.l.bf16 %v655
        %v720 = vunpack.c.h.bf16 %v655
        %v721 = vunpack.c.l.bf16 %v656
        %v722 = vunpack.c.h.bf16 %v656
        %v723 = vunpack.c.l.bf16 %v657
        %v724 = vunpack.c.h.bf16 %v657
        %v725 = vunpack.c.l.bf16 %v658
        %v726 = vunpack.c.h.bf16 %v658
        %v727 = vunpack.c.l.bf16 %v659
        %v728 = vunpack.c.h.bf16 %v659
        %v729 = vunpack.c.l.bf16 %v660
        %v730 = vunpack.c.h.bf16 %v660
        %v731 = vunpack.c.l.bf16 %v661
        %v732 = vunpack.c.h.bf16 %v661
        %v733 = vunpack.c.l.bf16 %v662
        %v734 = vunpack.c.h.bf16 %v662
        %v735 = vunpack.c.l.bf16 %v663
        %v736 = vunpack.c.h.bf16 %v663
        %v737 = vunpack.c.l.bf16 %v664
        %v738 = vunpack.c.h.bf16 %v664
        %v739 = vunpack.c.l.bf16 %v665
        %v740 = vunpack.c.h.bf16 %v665
        %v741 = vunpack.c.l.bf16 %v666
        %v742 = vunpack.c.h.bf16 %v666
        %v743 = vunpack.c.l.bf16 %v667
        %v744 = vunpack.c.h.bf16 %v667
        %v745 = vunpack.c.l.bf16 %v668
        %v746 = vunpack.c.h.bf16 %v668
        %v747 = vunpack.c.l.bf16 %v669
        %v748 = vunpack.c.h.bf16 %v669
        %v749 = vunpack.c.l.bf16 %v670
        %v750 = vunpack.c.h.bf16 %v670
        %v751 = vunpack.c.l.bf16 %v671
        %v752 = vunpack.c.h.bf16 %v671
        %v753 = vunpack.c.l.bf16 %v672
        %v754 = vunpack.c.h.bf16 %v672
        %v755 = vunpack.c.l.bf16 %v673
        %v756 = vunpack.c.h.bf16 %v673
        %v757 = vunpack.c.l.bf16 %v674
        %v758 = vunpack.c.h.bf16 %v674
        %v759 = vunpack.c.l.bf16 %v675
        %v760 = vunpack.c.h.bf16 %v675
        %v761 = vunpack.c.l.bf16 %v676
        %v762 = vunpack.c.h.bf16 %v676
        %v763 = vunpack.c.l.bf16 %v677
        %v764 = vunpack.c.h.bf16 %v677
        %v765 = vunpack.c.l.bf16 %v678
        %v766 = vunpack.c.h.bf16 %v678
        %v767 = vunpack.c.l.bf16 %v679
        %v768 = vunpack.c.h.bf16 %v679
        %v769 = vunpack.c.l.bf16 %v680
        %v770 = vunpack.c.h.bf16 %v680
        %v771 = vunpack.c.l.bf16 %v681
        %v772 = vunpack.c.h.bf16 %v681
        %v773 = vunpack.c.l.bf16 %v682
        %v774 = vunpack.c.h.bf16 %v682
        %v775 = vunpack.c.l.bf16 %v683
        %v776 = vunpack.c.h.bf16 %v683
        %v777 = vunpack.c.l.bf16 %v684
        %v778 = vunpack.c.h.bf16 %v684
        %v779 = vunpack.c.l.bf16 %v685
        %v780 = vunpack.c.h.bf16 %v685
        %v781 = vunpack.c.l.bf16 %v686
        %v782 = vunpack.c.h.bf16 %v686
        %v783 = vunpack.c.l.bf16 %v687
        %v784 = vunpack.c.h.bf16 %v687
        %v785 = vunpack.c.l.bf16 %v688
        %v786 = vunpack.c.h.bf16 %v688
        %v787 = vunpack.c.l.bf16 %v689
        %v788 = vunpack.c.h.bf16 %v689
        %v789 = vunpack.c.l.bf16 %v690
        %v790 = vunpack.c.h.bf16 %v690
        %v791 = vunpack.c.l.bf16 %v691
        %v792 = vunpack.c.h.bf16 %v691
        %v793 = vunpack.c.l.bf16 %v692
        %v794 = vunpack.c.h.bf16 %v692
        %v795 = vunpack.c.l.bf16 %v693
        %v796 = vunpack.c.h.bf16 %v693
        %v797 = vunpack.c.l.bf16 %v694
        %v798 = vunpack.c.h.bf16 %v694
        %v799 = vunpack.c.l.bf16 %v695
        %v800 = vunpack.c.h.bf16 %v695
        %v801 = vunpack.c.l.bf16 %v696
        %v802 = vunpack.c.h.bf16 %v696
        %v803 = vunpack.c.l.bf16 %v697
        %v804 = vunpack.c.h.bf16 %v697
        %v805 = vunpack.c.l.bf16 %v698
        %v806 = vunpack.c.h.bf16 %v698
        %v807 = vunpack.c.l.bf16 %v699
        %v808 = vunpack.c.h.bf16 %v699
        %v809 = vunpack.c.l.bf16 %v700
        %v810 = vunpack.c.h.bf16 %v700
        %v811 = vunpack.c.l.bf16 %v701
        %v812 = vunpack.c.h.bf16 %v701
        %v813 = vunpack.c.l.bf16 %v702
        %v814 = vunpack.c.h.bf16 %v702
        %v815 = vunpack.c.l.bf16 %v703
        %v816 = vunpack.c.h.bf16 %v703
        %v817 = vunpack.c.l.bf16 %v704
        %v818 = vunpack.c.h.bf16 %v704
        %v819 = vunpack.c.l.bf16 %v705
        %v820 = vunpack.c.h.bf16 %v705
        %v821 = vunpack.c.l.bf16 %v706
        %v822 = vunpack.c.h.bf16 %v706
        %v823 = vunpack.c.l.bf16 %v707
        %v824 = vunpack.c.h.bf16 %v707
        %v825 = vunpack.c.l.bf16 %v708
        %v826 = vunpack.c.h.bf16 %v708
        %v827 = vunpack.c.l.bf16 %v709
        %v828 = vunpack.c.h.bf16 %v709
        %v829 = vunpack.c.l.bf16 %v710
        %v830 = vunpack.c.h.bf16 %v710
        %v831 = vunpack.c.l.bf16 %v711
        %v832 = vunpack.c.h.bf16 %v711
        %v833 = vunpack.c.l.bf16 %v712
        %v834 = vunpack.c.h.bf16 %v712
        %v835 = vunpack.c.l.bf16 %v713
        %v836 = vunpack.c.h.bf16 %v713
        %v837 = vunpack.c.l.bf16 %v714
        %v838 = vunpack.c.h.bf16 %v714
        %v839 = vunpack.c.l.bf16 %v715
        %v840 = vunpack.c.h.bf16 %v715
        %v841 = vunpack.c.l.bf16 %v716
        %v842 = vunpack.c.h.bf16 %v716
        %v843 = vunpack.c.l.bf16 %v717
        %v844 = vunpack.c.h.bf16 %v717
        %v845 = vunpack.c.l.bf16 %v718
        %v846 = vunpack.c.h.bf16 %v718
        %v847 = vadd.f32 %v527, %v719
        %v848 = vadd.f32 %v528, %v720
        %v849 = vadd.f32 %v529, %v721
        %v850 = vadd.f32 %v530, %v722
        %v851 = vadd.f32 %v531, %v723
        %v852 = vadd.f32 %v532, %v724
        %v853 = vadd.f32 %v533, %v725
        %v854 = vadd.f32 %v534, %v726
        %v855 = vadd.f32 %v535, %v727
        %v856 = vadd.f32 %v536, %v728
        %v857 = vadd.f32 %v537, %v729
        %v858 = vadd.f32 %v538, %v730
        %v859 = vadd.f32 %v539, %v731
        %v860 = vadd.f32 %v540, %v732
        %v861 = vadd.f32 %v541, %v733
        %v862 = vadd.f32 %v542, %v734
        %v863 = vadd.f32 %v543, %v735
        %v864 = vadd.f32 %v544, %v736
        %v865 = vadd.f32 %v545, %v737
        %v866 = vadd.f32 %v546, %v738
        %v867 = vadd.f32 %v547, %v739
        %v868 = vadd.f32 %v548, %v740
        %v869 = vadd.f32 %v549, %v741
        %v870 = vadd.f32 %v550, %v742
        %v871 = vadd.f32 %v551, %v743
        %v872 = vadd.f32 %v552, %v744
        %v873 = vadd.f32 %v553, %v745
        %v874 = vadd.f32 %v554, %v746
        %v875 = vadd.f32 %v555, %v747
        %v876 = vadd.f32 %v556, %v748
        %v877 = vadd.f32 %v557, %v749
        %v878 = vadd.f32 %v558, %v750
        %v879 = vadd.f32 %v559, %v751
        %v880 = vadd.f32 %v560, %v752
        %v881 = vadd.f32 %v561, %v753
        %v882 = vadd.f32 %v562, %v754
        %v883 = vadd.f32 %v563, %v755
        %v884 = vadd.f32 %v564, %v756
        %v885 = vadd.f32 %v565, %v757
        %v886 = vadd.f32 %v566, %v758
        %v887 = vadd.f32 %v567, %v759
        %v888 = vadd.f32 %v568, %v760
        %v889 = vadd.f32 %v569, %v761
        %v890 = vadd.f32 %v570, %v762
        %v891 = vadd.f32 %v571, %v763
        %v892 = vadd.f32 %v572, %v764
        %v893 = vadd.f32 %v573, %v765
        %v894 = vadd.f32 %v574, %v766
        %v895 = vadd.f32 %v575, %v767
        %v896 = vadd.f32 %v576, %v768
        %v897 = vadd.f32 %v577, %v769
        %v898 = vadd.f32 %v578, %v770
        %v899 = vadd.f32 %v579, %v771
        %v900 = vadd.f32 %v580, %v772
        %v901 = vadd.f32 %v581, %v773
        %v902 = vadd.f32 %v582, %v774
        %v903 = vadd.f32 %v583, %v775
        %v904 = vadd.f32 %v584, %v776
        %v905 = vadd.f32 %v585, %v777
        %v906 = vadd.f32 %v586, %v778
        %v907 = vadd.f32 %v587, %v779
        %v908 = vadd.f32 %v588, %v780
        %v909 = vadd.f32 %v589, %v781
        %v910 = vadd.f32 %v590, %v782
        %v911 = vadd.f32 %v591, %v783
        %v912 = vadd.f32 %v592, %v784
        %v913 = vadd.f32 %v593, %v785
        %v914 = vadd.f32 %v594, %v786
        %v915 = vadd.f32 %v595, %v787
        %v916 = vadd.f32 %v596, %v788
        %v917 = vadd.f32 %v597, %v789
        %v918 = vadd.f32 %v598, %v790
        %v919 = vadd.f32 %v599, %v791
        %v920 = vadd.f32 %v600, %v792
        %v921 = vadd.f32 %v601, %v793
        %v922 = vadd.f32 %v602, %v794
        %v923 = vadd.f32 %v603, %v795
        %v924 = vadd.f32 %v604, %v796
        %v925 = vadd.f32 %v605, %v797
        %v926 = vadd.f32 %v606, %v798
        %v927 = vadd.f32 %v607, %v799
        %v928 = vadd.f32 %v608, %v800
        %v929 = vadd.f32 %v609, %v801
        %v930 = vadd.f32 %v610, %v802
        %v931 = vadd.f32 %v611, %v803
        %v932 = vadd.f32 %v612, %v804
        %v933 = vadd.f32 %v613, %v805
        %v934 = vadd.f32 %v614, %v806
        %v935 = vadd.f32 %v615, %v807
        %v936 = vadd.f32 %v616, %v808
        %v937 = vadd.f32 %v617, %v809
        %v938 = vadd.f32 %v618, %v810
        %v939 = vadd.f32 %v619, %v811
        %v940 = vadd.f32 %v620, %v812
        %v941 = vadd.f32 %v621, %v813
        %v942 = vadd.f32 %v622, %v814
        %v943 = vadd.f32 %v623, %v815
        %v944 = vadd.f32 %v624, %v816
        %v945 = vadd.f32 %v625, %v817
        %v946 = vadd.f32 %v626, %v818
        %v947 = vadd.f32 %v627, %v819
        %v948 = vadd.f32 %v628, %v820
        %v949 = vadd.f32 %v629, %v821
        %v950 = vadd.f32 %v630, %v822
        %v951 = vadd.f32 %v631, %v823
        %v952 = vadd.f32 %v632, %v824
        %v953 = vadd.f32 %v633, %v825
        %v954 = vadd.f32 %v634, %v826
        %v955 = vadd.f32 %v635, %v827
        %v956 = vadd.f32 %v636, %v828
        %v957 = vadd.f32 %v637, %v829
        %v958 = vadd.f32 %v638, %v830
        %v959 = vadd.f32 %v639, %v831
        %v960 = vadd.f32 %v640, %v832
        %v961 = vadd.f32 %v641, %v833
        %v962 = vadd.f32 %v642, %v834
        %v963 = vadd.f32 %v643, %v835
        %v964 = vadd.f32 %v644, %v836
        %v965 = vadd.f32 %v645, %v837
        %v966 = vadd.f32 %v646, %v838
        %v967 = vadd.f32 %v647, %v839
        %v968 = vadd.f32 %v648, %v840
        %v969 = vadd.f32 %v649, %v841
        %v970 = vadd.f32 %v650, %v842
        %v971 = vadd.f32 %v651, %v843
        %v972 = vadd.f32 %v652, %v844
        %v973 = vadd.f32 %v653, %v845
        %v974 = vadd.f32 %v654, %v846
        %v975 = vmax.f32 %v847, 0.0
        %v976 = vmax.f32 %v848, 0.0
        %v977 = vmax.f32 %v849, 0.0
        %v978 = vmax.f32 %v850, 0.0
        %v979 = vmax.f32 %v851, 0.0
        %v980 = vmax.f32 %v852, 0.0
        %v981 = vmax.f32 %v853, 0.0
        %v982 = vmax.f32 %v854, 0.0
        %v983 = vmax.f32 %v855, 0.0
        %v984 = vmax.f32 %v856, 0.0
        %v985 = vmax.f32 %v857, 0.0
        %v986 = vmax.f32 %v858, 0.0
        %v987 = vmax.f32 %v859, 0.0
        %v988 = vmax.f32 %v860, 0.0
        %v989 = vmax.f32 %v861, 0.0
        %v990 = vmax.f32 %v862, 0.0
        %v991 = vmax.f32 %v863, 0.0
        %v992 = vmax.f32 %v864, 0.0
        %v993 = vmax.f32 %v865, 0.0
        %v994 = vmax.f32 %v866, 0.0
        %v995 = vmax.f32 %v867, 0.0
        %v996 = vmax.f32 %v868, 0.0
        %v997 = vmax.f32 %v869, 0.0
        %v998 = vmax.f32 %v870, 0.0
        %v999 = vmax.f32 %v871, 0.0
        %v1000 = vmax.f32 %v872, 0.0
        %v1001 = vmax.f32 %v873, 0.0
        %v1002 = vmax.f32 %v874, 0.0
        %v1003 = vmax.f32 %v875, 0.0
        %v1004 = vmax.f32 %v876, 0.0
        %v1005 = vmax.f32 %v877, 0.0
        %v1006 = vmax.f32 %v878, 0.0
        %v1007 = vmax.f32 %v879, 0.0
        %v1008 = vmax.f32 %v880, 0.0
        %v1009 = vmax.f32 %v881, 0.0
        %v1010 = vmax.f32 %v882, 0.0
        %v1011 = vmax.f32 %v883, 0.0
        %v1012 = vmax.f32 %v884, 0.0
        %v1013 = vmax.f32 %v885, 0.0
        %v1014 = vmax.f32 %v886, 0.0
        %v1015 = vmax.f32 %v887, 0.0
        %v1016 = vmax.f32 %v888, 0.0
        %v1017 = vmax.f32 %v889, 0.0
        %v1018 = vmax.f32 %v890, 0.0
        %v1019 = vmax.f32 %v891, 0.0
        %v1020 = vmax.f32 %v892, 0.0
        %v1021 = vmax.f32 %v893, 0.0
        %v1022 = vmax.f32 %v894, 0.0
        %v1023 = vmax.f32 %v895, 0.0
        %v1024 = vmax.f32 %v896, 0.0
        %v1025 = vmax.f32 %v897, 0.0
        %v1026 = vmax.f32 %v898, 0.0
        %v1027 = vmax.f32 %v899, 0.0
        %v1028 = vmax.f32 %v900, 0.0
        %v1029 = vmax.f32 %v901, 0.0
        %v1030 = vmax.f32 %v902, 0.0
        %v1031 = vmax.f32 %v903, 0.0
        %v1032 = vmax.f32 %v904, 0.0
        %v1033 = vmax.f32 %v905, 0.0
        %v1034 = vmax.f32 %v906, 0.0
        %v1035 = vmax.f32 %v907, 0.0
        %v1036 = vmax.f32 %v908, 0.0
        %v1037 = vmax.f32 %v909, 0.0
        %v1038 = vmax.f32 %v910, 0.0
        %v1039 = vmax.f32 %v911, 0.0
        %v1040 = vmax.f32 %v912, 0.0
        %v1041 = vmax.f32 %v913, 0.0
        %v1042 = vmax.f32 %v914, 0.0
        %v1043 = vmax.f32 %v915, 0.0
        %v1044 = vmax.f32 %v916, 0.0
        %v1045 = vmax.f32 %v917, 0.0
        %v1046 = vmax.f32 %v918, 0.0
        %v1047 = vmax.f32 %v919, 0.0
        %v1048 = vmax.f32 %v920, 0.0
        %v1049 = vmax.f32 %v921, 0.0
        %v1050 = vmax.f32 %v922, 0.0
        %v1051 = vmax.f32 %v923, 0.0
        %v1052 = vmax.f32 %v924, 0.0
        %v1053 = vmax.f32 %v925, 0.0
        %v1054 = vmax.f32 %v926, 0.0
        %v1055 = vmax.f32 %v927, 0.0
        %v1056 = vmax.f32 %v928, 0.0
        %v1057 = vmax.f32 %v929, 0.0
        %v1058 = vmax.f32 %v930, 0.0
        %v1059 = vmax.f32 %v931, 0.0
        %v1060 = vmax.f32 %v932, 0.0
        %v1061 = vmax.f32 %v933, 0.0
        %v1062 = vmax.f32 %v934, 0.0
        %v1063 = vmax.f32 %v935, 0.0
        %v1064 = vmax.f32 %v936, 0.0
        %v1065 = vmax.f32 %v937, 0.0
        %v1066 = vmax.f32 %v938, 0.0
        %v1067 = vmax.f32 %v939, 0.0
        %v1068 = vmax.f32 %v940, 0.0
        %v1069 = vmax.f32 %v941, 0.0
        %v1070 = vmax.f32 %v942, 0.0
        %v1071 = vmax.f32 %v943, 0.0
        %v1072 = vmax.f32 %v944, 0.0
        %v1073 = vmax.f32 %v945, 0.0
        %v1074 = vmax.f32 %v946, 0.0
        %v1075 = vmax.f32 %v947, 0.0
        %v1076 = vmax.f32 %v948, 0.0
        %v1077 = vmax.f32 %v949, 0.0
        %v1078 = vmax.f32 %v950, 0.0
        %v1079 = vmax.f32 %v951, 0.0
        %v1080 = vmax.f32 %v952, 0.0
        %v1081 = vmax.f32 %v953, 0.0
        %v1082 = vmax.f32 %v954, 0.0
        %v1083 = vmax.f32 %v955, 0.0
        %v1084 = vmax.f32 %v956, 0.0
        %v1085 = vmax.f32 %v957, 0.0
        %v1086 = vmax.f32 %v958, 0.0
        %v1087 = vmax.f32 %v959, 0.0
        %v1088 = vmax.f32 %v960, 0.0
        %v1089 = vmax.f32 %v961, 0.0
        %v1090 = vmax.f32 %v962, 0.0
        %v1091 = vmax.f32 %v963, 0.0
        %v1092 = vmax.f32 %v964, 0.0
        %v1093 = vmax.f32 %v965, 0.0
        %v1094 = vmax.f32 %v966, 0.0
        %v1095 = vmax.f32 %v967, 0.0
        %v1096 = vmax.f32 %v968, 0.0
        %v1097 = vmax.f32 %v969, 0.0
        %v1098 = vmax.f32 %v970, 0.0
        %v1099 = vmax.f32 %v971, 0.0
        %v1100 = vmax.f32 %v972, 0.0
        %v1101 = vmax.f32 %v973, 0.0
        %v1102 = vmax.f32 %v974, 0.0
        %1103 = vst [vmem:[%s211] sm:$0xff] %v975
        %1104 = vst [vmem:[%s211 + $0x8] sm:$0xff] %v976
        %1105 = vst [vmem:[%s211 + $0x10] sm:$0xff] %v977
        %1106 = vst [vmem:[%s211 + $0x18] sm:$0xff] %v978
        %1107 = vst [vmem:[%s211 + $0x20] sm:$0xff] %v979
        %1108 = vst [vmem:[%s211 + $0x28] sm:$0xff] %v980
        %1109 = vst [vmem:[%s211 + $0x30] sm:$0xff] %v981
        %1110 = vst [vmem:[%s211 + $0x38] sm:$0xff] %v982
        %1111 = vst [vmem:[%s211 + $0x40] sm:$0xff] %v983
        %1112 = vst [vmem:[%s211 + $0x48] sm:$0xff] %v984
        %1113 = vst [vmem:[%s211 + $0x50] sm:$0xff] %v985
        %1114 = vst [vmem:[%s211 + $0x58] sm:$0xff] %v986
        %1115 = vst [vmem:[%s211 + $0x60] sm:$0xff] %v987
        %1116 = vst [vmem:[%s211 + $0x68] sm:$0xff] %v988
        %1117 = vst [vmem:[%s211 + $0x70] sm:$0xff] %v989
        %1118 = vst [vmem:[%s211 + $0x78] sm:$0xff] %v990
        %1119 = vst [vmem:[%s211 + $0x80] sm:$0xff] %v991
        %1120 = vst [vmem:[%s211 + $0x88] sm:$0xff] %v992
        %1121 = vst [vmem:[%s211 + $0x90] sm:$0xff] %v993
        %1122 = vst [vmem:[%s211 + $0x98] sm:$0xff] %v994
        %1123 = vst [vmem:[%s211 + $0xa0] sm:$0xff] %v995
        %1124 = vst [vmem:[%s211 + $0xa8] sm:$0xff] %v996
        %1125 = vst [vmem:[%s211 + $0xb0] sm:$0xff] %v997
        %1126 = vst [vmem:[%s211 + $0xb8] sm:$0xff] %v998
        %1127 = vst [vmem:[%s211 + $0xc0] sm:$0xff] %v999
        %1128 = vst [vmem:[%s211 + $0xc8] sm:$0xff] %v1000
        %1129 = vst [vmem:[%s211 + $0xd0] sm:$0xff] %v1001
        %1130 = vst [vmem:[%s211 + $0xd8] sm:$0xff] %v1002
        %1131 = vst [vmem:[%s211 + $0xe0] sm:$0xff] %v1003
        %1132 = vst [vmem:[%s211 + $0xe8] sm:$0xff] %v1004
        %1133 = vst [vmem:[%s211 + $0xf0] sm:$0xff] %v1005
        %1134 = vst [vmem:[%s211 + $0xf8] sm:$0xff] %v1006
        %1135 = vst [vmem:[%s211 + $0x100] sm:$0xff] %v1007
        %1136 = vst [vmem:[%s211 + $0x108] sm:$0xff] %v1008
        %1137 = vst [vmem:[%s211 + $0x110] sm:$0xff] %v1009
        %1138 = vst [vmem:[%s211 + $0x118] sm:$0xff] %v1010
        %1139 = vst [vmem:[%s211 + $0x120] sm:$0xff] %v1011
        %1140 = vst [vmem:[%s211 + $0x128] sm:$0xff] %v1012
        %1141 = vst [vmem:[%s211 + $0x130] sm:$0xff] %v1013
        %1142 = vst [vmem:[%s211 + $0x138] sm:$0xff] %v1014
        %1143 = vst [vmem:[%s211 + $0x140] sm:$0xff] %v1015
        %1144 = vst [vmem:[%s211 + $0x148] sm:$0xff] %v1016
        %1145 = vst [vmem:[%s211 + $0x150] sm:$0xff] %v1017
        %1146 = vst [vmem:[%s211 + $0x158] sm:$0xff] %v1018
        %1147 = vst [vmem:[%s211 + $0x160] sm:$0xff] %v1019
        %1148 = vst [vmem:[%s211 + $0x168] sm:$0xff] %v1020
        %1149 = vst [vmem:[%s211 + $0x170] sm:$0xff] %v1021
        %1150 = vst [vmem:[%s211 + $0x178] sm:$0xff] %v1022
        %1151 = vst [vmem:[%s211 + $0x180] sm:$0xff] %v1023
        %1152 = vst [vmem:[%s211 + $0x188] sm:$0xff] %v1024
        %1153 = vst [vmem:[%s211 + $0x190] sm:$0xff] %v1025
        %1154 = vst [vmem:[%s211 + $0x198] sm:$0xff] %v1026
        %1155 = vst [vmem:[%s211 + $0x1a0] sm:$0xff] %v1027
        %1156 = vst [vmem:[%s211 + $0x1a8] sm:$0xff] %v1028
        %1157 = vst [vmem:[%s211 + $0x1b0] sm:$0xff] %v1029
        %1158 = vst [vmem:[%s211 + $0x1b8] sm:$0xff] %v1030
        %1159 = vst [vmem:[%s211 + $0x1c0] sm:$0xff] %v1031
        %1160 = vst [vmem:[%s211 + $0x1c8] sm:$0xff] %v1032
        %1161 = vst [vmem:[%s211 + $0x1d0] sm:$0xff] %v1033
        %1162 = vst [vmem:[%s211 + $0x1d8] sm:$0xff] %v1034
        %1163 = vst [vmem:[%s211 + $0x1e0] sm:$0xff] %v1035
        %1164 = vst [vmem:[%s211 + $0x1e8] sm:$0xff] %v1036
        %1165 = vst [vmem:[%s211 + $0x1f0] sm:$0xff] %v1037
        %1166 = vst [vmem:[%s211 + $0x1f8] sm:$0xff] %v1038
        %1167 = vst [vmem:[%s211 + $0x200] sm:$0xff] %v1039
        %1168 = vst [vmem:[%s211 + $0x208] sm:$0xff] %v1040
        %1169 = vst [vmem:[%s211 + $0x210] sm:$0xff] %v1041
        %1170 = vst [vmem:[%s211 + $0x218] sm:$0xff] %v1042
        %1171 = vst [vmem:[%s211 + $0x220] sm:$0xff] %v1043
        %1172 = vst [vmem:[%s211 + $0x228] sm:$0xff] %v1044
        %1173 = vst [vmem:[%s211 + $0x230] sm:$0xff] %v1045
        %1174 = vst [vmem:[%s211 + $0x238] sm:$0xff] %v1046
        %1175 = vst [vmem:[%s211 + $0x240] sm:$0xff] %v1047
        %1176 = vst [vmem:[%s211 + $0x248] sm:$0xff] %v1048
        %1177 = vst [vmem:[%s211 + $0x250] sm:$0xff] %v1049
        %1178 = vst [vmem:[%s211 + $0x258] sm:$0xff] %v1050
        %1179 = vst [vmem:[%s211 + $0x260] sm:$0xff] %v1051
        %1180 = vst [vmem:[%s211 + $0x268] sm:$0xff] %v1052
        %1181 = vst [vmem:[%s211 + $0x270] sm:$0xff] %v1053
        %1182 = vst [vmem:[%s211 + $0x278] sm:$0xff] %v1054
        %1183 = vst [vmem:[%s211 + $0x280] sm:$0xff] %v1055
        %1184 = vst [vmem:[%s211 + $0x288] sm:$0xff] %v1056
        %1185 = vst [vmem:[%s211 + $0x290] sm:$0xff] %v1057
        %1186 = vst [vmem:[%s211 + $0x298] sm:$0xff] %v1058
        %1187 = vst [vmem:[%s211 + $0x2a0] sm:$0xff] %v1059
        %1188 = vst [vmem:[%s211 + $0x2a8] sm:$0xff] %v1060
        %1189 = vst [vmem:[%s211 + $0x2b0] sm:$0xff] %v1061
        %1190 = vst [vmem:[%s211 + $0x2b8] sm:$0xff] %v1062
        %1191 = vst [vmem:[%s211 + $0x2c0] sm:$0xff] %v1063
        %1192 = vst [vmem:[%s211 + $0x2c8] sm:$0xff] %v1064
        %1193 = vst [vmem:[%s211 + $0x2d0] sm:$0xff] %v1065
        %1194 = vst [vmem:[%s211 + $0x2d8] sm:$0xff] %v1066
        %1195 = vst [vmem:[%s211 + $0x2e0] sm:$0xff] %v1067
        %1196 = vst [vmem:[%s211 + $0x2e8] sm:$0xff] %v1068
        %1197 = vst [vmem:[%s211 + $0x2f0] sm:$0xff] %v1069
        %1198 = vst [vmem:[%s211 + $0x2f8] sm:$0xff] %v1070
        %1199 = vst [vmem:[%s211 + $0x300] sm:$0xff] %v1071
        %1200 = vst [vmem:[%s211 + $0x308] sm:$0xff] %v1072
        %1201 = vst [vmem:[%s211 + $0x310] sm:$0xff] %v1073
        %1202 = vst [vmem:[%s211 + $0x318] sm:$0xff] %v1074
        %1203 = vst [vmem:[%s211 + $0x320] sm:$0xff] %v1075
        %1204 = vst [vmem:[%s211 + $0x328] sm:$0xff] %v1076
        %1205 = vst [vmem:[%s211 + $0x330] sm:$0xff] %v1077
        %1206 = vst [vmem:[%s211 + $0x338] sm:$0xff] %v1078
        %1207 = vst [vmem:[%s211 + $0x340] sm:$0xff] %v1079
        %1208 = vst [vmem:[%s211 + $0x348] sm:$0xff] %v1080
        %1209 = vst [vmem:[%s211 + $0x350] sm:$0xff] %v1081
        %1210 = vst [vmem:[%s211 + $0x358] sm:$0xff] %v1082
        %1211 = vst [vmem:[%s211 + $0x360] sm:$0xff] %v1083
        %1212 = vst [vmem:[%s211 + $0x368] sm:$0xff] %v1084
        %1213 = vst [vmem:[%s211 + $0x370] sm:$0xff] %v1085
        %1214 = vst [vmem:[%s211 + $0x378] sm:$0xff] %v1086
        %1215 = vst [vmem:[%s211 + $0x380] sm:$0xff] %v1087
        %1216 = vst [vmem:[%s211 + $0x388] sm:$0xff] %v1088
        %1217 = vst [vmem:[%s211 + $0x390] sm:$0xff] %v1089
        %1218 = vst [vmem:[%s211 + $0x398] sm:$0xff] %v1090
        %1219 = vst [vmem:[%s211 + $0x3a0] sm:$0xff] %v1091
        %1220 = vst [vmem:[%s211 + $0x3a8] sm:$0xff] %v1092
        %1221 = vst [vmem:[%s211 + $0x3b0] sm:$0xff] %v1093
        %1222 = vst [vmem:[%s211 + $0x3b8] sm:$0xff] %v1094
        %1223 = vst [vmem:[%s211 + $0x3c0] sm:$0xff] %v1095
        %1224 = vst [vmem:[%s211 + $0x3c8] sm:$0xff] %v1096
        %1225 = vst [vmem:[%s211 + $0x3d0] sm:$0xff] %v1097
        %1226 = vst [vmem:[%s211 + $0x3d8] sm:$0xff] %v1098
        %1227 = vst [vmem:[%s211 + $0x3e0] sm:$0xff] %v1099
        %1228 = vst [vmem:[%s211 + $0x3e8] sm:$0xff] %v1100
        %1229 = vst [vmem:[%s211 + $0x3f0] sm:$0xff] %v1101
        %1230 = vst [vmem:[%s211 + $0x3f8] sm:$0xff] %v1102
        %s1231 = sand.u32 %s120, 1
        %s1232 = scalar_lea.sflag [#allocation3], %s1231
        %s1233 = sand.u32 %s120, 1
        %s1234 = smul.addr %s1233, 1024
        %s1235 = scalar_lea.vmem [#allocation2], %s1234
        // Predicated region
        $region37: #{_lambda_.7} parent=35 // pred_check
          %p1236 = pneg %p130
        $region38: #{_lambda_.7} parent=35 // pred_check_branch
          %1238 = sbr.rel (%p1236) target = $region40
        $region39: #{_lambda_.7} parent=35 // pred_region
          %s1239 = smul.u32 32, %s18
          %s1241 = ssub.s32 16384, 16384
          %1242 = vsyncadd %s1232, %s1241
          %s1243 = smul.addr %s1239, 4
          %s1244 = smul.addr %s1243, 128
          %s1245 = scalar_lea.hbm %s4, %s1244
          %s1246 = sshll.u32 %s1235, 4
          %s1247 = int_to_ptr.vmem [resolvable:$true] %s1246
          %1252 = dma.vmem_to_hbm [thread:$0]  %s1247, 16384, %s1245, %s1232, 512, 512, 32
        $region40: #{_lambda_.7} parent=35 // pred_fallthru
          _
      $region36: #{_lambda_.7} parent=5 // pred_fallthru
        _
      %p1253 = scmp.le.s32.totalorder 2, %s13
      // Predicated region
      $region41: #{_lambda_.7} parent=5 // pred_check
        %p1254 = pneg %p1253
      $region42: #{_lambda_.7} parent=5 // pred_check_branch
        %1256 = sbr.rel (%p1254) target = $region44
      $region43: #{_lambda_.7} parent=5 // pred_region
        %s1257 = ssub.s32 %s13, 2
        // Predicated region
        $region45: #{_lambda_.7} parent=43 // pred_check
          %p1258 = pneg %p136
        $region46: #{_lambda_.7} parent=43 // pred_check_branch
          %1260 = sbr.rel (%p1258) target = $region48
        $region47: #{_lambda_.7} parent=43 // pred_region
          %s1261 = sand.u32 %s121, 1
          %s1262 = scalar_lea.sflag [#allocation3], %s1261
          %s1263 = sand.u32 %s121, 1
          %s1264 = smul.addr %s1263, 1024
          %s1265 = scalar_lea.vmem [#allocation2], %s1264
          %1266 = dma.done %s1262, 16384
        $region48: #{_lambda_.7} parent=43 // pred_fallthru
          _
      $region44: #{_lambda_.7} parent=5 // pred_fallthru
        _
    $region6: #{_lambda_.7} parent=1 // loop_footer
      %s17 = sadd.s32 1, %s13
    $region7: #{_lambda_.7} parent=1 // loop_footer_branch
      %12 = sbr.rel target = $region3
    $region8: #{_lambda_.7} parent=1 // loop_exit
      _
    %1267 = vsyncpa [#allocation3], 1
    %s1268 = scalar_lea.sflag [#allocation3], 1
    %1269 = vsyncpa %s1268, 1

// kernel: _lambda_.5
$region0: #{_lambda_.5}
  #allocation0 [shape = 'u32[]', space=smem, size = 0x4, offset = 0x4, fixed_abs, tag = 'smem constant byte address 0x4 - core index']
  #allocation1 [shape = 'u32[144,128]{1,0:T(1,128)}', space=vmem, size = 0x12000, scoped, tag = 'internal scratch']
  %s0 = inlined_call_operand.vmem [shape: f32[512,128], index: 0, kind: input, shape index: {}]
  %s1 = inlined_call_operand.vmem [shape: f32[1,128], index: 1, kind: input, shape index: {}]
  %s2 = inlined_call_operand.vmem [shape: f32[1,128], index: 2, kind: input, shape index: {}]
  %s3 = inlined_call_operand.vmem [shape: bf16[1152,128], index: 3, kind: input, shape index: {}]
  %s4 = inlined_call_operand.vmem [shape: f32[512,128], index: 4, kind: output, shape index: {0}]
  %s5 = inlined_call_operand.vmem [shape: f32[2,128], index: 5, kind: output, shape index: {1}]
  %6 = xla_tuple %s4, %s5
  %s7 = sld [smem:[#allocation0]]
  $region61: #{_lambda_.5} parent=0
    _
  %s9 = ssub.s32 1, %s7
  %s10 = scalar_select 0, %s9, %s7
  loop: start=0, step=1, limit=4
  $region2: #{_lambda_.5} parent=0 // loop_pre_header
    _
  $region3: #{_lambda_.5} parent=0 // loop_header
    %s12 = sphi 0, %s16
    %p13 = scmp.ge.s32.totalorder %s12, 4
    %s22 = sphi 0, %s24
    %s25 = sphi 0, %s22
    %s26 = sphi 0, %s25
    %s42 = sphi 0, %s26
    %s46 = sphi 0, %s46
    %s48 = sphi 0, %s46
    %s49 = sphi 0, %s48
    %s63 = sphi 0, %s49
    %s67 = sphi 0, %s67
    %s69 = sphi 0, %s67
    %s70 = sphi 0, %s69
    %s84 = sphi 0, %s70
    %s88 = sphi 0, %s88
    %s90 = sphi 0, %s88
    %s91 = sphi 0, %s90
    %s105 = sphi 0, %s91
    %s111 = sphi 0, %s113
    %s114 = sphi 0, %s111
    %s115 = sphi 0, %s114
    %s131 = sphi 0, %s115
    %s135 = sphi 0, %s135
    %s137 = sphi 0, %s135
    %s138 = sphi 0, %s137
    %s152 = sphi 0, %s138
  $region4: #{_lambda_.5} parent=0 // loop_header_branch
    %15 = sbr.rel (%p13) target = $region8
  $region5: #{_lambda_.5} parent=0 // loop_body
    %s17 = ssub.s32 %s12, 1
    %s18 = ssub.s32 %s12, 2
    %s19 = sadd.s32 %s12, 1
    %s20 = ssub.s32 %s12, %s19
    %p21 = scmp.eq.s32.totalorder %s20, 0
    %s23 = sadd.s32 %s22, 1
    %s24 = scalar_select %p21, %s22, %s23
    %p27 = pneg %p21
    %p28 = scmp.eq.s32.totalorder %s12, 1
    %p29 = por %p27, %p28
    %p30 = scmp.ne.s32.totalorder %s22, %s25
    %p31 = scmp.eq.s32.totalorder %s12, 0
    %p32 = por %p30, %p31
    %p33 = scmp.ne.s32.totalorder %s22, %s25
    %p34 = scmp.eq.s32.totalorder %s17, 1
    %p35 = por %p33, %p34
    %p36 = scmp.ne.s32.totalorder %s25, %s26
    %p37 = scmp.eq.s32.totalorder %s17, 0
    %p38 = por %p36, %p37
    %p39 = scmp.ne.s32.totalorder %s25, %s26
    %p40 = scmp.eq.s32.totalorder %s18, 1
    %p41 = por %p39, %p40
    %p43 = scmp.ne.s32.totalorder %s26, %s42
    %p44 = scmp.eq.s32.totalorder %s18, 0
    %p45 = por %p43, %p44
    %s47 = sadd.s32 %s46, 1
    %p50 = scmp.eq.s32.totalorder %s12, 1
    %p51 = scmp.ne.s32.totalorder %s46, %s48
    %p52 = scmp.eq.s32.totalorder %s12, 0
    %p53 = por %p51, %p52
    %p54 = scmp.ne.s32.totalorder %s46, %s48
    %p55 = scmp.eq.s32.totalorder %s17, 1
    %p56 = por %p54, %p55
    %p57 = scmp.ne.s32.totalorder %s48, %s49
    %p58 = scmp.eq.s32.totalorder %s17, 0
    %p59 = por %p57, %p58
    %p60 = scmp.ne.s32.totalorder %s48, %s49
    %p61 = scmp.eq.s32.totalorder %s18, 1
    %p62 = por %p60, %p61
    %p64 = scmp.ne.s32.totalorder %s49, %s63
    %p65 = scmp.eq.s32.totalorder %s18, 0
    %p66 = por %p64, %p65
    %s68 = sadd.s32 %s67, 1
    %p71 = scmp.eq.s32.totalorder %s12, 1
    %p72 = scmp.ne.s32.totalorder %s67, %s69
    %p73 = scmp.eq.s32.totalorder %s12, 0
    %p74 = por %p72, %p73
    %p75 = scmp.ne.s32.totalorder %s67, %s69
    %p76 = scmp.eq.s32.totalorder %s17, 1
    %p77 = por %p75, %p76
    %p78 = scmp.ne.s32.totalorder %s69, %s70
    %p79 = scmp.eq.s32.totalorder %s17, 0
    %p80 = por %p78, %p79
    %p81 = scmp.ne.s32.totalorder %s69, %s70
    %p82 = scmp.eq.s32.totalorder %s18, 1
    %p83 = por %p81, %p82
    %p85 = scmp.ne.s32.totalorder %s70, %s84
    %p86 = scmp.eq.s32.totalorder %s18, 0
    %p87 = por %p85, %p86
    %s89 = sadd.s32 %s88, 1
    %p92 = scmp.eq.s32.totalorder %s12, 1
    %p93 = scmp.ne.s32.totalorder %s88, %s90
    %p94 = scmp.eq.s32.totalorder %s12, 0
    %p95 = por %p93, %p94
    %p96 = scmp.ne.s32.totalorder %s88, %s90
    %p97 = scmp.eq.s32.totalorder %s17, 1
    %p98 = por %p96, %p97
    %p99 = scmp.ne.s32.totalorder %s90, %s91
    %p100 = scmp.eq.s32.totalorder %s17, 0
    %p101 = por %p99, %p100
    %p102 = scmp.ne.s32.totalorder %s90, %s91
    %p103 = scmp.eq.s32.totalorder %s18, 1
    %p104 = por %p102, %p103
    %p106 = scmp.ne.s32.totalorder %s91, %s105
    %p107 = scmp.eq.s32.totalorder %s18, 0
    %p108 = por %p106, %p107
    %s109 = ssub.s32 %s12, %s19
    %p110 = scmp.eq.s32.totalorder %s109, 0
    %s112 = sadd.s32 %s111, 1
    %s113 = scalar_select %p110, %s111, %s112
    %p116 = pneg %p110
    %p117 = scmp.eq.s32.totalorder %s12, 1
    %p118 = por %p116, %p117
    %p119 = scmp.ne.s32.totalorder %s111, %s114
    %p120 = scmp.eq.s32.totalorder %s12, 0
    %p121 = por %p119, %p120
    %p122 = scmp.ne.s32.totalorder %s111, %s114
    %p123 = scmp.eq.s32.totalorder %s17, 1
    %p124 = por %p122, %p123
    %p125 = scmp.ne.s32.totalorder %s114, %s115
    %p126 = scmp.eq.s32.totalorder %s17, 0
    %p127 = por %p125, %p126
    %p128 = scmp.ne.s32.totalorder %s114, %s115
    %p129 = scmp.eq.s32.totalorder %s18, 1
    %p130 = por %p128, %p129
    %p132 = scmp.ne.s32.totalorder %s115, %s131
    %p133 = scmp.eq.s32.totalorder %s18, 0
    %p134 = por %p132, %p133
    %s136 = sadd.s32 %s135, 1
    %p139 = scmp.eq.s32.totalorder %s12, 1
    %p140 = scmp.ne.s32.totalorder %s135, %s137
    %p141 = scmp.eq.s32.totalorder %s12, 0
    %p142 = por %p140, %p141
    %p143 = scmp.ne.s32.totalorder %s135, %s137
    %p144 = scmp.eq.s32.totalorder %s17, 1
    %p145 = por %p143, %p144
    %p146 = scmp.ne.s32.totalorder %s137, %s138
    %p147 = scmp.eq.s32.totalorder %s17, 0
    %p148 = por %p146, %p147
    %p149 = scmp.ne.s32.totalorder %s137, %s138
    %p150 = scmp.eq.s32.totalorder %s18, 1
    %p151 = por %p149, %p150
    %p153 = scmp.ne.s32.totalorder %s138, %s152
    %p154 = scmp.eq.s32.totalorder %s18, 0
    %p155 = por %p153, %p154
    %p156 = scmp.le.s32.totalorder 1, %s12
    %p157 = scmp.lt.s32.totalorder %s12, 3
    %p158 = pnand %p156, %p157
    %p159 = pneg %p158
    // Predicated region
    $region9: #{_lambda_.5} parent=5 // pred_check
      _
    $region10: #{_lambda_.5} parent=5 // pred_check_branch
      %161 = sbr.rel (%p158) target = $region12
    $region11: #{_lambda_.5} parent=5 // pred_region
      %s162 = ssub.s32 %s12, 1
      // Predicated region
      $region13: #{_lambda_.5} parent=11 // pred_check
        %p163 = pneg %p59
      $region14: #{_lambda_.5} parent=11 // pred_check_branch
        %165 = sbr.rel (%p163) target = $region16
      $region15: #{_lambda_.5} parent=11 // pred_region
        _
      $region16: #{_lambda_.5} parent=11 // pred_fallthru
        _
      // Predicated region
      $region17: #{_lambda_.5} parent=11 // pred_check
        %p166 = pneg %p80
      $region18: #{_lambda_.5} parent=11 // pred_check_branch
        %168 = sbr.rel (%p166) target = $region20
      $region19: #{_lambda_.5} parent=11 // pred_region
        _
      $region20: #{_lambda_.5} parent=11 // pred_fallthru
        _
      // Predicated region
      $region21: #{_lambda_.5} parent=11 // pred_check
        %p169 = pneg %p101
      $region22: #{_lambda_.5} parent=11 // pred_check_branch
        %171 = sbr.rel (%p169) target = $region24
      $region23: #{_lambda_.5} parent=11 // pred_region
        _
      $region24: #{_lambda_.5} parent=11 // pred_fallthru
        _
    $region12: #{_lambda_.5} parent=5 // pred_fallthru
      _
    %p172 = scmp.lt.s32.totalorder %s12, 2
    // Predicated region
    $region25: #{_lambda_.5} parent=5 // pred_check
      %p173 = pneg %p172
    $region26: #{_lambda_.5} parent=5 // pred_check_branch
      %175 = sbr.rel (%p173) target = $region28
    $region27: #{_lambda_.5} parent=5 // pred_region
      // Predicated region
      $region29: #{_lambda_.5} parent=27 // pred_check
        %p176 = pneg %p32
      $region30: #{_lambda_.5} parent=27 // pred_check_branch
        %178 = sbr.rel (%p176) target = $region32
      $region31: #{_lambda_.5} parent=27 // pred_region
        %s179 = smul.u32 32, %s12
        %p180 = scmp.lt.s32.totalorder %s179, 63
        %s181 = scalar_select %p180, %s179, 63
        %s182 = smul.addr %s181, 8
        %s183 = scalar_lea.vmem %s0, %s182
        %s184 = smul.u32 32, %s12
      $region32: #{_lambda_.5} parent=27 // pred_fallthru
        _
    $region28: #{_lambda_.5} parent=5 // pred_fallthru
      _
    %p185 = scmp.le.s32.totalorder 1, %s12
    %p186 = scmp.lt.s32.totalorder %s12, 3
    %p187 = pnand %p185, %p186
    %p188 = pneg %p187
    // Predicated region
    $region33: #{_lambda_.5} parent=5 // pred_check
      _
    $region34: #{_lambda_.5} parent=5 // pred_check_branch
      %190 = sbr.rel (%p187) target = $region36
    $region35: #{_lambda_.5} parent=5 // pred_region
      %s191 = ssub.s32 %s12, 1
      %s192 = smul.u32 32, %s17
      %p193 = scmp.lt.s32.totalorder %s192, 63
      %s194 = scalar_select %p193, %s192, 63
      %s195 = smul.addr %s194, 8
      %s196 = scalar_lea.vmem %s0, %s195
      %p197 = pneg %p38
      %p198 = pneg %p35
      %p199 = pneg %p59
      %p200 = pneg %p56
      %p201 = pneg %p80
      %p202 = pneg %p77
      %p203 = pneg %p101
      %p204 = pneg %p98
      %p205 = pneg %p127
      %p206 = pneg %p124
      %s207 = smul.u32 32, %s17
      %p208 = scmp.lt.s32.totalorder %s207, 63
      %s209 = scalar_select %p208, %s207, 63
      %s210 = smul.addr %s209, 8
      %s211 = scalar_lea.vmem %s4, %s210
      %p212 = pneg %p148
      %p213 = pneg %p145
      %s214 = smul.u32 32, %s17
      %p215 = scmp.lt.s32.totalorder %s214, 63
      %s216 = scalar_select %p215, %s214, 63
      %s217 = smul.addr %s216, 8
      %s218 = scalar_lea.vmem %s0, %s217
      %s219 = smul.u32 32, %s17
      %s220 = smul.u32 32, %s17
      %p221 = scmp.lt.s32.totalorder %s220, 63
      %s222 = scalar_select %p221, %s220, 63
      %s223 = smul.addr %s222, 8
      %s224 = scalar_lea.vmem %s4, %s223
      %s225 = smul.u32 32, %s17
      %v227 = vld [vmem:[%s218] sm:$0xff]
      %v228 = vld [vmem:[%s218 + $0x8] sm:$0xff]
      %v229 = vld [vmem:[%s218 + $0x10] sm:$0xff]
      %v230 = vld [vmem:[%s218 + $0x18] sm:$0xff]
      %v231 = vld [vmem:[%s218 + $0x20] sm:$0xff]
      %v232 = vld [vmem:[%s218 + $0x28] sm:$0xff]
      %v233 = vld [vmem:[%s218 + $0x30] sm:$0xff]
      %v234 = vld [vmem:[%s218 + $0x38] sm:$0xff]
      %v235 = vld [vmem:[%s218 + $0x40] sm:$0xff]
      %v236 = vld [vmem:[%s218 + $0x48] sm:$0xff]
      %v237 = vld [vmem:[%s218 + $0x50] sm:$0xff]
      %v238 = vld [vmem:[%s218 + $0x58] sm:$0xff]
      %v239 = vld [vmem:[%s218 + $0x60] sm:$0xff]
      %v240 = vld [vmem:[%s218 + $0x68] sm:$0xff]
      %v241 = vld [vmem:[%s218 + $0x70] sm:$0xff]
      %v242 = vld [vmem:[%s218 + $0x78] sm:$0xff]
      %v243 = vld [vmem:[%s218 + $0x80] sm:$0xff]
      %v244 = vld [vmem:[%s218 + $0x88] sm:$0xff]
      %v245 = vld [vmem:[%s218 + $0x90] sm:$0xff]
      %v246 = vld [vmem:[%s218 + $0x98] sm:$0xff]
      %v247 = vld [vmem:[%s218 + $0xa0] sm:$0xff]
      %v248 = vld [vmem:[%s218 + $0xa8] sm:$0xff]
      %v249 = vld [vmem:[%s218 + $0xb0] sm:$0xff]
      %v250 = vld [vmem:[%s218 + $0xb8] sm:$0xff]
      %v251 = vld [vmem:[%s218 + $0xc0] sm:$0xff]
      %v252 = vld [vmem:[%s218 + $0xc8] sm:$0xff]
      %v253 = vld [vmem:[%s218 + $0xd0] sm:$0xff]
      %v254 = vld [vmem:[%s218 + $0xd8] sm:$0xff]
      %v255 = vld [vmem:[%s218 + $0xe0] sm:$0xff]
      %v256 = vld [vmem:[%s218 + $0xe8] sm:$0xff]
      %v257 = vld [vmem:[%s218 + $0xf0] sm:$0xff]
      %v258 = vld [vmem:[%s218 + $0xf8] sm:$0xff]
      %v259 = vld [vmem:[%s1] sm:$0x1]
      %v261 = vlaneseq
      %v262 = vshrl.u32 %v261, 7
      %v263 = vsub.s32 0, %v262
      %v264 = vrot.slane %v259, %v263
      %v266 = vmul.f32 %v227, %v264
      %v267 = vmul.f32 %v228, %v264
      %v268 = vmul.f32 %v229, %v264
      %v269 = vmul.f32 %v230, %v264
      %v270 = vmul.f32 %v231, %v264
      %v271 = vmul.f32 %v232, %v264
      %v272 = vmul.f32 %v233, %v264
      %v273 = vmul.f32 %v234, %v264
      %v274 = vmul.f32 %v235, %v264
      %v275 = vmul.f32 %v236, %v264
      %v276 = vmul.f32 %v237, %v264
      %v277 = vmul.f32 %v238, %v264
      %v278 = vmul.f32 %v239, %v264
      %v279 = vmul.f32 %v240, %v264
      %v280 = vmul.f32 %v241, %v264
      %v281 = vmul.f32 %v242, %v264
      %v282 = vmul.f32 %v243, %v264
      %v283 = vmul.f32 %v244, %v264
      %v284 = vmul.f32 %v245, %v264
      %v285 = vmul.f32 %v246, %v264
      %v286 = vmul.f32 %v247, %v264
      %v287 = vmul.f32 %v248, %v264
      %v288 = vmul.f32 %v249, %v264
      %v289 = vmul.f32 %v250, %v264
      %v290 = vmul.f32 %v251, %v264
      %v291 = vmul.f32 %v252, %v264
      %v292 = vmul.f32 %v253, %v264
      %v293 = vmul.f32 %v254, %v264
      %v294 = vmul.f32 %v255, %v264
      %v295 = vmul.f32 %v256, %v264
      %v296 = vmul.f32 %v257, %v264
      %v297 = vmul.f32 %v258, %v264
      %v298 = vld [vmem:[%s2] sm:$0x1]
      %v300 = vlaneseq
      %v301 = vshrl.u32 %v300, 7
      %v302 = vsub.s32 0, %v301
      %v303 = vrot.slane %v298, %v302
      %v305 = vadd.f32 %v266, %v303
      %v306 = vadd.f32 %v267, %v303
      %v307 = vadd.f32 %v268, %v303
      %v308 = vadd.f32 %v269, %v303
      %v309 = vadd.f32 %v270, %v303
      %v310 = vadd.f32 %v271, %v303
      %v311 = vadd.f32 %v272, %v303
      %v312 = vadd.f32 %v273, %v303
      %v313 = vadd.f32 %v274, %v303
      %v314 = vadd.f32 %v275, %v303
      %v315 = vadd.f32 %v276, %v303
      %v316 = vadd.f32 %v277, %v303
      %v317 = vadd.f32 %v278, %v303
      %v318 = vadd.f32 %v279, %v303
      %v319 = vadd.f32 %v280, %v303
      %v320 = vadd.f32 %v281, %v303
      %v321 = vadd.f32 %v282, %v303
      %v322 = vadd.f32 %v283, %v303
      %v323 = vadd.f32 %v284, %v303
      %v324 = vadd.f32 %v285, %v303
      %v325 = vadd.f32 %v286, %v303
      %v326 = vadd.f32 %v287, %v303
      %v327 = vadd.f32 %v288, %v303
      %v328 = vadd.f32 %v289, %v303
      %v329 = vadd.f32 %v290, %v303
      %v330 = vadd.f32 %v291, %v303
      %v331 = vadd.f32 %v292, %v303
      %v332 = vadd.f32 %v293, %v303
      %v333 = vadd.f32 %v294, %v303
      %v334 = vadd.f32 %v295, %v303
      %v335 = vadd.f32 %v296, %v303
      %v336 = vadd.f32 %v297, %v303
      %v337 = vmax.f32 %v305, 0.0
      %v338 = vmax.f32 %v306, 0.0
      %v339 = vmax.f32 %v307, 0.0
      %v340 = vmax.f32 %v308, 0.0
      %v341 = vmax.f32 %v309, 0.0
      %v342 = vmax.f32 %v310, 0.0
      %v343 = vmax.f32 %v311, 0.0
      %v344 = vmax.f32 %v312, 0.0
      %v345 = vmax.f32 %v313, 0.0
      %v346 = vmax.f32 %v314, 0.0
      %v347 = vmax.f32 %v315, 0.0
      %v348 = vmax.f32 %v316, 0.0
      %v349 = vmax.f32 %v317, 0.0
      %v350 = vmax.f32 %v318, 0.0
      %v351 = vmax.f32 %v319, 0.0
      %v352 = vmax.f32 %v320, 0.0
      %v353 = vmax.f32 %v321, 0.0
      %v354 = vmax.f32 %v322, 0.0
      %v355 = vmax.f32 %v323, 0.0
      %v356 = vmax.f32 %v324, 0.0
      %v357 = vmax.f32 %v325, 0.0
      %v358 = vmax.f32 %v326, 0.0
      %v359 = vmax.f32 %v327, 0.0
      %v360 = vmax.f32 %v328, 0.0
      %v361 = vmax.f32 %v329, 0.0
      %v362 = vmax.f32 %v330, 0.0
      %v363 = vmax.f32 %v331, 0.0
      %v364 = vmax.f32 %v332, 0.0
      %v365 = vmax.f32 %v333, 0.0
      %v366 = vmax.f32 %v334, 0.0
      %v367 = vmax.f32 %v335, 0.0
      %v368 = vmax.f32 %v336, 0.0
      %v369 = vlaneseq
      %v370 = vshrl.u32 %v369, 7
      %v371 = vadd.s32 %v370, 8
      %v372 = vadd.s32 %v370, 16
      %v373 = vadd.s32 %v370, 24
      %v374 = vadd.s32 %v370, 32
      %v375 = vadd.s32 %v370, 40
      %v376 = vadd.s32 %v370, 48
      %v377 = vadd.s32 %v370, 56
      %v378 = vadd.s32 %v370, 64
      %v379 = vadd.s32 %v370, 72
      %v380 = vadd.s32 %v370, 80
      %v381 = vadd.s32 %v370, 88
      %v382 = vadd.s32 %v370, 96
      %v383 = vadd.s32 %v370, 104
      %v384 = vadd.s32 %v370, 112
      %v385 = vadd.s32 %v370, 120
      %v386 = vadd.s32 %v370, 128
      %v387 = vadd.s32 %v370, 136
      %v388 = vadd.s32 %v370, 144
      %v389 = vadd.s32 %v370, 152
      %v390 = vadd.s32 %v370, 160
      %v391 = vadd.s32 %v370, 168
      %v392 = vadd.s32 %v370, 176
      %v393 = vadd.s32 %v370, 184
      %v394 = vadd.s32 %v370, 192
      %v395 = vadd.s32 %v370, 200
      %v396 = vadd.s32 %v370, 208
      %v397 = vadd.s32 %v370, 216
      %v398 = vadd.s32 %v370, 224
      %v399 = vadd.s32 %v370, 232
      %v400 = vadd.s32 %v370, 240
      %v401 = vadd.s32 %v370, 248
      %v402 = vand.u32 %v370, 15
      %v403 = vand.u32 %v371, 15
      %v404 = vand.u32 %v372, 15
      %v405 = vand.u32 %v373, 15
      %v406 = vand.u32 %v374, 15
      %v407 = vand.u32 %v375, 15
      %v408 = vand.u32 %v376, 15
      %v409 = vand.u32 %v377, 15
      %v410 = vand.u32 %v378, 15
      %v411 = vand.u32 %v379, 15
      %v412 = vand.u32 %v380, 15
      %v413 = vand.u32 %v381, 15
      %v414 = vand.u32 %v382, 15
      %v415 = vand.u32 %v383, 15
      %v416 = vand.u32 %v384, 15
      %v417 = vand.u32 %v385, 15
      %v418 = vand.u32 %v386, 15
      %v419 = vand.u32 %v387, 15
      %v420 = vand.u32 %v388, 15
      %v421 = vand.u32 %v389, 15
      %v422 = vand.u32 %v390, 15
      %v423 = vand.u32 %v391, 15
      %v424 = vand.u32 %v392, 15
      %v425 = vand.u32 %v393, 15
      %v426 = vand.u32 %v394, 15
      %v427 = vand.u32 %v395, 15
      %v428 = vand.u32 %v396, 15
      %v429 = vand.u32 %v397, 15
      %v430 = vand.u32 %v398, 15
      %v431 = vand.u32 %v399, 15
      %v432 = vand.u32 %v400, 15
      %v433 = vand.u32 %v401, 15
      %v434 = vshra.s32 %v370, 4
      %v435 = vshra.s32 %v371, 4
      %v436 = vshra.s32 %v372, 4
      %v437 = vshra.s32 %v373, 4
      %v438 = vshra.s32 %v374, 4
      %v439 = vshra.s32 %v375, 4
      %v440 = vshra.s32 %v376, 4
      %v441 = vshra.s32 %v377, 4
      %v442 = vshra.s32 %v378, 4
      %v443 = vshra.s32 %v379, 4
      %v444 = vshra.s32 %v380, 4
      %v445 = vshra.s32 %v381, 4
      %v446 = vshra.s32 %v382, 4
      %v447 = vshra.s32 %v383, 4
      %v448 = vshra.s32 %v384, 4
      %v449 = vshra.s32 %v385, 4
      %v450 = vshra.s32 %v386, 4
      %v451 = vshra.s32 %v387, 4
      %v452 = vshra.s32 %v388, 4
      %v453 = vshra.s32 %v389, 4
      %v454 = vshra.s32 %v390, 4
      %v455 = vshra.s32 %v391, 4
      %v456 = vshra.s32 %v392, 4
      %v457 = vshra.s32 %v393, 4
      %v458 = vshra.s32 %v394, 4
      %v459 = vshra.s32 %v395, 4
      %v460 = vshra.s32 %v396, 4
      %v461 = vshra.s32 %v397, 4
      %v462 = vshra.s32 %v398, 4
      %v463 = vshra.s32 %v399, 4
      %v464 = vshra.s32 %v400, 4
      %v465 = vshra.s32 %v401, 4
      %v466 = vand.u32 %v434, 15
      %v467 = vand.u32 %v435, 15
      %v468 = vand.u32 %v436, 15
      %v469 = vand.u32 %v437, 15
      %v470 = vand.u32 %v438, 15
      %v471 = vand.u32 %v439, 15
      %v472 = vand.u32 %v440, 15
      %v473 = vand.u32 %v441, 15
      %v474 = vand.u32 %v442, 15
      %v475 = vand.u32 %v443, 15
      %v476 = vand.u32 %v444, 15
      %v477 = vand.u32 %v445, 15
      %v478 = vand.u32 %v446, 15
      %v479 = vand.u32 %v447, 15
      %v480 = vand.u32 %v448, 15
      %v481 = vand.u32 %v449, 15
      %v482 = vand.u32 %v450, 15
      %v483 = vand.u32 %v451, 15
      %v484 = vand.u32 %v452, 15
      %v485 = vand.u32 %v453, 15
      %v486 = vand.u32 %v454, 15
      %v487 = vand.u32 %v455, 15
      %v488 = vand.u32 %v456, 15
      %v489 = vand.u32 %v457, 15
      %v490 = vand.u32 %v458, 15
      %v491 = vand.u32 %v459, 15
      %v492 = vand.u32 %v460, 15
      %v493 = vand.u32 %v461, 15
      %v494 = vand.u32 %v462, 15
      %v495 = vand.u32 %v463, 15
      %v496 = vand.u32 %v464, 15
      %v497 = vand.u32 %v465, 15
      %v498 = vrot.slane %v337, 7
      %v499 = vrot.slane %v338, 7
      %v500 = vrot.slane %v339, 7
      %v501 = vrot.slane %v340, 7
      %v502 = vrot.slane %v341, 7
      %v503 = vrot.slane %v342, 7
      %v504 = vrot.slane %v343, 7
      %v505 = vrot.slane %v344, 7
      %v506 = vrot.slane %v345, 7
      %v507 = vrot.slane %v346, 7
      %v508 = vrot.slane %v347, 7
      %v509 = vrot.slane %v348, 7
      %v510 = vrot.slane %v349, 7
      %v511 = vrot.slane %v350, 7
      %v512 = vrot.slane %v351, 7
      %v513 = vrot.slane %v352, 7
      %v514 = vrot.slane %v353, 7
      %v515 = vrot.slane %v354, 7
      %v516 = vrot.slane %v355, 7
      %v517 = vrot.slane %v356, 7
      %v518 = vrot.slane %v357, 7
      %v519 = vrot.slane %v358, 7
      %v520 = vrot.slane %v359, 7
      %v521 = vrot.slane %v360, 7
      %v522 = vrot.slane %v361, 7
      %v523 = vrot.slane %v362, 7
      %v524 = vrot.slane %v363, 7
      %v525 = vrot.slane %v364, 7
      %v526 = vrot.slane %v365, 7
      %v527 = vrot.slane %v366, 7
      %v528 = vrot.slane %v367, 7
      %v529 = vrot.slane %v368, 7
      %vm530 = vcmp.lt.s32.totalorder %v370, 1
      %v531 = vsel %vm530, %v528, %v529
      %v532 = vsel %vm530, %v527, %v528
      %v533 = vsel %vm530, %v526, %v527
      %v534 = vsel %vm530, %v525, %v526
      %v535 = vsel %vm530, %v524, %v525
      %v536 = vsel %vm530, %v523, %v524
      %v537 = vsel %vm530, %v522, %v523
      %v538 = vsel %vm530, %v521, %v522
      %v539 = vsel %vm530, %v520, %v521
      %v540 = vsel %vm530, %v519, %v520
      %v541 = vsel %vm530, %v518, %v519
      %v542 = vsel %vm530, %v517, %v518
      %v543 = vsel %vm530, %v516, %v517
      %v544 = vsel %vm530, %v515, %v516
      %v545 = vsel %vm530, %v514, %v515
      %v546 = vsel %vm530, %v513, %v514
      %v547 = vsel %vm530, %v512, %v513
      %v548 = vsel %vm530, %v511, %v512
      %v549 = vsel %vm530, %v510, %v511
      %v550 = vsel %vm530, %v509, %v510
      %v551 = vsel %vm530, %v508, %v509
      %v552 = vsel %vm530, %v507, %v508
      %v553 = vsel %vm530, %v506, %v507
      %v554 = vsel %vm530, %v505, %v506
      %v555 = vsel %vm530, %v504, %v505
      %v556 = vsel %vm530, %v503, %v504
      %v557 = vsel %vm530, %v502, %v503
      %v558 = vsel %vm530, %v501, %v502
      %v559 = vsel %vm530, %v500, %v501
      %v560 = vsel %vm530, %v499, %v500
      %v561 = vsel %vm530, %v498, %v499
      %v562 = vsel %vm530, %v529, %v498
      %v563 = vadd.s32 %v466, 4294967295
      %v564 = vadd.s32 %v467, 4294967295
      %v565 = vadd.s32 %v468, 4294967295
      %v566 = vadd.s32 %v469, 4294967295
      %v567 = vadd.s32 %v470, 4294967295
      %v568 = vadd.s32 %v471, 4294967295
      %v569 = vadd.s32 %v472, 4294967295
      %v570 = vadd.s32 %v473, 4294967295
      %v571 = vadd.s32 %v474, 4294967295
      %v572 = vadd.s32 %v475, 4294967295
      %v573 = vadd.s32 %v476, 4294967295
      %v574 = vadd.s32 %v477, 4294967295
      %v575 = vadd.s32 %v478, 4294967295
      %v576 = vadd.s32 %v479, 4294967295
      %v577 = vadd.s32 %v480, 4294967295
      %v578 = vadd.s32 %v481, 4294967295
      %v579 = vadd.s32 %v482, 4294967295
      %v580 = vadd.s32 %v483, 4294967295
      %v581 = vadd.s32 %v484, 4294967295
      %v582 = vadd.s32 %v485, 4294967295
      %v583 = vadd.s32 %v486, 4294967295
      %v584 = vadd.s32 %v487, 4294967295
      %v585 = vadd.s32 %v488, 4294967295
      %v586 = vadd.s32 %v489, 4294967295
      %v587 = vadd.s32 %v490, 4294967295
      %v588 = vadd.s32 %v491, 4294967295
      %v589 = vadd.s32 %v492, 4294967295
      %v590 = vadd.s32 %v493, 4294967295
      %v591 = vadd.s32 %v494, 4294967295
      %v592 = vadd.s32 %v495, 4294967295
      %v593 = vadd.s32 %v496, 4294967295
      %v594 = vadd.s32 %v497, 4294967295
      %vm595 = vcmp.ge.s32.totalorder %v563, 0
      %vm596 = vcmp.ge.s32.totalorder %v564, 0
      %vm597 = vcmp.ge.s32.totalorder %v565, 0
      %vm598 = vcmp.ge.s32.totalorder %v566, 0
      %vm599 = vcmp.ge.s32.totalorder %v567, 0
      %vm600 = vcmp.ge.s32.totalorder %v568, 0
      %vm601 = vcmp.ge.s32.totalorder %v569, 0
      %vm602 = vcmp.ge.s32.totalorder %v570, 0
      %vm603 = vcmp.ge.s32.totalorder %v571, 0
      %vm604 = vcmp.ge.s32.totalorder %v572, 0
      %vm605 = vcmp.ge.s32.totalorder %v573, 0
      %vm606 = vcmp.ge.s32.totalorder %v574, 0
      %vm607 = vcmp.ge.s32.totalorder %v575, 0
      %vm608 = vcmp.ge.s32.totalorder %v576, 0
      %vm609 = vcmp.ge.s32.totalorder %v577, 0
      %vm610 = vcmp.ge.s32.totalorder %v578, 0
      %vm611 = vcmp.ge.s32.totalorder %v579, 0
      %vm612 = vcmp.ge.s32.totalorder %v580, 0
      %vm613 = vcmp.ge.s32.totalorder %v581, 0
      %vm614 = vcmp.ge.s32.totalorder %v582, 0
      %vm615 = vcmp.ge.s32.totalorder %v583, 0
      %vm616 = vcmp.ge.s32.totalorder %v584, 0
      %vm617 = vcmp.ge.s32.totalorder %v585, 0
      %vm618 = vcmp.ge.s32.totalorder %v586, 0
      %vm619 = vcmp.ge.s32.totalorder %v587, 0
      %vm620 = vcmp.ge.s32.totalorder %v588, 0
      %vm621 = vcmp.ge.s32.totalorder %v589, 0
      %vm622 = vcmp.ge.s32.totalorder %v590, 0
      %vm623 = vcmp.ge.s32.totalorder %v591, 0
      %vm624 = vcmp.ge.s32.totalorder %v592, 0
      %vm625 = vcmp.ge.s32.totalorder %v593, 0
      %vm626 = vcmp.ge.s32.totalorder %v594, 0
      %vm627 = vcmp.lt.s32.totalorder %v563, 16
      %vm628 = vcmp.lt.s32.totalorder %v564, 16
      %vm629 = vcmp.lt.s32.totalorder %v565, 16
      %vm630 = vcmp.lt.s32.totalorder %v566, 16
      %vm631 = vcmp.lt.s32.totalorder %v567, 16
      %vm632 = vcmp.lt.s32.totalorder %v568, 16
      %vm633 = vcmp.lt.s32.totalorder %v569, 16
      %vm634 = vcmp.lt.s32.totalorder %v570, 16
      %vm635 = vcmp.lt.s32.totalorder %v571, 16
      %vm636 = vcmp.lt.s32.totalorder %v572, 16
      %vm637 = vcmp.lt.s32.totalorder %v573, 16
      %vm638 = vcmp.lt.s32.totalorder %v574, 16
      %vm639 = vcmp.lt.s32.totalorder %v575, 16
      %vm640 = vcmp.lt.s32.totalorder %v576, 16
      %vm641 = vcmp.lt.s32.totalorder %v577, 16
      %vm642 = vcmp.lt.s32.totalorder %v578, 16
      %vm643 = vcmp.lt.s32.totalorder %v579, 16
      %vm644 = vcmp.lt.s32.totalorder %v580, 16
      %vm645 = vcmp.lt.s32.totalorder %v581, 16
      %vm646 = vcmp.lt.s32.totalorder %v582, 16
      %vm647 = vcmp.lt.s32.totalorder %v583, 16
      %vm648 = vcmp.lt.s32.totalorder %v584, 16
      %vm649 = vcmp.lt.s32.totalorder %v585, 16
      %vm650 = vcmp.lt.s32.totalorder %v586, 16
      %vm651 = vcmp.lt.s32.totalorder %v587, 16
      %vm652 = vcmp.lt.s32.totalorder %v588, 16
      %vm653 = vcmp.lt.s32.totalorder %v589, 16
      %vm654 = vcmp.lt.s32.totalorder %v590, 16
      %vm655 = vcmp.lt.s32.totalorder %v591, 16
      %vm656 = vcmp.lt.s32.totalorder %v592, 16
      %vm657 = vcmp.lt.s32.totalorder %v593, 16
      %vm658 = vcmp.lt.s32.totalorder %v594, 16
      %vm659 = vmand %vm595, %vm627
      %vm660 = vmand %vm596, %vm628
      %vm661 = vmand %vm597, %vm629
      %vm662 = vmand %vm598, %vm630
      %vm663 = vmand %vm599, %vm631
      %vm664 = vmand %vm600, %vm632
      %vm665 = vmand %vm601, %vm633
      %vm666 = vmand %vm602, %vm634
      %vm667 = vmand %vm603, %vm635
      %vm668 = vmand %vm604, %vm636
      %vm669 = vmand %vm605, %vm637
      %vm670 = vmand %vm606, %vm638
      %vm671 = vmand %vm607, %vm639
      %vm672 = vmand %vm608, %vm640
      %vm673 = vmand %vm609, %vm641
      %vm674 = vmand %vm610, %vm642
      %vm675 = vmand %vm611, %vm643
      %vm676 = vmand %vm612, %vm644
      %vm677 = vmand %vm613, %vm645
      %vm678 = vmand %vm614, %vm646
      %vm679 = vmand %vm615, %vm647
      %vm680 = vmand %vm616, %vm648
      %vm681 = vmand %vm617, %vm649
      %vm682 = vmand %vm618, %vm650
      %vm683 = vmand %vm619, %vm651
      %vm684 = vmand %vm620, %vm652
      %vm685 = vmand %vm621, %vm653
      %vm686 = vmand %vm622, %vm654
      %vm687 = vmand %vm623, %vm655
      %vm688 = vmand %vm624, %vm656
      %vm689 = vmand %vm625, %vm657
      %vm690 = vmand %vm626, %vm658
      %v691 = vadd.s32 %v402, 4294967295
      %v692 = vadd.s32 %v403, 4294967295
      %v693 = vadd.s32 %v404, 4294967295
      %v694 = vadd.s32 %v405, 4294967295
      %v695 = vadd.s32 %v406, 4294967295
      %v696 = vadd.s32 %v407, 4294967295
      %v697 = vadd.s32 %v408, 4294967295
      %v698 = vadd.s32 %v409, 4294967295
      %v699 = vadd.s32 %v410, 4294967295
      %v700 = vadd.s32 %v411, 4294967295
      %v701 = vadd.s32 %v412, 4294967295
      %v702 = vadd.s32 %v413, 4294967295
      %v703 = vadd.s32 %v414, 4294967295
      %v704 = vadd.s32 %v415, 4294967295
      %v705 = vadd.s32 %v416, 4294967295
      %v706 = vadd.s32 %v417, 4294967295
      %v707 = vadd.s32 %v418, 4294967295
      %v708 = vadd.s32 %v419, 4294967295
      %v709 = vadd.s32 %v420, 4294967295
      %v710 = vadd.s32 %v421, 4294967295
      %v711 = vadd.s32 %v422, 4294967295
      %v712 = vadd.s32 %v423, 4294967295
      %v713 = vadd.s32 %v424, 4294967295
      %v714 = vadd.s32 %v425, 4294967295
      %v715 = vadd.s32 %v426, 4294967295
      %v716 = vadd.s32 %v427, 4294967295
      %v717 = vadd.s32 %v428, 4294967295
      %v718 = vadd.s32 %v429, 4294967295
      %v719 = vadd.s32 %v430, 4294967295
      %v720 = vadd.s32 %v431, 4294967295
      %v721 = vadd.s32 %v432, 4294967295
      %v722 = vadd.s32 %v433, 4294967295
      %vm723 = vcmp.ge.s32.totalorder %v691, 0
      %vm724 = vcmp.ge.s32.totalorder %v692, 0
      %vm725 = vcmp.ge.s32.totalorder %v693, 0
      %vm726 = vcmp.ge.s32.totalorder %v694, 0
      %vm727 = vcmp.ge.s32.totalorder %v695, 0
      %vm728 = vcmp.ge.s32.totalorder %v696, 0
      %vm729 = vcmp.ge.s32.totalorder %v697, 0
      %vm730 = vcmp.ge.s32.totalorder %v698, 0
      %vm731 = vcmp.ge.s32.totalorder %v699, 0
      %vm732 = vcmp.ge.s32.totalorder %v700, 0
      %vm733 = vcmp.ge.s32.totalorder %v701, 0
      %vm734 = vcmp.ge.s32.totalorder %v702, 0
      %vm735 = vcmp.ge.s32.totalorder %v703, 0
      %vm736 = vcmp.ge.s32.totalorder %v704, 0
      %vm737 = vcmp.ge.s32.totalorder %v705, 0
      %vm738 = vcmp.ge.s32.totalorder %v706, 0
      %vm739 = vcmp.ge.s32.totalorder %v707, 0
      %vm740 = vcmp.ge.s32.totalorder %v708, 0
      %vm741 = vcmp.ge.s32.totalorder %v709, 0
      %vm742 = vcmp.ge.s32.totalorder %v710, 0
      %vm743 = vcmp.ge.s32.totalorder %v711, 0
      %vm744 = vcmp.ge.s32.totalorder %v712, 0
      %vm745 = vcmp.ge.s32.totalorder %v713, 0
      %vm746 = vcmp.ge.s32.totalorder %v714, 0
      %vm747 = vcmp.ge.s32.totalorder %v715, 0
      %vm748 = vcmp.ge.s32.totalorder %v716, 0
      %vm749 = vcmp.ge.s32.totalorder %v717, 0
      %vm750 = vcmp.ge.s32.totalorder %v718, 0
      %vm751 = vcmp.ge.s32.totalorder %v719, 0
      %vm752 = vcmp.ge.s32.totalorder %v720, 0
      %vm753 = vcmp.ge.s32.totalorder %v721, 0
      %vm754 = vcmp.ge.s32.totalorder %v722, 0
      %vm755 = vmand %vm659, %vm723
      %vm756 = vmand %vm660, %vm724
      %vm757 = vmand %vm661, %vm725
      %vm758 = vmand %vm662, %vm726
      %vm759 = vmand %vm663, %vm727
      %vm760 = vmand %vm664, %vm728
      %vm761 = vmand %vm665, %vm729
      %vm762 = vmand %vm666, %vm730
      %vm763 = vmand %vm667, %vm731
      %vm764 = vmand %vm668, %vm732
      %vm765 = vmand %vm669, %vm733
      %vm766 = vmand %vm670, %vm734
      %vm767 = vmand %vm671, %vm735
      %vm768 = vmand %vm672, %vm736
      %vm769 = vmand %vm673, %vm737
      %vm770 = vmand %vm674, %vm738
      %vm771 = vmand %vm675, %vm739
      %vm772 = vmand %vm676, %vm740
      %vm773 = vmand %vm677, %vm741
      %vm774 = vmand %vm678, %vm742
      %vm775 = vmand %vm679, %vm743
      %vm776 = vmand %vm680, %vm744
      %vm777 = vmand %vm681, %vm745
      %vm778 = vmand %vm682, %vm746
      %vm779 = vmand %vm683, %vm747
      %vm780 = vmand %vm684, %vm748
      %vm781 = vmand %vm685, %vm749
      %vm782 = vmand %vm686, %vm750
      %vm783 = vmand %vm687, %vm751
      %vm784 = vmand %vm688, %vm752
      %vm785 = vmand %vm689, %vm753
      %vm786 = vmand %vm690, %vm754
      %vm787 = vcmp.lt.s32.totalorder %v691, 16
      %vm788 = vcmp.lt.s32.totalorder %v692, 16
      %vm789 = vcmp.lt.s32.totalorder %v693, 16
      %vm790 = vcmp.lt.s32.totalorder %v694, 16
      %vm791 = vcmp.lt.s32.totalorder %v695, 16
      %vm792 = vcmp.lt.s32.totalorder %v696, 16
      %vm793 = vcmp.lt.s32.totalorder %v697, 16
      %vm794 = vcmp.lt.s32.totalorder %v698, 16
      %vm795 = vcmp.lt.s32.totalorder %v699, 16
      %vm796 = vcmp.lt.s32.totalorder %v700, 16
      %vm797 = vcmp.lt.s32.totalorder %v701, 16
      %vm798 = vcmp.lt.s32.totalorder %v702, 16
      %vm799 = vcmp.lt.s32.totalorder %v703, 16
      %vm800 = vcmp.lt.s32.totalorder %v704, 16
      %vm801 = vcmp.lt.s32.totalorder %v705, 16
      %vm802 = vcmp.lt.s32.totalorder %v706, 16
      %vm803 = vcmp.lt.s32.totalorder %v707, 16
      %vm804 = vcmp.lt.s32.totalorder %v708, 16
      %vm805 = vcmp.lt.s32.totalorder %v709, 16
      %vm806 = vcmp.lt.s32.totalorder %v710, 16
      %vm807 = vcmp.lt.s32.totalorder %v711, 16
      %vm808 = vcmp.lt.s32.totalorder %v712, 16
      %vm809 = vcmp.lt.s32.totalorder %v713, 16
      %vm810 = vcmp.lt.s32.totalorder %v714, 16
      %vm811 = vcmp.lt.s32.totalorder %v715, 16
      %vm812 = vcmp.lt.s32.totalorder %v716, 16
      %vm813 = vcmp.lt.s32.totalorder %v717, 16
      %vm814 = vcmp.lt.s32.totalorder %v718, 16
      %vm815 = vcmp.lt.s32.totalorder %v719, 16
      %vm816 = vcmp.lt.s32.totalorder %v720, 16
      %vm817 = vcmp.lt.s32.totalorder %v721, 16
      %vm818 = vcmp.lt.s32.totalorder %v722, 16
      %vm819 = vmand %vm755, %vm787
      %vm820 = vmand %vm756, %vm788
      %vm821 = vmand %vm757, %vm789
      %vm822 = vmand %vm758, %vm790
      %vm823 = vmand %vm759, %vm791
      %vm824 = vmand %vm760, %vm792
      %vm825 = vmand %vm761, %vm793
      %vm826 = vmand %vm762, %vm794
      %vm827 = vmand %vm763, %vm795
      %vm828 = vmand %vm764, %vm796
      %vm829 = vmand %vm765, %vm797
      %vm830 = vmand %vm766, %vm798
      %vm831 = vmand %vm767, %vm799
      %vm832 = vmand %vm768, %vm800
      %vm833 = vmand %vm769, %vm801
      %vm834 = vmand %vm770, %vm802
      %vm835 = vmand %vm771, %vm803
      %vm836 = vmand %vm772, %vm804
      %vm837 = vmand %vm773, %vm805
      %vm838 = vmand %vm774, %vm806
      %vm839 = vmand %vm775, %vm807
      %vm840 = vmand %vm776, %vm808
      %vm841 = vmand %vm777, %vm809
      %vm842 = vmand %vm778, %vm810
      %vm843 = vmand %vm779, %vm811
      %vm844 = vmand %vm780, %vm812
      %vm845 = vmand %vm781, %vm813
      %vm846 = vmand %vm782, %vm814
      %vm847 = vmand %vm783, %vm815
      %vm848 = vmand %vm784, %vm816
      %vm849 = vmand %vm785, %vm817
      %vm850 = vmand %vm786, %vm818
      %v851 = vsel %vm819, 1, 0
      %v852 = vsel %vm820, 1, 0
      %v853 = vsel %vm821, 1, 0
      %v854 = vsel %vm822, 1, 0
      %v855 = vsel %vm823, 1, 0
      %v856 = vsel %vm824, 1, 0
      %v857 = vsel %vm825, 1, 0
      %v858 = vsel %vm826, 1, 0
      %v859 = vsel %vm827, 1, 0
      %v860 = vsel %vm828, 1, 0
      %v861 = vsel %vm829, 1, 0
      %v862 = vsel %vm830, 1, 0
      %v863 = vsel %vm831, 1, 0
      %v864 = vsel %vm832, 1, 0
      %v865 = vsel %vm833, 1, 0
      %v866 = vsel %vm834, 1, 0
      %v867 = vsel %vm835, 1, 0
      %v868 = vsel %vm836, 1, 0
      %v869 = vsel %vm837, 1, 0
      %v870 = vsel %vm838, 1, 0
      %v871 = vsel %vm839, 1, 0
      %v872 = vsel %vm840, 1, 0
      %v873 = vsel %vm841, 1, 0
      %v874 = vsel %vm842, 1, 0
      %v875 = vsel %vm843, 1, 0
      %v876 = vsel %vm844, 1, 0
      %v877 = vsel %vm845, 1, 0
      %v878 = vsel %vm846, 1, 0
      %v879 = vsel %vm847, 1, 0
      %v880 = vsel %vm848, 1, 0
      %v881 = vsel %vm849, 1, 0
      %v882 = vsel %vm850, 1, 0
      %vm883 = vcmp.eq.s32.totalorder %v851, 1
      %vm884 = vcmp.eq.s32.totalorder %v852, 1
      %vm885 = vcmp.eq.s32.totalorder %v853, 1
      %vm886 = vcmp.eq.s32.totalorder %v854, 1
      %vm887 = vcmp.eq.s32.totalorder %v855, 1
      %vm888 = vcmp.eq.s32.totalorder %v856, 1
      %vm889 = vcmp.eq.s32.totalorder %v857, 1
      %vm890 = vcmp.eq.s32.totalorder %v858, 1
      %vm891 = vcmp.eq.s32.totalorder %v859, 1
      %vm892 = vcmp.eq.s32.totalorder %v860, 1
      %vm893 = vcmp.eq.s32.totalorder %v861, 1
      %vm894 = vcmp.eq.s32.totalorder %v862, 1
      %vm895 = vcmp.eq.s32.totalorder %v863, 1
      %vm896 = vcmp.eq.s32.totalorder %v864, 1
      %vm897 = vcmp.eq.s32.totalorder %v865, 1
      %vm898 = vcmp.eq.s32.totalorder %v866, 1
      %vm899 = vcmp.eq.s32.totalorder %v867, 1
      %vm900 = vcmp.eq.s32.totalorder %v868, 1
      %vm901 = vcmp.eq.s32.totalorder %v869, 1
      %vm902 = vcmp.eq.s32.totalorder %v870, 1
      %vm903 = vcmp.eq.s32.totalorder %v871, 1
      %vm904 = vcmp.eq.s32.totalorder %v872, 1
      %vm905 = vcmp.eq.s32.totalorder %v873, 1
      %vm906 = vcmp.eq.s32.totalorder %v874, 1
      %vm907 = vcmp.eq.s32.totalorder %v875, 1
      %vm908 = vcmp.eq.s32.totalorder %v876, 1
      %vm909 = vcmp.eq.s32.totalorder %v877, 1
      %vm910 = vcmp.eq.s32.totalorder %v878, 1
      %vm911 = vcmp.eq.s32.totalorder %v879, 1
      %vm912 = vcmp.eq.s32.totalorder %v880, 1
      %vm913 = vcmp.eq.s32.totalorder %v881, 1
      %vm914 = vcmp.eq.s32.totalorder %v882, 1
      %v915 = vsel %vm883, %v532, 0.0
      %v916 = vsel %vm884, %v531, 0.0
      %v917 = vsel %vm885, %v562, 0.0
      %v918 = vsel %vm886, %v561, 0.0
      %v919 = vsel %vm887, %v560, 0.0
      %v920 = vsel %vm888, %v559, 0.0
      %v921 = vsel %vm889, %v558, 0.0
      %v922 = vsel %vm890, %v557, 0.0
      %v923 = vsel %vm891, %v556, 0.0
      %v924 = vsel %vm892, %v555, 0.0
      %v925 = vsel %vm893, %v554, 0.0
      %v926 = vsel %vm894, %v553, 0.0
      %v927 = vsel %vm895, %v552, 0.0
      %v928 = vsel %vm896, %v551, 0.0
      %v929 = vsel %vm897, %v550, 0.0
      %v930 = vsel %vm898, %v549, 0.0
      %v931 = vsel %vm899, %v548, 0.0
      %v932 = vsel %vm900, %v547, 0.0
      %v933 = vsel %vm901, %v546, 0.0
      %v934 = vsel %vm902, %v545, 0.0
      %v935 = vsel %vm903, %v544, 0.0
      %v936 = vsel %vm904, %v543, 0.0
      %v937 = vsel %vm905, %v542, 0.0
      %v938 = vsel %vm906, %v541, 0.0
      %v939 = vsel %vm907, %v540, 0.0
      %v940 = vsel %vm908, %v539, 0.0
      %v941 = vsel %vm909, %v538, 0.0
      %v942 = vsel %vm910, %v537, 0.0
      %v943 = vsel %vm911, %v536, 0.0
      %v944 = vsel %vm912, %v535, 0.0
      %v945 = vsel %vm913, %v534, 0.0
      %v946 = vsel %vm914, %v533, 0.0
      %v947 = vpack.c.bf16 %v916, %v915
      %v948 = vpack.c.bf16 %v918, %v917
      %v949 = vpack.c.bf16 %v920, %v919
      %v950 = vpack.c.bf16 %v922, %v921
      %v951 = vpack.c.bf16 %v924, %v923
      %v952 = vpack.c.bf16 %v926, %v925
      %v953 = vpack.c.bf16 %v928, %v927
      %v954 = vpack.c.bf16 %v930, %v929
      %v955 = vpack.c.bf16 %v932, %v931
      %v956 = vpack.c.bf16 %v934, %v933
      %v957 = vpack.c.bf16 %v936, %v935
      %v958 = vpack.c.bf16 %v938, %v937
      %v959 = vpack.c.bf16 %v940, %v939
      %v960 = vpack.c.bf16 %v942, %v941
      %v961 = vpack.c.bf16 %v944, %v943
      %v962 = vpack.c.bf16 %v946, %v945
      %vm963 = vcmp.ge.s32.totalorder %v402, 0
      %vm964 = vcmp.ge.s32.totalorder %v403, 0
      %vm965 = vcmp.ge.s32.totalorder %v404, 0
      %vm966 = vcmp.ge.s32.totalorder %v405, 0
      %vm967 = vcmp.ge.s32.totalorder %v406, 0
      %vm968 = vcmp.ge.s32.totalorder %v407, 0
      %vm969 = vcmp.ge.s32.totalorder %v408, 0
      %vm970 = vcmp.ge.s32.totalorder %v409, 0
      %vm971 = vcmp.ge.s32.totalorder %v410, 0
      %vm972 = vcmp.ge.s32.totalorder %v411, 0
      %vm973 = vcmp.ge.s32.totalorder %v412, 0
      %vm974 = vcmp.ge.s32.totalorder %v413, 0
      %vm975 = vcmp.ge.s32.totalorder %v414, 0
      %vm976 = vcmp.ge.s32.totalorder %v415, 0
      %vm977 = vcmp.ge.s32.totalorder %v416, 0
      %vm978 = vcmp.ge.s32.totalorder %v417, 0
      %vm979 = vcmp.ge.s32.totalorder %v418, 0
      %vm980 = vcmp.ge.s32.totalorder %v419, 0
      %vm981 = vcmp.ge.s32.totalorder %v420, 0
      %vm982 = vcmp.ge.s32.totalorder %v421, 0
      %vm983 = vcmp.ge.s32.totalorder %v422, 0
      %vm984 = vcmp.ge.s32.totalorder %v423, 0
      %vm985 = vcmp.ge.s32.totalorder %v424, 0
      %vm986 = vcmp.ge.s32.totalorder %v425, 0
      %vm987 = vcmp.ge.s32.totalorder %v426, 0
      %vm988 = vcmp.ge.s32.totalorder %v427, 0
      %vm989 = vcmp.ge.s32.totalorder %v428, 0
      %vm990 = vcmp.ge.s32.totalorder %v429, 0
      %vm991 = vcmp.ge.s32.totalorder %v430, 0
      %vm992 = vcmp.ge.s32.totalorder %v431, 0
      %vm993 = vcmp.ge.s32.totalorder %v432, 0
      %vm994 = vcmp.ge.s32.totalorder %v433, 0
      %vm995 = vmand %vm659, %vm963
      %vm996 = vmand %vm660, %vm964
      %vm997 = vmand %vm661, %vm965
      %vm998 = vmand %vm662, %vm966
      %vm999 = vmand %vm663, %vm967
      %vm1000 = vmand %vm664, %vm968
      %vm1001 = vmand %vm665, %vm969
      %vm1002 = vmand %vm666, %vm970
      %vm1003 = vmand %vm667, %vm971
      %vm1004 = vmand %vm668, %vm972
      %vm1005 = vmand %vm669, %vm973
      %vm1006 = vmand %vm670, %vm974
      %vm1007 = vmand %vm671, %vm975
      %vm1008 = vmand %vm672, %vm976
      %vm1009 = vmand %vm673, %vm977
      %vm1010 = vmand %vm674, %vm978
      %vm1011 = vmand %vm675, %vm979
      %vm1012 = vmand %vm676, %vm980
      %vm1013 = vmand %vm677, %vm981
      %vm1014 = vmand %vm678, %vm982
      %vm1015 = vmand %vm679, %vm983
      %vm1016 = vmand %vm680, %vm984
      %vm1017 = vmand %vm681, %vm985
      %vm1018 = vmand %vm682, %vm986
      %vm1019 = vmand %vm683, %vm987
      %vm1020 = vmand %vm684, %vm988
      %vm1021 = vmand %vm685, %vm989
      %vm1022 = vmand %vm686, %vm990
      %vm1023 = vmand %vm687, %vm991
      %vm1024 = vmand %vm688, %vm992
      %vm1025 = vmand %vm689, %vm993
      %vm1026 = vmand %vm690, %vm994
      %vm1027 = vcmp.lt.s32.totalorder %v402, 16
      %vm1028 = vcmp.lt.s32.totalorder %v403, 16
      %vm1029 = vcmp.lt.s32.totalorder %v404, 16
      %vm1030 = vcmp.lt.s32.totalorder %v405, 16
      %vm1031 = vcmp.lt.s32.totalorder %v406, 16
      %vm1032 = vcmp.lt.s32.totalorder %v407, 16
      %vm1033 = vcmp.lt.s32.totalorder %v408, 16
      %vm1034 = vcmp.lt.s32.totalorder %v409, 16
      %vm1035 = vcmp.lt.s32.totalorder %v410, 16
      %vm1036 = vcmp.lt.s32.totalorder %v411, 16
      %vm1037 = vcmp.lt.s32.totalorder %v412, 16
      %vm1038 = vcmp.lt.s32.totalorder %v413, 16
      %vm1039 = vcmp.lt.s32.totalorder %v414, 16
      %vm1040 = vcmp.lt.s32.totalorder %v415, 16
      %vm1041 = vcmp.lt.s32.totalorder %v416, 16
      %vm1042 = vcmp.lt.s32.totalorder %v417, 16
      %vm1043 = vcmp.lt.s32.totalorder %v418, 16
      %vm1044 = vcmp.lt.s32.totalorder %v419, 16
      %vm1045 = vcmp.lt.s32.totalorder %v420, 16
      %vm1046 = vcmp.lt.s32.totalorder %v421, 16
      %vm1047 = vcmp.lt.s32.totalorder %v422, 16
      %vm1048 = vcmp.lt.s32.totalorder %v423, 16
      %vm1049 = vcmp.lt.s32.totalorder %v424, 16
      %vm1050 = vcmp.lt.s32.totalorder %v425, 16
      %vm1051 = vcmp.lt.s32.totalorder %v426, 16
      %vm1052 = vcmp.lt.s32.totalorder %v427, 16
      %vm1053 = vcmp.lt.s32.totalorder %v428, 16
      %vm1054 = vcmp.lt.s32.totalorder %v429, 16
      %vm1055 = vcmp.lt.s32.totalorder %v430, 16
      %vm1056 = vcmp.lt.s32.totalorder %v431, 16
      %vm1057 = vcmp.lt.s32.totalorder %v432, 16
      %vm1058 = vcmp.lt.s32.totalorder %v433, 16
      %vm1059 = vmand %vm995, %vm1027
      %vm1060 = vmand %vm996, %vm1028
      %vm1061 = vmand %vm997, %vm1029
      %vm1062 = vmand %vm998, %vm1030
      %vm1063 = vmand %vm999, %vm1031
      %vm1064 = vmand %vm1000, %vm1032
      %vm1065 = vmand %vm1001, %vm1033
      %vm1066 = vmand %vm1002, %vm1034
      %vm1067 = vmand %vm1003, %vm1035
      %vm1068 = vmand %vm1004, %vm1036
      %vm1069 = vmand %vm1005, %vm1037
      %vm1070 = vmand %vm1006, %vm1038
      %vm1071 = vmand %vm1007, %vm1039
      %vm1072 = vmand %vm1008, %vm1040
      %vm1073 = vmand %vm1009, %vm1041
      %vm1074 = vmand %vm1010, %vm1042
      %vm1075 = vmand %vm1011, %vm1043
      %vm1076 = vmand %vm1012, %vm1044
      %vm1077 = vmand %vm1013, %vm1045
      %vm1078 = vmand %vm1014, %vm1046
      %vm1079 = vmand %vm1015, %vm1047
      %vm1080 = vmand %vm1016, %vm1048
      %vm1081 = vmand %vm1017, %vm1049
      %vm1082 = vmand %vm1018, %vm1050
      %vm1083 = vmand %vm1019, %vm1051
      %vm1084 = vmand %vm1020, %vm1052
      %vm1085 = vmand %vm1021, %vm1053
      %vm1086 = vmand %vm1022, %vm1054
      %vm1087 = vmand %vm1023, %vm1055
      %vm1088 = vmand %vm1024, %vm1056
      %vm1089 = vmand %vm1025, %vm1057
      %vm1090 = vmand %vm1026, %vm1058
      %v1091 = vsel %vm1059, 1, 0
      %v1092 = vsel %vm1060, 1, 0
      %v1093 = vsel %vm1061, 1, 0
      %v1094 = vsel %vm1062, 1, 0
      %v1095 = vsel %vm1063, 1, 0
      %v1096 = vsel %vm1064, 1, 0
      %v1097 = vsel %vm1065, 1, 0
      %v1098 = vsel %vm1066, 1, 0
      %v1099 = vsel %vm1067, 1, 0
      %v1100 = vsel %vm1068, 1, 0
      %v1101 = vsel %vm1069, 1, 0
      %v1102 = vsel %vm1070, 1, 0
      %v1103 = vsel %vm1071, 1, 0
      %v1104 = vsel %vm1072, 1, 0
      %v1105 = vsel %vm1073, 1, 0
      %v1106 = vsel %vm1074, 1, 0
      %v1107 = vsel %vm1075, 1, 0
      %v1108 = vsel %vm1076, 1, 0
      %v1109 = vsel %vm1077, 1, 0
      %v1110 = vsel %vm1078, 1, 0
      %v1111 = vsel %vm1079, 1, 0
      %v1112 = vsel %vm1080, 1, 0
      %v1113 = vsel %vm1081, 1, 0
      %v1114 = vsel %vm1082, 1, 0
      %v1115 = vsel %vm1083, 1, 0
      %v1116 = vsel %vm1084, 1, 0
      %v1117 = vsel %vm1085, 1, 0
      %v1118 = vsel %vm1086, 1, 0
      %v1119 = vsel %vm1087, 1, 0
      %v1120 = vsel %vm1088, 1, 0
      %v1121 = vsel %vm1089, 1, 0
      %v1122 = vsel %vm1090, 1, 0
      %vm1123 = vcmp.eq.s32.totalorder %v1091, 1
      %vm1124 = vcmp.eq.s32.totalorder %v1092, 1
      %vm1125 = vcmp.eq.s32.totalorder %v1093, 1
      %vm1126 = vcmp.eq.s32.totalorder %v1094, 1
      %vm1127 = vcmp.eq.s32.totalorder %v1095, 1
      %vm1128 = vcmp.eq.s32.totalorder %v1096, 1
      %vm1129 = vcmp.eq.s32.totalorder %v1097, 1
      %vm1130 = vcmp.eq.s32.totalorder %v1098, 1
      %vm1131 = vcmp.eq.s32.totalorder %v1099, 1
      %vm1132 = vcmp.eq.s32.totalorder %v1100, 1
      %vm1133 = vcmp.eq.s32.totalorder %v1101, 1
      %vm1134 = vcmp.eq.s32.totalorder %v1102, 1
      %vm1135 = vcmp.eq.s32.totalorder %v1103, 1
      %vm1136 = vcmp.eq.s32.totalorder %v1104, 1
      %vm1137 = vcmp.eq.s32.totalorder %v1105, 1
      %vm1138 = vcmp.eq.s32.totalorder %v1106, 1
      %vm1139 = vcmp.eq.s32.totalorder %v1107, 1
      %vm1140 = vcmp.eq.s32.totalorder %v1108, 1
      %vm1141 = vcmp.eq.s32.totalorder %v1109, 1
      %vm1142 = vcmp.eq.s32.totalorder %v1110, 1
      %vm1143 = vcmp.eq.s32.totalorder %v1111, 1
      %vm1144 = vcmp.eq.s32.totalorder %v1112, 1
      %vm1145 = vcmp.eq.s32.totalorder %v1113, 1
      %vm1146 = vcmp.eq.s32.totalorder %v1114, 1
      %vm1147 = vcmp.eq.s32.totalorder %v1115, 1
      %vm1148 = vcmp.eq.s32.totalorder %v1116, 1
      %vm1149 = vcmp.eq.s32.totalorder %v1117, 1
      %vm1150 = vcmp.eq.s32.totalorder %v1118, 1
      %vm1151 = vcmp.eq.s32.totalorder %v1119, 1
      %vm1152 = vcmp.eq.s32.totalorder %v1120, 1
      %vm1153 = vcmp.eq.s32.totalorder %v1121, 1
      %vm1154 = vcmp.eq.s32.totalorder %v1122, 1
      %v1155 = vsel %vm1123, %v367, 0.0
      %v1156 = vsel %vm1124, %v368, 0.0
      %v1157 = vsel %vm1125, %v337, 0.0
      %v1158 = vsel %vm1126, %v338, 0.0
      %v1159 = vsel %vm1127, %v339, 0.0
      %v1160 = vsel %vm1128, %v340, 0.0
      %v1161 = vsel %vm1129, %v341, 0.0
      %v1162 = vsel %vm1130, %v342, 0.0
      %v1163 = vsel %vm1131, %v343, 0.0
      %v1164 = vsel %vm1132, %v344, 0.0
      %v1165 = vsel %vm1133, %v345, 0.0
      %v1166 = vsel %vm1134, %v346, 0.0
      %v1167 = vsel %vm1135, %v347, 0.0
      %v1168 = vsel %vm1136, %v348, 0.0
      %v1169 = vsel %vm1137, %v349, 0.0
      %v1170 = vsel %vm1138, %v350, 0.0
      %v1171 = vsel %vm1139, %v351, 0.0
      %v1172 = vsel %vm1140, %v352, 0.0
      %v1173 = vsel %vm1141, %v353, 0.0
      %v1174 = vsel %vm1142, %v354, 0.0
      %v1175 = vsel %vm1143, %v355, 0.0
      %v1176 = vsel %vm1144, %v356, 0.0
      %v1177 = vsel %vm1145, %v357, 0.0
      %v1178 = vsel %vm1146, %v358, 0.0
      %v1179 = vsel %vm1147, %v359, 0.0
      %v1180 = vsel %vm1148, %v360, 0.0
      %v1181 = vsel %vm1149, %v361, 0.0
      %v1182 = vsel %vm1150, %v362, 0.0
      %v1183 = vsel %vm1151, %v363, 0.0
      %v1184 = vsel %vm1152, %v364, 0.0
      %v1185 = vsel %vm1153, %v365, 0.0
      %v1186 = vsel %vm1154, %v366, 0.0
      %v1187 = vpack.c.bf16 %v1156, %v1155
      %v1188 = vpack.c.bf16 %v1158, %v1157
      %v1189 = vpack.c.bf16 %v1160, %v1159
      %v1190 = vpack.c.bf16 %v1162, %v1161
      %v1191 = vpack.c.bf16 %v1164, %v1163
      %v1192 = vpack.c.bf16 %v1166, %v1165
      %v1193 = vpack.c.bf16 %v1168, %v1167
      %v1194 = vpack.c.bf16 %v1170, %v1169
      %v1195 = vpack.c.bf16 %v1172, %v1171
      %v1196 = vpack.c.bf16 %v1174, %v1173
      %v1197 = vpack.c.bf16 %v1176, %v1175
      %v1198 = vpack.c.bf16 %v1178, %v1177
      %v1199 = vpack.c.bf16 %v1180, %v1179
      %v1200 = vpack.c.bf16 %v1182, %v1181
      %v1201 = vpack.c.bf16 %v1184, %v1183
      %v1202 = vpack.c.bf16 %v1186, %v1185
      %v1203 = vrot.slane %v337, 1
      %v1204 = vrot.slane %v338, 1
      %v1205 = vrot.slane %v339, 1
      %v1206 = vrot.slane %v340, 1
      %v1207 = vrot.slane %v341, 1
      %v1208 = vrot.slane %v342, 1
      %v1209 = vrot.slane %v343, 1
      %v1210 = vrot.slane %v344, 1
      %v1211 = vrot.slane %v345, 1
      %v1212 = vrot.slane %v346, 1
      %v1213 = vrot.slane %v347, 1
      %v1214 = vrot.slane %v348, 1
      %v1215 = vrot.slane %v349, 1
      %v1216 = vrot.slane %v350, 1
      %v1217 = vrot.slane %v351, 1
      %v1218 = vrot.slane %v352, 1
      %v1219 = vrot.slane %v353, 1
      %v1220 = vrot.slane %v354, 1
      %v1221 = vrot.slane %v355, 1
      %v1222 = vrot.slane %v356, 1
      %v1223 = vrot.slane %v357, 1
      %v1224 = vrot.slane %v358, 1
      %v1225 = vrot.slane %v359, 1
      %v1226 = vrot.slane %v360, 1
      %v1227 = vrot.slane %v361, 1
      %v1228 = vrot.slane %v362, 1
      %v1229 = vrot.slane %v363, 1
      %v1230 = vrot.slane %v364, 1
      %v1231 = vrot.slane %v365, 1
      %v1232 = vrot.slane %v366, 1
      %v1233 = vrot.slane %v367, 1
      %v1234 = vrot.slane %v368, 1
      %vm1235 = vcmp.lt.s32.totalorder %v370, 7
      %v1236 = vsel %vm1235, %v1233, %v1234
      %v1237 = vsel %vm1235, %v1232, %v1233
      %v1238 = vsel %vm1235, %v1231, %v1232
      %v1239 = vsel %vm1235, %v1230, %v1231
      %v1240 = vsel %vm1235, %v1229, %v1230
      %v1241 = vsel %vm1235, %v1228, %v1229
      %v1242 = vsel %vm1235, %v1227, %v1228
      %v1243 = vsel %vm1235, %v1226, %v1227
      %v1244 = vsel %vm1235, %v1225, %v1226
      %v1245 = vsel %vm1235, %v1224, %v1225
      %v1246 = vsel %vm1235, %v1223, %v1224
      %v1247 = vsel %vm1235, %v1222, %v1223
      %v1248 = vsel %vm1235, %v1221, %v1222
      %v1249 = vsel %vm1235, %v1220, %v1221
      %v1250 = vsel %vm1235, %v1219, %v1220
      %v1251 = vsel %vm1235, %v1218, %v1219
      %v1252 = vsel %vm1235, %v1217, %v1218
      %v1253 = vsel %vm1235, %v1216, %v1217
      %v1254 = vsel %vm1235, %v1215, %v1216
      %v1255 = vsel %vm1235, %v1214, %v1215
      %v1256 = vsel %vm1235, %v1213, %v1214
      %v1257 = vsel %vm1235, %v1212, %v1213
      %v1258 = vsel %vm1235, %v1211, %v1212
      %v1259 = vsel %vm1235, %v1210, %v1211
      %v1260 = vsel %vm1235, %v1209, %v1210
      %v1261 = vsel %vm1235, %v1208, %v1209
      %v1262 = vsel %vm1235, %v1207, %v1208
      %v1263 = vsel %vm1235, %v1206, %v1207
      %v1264 = vsel %vm1235, %v1205, %v1206
      %v1265 = vsel %vm1235, %v1204, %v1205
      %v1266 = vsel %vm1235, %v1203, %v1204
      %v1267 = vsel %vm1235, %v1234, %v1203
      %v1268 = vadd.s32 %v402, 1
      %v1269 = vadd.s32 %v403, 1
      %v1270 = vadd.s32 %v404, 1
      %v1271 = vadd.s32 %v405, 1
      %v1272 = vadd.s32 %v406, 1
      %v1273 = vadd.s32 %v407, 1
      %v1274 = vadd.s32 %v408, 1
      %v1275 = vadd.s32 %v409, 1
      %v1276 = vadd.s32 %v410, 1
      %v1277 = vadd.s32 %v411, 1
      %v1278 = vadd.s32 %v412, 1
      %v1279 = vadd.s32 %v413, 1
      %v1280 = vadd.s32 %v414, 1
      %v1281 = vadd.s32 %v415, 1
      %v1282 = vadd.s32 %v416, 1
      %v1283 = vadd.s32 %v417, 1
      %v1284 = vadd.s32 %v418, 1
      %v1285 = vadd.s32 %v419, 1
      %v1286 = vadd.s32 %v420, 1
      %v1287 = vadd.s32 %v421, 1
      %v1288 = vadd.s32 %v422, 1
      %v1289 = vadd.s32 %v423, 1
      %v1290 = vadd.s32 %v424, 1
      %v1291 = vadd.s32 %v425, 1
      %v1292 = vadd.s32 %v426, 1
      %v1293 = vadd.s32 %v427, 1
      %v1294 = vadd.s32 %v428, 1
      %v1295 = vadd.s32 %v429, 1
      %v1296 = vadd.s32 %v430, 1
      %v1297 = vadd.s32 %v431, 1
      %v1298 = vadd.s32 %v432, 1
      %v1299 = vadd.s32 %v433, 1
      %vm1300 = vcmp.ge.s32.totalorder %v1268, 0
      %vm1301 = vcmp.ge.s32.totalorder %v1269, 0
      %vm1302 = vcmp.ge.s32.totalorder %v1270, 0
      %vm1303 = vcmp.ge.s32.totalorder %v1271, 0
      %vm1304 = vcmp.ge.s32.totalorder %v1272, 0
      %vm1305 = vcmp.ge.s32.totalorder %v1273, 0
      %vm1306 = vcmp.ge.s32.totalorder %v1274, 0
      %vm1307 = vcmp.ge.s32.totalorder %v1275, 0
      %vm1308 = vcmp.ge.s32.totalorder %v1276, 0
      %vm1309 = vcmp.ge.s32.totalorder %v1277, 0
      %vm1310 = vcmp.ge.s32.totalorder %v1278, 0
      %vm1311 = vcmp.ge.s32.totalorder %v1279, 0
      %vm1312 = vcmp.ge.s32.totalorder %v1280, 0
      %vm1313 = vcmp.ge.s32.totalorder %v1281, 0
      %vm1314 = vcmp.ge.s32.totalorder %v1282, 0
      %vm1315 = vcmp.ge.s32.totalorder %v1283, 0
      %vm1316 = vcmp.ge.s32.totalorder %v1284, 0
      %vm1317 = vcmp.ge.s32.totalorder %v1285, 0
      %vm1318 = vcmp.ge.s32.totalorder %v1286, 0
      %vm1319 = vcmp.ge.s32.totalorder %v1287, 0
      %vm1320 = vcmp.ge.s32.totalorder %v1288, 0
      %vm1321 = vcmp.ge.s32.totalorder %v1289, 0
      %vm1322 = vcmp.ge.s32.totalorder %v1290, 0
      %vm1323 = vcmp.ge.s32.totalorder %v1291, 0
      %vm1324 = vcmp.ge.s32.totalorder %v1292, 0
      %vm1325 = vcmp.ge.s32.totalorder %v1293, 0
      %vm1326 = vcmp.ge.s32.totalorder %v1294, 0
      %vm1327 = vcmp.ge.s32.totalorder %v1295, 0
      %vm1328 = vcmp.ge.s32.totalorder %v1296, 0
      %vm1329 = vcmp.ge.s32.totalorder %v1297, 0
      %vm1330 = vcmp.ge.s32.totalorder %v1298, 0
      %vm1331 = vcmp.ge.s32.totalorder %v1299, 0
      %vm1332 = vmand %vm659, %vm1300
      %vm1333 = vmand %vm660, %vm1301
      %vm1334 = vmand %vm661, %vm1302
      %vm1335 = vmand %vm662, %vm1303
      %vm1336 = vmand %vm663, %vm1304
      %vm1337 = vmand %vm664, %vm1305
      %vm1338 = vmand %vm665, %vm1306
      %vm1339 = vmand %vm666, %vm1307
      %vm1340 = vmand %vm667, %vm1308
      %vm1341 = vmand %vm668, %vm1309
      %vm1342 = vmand %vm669, %vm1310
      %vm1343 = vmand %vm670, %vm1311
      %vm1344 = vmand %vm671, %vm1312
      %vm1345 = vmand %vm672, %vm1313
      %vm1346 = vmand %vm673, %vm1314
      %vm1347 = vmand %vm674, %vm1315
      %vm1348 = vmand %vm675, %vm1316
      %vm1349 = vmand %vm676, %vm1317
      %vm1350 = vmand %vm677, %vm1318
      %vm1351 = vmand %vm678, %vm1319
      %vm1352 = vmand %vm679, %vm1320
      %vm1353 = vmand %vm680, %vm1321
      %vm1354 = vmand %vm681, %vm1322
      %vm1355 = vmand %vm682, %vm1323
      %vm1356 = vmand %vm683, %vm1324
      %vm1357 = vmand %vm684, %vm1325
      %vm1358 = vmand %vm685, %vm1326
      %vm1359 = vmand %vm686, %vm1327
      %vm1360 = vmand %vm687, %vm1328
      %vm1361 = vmand %vm688, %vm1329
      %vm1362 = vmand %vm689, %vm1330
      %vm1363 = vmand %vm690, %vm1331
      %vm1364 = vcmp.lt.s32.totalorder %v1268, 16
      %vm1365 = vcmp.lt.s32.totalorder %v1269, 16
      %vm1366 = vcmp.lt.s32.totalorder %v1270, 16
      %vm1367 = vcmp.lt.s32.totalorder %v1271, 16
      %vm1368 = vcmp.lt.s32.totalorder %v1272, 16
      %vm1369 = vcmp.lt.s32.totalorder %v1273, 16
      %vm1370 = vcmp.lt.s32.totalorder %v1274, 16
      %vm1371 = vcmp.lt.s32.totalorder %v1275, 16
      %vm1372 = vcmp.lt.s32.totalorder %v1276, 16
      %vm1373 = vcmp.lt.s32.totalorder %v1277, 16
      %vm1374 = vcmp.lt.s32.totalorder %v1278, 16
      %vm1375 = vcmp.lt.s32.totalorder %v1279, 16
      %vm1376 = vcmp.lt.s32.totalorder %v1280, 16
      %vm1377 = vcmp.lt.s32.totalorder %v1281, 16
      %vm1378 = vcmp.lt.s32.totalorder %v1282, 16
      %vm1379 = vcmp.lt.s32.totalorder %v1283, 16
      %vm1380 = vcmp.lt.s32.totalorder %v1284, 16
      %vm1381 = vcmp.lt.s32.totalorder %v1285, 16
      %vm1382 = vcmp.lt.s32.totalorder %v1286, 16
      %vm1383 = vcmp.lt.s32.totalorder %v1287, 16
      %vm1384 = vcmp.lt.s32.totalorder %v1288, 16
      %vm1385 = vcmp.lt.s32.totalorder %v1289, 16
      %vm1386 = vcmp.lt.s32.totalorder %v1290, 16
      %vm1387 = vcmp.lt.s32.totalorder %v1291, 16
      %vm1388 = vcmp.lt.s32.totalorder %v1292, 16
      %vm1389 = vcmp.lt.s32.totalorder %v1293, 16
      %vm1390 = vcmp.lt.s32.totalorder %v1294, 16
      %vm1391 = vcmp.lt.s32.totalorder %v1295, 16
      %vm1392 = vcmp.lt.s32.totalorder %v1296, 16
      %vm1393 = vcmp.lt.s32.totalorder %v1297, 16
      %vm1394 = vcmp.lt.s32.totalorder %v1298, 16
      %vm1395 = vcmp.lt.s32.totalorder %v1299, 16
      %vm1396 = vmand %vm1332, %vm1364
      %vm1397 = vmand %vm1333, %vm1365
      %vm1398 = vmand %vm1334, %vm1366
      %vm1399 = vmand %vm1335, %vm1367
      %vm1400 = vmand %vm1336, %vm1368
      %vm1401 = vmand %vm1337, %vm1369
      %vm1402 = vmand %vm1338, %vm1370
      %vm1403 = vmand %vm1339, %vm1371
      %vm1404 = vmand %vm1340, %vm1372
      %vm1405 = vmand %vm1341, %vm1373
      %vm1406 = vmand %vm1342, %vm1374
      %vm1407 = vmand %vm1343, %vm1375
      %vm1408 = vmand %vm1344, %vm1376
      %vm1409 = vmand %vm1345, %vm1377
      %vm1410 = vmand %vm1346, %vm1378
      %vm1411 = vmand %vm1347, %vm1379
      %vm1412 = vmand %vm1348, %vm1380
      %vm1413 = vmand %vm1349, %vm1381
      %vm1414 = vmand %vm1350, %vm1382
      %vm1415 = vmand %vm1351, %vm1383
      %vm1416 = vmand %vm1352, %vm1384
      %vm1417 = vmand %vm1353, %vm1385
      %vm1418 = vmand %vm1354, %vm1386
      %vm1419 = vmand %vm1355, %vm1387
      %vm1420 = vmand %vm1356, %vm1388
      %vm1421 = vmand %vm1357, %vm1389
      %vm1422 = vmand %vm1358, %vm1390
      %vm1423 = vmand %vm1359, %vm1391
      %vm1424 = vmand %vm1360, %vm1392
      %vm1425 = vmand %vm1361, %vm1393
      %vm1426 = vmand %vm1362, %vm1394
      %vm1427 = vmand %vm1363, %vm1395
      %v1428 = vsel %vm1396, 1, 0
      %v1429 = vsel %vm1397, 1, 0
      %v1430 = vsel %vm1398, 1, 0
      %v1431 = vsel %vm1399, 1, 0
      %v1432 = vsel %vm1400, 1, 0
      %v1433 = vsel %vm1401, 1, 0
      %v1434 = vsel %vm1402, 1, 0
      %v1435 = vsel %vm1403, 1, 0
      %v1436 = vsel %vm1404, 1, 0
      %v1437 = vsel %vm1405, 1, 0
      %v1438 = vsel %vm1406, 1, 0
      %v1439 = vsel %vm1407, 1, 0
      %v1440 = vsel %vm1408, 1, 0
      %v1441 = vsel %vm1409, 1, 0
      %v1442 = vsel %vm1410, 1, 0
      %v1443 = vsel %vm1411, 1, 0
      %v1444 = vsel %vm1412, 1, 0
      %v1445 = vsel %vm1413, 1, 0
      %v1446 = vsel %vm1414, 1, 0
      %v1447 = vsel %vm1415, 1, 0
      %v1448 = vsel %vm1416, 1, 0
      %v1449 = vsel %vm1417, 1, 0
      %v1450 = vsel %vm1418, 1, 0
      %v1451 = vsel %vm1419, 1, 0
      %v1452 = vsel %vm1420, 1, 0
      %v1453 = vsel %vm1421, 1, 0
      %v1454 = vsel %vm1422, 1, 0
      %v1455 = vsel %vm1423, 1, 0
      %v1456 = vsel %vm1424, 1, 0
      %v1457 = vsel %vm1425, 1, 0
      %v1458 = vsel %vm1426, 1, 0
      %v1459 = vsel %vm1427, 1, 0
      %vm1460 = vcmp.eq.s32.totalorder %v1428, 1
      %vm1461 = vcmp.eq.s32.totalorder %v1429, 1
      %vm1462 = vcmp.eq.s32.totalorder %v1430, 1
      %vm1463 = vcmp.eq.s32.totalorder %v1431, 1
      %vm1464 = vcmp.eq.s32.totalorder %v1432, 1
      %vm1465 = vcmp.eq.s32.totalorder %v1433, 1
      %vm1466 = vcmp.eq.s32.totalorder %v1434, 1
      %vm1467 = vcmp.eq.s32.totalorder %v1435, 1
      %vm1468 = vcmp.eq.s32.totalorder %v1436, 1
      %vm1469 = vcmp.eq.s32.totalorder %v1437, 1
      %vm1470 = vcmp.eq.s32.totalorder %v1438, 1
      %vm1471 = vcmp.eq.s32.totalorder %v1439, 1
      %vm1472 = vcmp.eq.s32.totalorder %v1440, 1
      %vm1473 = vcmp.eq.s32.totalorder %v1441, 1
      %vm1474 = vcmp.eq.s32.totalorder %v1442, 1
      %vm1475 = vcmp.eq.s32.totalorder %v1443, 1
      %vm1476 = vcmp.eq.s32.totalorder %v1444, 1
      %vm1477 = vcmp.eq.s32.totalorder %v1445, 1
      %vm1478 = vcmp.eq.s32.totalorder %v1446, 1
      %vm1479 = vcmp.eq.s32.totalorder %v1447, 1
      %vm1480 = vcmp.eq.s32.totalorder %v1448, 1
      %vm1481 = vcmp.eq.s32.totalorder %v1449, 1
      %vm1482 = vcmp.eq.s32.totalorder %v1450, 1
      %vm1483 = vcmp.eq.s32.totalorder %v1451, 1
      %vm1484 = vcmp.eq.s32.totalorder %v1452, 1
      %vm1485 = vcmp.eq.s32.totalorder %v1453, 1
      %vm1486 = vcmp.eq.s32.totalorder %v1454, 1
      %vm1487 = vcmp.eq.s32.totalorder %v1455, 1
      %vm1488 = vcmp.eq.s32.totalorder %v1456, 1
      %vm1489 = vcmp.eq.s32.totalorder %v1457, 1
      %vm1490 = vcmp.eq.s32.totalorder %v1458, 1
      %vm1491 = vcmp.eq.s32.totalorder %v1459, 1
      %v1492 = vsel %vm1460, %v1236, 0.0
      %v1493 = vsel %vm1461, %v1267, 0.0
      %v1494 = vsel %vm1462, %v1266, 0.0
      %v1495 = vsel %vm1463, %v1265, 0.0
      %v1496 = vsel %vm1464, %v1264, 0.0
      %v1497 = vsel %vm1465, %v1263, 0.0
      %v1498 = vsel %vm1466, %v1262, 0.0
      %v1499 = vsel %vm1467, %v1261, 0.0
      %v1500 = vsel %vm1468, %v1260, 0.0
      %v1501 = vsel %vm1469, %v1259, 0.0
      %v1502 = vsel %vm1470, %v1258, 0.0
      %v1503 = vsel %vm1471, %v1257, 0.0
      %v1504 = vsel %vm1472, %v1256, 0.0
      %v1505 = vsel %vm1473, %v1255, 0.0
      %v1506 = vsel %vm1474, %v1254, 0.0
      %v1507 = vsel %vm1475, %v1253, 0.0
      %v1508 = vsel %vm1476, %v1252, 0.0
      %v1509 = vsel %vm1477, %v1251, 0.0
      %v1510 = vsel %vm1478, %v1250, 0.0
      %v1511 = vsel %vm1479, %v1249, 0.0
      %v1512 = vsel %vm1480, %v1248, 0.0
      %v1513 = vsel %vm1481, %v1247, 0.0
      %v1514 = vsel %vm1482, %v1246, 0.0
      %v1515 = vsel %vm1483, %v1245, 0.0
      %v1516 = vsel %vm1484, %v1244, 0.0
      %v1517 = vsel %vm1485, %v1243, 0.0
      %v1518 = vsel %vm1486, %v1242, 0.0
      %v1519 = vsel %vm1487, %v1241, 0.0
      %v1520 = vsel %vm1488, %v1240, 0.0
      %v1521 = vsel %vm1489, %v1239, 0.0
      %v1522 = vsel %vm1490, %v1238, 0.0
      %v1523 = vsel %vm1491, %v1237, 0.0
      %v1524 = vpack.c.bf16 %v1493, %v1492
      %v1525 = vpack.c.bf16 %v1495, %v1494
      %v1526 = vpack.c.bf16 %v1497, %v1496
      %v1527 = vpack.c.bf16 %v1499, %v1498
      %v1528 = vpack.c.bf16 %v1501, %v1500
      %v1529 = vpack.c.bf16 %v1503, %v1502
      %v1530 = vpack.c.bf16 %v1505, %v1504
      %v1531 = vpack.c.bf16 %v1507, %v1506
      %v1532 = vpack.c.bf16 %v1509, %v1508
      %v1533 = vpack.c.bf16 %v1511, %v1510
      %v1534 = vpack.c.bf16 %v1513, %v1512
      %v1535 = vpack.c.bf16 %v1515, %v1514
      %v1536 = vpack.c.bf16 %v1517, %v1516
      %v1537 = vpack.c.bf16 %v1519, %v1518
      %v1538 = vpack.c.bf16 %v1521, %v1520
      %v1539 = vpack.c.bf16 %v1523, %v1522
      %vm1540 = vcmp.ge.s32.totalorder %v466, 0
      %vm1541 = vcmp.ge.s32.totalorder %v467, 0
      %vm1542 = vcmp.ge.s32.totalorder %v468, 0
      %vm1543 = vcmp.ge.s32.totalorder %v469, 0
      %vm1544 = vcmp.ge.s32.totalorder %v470, 0
      %vm1545 = vcmp.ge.s32.totalorder %v471, 0
      %vm1546 = vcmp.ge.s32.totalorder %v472, 0
      %vm1547 = vcmp.ge.s32.totalorder %v473, 0
      %vm1548 = vcmp.ge.s32.totalorder %v474, 0
      %vm1549 = vcmp.ge.s32.totalorder %v475, 0
      %vm1550 = vcmp.ge.s32.totalorder %v476, 0
      %vm1551 = vcmp.ge.s32.totalorder %v477, 0
      %vm1552 = vcmp.ge.s32.totalorder %v478, 0
      %vm1553 = vcmp.ge.s32.totalorder %v479, 0
      %vm1554 = vcmp.ge.s32.totalorder %v480, 0
      %vm1555 = vcmp.ge.s32.totalorder %v481, 0
      %vm1556 = vcmp.ge.s32.totalorder %v482, 0
      %vm1557 = vcmp.ge.s32.totalorder %v483, 0
      %vm1558 = vcmp.ge.s32.totalorder %v484, 0
      %vm1559 = vcmp.ge.s32.totalorder %v485, 0
      %vm1560 = vcmp.ge.s32.totalorder %v486, 0
      %vm1561 = vcmp.ge.s32.totalorder %v487, 0
      %vm1562 = vcmp.ge.s32.totalorder %v488, 0
      %vm1563 = vcmp.ge.s32.totalorder %v489, 0
      %vm1564 = vcmp.ge.s32.totalorder %v490, 0
      %vm1565 = vcmp.ge.s32.totalorder %v491, 0
      %vm1566 = vcmp.ge.s32.totalorder %v492, 0
      %vm1567 = vcmp.ge.s32.totalorder %v493, 0
      %vm1568 = vcmp.ge.s32.totalorder %v494, 0
      %vm1569 = vcmp.ge.s32.totalorder %v495, 0
      %vm1570 = vcmp.ge.s32.totalorder %v496, 0
      %vm1571 = vcmp.ge.s32.totalorder %v497, 0
      %vm1572 = vcmp.lt.s32.totalorder %v466, 16
      %vm1573 = vcmp.lt.s32.totalorder %v467, 16
      %vm1574 = vcmp.lt.s32.totalorder %v468, 16
      %vm1575 = vcmp.lt.s32.totalorder %v469, 16
      %vm1576 = vcmp.lt.s32.totalorder %v470, 16
      %vm1577 = vcmp.lt.s32.totalorder %v471, 16
      %vm1578 = vcmp.lt.s32.totalorder %v472, 16
      %vm1579 = vcmp.lt.s32.totalorder %v473, 16
      %vm1580 = vcmp.lt.s32.totalorder %v474, 16
      %vm1581 = vcmp.lt.s32.totalorder %v475, 16
      %vm1582 = vcmp.lt.s32.totalorder %v476, 16
      %vm1583 = vcmp.lt.s32.totalorder %v477, 16
      %vm1584 = vcmp.lt.s32.totalorder %v478, 16
      %vm1585 = vcmp.lt.s32.totalorder %v479, 16
      %vm1586 = vcmp.lt.s32.totalorder %v480, 16
      %vm1587 = vcmp.lt.s32.totalorder %v481, 16
      %vm1588 = vcmp.lt.s32.totalorder %v482, 16
      %vm1589 = vcmp.lt.s32.totalorder %v483, 16
      %vm1590 = vcmp.lt.s32.totalorder %v484, 16
      %vm1591 = vcmp.lt.s32.totalorder %v485, 16
      %vm1592 = vcmp.lt.s32.totalorder %v486, 16
      %vm1593 = vcmp.lt.s32.totalorder %v487, 16
      %vm1594 = vcmp.lt.s32.totalorder %v488, 16
      %vm1595 = vcmp.lt.s32.totalorder %v489, 16
      %vm1596 = vcmp.lt.s32.totalorder %v490, 16
      %vm1597 = vcmp.lt.s32.totalorder %v491, 16
      %vm1598 = vcmp.lt.s32.totalorder %v492, 16
      %vm1599 = vcmp.lt.s32.totalorder %v493, 16
      %vm1600 = vcmp.lt.s32.totalorder %v494, 16
      %vm1601 = vcmp.lt.s32.totalorder %v495, 16
      %vm1602 = vcmp.lt.s32.totalorder %v496, 16
      %vm1603 = vcmp.lt.s32.totalorder %v497, 16
      %vm1604 = vmand %vm1540, %vm1572
      %vm1605 = vmand %vm1541, %vm1573
      %vm1606 = vmand %vm1542, %vm1574
      %vm1607 = vmand %vm1543, %vm1575
      %vm1608 = vmand %vm1544, %vm1576
      %vm1609 = vmand %vm1545, %vm1577
      %vm1610 = vmand %vm1546, %vm1578
      %vm1611 = vmand %vm1547, %vm1579
      %vm1612 = vmand %vm1548, %vm1580
      %vm1613 = vmand %vm1549, %vm1581
      %vm1614 = vmand %vm1550, %vm1582
      %vm1615 = vmand %vm1551, %vm1583
      %vm1616 = vmand %vm1552, %vm1584
      %vm1617 = vmand %vm1553, %vm1585
      %vm1618 = vmand %vm1554, %vm1586
      %vm1619 = vmand %vm1555, %vm1587
      %vm1620 = vmand %vm1556, %vm1588
      %vm1621 = vmand %vm1557, %vm1589
      %vm1622 = vmand %vm1558, %vm1590
      %vm1623 = vmand %vm1559, %vm1591
      %vm1624 = vmand %vm1560, %vm1592
      %vm1625 = vmand %vm1561, %vm1593
      %vm1626 = vmand %vm1562, %vm1594
      %vm1627 = vmand %vm1563, %vm1595
      %vm1628 = vmand %vm1564, %vm1596
      %vm1629 = vmand %vm1565, %vm1597
      %vm1630 = vmand %vm1566, %vm1598
      %vm1631 = vmand %vm1567, %vm1599
      %vm1632 = vmand %vm1568, %vm1600
      %vm1633 = vmand %vm1569, %vm1601
      %vm1634 = vmand %vm1570, %vm1602
      %vm1635 = vmand %vm1571, %vm1603
      %vm1636 = vmand %vm1604, %vm723
      %vm1637 = vmand %vm1605, %vm724
      %vm1638 = vmand %vm1606, %vm725
      %vm1639 = vmand %vm1607, %vm726
      %vm1640 = vmand %vm1608, %vm727
      %vm1641 = vmand %vm1609, %vm728
      %vm1642 = vmand %vm1610, %vm729
      %vm1643 = vmand %vm1611, %vm730
      %vm1644 = vmand %vm1612, %vm731
      %vm1645 = vmand %vm1613, %vm732
      %vm1646 = vmand %vm1614, %vm733
      %vm1647 = vmand %vm1615, %vm734
      %vm1648 = vmand %vm1616, %vm735
      %vm1649 = vmand %vm1617, %vm736
      %vm1650 = vmand %vm1618, %vm737
      %vm1651 = vmand %vm1619, %vm738
      %vm1652 = vmand %vm1620, %vm739
      %vm1653 = vmand %vm1621, %vm740
      %vm1654 = vmand %vm1622, %vm741
      %vm1655 = vmand %vm1623, %vm742
      %vm1656 = vmand %vm1624, %vm743
      %vm1657 = vmand %vm1625, %vm744
      %vm1658 = vmand %vm1626, %vm745
      %vm1659 = vmand %vm1627, %vm746
      %vm1660 = vmand %vm1628, %vm747
      %vm1661 = vmand %vm1629, %vm748
      %vm1662 = vmand %vm1630, %vm749
      %vm1663 = vmand %vm1631, %vm750
      %vm1664 = vmand %vm1632, %vm751
      %vm1665 = vmand %vm1633, %vm752
      %vm1666 = vmand %vm1634, %vm753
      %vm1667 = vmand %vm1635, %vm754
      %vm1668 = vmand %vm1636, %vm787
      %vm1669 = vmand %vm1637, %vm788
      %vm1670 = vmand %vm1638, %vm789
      %vm1671 = vmand %vm1639, %vm790
      %vm1672 = vmand %vm1640, %vm791
      %vm1673 = vmand %vm1641, %vm792
      %vm1674 = vmand %vm1642, %vm793
      %vm1675 = vmand %vm1643, %vm794
      %vm1676 = vmand %vm1644, %vm795
      %vm1677 = vmand %vm1645, %vm796
      %vm1678 = vmand %vm1646, %vm797
      %vm1679 = vmand %vm1647, %vm798
      %vm1680 = vmand %vm1648, %vm799
      %vm1681 = vmand %vm1649, %vm800
      %vm1682 = vmand %vm1650, %vm801
      %vm1683 = vmand %vm1651, %vm802
      %vm1684 = vmand %vm1652, %vm803
      %vm1685 = vmand %vm1653, %vm804
      %vm1686 = vmand %vm1654, %vm805
      %vm1687 = vmand %vm1655, %vm806
      %vm1688 = vmand %vm1656, %vm807
      %vm1689 = vmand %vm1657, %vm808
      %vm1690 = vmand %vm1658, %vm809
      %vm1691 = vmand %vm1659, %vm810
      %vm1692 = vmand %vm1660, %vm811
      %vm1693 = vmand %vm1661, %vm812
      %vm1694 = vmand %vm1662, %vm813
      %vm1695 = vmand %vm1663, %vm814
      %vm1696 = vmand %vm1664, %vm815
      %vm1697 = vmand %vm1665, %vm816
      %vm1698 = vmand %vm1666, %vm817
      %vm1699 = vmand %vm1667, %vm818
      %v1700 = vsel %vm1668, 1, 0
      %v1701 = vsel %vm1669, 1, 0
      %v1702 = vsel %vm1670, 1, 0
      %v1703 = vsel %vm1671, 1, 0
      %v1704 = vsel %vm1672, 1, 0
      %v1705 = vsel %vm1673, 1, 0
      %v1706 = vsel %vm1674, 1, 0
      %v1707 = vsel %vm1675, 1, 0
      %v1708 = vsel %vm1676, 1, 0
      %v1709 = vsel %vm1677, 1, 0
      %v1710 = vsel %vm1678, 1, 0
      %v1711 = vsel %vm1679, 1, 0
      %v1712 = vsel %vm1680, 1, 0
      %v1713 = vsel %vm1681, 1, 0
      %v1714 = vsel %vm1682, 1, 0
      %v1715 = vsel %vm1683, 1, 0
      %v1716 = vsel %vm1684, 1, 0
      %v1717 = vsel %vm1685, 1, 0
      %v1718 = vsel %vm1686, 1, 0
      %v1719 = vsel %vm1687, 1, 0
      %v1720 = vsel %vm1688, 1, 0
      %v1721 = vsel %vm1689, 1, 0
      %v1722 = vsel %vm1690, 1, 0
      %v1723 = vsel %vm1691, 1, 0
      %v1724 = vsel %vm1692, 1, 0
      %v1725 = vsel %vm1693, 1, 0
      %v1726 = vsel %vm1694, 1, 0
      %v1727 = vsel %vm1695, 1, 0
      %v1728 = vsel %vm1696, 1, 0
      %v1729 = vsel %vm1697, 1, 0
      %v1730 = vsel %vm1698, 1, 0
      %v1731 = vsel %vm1699, 1, 0
      %vm1732 = vcmp.eq.s32.totalorder %v1700, 1
      %vm1733 = vcmp.eq.s32.totalorder %v1701, 1
      %vm1734 = vcmp.eq.s32.totalorder %v1702, 1
      %vm1735 = vcmp.eq.s32.totalorder %v1703, 1
      %vm1736 = vcmp.eq.s32.totalorder %v1704, 1
      %vm1737 = vcmp.eq.s32.totalorder %v1705, 1
      %vm1738 = vcmp.eq.s32.totalorder %v1706, 1
      %vm1739 = vcmp.eq.s32.totalorder %v1707, 1
      %vm1740 = vcmp.eq.s32.totalorder %v1708, 1
      %vm1741 = vcmp.eq.s32.totalorder %v1709, 1
      %vm1742 = vcmp.eq.s32.totalorder %v1710, 1
      %vm1743 = vcmp.eq.s32.totalorder %v1711, 1
      %vm1744 = vcmp.eq.s32.totalorder %v1712, 1
      %vm1745 = vcmp.eq.s32.totalorder %v1713, 1
      %vm1746 = vcmp.eq.s32.totalorder %v1714, 1
      %vm1747 = vcmp.eq.s32.totalorder %v1715, 1
      %vm1748 = vcmp.eq.s32.totalorder %v1716, 1
      %vm1749 = vcmp.eq.s32.totalorder %v1717, 1
      %vm1750 = vcmp.eq.s32.totalorder %v1718, 1
      %vm1751 = vcmp.eq.s32.totalorder %v1719, 1
      %vm1752 = vcmp.eq.s32.totalorder %v1720, 1
      %vm1753 = vcmp.eq.s32.totalorder %v1721, 1
      %vm1754 = vcmp.eq.s32.totalorder %v1722, 1
      %vm1755 = vcmp.eq.s32.totalorder %v1723, 1
      %vm1756 = vcmp.eq.s32.totalorder %v1724, 1
      %vm1757 = vcmp.eq.s32.totalorder %v1725, 1
      %vm1758 = vcmp.eq.s32.totalorder %v1726, 1
      %vm1759 = vcmp.eq.s32.totalorder %v1727, 1
      %vm1760 = vcmp.eq.s32.totalorder %v1728, 1
      %vm1761 = vcmp.eq.s32.totalorder %v1729, 1
      %vm1762 = vcmp.eq.s32.totalorder %v1730, 1
      %vm1763 = vcmp.eq.s32.totalorder %v1731, 1
      %v1764 = vsel %vm1732, %v562, 0.0
      %v1765 = vsel %vm1733, %v561, 0.0
      %v1766 = vsel %vm1734, %v560, 0.0
      %v1767 = vsel %vm1735, %v559, 0.0
      %v1768 = vsel %vm1736, %v558, 0.0
      %v1769 = vsel %vm1737, %v557, 0.0
      %v1770 = vsel %vm1738, %v556, 0.0
      %v1771 = vsel %vm1739, %v555, 0.0
      %v1772 = vsel %vm1740, %v554, 0.0
      %v1773 = vsel %vm1741, %v553, 0.0
      %v1774 = vsel %vm1742, %v552, 0.0
      %v1775 = vsel %vm1743, %v551, 0.0
      %v1776 = vsel %vm1744, %v550, 0.0
      %v1777 = vsel %vm1745, %v549, 0.0
      %v1778 = vsel %vm1746, %v548, 0.0
      %v1779 = vsel %vm1747, %v547, 0.0
      %v1780 = vsel %vm1748, %v546, 0.0
      %v1781 = vsel %vm1749, %v545, 0.0
      %v1782 = vsel %vm1750, %v544, 0.0
      %v1783 = vsel %vm1751, %v543, 0.0
      %v1784 = vsel %vm1752, %v542, 0.0
      %v1785 = vsel %vm1753, %v541, 0.0
      %v1786 = vsel %vm1754, %v540, 0.0
      %v1787 = vsel %vm1755, %v539, 0.0
      %v1788 = vsel %vm1756, %v538, 0.0
      %v1789 = vsel %vm1757, %v537, 0.0
      %v1790 = vsel %vm1758, %v536, 0.0
      %v1791 = vsel %vm1759, %v535, 0.0
      %v1792 = vsel %vm1760, %v534, 0.0
      %v1793 = vsel %vm1761, %v533, 0.0
      %v1794 = vsel %vm1762, %v532, 0.0
      %v1795 = vsel %vm1763, %v531, 0.0
      %v1796 = vpack.c.bf16 %v1765, %v1764
      %v1797 = vpack.c.bf16 %v1767, %v1766
      %v1798 = vpack.c.bf16 %v1769, %v1768
      %v1799 = vpack.c.bf16 %v1771, %v1770
      %v1800 = vpack.c.bf16 %v1773, %v1772
      %v1801 = vpack.c.bf16 %v1775, %v1774
      %v1802 = vpack.c.bf16 %v1777, %v1776
      %v1803 = vpack.c.bf16 %v1779, %v1778
      %v1804 = vpack.c.bf16 %v1781, %v1780
      %v1805 = vpack.c.bf16 %v1783, %v1782
      %v1806 = vpack.c.bf16 %v1785, %v1784
      %v1807 = vpack.c.bf16 %v1787, %v1786
      %v1808 = vpack.c.bf16 %v1789, %v1788
      %v1809 = vpack.c.bf16 %v1791, %v1790
      %v1810 = vpack.c.bf16 %v1793, %v1792
      %v1811 = vpack.c.bf16 %v1795, %v1794
      %v1812 = vpack.c.bf16 %v338, %v337
      %v1813 = vpack.c.bf16 %v340, %v339
      %v1814 = vpack.c.bf16 %v342, %v341
      %v1815 = vpack.c.bf16 %v344, %v343
      %v1816 = vpack.c.bf16 %v346, %v345
      %v1817 = vpack.c.bf16 %v348, %v347
      %v1818 = vpack.c.bf16 %v350, %v349
      %v1819 = vpack.c.bf16 %v352, %v351
      %v1820 = vpack.c.bf16 %v354, %v353
      %v1821 = vpack.c.bf16 %v356, %v355
      %v1822 = vpack.c.bf16 %v358, %v357
      %v1823 = vpack.c.bf16 %v360, %v359
      %v1824 = vpack.c.bf16 %v362, %v361
      %v1825 = vpack.c.bf16 %v364, %v363
      %v1826 = vpack.c.bf16 %v366, %v365
      %v1827 = vpack.c.bf16 %v368, %v367
      %vm1828 = vmand %vm1604, %vm1300
      %vm1829 = vmand %vm1605, %vm1301
      %vm1830 = vmand %vm1606, %vm1302
      %vm1831 = vmand %vm1607, %vm1303
      %vm1832 = vmand %vm1608, %vm1304
      %vm1833 = vmand %vm1609, %vm1305
      %vm1834 = vmand %vm1610, %vm1306
      %vm1835 = vmand %vm1611, %vm1307
      %vm1836 = vmand %vm1612, %vm1308
      %vm1837 = vmand %vm1613, %vm1309
      %vm1838 = vmand %vm1614, %vm1310
      %vm1839 = vmand %vm1615, %vm1311
      %vm1840 = vmand %vm1616, %vm1312
      %vm1841 = vmand %vm1617, %vm1313
      %vm1842 = vmand %vm1618, %vm1314
      %vm1843 = vmand %vm1619, %vm1315
      %vm1844 = vmand %vm1620, %vm1316
      %vm1845 = vmand %vm1621, %vm1317
      %vm1846 = vmand %vm1622, %vm1318
      %vm1847 = vmand %vm1623, %vm1319
      %vm1848 = vmand %vm1624, %vm1320
      %vm1849 = vmand %vm1625, %vm1321
      %vm1850 = vmand %vm1626, %vm1322
      %vm1851 = vmand %vm1627, %vm1323
      %vm1852 = vmand %vm1628, %vm1324
      %vm1853 = vmand %vm1629, %vm1325
      %vm1854 = vmand %vm1630, %vm1326
      %vm1855 = vmand %vm1631, %vm1327
      %vm1856 = vmand %vm1632, %vm1328
      %vm1857 = vmand %vm1633, %vm1329
      %vm1858 = vmand %vm1634, %vm1330
      %vm1859 = vmand %vm1635, %vm1331
      %vm1860 = vmand %vm1828, %vm1364
      %vm1861 = vmand %vm1829, %vm1365
      %vm1862 = vmand %vm1830, %vm1366
      %vm1863 = vmand %vm1831, %vm1367
      %vm1864 = vmand %vm1832, %vm1368
      %vm1865 = vmand %vm1833, %vm1369
      %vm1866 = vmand %vm1834, %vm1370
      %vm1867 = vmand %vm1835, %vm1371
      %vm1868 = vmand %vm1836, %vm1372
      %vm1869 = vmand %vm1837, %vm1373
      %vm1870 = vmand %vm1838, %vm1374
      %vm1871 = vmand %vm1839, %vm1375
      %vm1872 = vmand %vm1840, %vm1376
      %vm1873 = vmand %vm1841, %vm1377
      %vm1874 = vmand %vm1842, %vm1378
      %vm1875 = vmand %vm1843, %vm1379
      %vm1876 = vmand %vm1844, %vm1380
      %vm1877 = vmand %vm1845, %vm1381
      %vm1878 = vmand %vm1846, %vm1382
      %vm1879 = vmand %vm1847, %vm1383
      %vm1880 = vmand %vm1848, %vm1384
      %vm1881 = vmand %vm1849, %vm1385
      %vm1882 = vmand %vm1850, %vm1386
      %vm1883 = vmand %vm1851, %vm1387
      %vm1884 = vmand %vm1852, %vm1388
      %vm1885 = vmand %vm1853, %vm1389
      %vm1886 = vmand %vm1854, %vm1390
      %vm1887 = vmand %vm1855, %vm1391
      %vm1888 = vmand %vm1856, %vm1392
      %vm1889 = vmand %vm1857, %vm1393
      %vm1890 = vmand %vm1858, %vm1394
      %vm1891 = vmand %vm1859, %vm1395
      %v1892 = vsel %vm1860, 1, 0
      %v1893 = vsel %vm1861, 1, 0
      %v1894 = vsel %vm1862, 1, 0
      %v1895 = vsel %vm1863, 1, 0
      %v1896 = vsel %vm1864, 1, 0
      %v1897 = vsel %vm1865, 1, 0
      %v1898 = vsel %vm1866, 1, 0
      %v1899 = vsel %vm1867, 1, 0
      %v1900 = vsel %vm1868, 1, 0
      %v1901 = vsel %vm1869, 1, 0
      %v1902 = vsel %vm1870, 1, 0
      %v1903 = vsel %vm1871, 1, 0
      %v1904 = vsel %vm1872, 1, 0
      %v1905 = vsel %vm1873, 1, 0
      %v1906 = vsel %vm1874, 1, 0
      %v1907 = vsel %vm1875, 1, 0
      %v1908 = vsel %vm1876, 1, 0
      %v1909 = vsel %vm1877, 1, 0
      %v1910 = vsel %vm1878, 1, 0
      %v1911 = vsel %vm1879, 1, 0
      %v1912 = vsel %vm1880, 1, 0
      %v1913 = vsel %vm1881, 1, 0
      %v1914 = vsel %vm1882, 1, 0
      %v1915 = vsel %vm1883, 1, 0
      %v1916 = vsel %vm1884, 1, 0
      %v1917 = vsel %vm1885, 1, 0
      %v1918 = vsel %vm1886, 1, 0
      %v1919 = vsel %vm1887, 1, 0
      %v1920 = vsel %vm1888, 1, 0
      %v1921 = vsel %vm1889, 1, 0
      %v1922 = vsel %vm1890, 1, 0
      %v1923 = vsel %vm1891, 1, 0
      %vm1924 = vcmp.eq.s32.totalorder %v1892, 1
      %vm1925 = vcmp.eq.s32.totalorder %v1893, 1
      %vm1926 = vcmp.eq.s32.totalorder %v1894, 1
      %vm1927 = vcmp.eq.s32.totalorder %v1895, 1
      %vm1928 = vcmp.eq.s32.totalorder %v1896, 1
      %vm1929 = vcmp.eq.s32.totalorder %v1897, 1
      %vm1930 = vcmp.eq.s32.totalorder %v1898, 1
      %vm1931 = vcmp.eq.s32.totalorder %v1899, 1
      %vm1932 = vcmp.eq.s32.totalorder %v1900, 1
      %vm1933 = vcmp.eq.s32.totalorder %v1901, 1
      %vm1934 = vcmp.eq.s32.totalorder %v1902, 1
      %vm1935 = vcmp.eq.s32.totalorder %v1903, 1
      %vm1936 = vcmp.eq.s32.totalorder %v1904, 1
      %vm1937 = vcmp.eq.s32.totalorder %v1905, 1
      %vm1938 = vcmp.eq.s32.totalorder %v1906, 1
      %vm1939 = vcmp.eq.s32.totalorder %v1907, 1
      %vm1940 = vcmp.eq.s32.totalorder %v1908, 1
      %vm1941 = vcmp.eq.s32.totalorder %v1909, 1
      %vm1942 = vcmp.eq.s32.totalorder %v1910, 1
      %vm1943 = vcmp.eq.s32.totalorder %v1911, 1
      %vm1944 = vcmp.eq.s32.totalorder %v1912, 1
      %vm1945 = vcmp.eq.s32.totalorder %v1913, 1
      %vm1946 = vcmp.eq.s32.totalorder %v1914, 1
      %vm1947 = vcmp.eq.s32.totalorder %v1915, 1
      %vm1948 = vcmp.eq.s32.totalorder %v1916, 1
      %vm1949 = vcmp.eq.s32.totalorder %v1917, 1
      %vm1950 = vcmp.eq.s32.totalorder %v1918, 1
      %vm1951 = vcmp.eq.s32.totalorder %v1919, 1
      %vm1952 = vcmp.eq.s32.totalorder %v1920, 1
      %vm1953 = vcmp.eq.s32.totalorder %v1921, 1
      %vm1954 = vcmp.eq.s32.totalorder %v1922, 1
      %vm1955 = vcmp.eq.s32.totalorder %v1923, 1
      %v1956 = vsel %vm1924, %v1266, 0.0
      %v1957 = vsel %vm1925, %v1265, 0.0
      %v1958 = vsel %vm1926, %v1264, 0.0
      %v1959 = vsel %vm1927, %v1263, 0.0
      %v1960 = vsel %vm1928, %v1262, 0.0
      %v1961 = vsel %vm1929, %v1261, 0.0
      %v1962 = vsel %vm1930, %v1260, 0.0
      %v1963 = vsel %vm1931, %v1259, 0.0
      %v1964 = vsel %vm1932, %v1258, 0.0
      %v1965 = vsel %vm1933, %v1257, 0.0
      %v1966 = vsel %vm1934, %v1256, 0.0
      %v1967 = vsel %vm1935, %v1255, 0.0
      %v1968 = vsel %vm1936, %v1254, 0.0
      %v1969 = vsel %vm1937, %v1253, 0.0
      %v1970 = vsel %vm1938, %v1252, 0.0
      %v1971 = vsel %vm1939, %v1251, 0.0
      %v1972 = vsel %vm1940, %v1250, 0.0
      %v1973 = vsel %vm1941, %v1249, 0.0
      %v1974 = vsel %vm1942, %v1248, 0.0
      %v1975 = vsel %vm1943, %v1247, 0.0
      %v1976 = vsel %vm1944, %v1246, 0.0
      %v1977 = vsel %vm1945, %v1245, 0.0
      %v1978 = vsel %vm1946, %v1244, 0.0
      %v1979 = vsel %vm1947, %v1243, 0.0
      %v1980 = vsel %vm1948, %v1242, 0.0
      %v1981 = vsel %vm1949, %v1241, 0.0
      %v1982 = vsel %vm1950, %v1240, 0.0
      %v1983 = vsel %vm1951, %v1239, 0.0
      %v1984 = vsel %vm1952, %v1238, 0.0
      %v1985 = vsel %vm1953, %v1237, 0.0
      %v1986 = vsel %vm1954, %v1236, 0.0
      %v1987 = vsel %vm1955, %v1267, 0.0
      %v1988 = vpack.c.bf16 %v1957, %v1956
      %v1989 = vpack.c.bf16 %v1959, %v1958
      %v1990 = vpack.c.bf16 %v1961, %v1960
      %v1991 = vpack.c.bf16 %v1963, %v1962
      %v1992 = vpack.c.bf16 %v1965, %v1964
      %v1993 = vpack.c.bf16 %v1967, %v1966
      %v1994 = vpack.c.bf16 %v1969, %v1968
      %v1995 = vpack.c.bf16 %v1971, %v1970
      %v1996 = vpack.c.bf16 %v1973, %v1972
      %v1997 = vpack.c.bf16 %v1975, %v1974
      %v1998 = vpack.c.bf16 %v1977, %v1976
      %v1999 = vpack.c.bf16 %v1979, %v1978
      %v2000 = vpack.c.bf16 %v1981, %v1980
      %v2001 = vpack.c.bf16 %v1983, %v1982
      %v2002 = vpack.c.bf16 %v1985, %v1984
      %v2003 = vpack.c.bf16 %v1987, %v1986
      %v2004 = vadd.s32 %v466, 1
      %v2005 = vadd.s32 %v467, 1
      %v2006 = vadd.s32 %v468, 1
      %v2007 = vadd.s32 %v469, 1
      %v2008 = vadd.s32 %v470, 1
      %v2009 = vadd.s32 %v471, 1
      %v2010 = vadd.s32 %v472, 1
      %v2011 = vadd.s32 %v473, 1
      %v2012 = vadd.s32 %v474, 1
      %v2013 = vadd.s32 %v475, 1
      %v2014 = vadd.s32 %v476, 1
      %v2015 = vadd.s32 %v477, 1
      %v2016 = vadd.s32 %v478, 1
      %v2017 = vadd.s32 %v479, 1
      %v2018 = vadd.s32 %v480, 1
      %v2019 = vadd.s32 %v481, 1
      %v2020 = vadd.s32 %v482, 1
      %v2021 = vadd.s32 %v483, 1
      %v2022 = vadd.s32 %v484, 1
      %v2023 = vadd.s32 %v485, 1
      %v2024 = vadd.s32 %v486, 1
      %v2025 = vadd.s32 %v487, 1
      %v2026 = vadd.s32 %v488, 1
      %v2027 = vadd.s32 %v489, 1
      %v2028 = vadd.s32 %v490, 1
      %v2029 = vadd.s32 %v491, 1
      %v2030 = vadd.s32 %v492, 1
      %v2031 = vadd.s32 %v493, 1
      %v2032 = vadd.s32 %v494, 1
      %v2033 = vadd.s32 %v495, 1
      %v2034 = vadd.s32 %v496, 1
      %v2035 = vadd.s32 %v497, 1
      %vm2036 = vcmp.ge.s32.totalorder %v2004, 0
      %vm2037 = vcmp.ge.s32.totalorder %v2005, 0
      %vm2038 = vcmp.ge.s32.totalorder %v2006, 0
      %vm2039 = vcmp.ge.s32.totalorder %v2007, 0
      %vm2040 = vcmp.ge.s32.totalorder %v2008, 0
      %vm2041 = vcmp.ge.s32.totalorder %v2009, 0
      %vm2042 = vcmp.ge.s32.totalorder %v2010, 0
      %vm2043 = vcmp.ge.s32.totalorder %v2011, 0
      %vm2044 = vcmp.ge.s32.totalorder %v2012, 0
      %vm2045 = vcmp.ge.s32.totalorder %v2013, 0
      %vm2046 = vcmp.ge.s32.totalorder %v2014, 0
      %vm2047 = vcmp.ge.s32.totalorder %v2015, 0
      %vm2048 = vcmp.ge.s32.totalorder %v2016, 0
      %vm2049 = vcmp.ge.s32.totalorder %v2017, 0
      %vm2050 = vcmp.ge.s32.totalorder %v2018, 0
      %vm2051 = vcmp.ge.s32.totalorder %v2019, 0
      %vm2052 = vcmp.ge.s32.totalorder %v2020, 0
      %vm2053 = vcmp.ge.s32.totalorder %v2021, 0
      %vm2054 = vcmp.ge.s32.totalorder %v2022, 0
      %vm2055 = vcmp.ge.s32.totalorder %v2023, 0
      %vm2056 = vcmp.ge.s32.totalorder %v2024, 0
      %vm2057 = vcmp.ge.s32.totalorder %v2025, 0
      %vm2058 = vcmp.ge.s32.totalorder %v2026, 0
      %vm2059 = vcmp.ge.s32.totalorder %v2027, 0
      %vm2060 = vcmp.ge.s32.totalorder %v2028, 0
      %vm2061 = vcmp.ge.s32.totalorder %v2029, 0
      %vm2062 = vcmp.ge.s32.totalorder %v2030, 0
      %vm2063 = vcmp.ge.s32.totalorder %v2031, 0
      %vm2064 = vcmp.ge.s32.totalorder %v2032, 0
      %vm2065 = vcmp.ge.s32.totalorder %v2033, 0
      %vm2066 = vcmp.ge.s32.totalorder %v2034, 0
      %vm2067 = vcmp.ge.s32.totalorder %v2035, 0
      %vm2068 = vcmp.lt.s32.totalorder %v2004, 16
      %vm2069 = vcmp.lt.s32.totalorder %v2005, 16
      %vm2070 = vcmp.lt.s32.totalorder %v2006, 16
      %vm2071 = vcmp.lt.s32.totalorder %v2007, 16
      %vm2072 = vcmp.lt.s32.totalorder %v2008, 16
      %vm2073 = vcmp.lt.s32.totalorder %v2009, 16
      %vm2074 = vcmp.lt.s32.totalorder %v2010, 16
      %vm2075 = vcmp.lt.s32.totalorder %v2011, 16
      %vm2076 = vcmp.lt.s32.totalorder %v2012, 16
      %vm2077 = vcmp.lt.s32.totalorder %v2013, 16
      %vm2078 = vcmp.lt.s32.totalorder %v2014, 16
      %vm2079 = vcmp.lt.s32.totalorder %v2015, 16
      %vm2080 = vcmp.lt.s32.totalorder %v2016, 16
      %vm2081 = vcmp.lt.s32.totalorder %v2017, 16
      %vm2082 = vcmp.lt.s32.totalorder %v2018, 16
      %vm2083 = vcmp.lt.s32.totalorder %v2019, 16
      %vm2084 = vcmp.lt.s32.totalorder %v2020, 16
      %vm2085 = vcmp.lt.s32.totalorder %v2021, 16
      %vm2086 = vcmp.lt.s32.totalorder %v2022, 16
      %vm2087 = vcmp.lt.s32.totalorder %v2023, 16
      %vm2088 = vcmp.lt.s32.totalorder %v2024, 16
      %vm2089 = vcmp.lt.s32.totalorder %v2025, 16
      %vm2090 = vcmp.lt.s32.totalorder %v2026, 16
      %vm2091 = vcmp.lt.s32.totalorder %v2027, 16
      %vm2092 = vcmp.lt.s32.totalorder %v2028, 16
      %vm2093 = vcmp.lt.s32.totalorder %v2029, 16
      %vm2094 = vcmp.lt.s32.totalorder %v2030, 16
      %vm2095 = vcmp.lt.s32.totalorder %v2031, 16
      %vm2096 = vcmp.lt.s32.totalorder %v2032, 16
      %vm2097 = vcmp.lt.s32.totalorder %v2033, 16
      %vm2098 = vcmp.lt.s32.totalorder %v2034, 16
      %vm2099 = vcmp.lt.s32.totalorder %v2035, 16
      %vm2100 = vmand %vm2036, %vm2068
      %vm2101 = vmand %vm2037, %vm2069
      %vm2102 = vmand %vm2038, %vm2070
      %vm2103 = vmand %vm2039, %vm2071
      %vm2104 = vmand %vm2040, %vm2072
      %vm2105 = vmand %vm2041, %vm2073
      %vm2106 = vmand %vm2042, %vm2074
      %vm2107 = vmand %vm2043, %vm2075
      %vm2108 = vmand %vm2044, %vm2076
      %vm2109 = vmand %vm2045, %vm2077
      %vm2110 = vmand %vm2046, %vm2078
      %vm2111 = vmand %vm2047, %vm2079
      %vm2112 = vmand %vm2048, %vm2080
      %vm2113 = vmand %vm2049, %vm2081
      %vm2114 = vmand %vm2050, %vm2082
      %vm2115 = vmand %vm2051, %vm2083
      %vm2116 = vmand %vm2052, %vm2084
      %vm2117 = vmand %vm2053, %vm2085
      %vm2118 = vmand %vm2054, %vm2086
      %vm2119 = vmand %vm2055, %vm2087
      %vm2120 = vmand %vm2056, %vm2088
      %vm2121 = vmand %vm2057, %vm2089
      %vm2122 = vmand %vm2058, %vm2090
      %vm2123 = vmand %vm2059, %vm2091
      %vm2124 = vmand %vm2060, %vm2092
      %vm2125 = vmand %vm2061, %vm2093
      %vm2126 = vmand %vm2062, %vm2094
      %vm2127 = vmand %vm2063, %vm2095
      %vm2128 = vmand %vm2064, %vm2096
      %vm2129 = vmand %vm2065, %vm2097
      %vm2130 = vmand %vm2066, %vm2098
      %vm2131 = vmand %vm2067, %vm2099
      %vm2132 = vmand %vm2100, %vm723
      %vm2133 = vmand %vm2101, %vm724
      %vm2134 = vmand %vm2102, %vm725
      %vm2135 = vmand %vm2103, %vm726
      %vm2136 = vmand %vm2104, %vm727
      %vm2137 = vmand %vm2105, %vm728
      %vm2138 = vmand %vm2106, %vm729
      %vm2139 = vmand %vm2107, %vm730
      %vm2140 = vmand %vm2108, %vm731
      %vm2141 = vmand %vm2109, %vm732
      %vm2142 = vmand %vm2110, %vm733
      %vm2143 = vmand %vm2111, %vm734
      %vm2144 = vmand %vm2112, %vm735
      %vm2145 = vmand %vm2113, %vm736
      %vm2146 = vmand %vm2114, %vm737
      %vm2147 = vmand %vm2115, %vm738
      %vm2148 = vmand %vm2116, %vm739
      %vm2149 = vmand %vm2117, %vm740
      %vm2150 = vmand %vm2118, %vm741
      %vm2151 = vmand %vm2119, %vm742
      %vm2152 = vmand %vm2120, %vm743
      %vm2153 = vmand %vm2121, %vm744
      %vm2154 = vmand %vm2122, %vm745
      %vm2155 = vmand %vm2123, %vm746
      %vm2156 = vmand %vm2124, %vm747
      %vm2157 = vmand %vm2125, %vm748
      %vm2158 = vmand %vm2126, %vm749
      %vm2159 = vmand %vm2127, %vm750
      %vm2160 = vmand %vm2128, %vm751
      %vm2161 = vmand %vm2129, %vm752
      %vm2162 = vmand %vm2130, %vm753
      %vm2163 = vmand %vm2131, %vm754
      %vm2164 = vmand %vm2132, %vm787
      %vm2165 = vmand %vm2133, %vm788
      %vm2166 = vmand %vm2134, %vm789
      %vm2167 = vmand %vm2135, %vm790
      %vm2168 = vmand %vm2136, %vm791
      %vm2169 = vmand %vm2137, %vm792
      %vm2170 = vmand %vm2138, %vm793
      %vm2171 = vmand %vm2139, %vm794
      %vm2172 = vmand %vm2140, %vm795
      %vm2173 = vmand %vm2141, %vm796
      %vm2174 = vmand %vm2142, %vm797
      %vm2175 = vmand %vm2143, %vm798
      %vm2176 = vmand %vm2144, %vm799
      %vm2177 = vmand %vm2145, %vm800
      %vm2178 = vmand %vm2146, %vm801
      %vm2179 = vmand %vm2147, %vm802
      %vm2180 = vmand %vm2148, %vm803
      %vm2181 = vmand %vm2149, %vm804
      %vm2182 = vmand %vm2150, %vm805
      %vm2183 = vmand %vm2151, %vm806
      %vm2184 = vmand %vm2152, %vm807
      %vm2185 = vmand %vm2153, %vm808
      %vm2186 = vmand %vm2154, %vm809
      %vm2187 = vmand %vm2155, %vm810
      %vm2188 = vmand %vm2156, %vm811
      %vm2189 = vmand %vm2157, %vm812
      %vm2190 = vmand %vm2158, %vm813
      %vm2191 = vmand %vm2159, %vm814
      %vm2192 = vmand %vm2160, %vm815
      %vm2193 = vmand %vm2161, %vm816
      %vm2194 = vmand %vm2162, %vm817
      %vm2195 = vmand %vm2163, %vm818
      %v2196 = vsel %vm2164, 1, 0
      %v2197 = vsel %vm2165, 1, 0
      %v2198 = vsel %vm2166, 1, 0
      %v2199 = vsel %vm2167, 1, 0
      %v2200 = vsel %vm2168, 1, 0
      %v2201 = vsel %vm2169, 1, 0
      %v2202 = vsel %vm2170, 1, 0
      %v2203 = vsel %vm2171, 1, 0
      %v2204 = vsel %vm2172, 1, 0
      %v2205 = vsel %vm2173, 1, 0
      %v2206 = vsel %vm2174, 1, 0
      %v2207 = vsel %vm2175, 1, 0
      %v2208 = vsel %vm2176, 1, 0
      %v2209 = vsel %vm2177, 1, 0
      %v2210 = vsel %vm2178, 1, 0
      %v2211 = vsel %vm2179, 1, 0
      %v2212 = vsel %vm2180, 1, 0
      %v2213 = vsel %vm2181, 1, 0
      %v2214 = vsel %vm2182, 1, 0
      %v2215 = vsel %vm2183, 1, 0
      %v2216 = vsel %vm2184, 1, 0
      %v2217 = vsel %vm2185, 1, 0
      %v2218 = vsel %vm2186, 1, 0
      %v2219 = vsel %vm2187, 1, 0
      %v2220 = vsel %vm2188, 1, 0
      %v2221 = vsel %vm2189, 1, 0
      %v2222 = vsel %vm2190, 1, 0
      %v2223 = vsel %vm2191, 1, 0
      %v2224 = vsel %vm2192, 1, 0
      %v2225 = vsel %vm2193, 1, 0
      %v2226 = vsel %vm2194, 1, 0
      %v2227 = vsel %vm2195, 1, 0
      %vm2228 = vcmp.eq.s32.totalorder %v2196, 1
      %vm2229 = vcmp.eq.s32.totalorder %v2197, 1
      %vm2230 = vcmp.eq.s32.totalorder %v2198, 1
      %vm2231 = vcmp.eq.s32.totalorder %v2199, 1
      %vm2232 = vcmp.eq.s32.totalorder %v2200, 1
      %vm2233 = vcmp.eq.s32.totalorder %v2201, 1
      %vm2234 = vcmp.eq.s32.totalorder %v2202, 1
      %vm2235 = vcmp.eq.s32.totalorder %v2203, 1
      %vm2236 = vcmp.eq.s32.totalorder %v2204, 1
      %vm2237 = vcmp.eq.s32.totalorder %v2205, 1
      %vm2238 = vcmp.eq.s32.totalorder %v2206, 1
      %vm2239 = vcmp.eq.s32.totalorder %v2207, 1
      %vm2240 = vcmp.eq.s32.totalorder %v2208, 1
      %vm2241 = vcmp.eq.s32.totalorder %v2209, 1
      %vm2242 = vcmp.eq.s32.totalorder %v2210, 1
      %vm2243 = vcmp.eq.s32.totalorder %v2211, 1
      %vm2244 = vcmp.eq.s32.totalorder %v2212, 1
      %vm2245 = vcmp.eq.s32.totalorder %v2213, 1
      %vm2246 = vcmp.eq.s32.totalorder %v2214, 1
      %vm2247 = vcmp.eq.s32.totalorder %v2215, 1
      %vm2248 = vcmp.eq.s32.totalorder %v2216, 1
      %vm2249 = vcmp.eq.s32.totalorder %v2217, 1
      %vm2250 = vcmp.eq.s32.totalorder %v2218, 1
      %vm2251 = vcmp.eq.s32.totalorder %v2219, 1
      %vm2252 = vcmp.eq.s32.totalorder %v2220, 1
      %vm2253 = vcmp.eq.s32.totalorder %v2221, 1
      %vm2254 = vcmp.eq.s32.totalorder %v2222, 1
      %vm2255 = vcmp.eq.s32.totalorder %v2223, 1
      %vm2256 = vcmp.eq.s32.totalorder %v2224, 1
      %vm2257 = vcmp.eq.s32.totalorder %v2225, 1
      %vm2258 = vcmp.eq.s32.totalorder %v2226, 1
      %vm2259 = vcmp.eq.s32.totalorder %v2227, 1
      %v2260 = vsel %vm2228, %v560, 0.0
      %v2261 = vsel %vm2229, %v559, 0.0
      %v2262 = vsel %vm2230, %v558, 0.0
      %v2263 = vsel %vm2231, %v557, 0.0
      %v2264 = vsel %vm2232, %v556, 0.0
      %v2265 = vsel %vm2233, %v555, 0.0
      %v2266 = vsel %vm2234, %v554, 0.0
      %v2267 = vsel %vm2235, %v553, 0.0
      %v2268 = vsel %vm2236, %v552, 0.0
      %v2269 = vsel %vm2237, %v551, 0.0
      %v2270 = vsel %vm2238, %v550, 0.0
      %v2271 = vsel %vm2239, %v549, 0.0
      %v2272 = vsel %vm2240, %v548, 0.0
      %v2273 = vsel %vm2241, %v547, 0.0
      %v2274 = vsel %vm2242, %v546, 0.0
      %v2275 = vsel %vm2243, %v545, 0.0
      %v2276 = vsel %vm2244, %v544, 0.0
      %v2277 = vsel %vm2245, %v543, 0.0
      %v2278 = vsel %vm2246, %v542, 0.0
      %v2279 = vsel %vm2247, %v541, 0.0
      %v2280 = vsel %vm2248, %v540, 0.0
      %v2281 = vsel %vm2249, %v539, 0.0
      %v2282 = vsel %vm2250, %v538, 0.0
      %v2283 = vsel %vm2251, %v537, 0.0
      %v2284 = vsel %vm2252, %v536, 0.0
      %v2285 = vsel %vm2253, %v535, 0.0
      %v2286 = vsel %vm2254, %v534, 0.0
      %v2287 = vsel %vm2255, %v533, 0.0
      %v2288 = vsel %vm2256, %v532, 0.0
      %v2289 = vsel %vm2257, %v531, 0.0
      %v2290 = vsel %vm2258, %v562, 0.0
      %v2291 = vsel %vm2259, %v561, 0.0
      %v2292 = vpack.c.bf16 %v2261, %v2260
      %v2293 = vpack.c.bf16 %v2263, %v2262
      %v2294 = vpack.c.bf16 %v2265, %v2264
      %v2295 = vpack.c.bf16 %v2267, %v2266
      %v2296 = vpack.c.bf16 %v2269, %v2268
      %v2297 = vpack.c.bf16 %v2271, %v2270
      %v2298 = vpack.c.bf16 %v2273, %v2272
      %v2299 = vpack.c.bf16 %v2275, %v2274
      %v2300 = vpack.c.bf16 %v2277, %v2276
      %v2301 = vpack.c.bf16 %v2279, %v2278
      %v2302 = vpack.c.bf16 %v2281, %v2280
      %v2303 = vpack.c.bf16 %v2283, %v2282
      %v2304 = vpack.c.bf16 %v2285, %v2284
      %v2305 = vpack.c.bf16 %v2287, %v2286
      %v2306 = vpack.c.bf16 %v2289, %v2288
      %v2307 = vpack.c.bf16 %v2291, %v2290
      %vm2308 = vmand %vm2100, %vm963
      %vm2309 = vmand %vm2101, %vm964
      %vm2310 = vmand %vm2102, %vm965
      %vm2311 = vmand %vm2103, %vm966
      %vm2312 = vmand %vm2104, %vm967
      %vm2313 = vmand %vm2105, %vm968
      %vm2314 = vmand %vm2106, %vm969
      %vm2315 = vmand %vm2107, %vm970
      %vm2316 = vmand %vm2108, %vm971
      %vm2317 = vmand %vm2109, %vm972
      %vm2318 = vmand %vm2110, %vm973
      %vm2319 = vmand %vm2111, %vm974
      %vm2320 = vmand %vm2112, %vm975
      %vm2321 = vmand %vm2113, %vm976
      %vm2322 = vmand %vm2114, %vm977
      %vm2323 = vmand %vm2115, %vm978
      %vm2324 = vmand %vm2116, %vm979
      %vm2325 = vmand %vm2117, %vm980
      %vm2326 = vmand %vm2118, %vm981
      %vm2327 = vmand %vm2119, %vm982
      %vm2328 = vmand %vm2120, %vm983
      %vm2329 = vmand %vm2121, %vm984
      %vm2330 = vmand %vm2122, %vm985
      %vm2331 = vmand %vm2123, %vm986
      %vm2332 = vmand %vm2124, %vm987
      %vm2333 = vmand %vm2125, %vm988
      %vm2334 = vmand %vm2126, %vm989
      %vm2335 = vmand %vm2127, %vm990
      %vm2336 = vmand %vm2128, %vm991
      %vm2337 = vmand %vm2129, %vm992
      %vm2338 = vmand %vm2130, %vm993
      %vm2339 = vmand %vm2131, %vm994
      %vm2340 = vmand %vm2308, %vm1027
      %vm2341 = vmand %vm2309, %vm1028
      %vm2342 = vmand %vm2310, %vm1029
      %vm2343 = vmand %vm2311, %vm1030
      %vm2344 = vmand %vm2312, %vm1031
      %vm2345 = vmand %vm2313, %vm1032
      %vm2346 = vmand %vm2314, %vm1033
      %vm2347 = vmand %vm2315, %vm1034
      %vm2348 = vmand %vm2316, %vm1035
      %vm2349 = vmand %vm2317, %vm1036
      %vm2350 = vmand %vm2318, %vm1037
      %vm2351 = vmand %vm2319, %vm1038
      %vm2352 = vmand %vm2320, %vm1039
      %vm2353 = vmand %vm2321, %vm1040
      %vm2354 = vmand %vm2322, %vm1041
      %vm2355 = vmand %vm2323, %vm1042
      %vm2356 = vmand %vm2324, %vm1043
      %vm2357 = vmand %vm2325, %vm1044
      %vm2358 = vmand %vm2326, %vm1045
      %vm2359 = vmand %vm2327, %vm1046
      %vm2360 = vmand %vm2328, %vm1047
      %vm2361 = vmand %vm2329, %vm1048
      %vm2362 = vmand %vm2330, %vm1049
      %vm2363 = vmand %vm2331, %vm1050
      %vm2364 = vmand %vm2332, %vm1051
      %vm2365 = vmand %vm2333, %vm1052
      %vm2366 = vmand %vm2334, %vm1053
      %vm2367 = vmand %vm2335, %vm1054
      %vm2368 = vmand %vm2336, %vm1055
      %vm2369 = vmand %vm2337, %vm1056
      %vm2370 = vmand %vm2338, %vm1057
      %vm2371 = vmand %vm2339, %vm1058
      %v2372 = vsel %vm2340, 1, 0
      %v2373 = vsel %vm2341, 1, 0
      %v2374 = vsel %vm2342, 1, 0
      %v2375 = vsel %vm2343, 1, 0
      %v2376 = vsel %vm2344, 1, 0
      %v2377 = vsel %vm2345, 1, 0
      %v2378 = vsel %vm2346, 1, 0
      %v2379 = vsel %vm2347, 1, 0
      %v2380 = vsel %vm2348, 1, 0
      %v2381 = vsel %vm2349, 1, 0
      %v2382 = vsel %vm2350, 1, 0
      %v2383 = vsel %vm2351, 1, 0
      %v2384 = vsel %vm2352, 1, 0
      %v2385 = vsel %vm2353, 1, 0
      %v2386 = vsel %vm2354, 1, 0
      %v2387 = vsel %vm2355, 1, 0
      %v2388 = vsel %vm2356, 1, 0
      %v2389 = vsel %vm2357, 1, 0
      %v2390 = vsel %vm2358, 1, 0
      %v2391 = vsel %vm2359, 1, 0
      %v2392 = vsel %vm2360, 1, 0
      %v2393 = vsel %vm2361, 1, 0
      %v2394 = vsel %vm2362, 1, 0
      %v2395 = vsel %vm2363, 1, 0
      %v2396 = vsel %vm2364, 1, 0
      %v2397 = vsel %vm2365, 1, 0
      %v2398 = vsel %vm2366, 1, 0
      %v2399 = vsel %vm2367, 1, 0
      %v2400 = vsel %vm2368, 1, 0
      %v2401 = vsel %vm2369, 1, 0
      %v2402 = vsel %vm2370, 1, 0
      %v2403 = vsel %vm2371, 1, 0
      %vm2404 = vcmp.eq.s32.totalorder %v2372, 1
      %vm2405 = vcmp.eq.s32.totalorder %v2373, 1
      %vm2406 = vcmp.eq.s32.totalorder %v2374, 1
      %vm2407 = vcmp.eq.s32.totalorder %v2375, 1
      %vm2408 = vcmp.eq.s32.totalorder %v2376, 1
      %vm2409 = vcmp.eq.s32.totalorder %v2377, 1
      %vm2410 = vcmp.eq.s32.totalorder %v2378, 1
      %vm2411 = vcmp.eq.s32.totalorder %v2379, 1
      %vm2412 = vcmp.eq.s32.totalorder %v2380, 1
      %vm2413 = vcmp.eq.s32.totalorder %v2381, 1
      %vm2414 = vcmp.eq.s32.totalorder %v2382, 1
      %vm2415 = vcmp.eq.s32.totalorder %v2383, 1
      %vm2416 = vcmp.eq.s32.totalorder %v2384, 1
      %vm2417 = vcmp.eq.s32.totalorder %v2385, 1
      %vm2418 = vcmp.eq.s32.totalorder %v2386, 1
      %vm2419 = vcmp.eq.s32.totalorder %v2387, 1
      %vm2420 = vcmp.eq.s32.totalorder %v2388, 1
      %vm2421 = vcmp.eq.s32.totalorder %v2389, 1
      %vm2422 = vcmp.eq.s32.totalorder %v2390, 1
      %vm2423 = vcmp.eq.s32.totalorder %v2391, 1
      %vm2424 = vcmp.eq.s32.totalorder %v2392, 1
      %vm2425 = vcmp.eq.s32.totalorder %v2393, 1
      %vm2426 = vcmp.eq.s32.totalorder %v2394, 1
      %vm2427 = vcmp.eq.s32.totalorder %v2395, 1
      %vm2428 = vcmp.eq.s32.totalorder %v2396, 1
      %vm2429 = vcmp.eq.s32.totalorder %v2397, 1
      %vm2430 = vcmp.eq.s32.totalorder %v2398, 1
      %vm2431 = vcmp.eq.s32.totalorder %v2399, 1
      %vm2432 = vcmp.eq.s32.totalorder %v2400, 1
      %vm2433 = vcmp.eq.s32.totalorder %v2401, 1
      %vm2434 = vcmp.eq.s32.totalorder %v2402, 1
      %vm2435 = vcmp.eq.s32.totalorder %v2403, 1
      %v2436 = vsel %vm2404, %v339, 0.0
      %v2437 = vsel %vm2405, %v340, 0.0
      %v2438 = vsel %vm2406, %v341, 0.0
      %v2439 = vsel %vm2407, %v342, 0.0
      %v2440 = vsel %vm2408, %v343, 0.0
      %v2441 = vsel %vm2409, %v344, 0.0
      %v2442 = vsel %vm2410, %v345, 0.0
      %v2443 = vsel %vm2411, %v346, 0.0
      %v2444 = vsel %vm2412, %v347, 0.0
      %v2445 = vsel %vm2413, %v348, 0.0
      %v2446 = vsel %vm2414, %v349, 0.0
      %v2447 = vsel %vm2415, %v350, 0.0
      %v2448 = vsel %vm2416, %v351, 0.0
      %v2449 = vsel %vm2417, %v352, 0.0
      %v2450 = vsel %vm2418, %v353, 0.0
      %v2451 = vsel %vm2419, %v354, 0.0
      %v2452 = vsel %vm2420, %v355, 0.0
      %v2453 = vsel %vm2421, %v356, 0.0
      %v2454 = vsel %vm2422, %v357, 0.0
      %v2455 = vsel %vm2423, %v358, 0.0
      %v2456 = vsel %vm2424, %v359, 0.0
      %v2457 = vsel %vm2425, %v360, 0.0
      %v2458 = vsel %vm2426, %v361, 0.0
      %v2459 = vsel %vm2427, %v362, 0.0
      %v2460 = vsel %vm2428, %v363, 0.0
      %v2461 = vsel %vm2429, %v364, 0.0
      %v2462 = vsel %vm2430, %v365, 0.0
      %v2463 = vsel %vm2431, %v366, 0.0
      %v2464 = vsel %vm2432, %v367, 0.0
      %v2465 = vsel %vm2433, %v368, 0.0
      %v2466 = vsel %vm2434, %v337, 0.0
      %v2467 = vsel %vm2435, %v338, 0.0
      %v2468 = vpack.c.bf16 %v2437, %v2436
      %v2469 = vpack.c.bf16 %v2439, %v2438
      %v2470 = vpack.c.bf16 %v2441, %v2440
      %v2471 = vpack.c.bf16 %v2443, %v2442
      %v2472 = vpack.c.bf16 %v2445, %v2444
      %v2473 = vpack.c.bf16 %v2447, %v2446
      %v2474 = vpack.c.bf16 %v2449, %v2448
      %v2475 = vpack.c.bf16 %v2451, %v2450
      %v2476 = vpack.c.bf16 %v2453, %v2452
      %v2477 = vpack.c.bf16 %v2455, %v2454
      %v2478 = vpack.c.bf16 %v2457, %v2456
      %v2479 = vpack.c.bf16 %v2459, %v2458
      %v2480 = vpack.c.bf16 %v2461, %v2460
      %v2481 = vpack.c.bf16 %v2463, %v2462
      %v2482 = vpack.c.bf16 %v2465, %v2464
      %v2483 = vpack.c.bf16 %v2467, %v2466
      %vm2484 = vmand %vm2100, %vm1300
      %vm2485 = vmand %vm2101, %vm1301
      %vm2486 = vmand %vm2102, %vm1302
      %vm2487 = vmand %vm2103, %vm1303
      %vm2488 = vmand %vm2104, %vm1304
      %vm2489 = vmand %vm2105, %vm1305
      %vm2490 = vmand %vm2106, %vm1306
      %vm2491 = vmand %vm2107, %vm1307
      %vm2492 = vmand %vm2108, %vm1308
      %vm2493 = vmand %vm2109, %vm1309
      %vm2494 = vmand %vm2110, %vm1310
      %vm2495 = vmand %vm2111, %vm1311
      %vm2496 = vmand %vm2112, %vm1312
      %vm2497 = vmand %vm2113, %vm1313
      %vm2498 = vmand %vm2114, %vm1314
      %vm2499 = vmand %vm2115, %vm1315
      %vm2500 = vmand %vm2116, %vm1316
      %vm2501 = vmand %vm2117, %vm1317
      %vm2502 = vmand %vm2118, %vm1318
      %vm2503 = vmand %vm2119, %vm1319
      %vm2504 = vmand %vm2120, %vm1320
      %vm2505 = vmand %vm2121, %vm1321
      %vm2506 = vmand %vm2122, %vm1322
      %vm2507 = vmand %vm2123, %vm1323
      %vm2508 = vmand %vm2124, %vm1324
      %vm2509 = vmand %vm2125, %vm1325
      %vm2510 = vmand %vm2126, %vm1326
      %vm2511 = vmand %vm2127, %vm1327
      %vm2512 = vmand %vm2128, %vm1328
      %vm2513 = vmand %vm2129, %vm1329
      %vm2514 = vmand %vm2130, %vm1330
      %vm2515 = vmand %vm2131, %vm1331
      %vm2516 = vmand %vm2484, %vm1364
      %vm2517 = vmand %vm2485, %vm1365
      %vm2518 = vmand %vm2486, %vm1366
      %vm2519 = vmand %vm2487, %vm1367
      %vm2520 = vmand %vm2488, %vm1368
      %vm2521 = vmand %vm2489, %vm1369
      %vm2522 = vmand %vm2490, %vm1370
      %vm2523 = vmand %vm2491, %vm1371
      %vm2524 = vmand %vm2492, %vm1372
      %vm2525 = vmand %vm2493, %vm1373
      %vm2526 = vmand %vm2494, %vm1374
      %vm2527 = vmand %vm2495, %vm1375
      %vm2528 = vmand %vm2496, %vm1376
      %vm2529 = vmand %vm2497, %vm1377
      %vm2530 = vmand %vm2498, %vm1378
      %vm2531 = vmand %vm2499, %vm1379
      %vm2532 = vmand %vm2500, %vm1380
      %vm2533 = vmand %vm2501, %vm1381
      %vm2534 = vmand %vm2502, %vm1382
      %vm2535 = vmand %vm2503, %vm1383
      %vm2536 = vmand %vm2504, %vm1384
      %vm2537 = vmand %vm2505, %vm1385
      %vm2538 = vmand %vm2506, %vm1386
      %vm2539 = vmand %vm2507, %vm1387
      %vm2540 = vmand %vm2508, %vm1388
      %vm2541 = vmand %vm2509, %vm1389
      %vm2542 = vmand %vm2510, %vm1390
      %vm2543 = vmand %vm2511, %vm1391
      %vm2544 = vmand %vm2512, %vm1392
      %vm2545 = vmand %vm2513, %vm1393
      %vm2546 = vmand %vm2514, %vm1394
      %vm2547 = vmand %vm2515, %vm1395
      %v2548 = vsel %vm2516, 1, 0
      %v2549 = vsel %vm2517, 1, 0
      %v2550 = vsel %vm2518, 1, 0
      %v2551 = vsel %vm2519, 1, 0
      %v2552 = vsel %vm2520, 1, 0
      %v2553 = vsel %vm2521, 1, 0
      %v2554 = vsel %vm2522, 1, 0
      %v2555 = vsel %vm2523, 1, 0
      %v2556 = vsel %vm2524, 1, 0
      %v2557 = vsel %vm2525, 1, 0
      %v2558 = vsel %vm2526, 1, 0
      %v2559 = vsel %vm2527, 1, 0
      %v2560 = vsel %vm2528, 1, 0
      %v2561 = vsel %vm2529, 1, 0
      %v2562 = vsel %vm2530, 1, 0
      %v2563 = vsel %vm2531, 1, 0
      %v2564 = vsel %vm2532, 1, 0
      %v2565 = vsel %vm2533, 1, 0
      %v2566 = vsel %vm2534, 1, 0
      %v2567 = vsel %vm2535, 1, 0
      %v2568 = vsel %vm2536, 1, 0
      %v2569 = vsel %vm2537, 1, 0
      %v2570 = vsel %vm2538, 1, 0
      %v2571 = vsel %vm2539, 1, 0
      %v2572 = vsel %vm2540, 1, 0
      %v2573 = vsel %vm2541, 1, 0
      %v2574 = vsel %vm2542, 1, 0
      %v2575 = vsel %vm2543, 1, 0
      %v2576 = vsel %vm2544, 1, 0
      %v2577 = vsel %vm2545, 1, 0
      %v2578 = vsel %vm2546, 1, 0
      %v2579 = vsel %vm2547, 1, 0
      %vm2580 = vcmp.eq.s32.totalorder %v2548, 1
      %vm2581 = vcmp.eq.s32.totalorder %v2549, 1
      %vm2582 = vcmp.eq.s32.totalorder %v2550, 1
      %vm2583 = vcmp.eq.s32.totalorder %v2551, 1
      %vm2584 = vcmp.eq.s32.totalorder %v2552, 1
      %vm2585 = vcmp.eq.s32.totalorder %v2553, 1
      %vm2586 = vcmp.eq.s32.totalorder %v2554, 1
      %vm2587 = vcmp.eq.s32.totalorder %v2555, 1
      %vm2588 = vcmp.eq.s32.totalorder %v2556, 1
      %vm2589 = vcmp.eq.s32.totalorder %v2557, 1
      %vm2590 = vcmp.eq.s32.totalorder %v2558, 1
      %vm2591 = vcmp.eq.s32.totalorder %v2559, 1
      %vm2592 = vcmp.eq.s32.totalorder %v2560, 1
      %vm2593 = vcmp.eq.s32.totalorder %v2561, 1
      %vm2594 = vcmp.eq.s32.totalorder %v2562, 1
      %vm2595 = vcmp.eq.s32.totalorder %v2563, 1
      %vm2596 = vcmp.eq.s32.totalorder %v2564, 1
      %vm2597 = vcmp.eq.s32.totalorder %v2565, 1
      %vm2598 = vcmp.eq.s32.totalorder %v2566, 1
      %vm2599 = vcmp.eq.s32.totalorder %v2567, 1
      %vm2600 = vcmp.eq.s32.totalorder %v2568, 1
      %vm2601 = vcmp.eq.s32.totalorder %v2569, 1
      %vm2602 = vcmp.eq.s32.totalorder %v2570, 1
      %vm2603 = vcmp.eq.s32.totalorder %v2571, 1
      %vm2604 = vcmp.eq.s32.totalorder %v2572, 1
      %vm2605 = vcmp.eq.s32.totalorder %v2573, 1
      %vm2606 = vcmp.eq.s32.totalorder %v2574, 1
      %vm2607 = vcmp.eq.s32.totalorder %v2575, 1
      %vm2608 = vcmp.eq.s32.totalorder %v2576, 1
      %vm2609 = vcmp.eq.s32.totalorder %v2577, 1
      %vm2610 = vcmp.eq.s32.totalorder %v2578, 1
      %vm2611 = vcmp.eq.s32.totalorder %v2579, 1
      %v2612 = vsel %vm2580, %v1264, 0.0
      %v2613 = vsel %vm2581, %v1263, 0.0
      %v2614 = vsel %vm2582, %v1262, 0.0
      %v2615 = vsel %vm2583, %v1261, 0.0
      %v2616 = vsel %vm2584, %v1260, 0.0
      %v2617 = vsel %vm2585, %v1259, 0.0
      %v2618 = vsel %vm2586, %v1258, 0.0
      %v2619 = vsel %vm2587, %v1257, 0.0
      %v2620 = vsel %vm2588, %v1256, 0.0
      %v2621 = vsel %vm2589, %v1255, 0.0
      %v2622 = vsel %vm2590, %v1254, 0.0
      %v2623 = vsel %vm2591, %v1253, 0.0
      %v2624 = vsel %vm2592, %v1252, 0.0
      %v2625 = vsel %vm2593, %v1251, 0.0
      %v2626 = vsel %vm2594, %v1250, 0.0
      %v2627 = vsel %vm2595, %v1249, 0.0
      %v2628 = vsel %vm2596, %v1248, 0.0
      %v2629 = vsel %vm2597, %v1247, 0.0
      %v2630 = vsel %vm2598, %v1246, 0.0
      %v2631 = vsel %vm2599, %v1245, 0.0
      %v2632 = vsel %vm2600, %v1244, 0.0
      %v2633 = vsel %vm2601, %v1243, 0.0
      %v2634 = vsel %vm2602, %v1242, 0.0
      %v2635 = vsel %vm2603, %v1241, 0.0
      %v2636 = vsel %vm2604, %v1240, 0.0
      %v2637 = vsel %vm2605, %v1239, 0.0
      %v2638 = vsel %vm2606, %v1238, 0.0
      %v2639 = vsel %vm2607, %v1237, 0.0
      %v2640 = vsel %vm2608, %v1236, 0.0
      %v2641 = vsel %vm2609, %v1267, 0.0
      %v2642 = vsel %vm2610, %v1266, 0.0
      %v2643 = vsel %vm2611, %v1265, 0.0
      %v2644 = vpack.c.bf16 %v2613, %v2612
      %v2645 = vpack.c.bf16 %v2615, %v2614
      %v2646 = vpack.c.bf16 %v2617, %v2616
      %v2647 = vpack.c.bf16 %v2619, %v2618
      %v2648 = vpack.c.bf16 %v2621, %v2620
      %v2649 = vpack.c.bf16 %v2623, %v2622
      %v2650 = vpack.c.bf16 %v2625, %v2624
      %v2651 = vpack.c.bf16 %v2627, %v2626
      %v2652 = vpack.c.bf16 %v2629, %v2628
      %v2653 = vpack.c.bf16 %v2631, %v2630
      %v2654 = vpack.c.bf16 %v2633, %v2632
      %v2655 = vpack.c.bf16 %v2635, %v2634
      %v2656 = vpack.c.bf16 %v2637, %v2636
      %v2657 = vpack.c.bf16 %v2639, %v2638
      %v2658 = vpack.c.bf16 %v2641, %v2640
      %v2659 = vpack.c.bf16 %v2643, %v2642
      %v2660 = vld [vmem:[%s3] sm:$0xf]
      %v2661 = vld [vmem:[%s3 + $0x4] sm:$0xf]
      %v2662 = vld [vmem:[%s3 + $0x8] sm:$0xf]
      %v2663 = vld [vmem:[%s3 + $0xc] sm:$0xf]
      %v2664 = vld [vmem:[%s3 + $0x10] sm:$0xf]
      %v2665 = vld [vmem:[%s3 + $0x14] sm:$0xf]
      %v2666 = vld [vmem:[%s3 + $0x18] sm:$0xf]
      %v2667 = vld [vmem:[%s3 + $0x1c] sm:$0xf]
      %v2668 = vld [vmem:[%s3 + $0x20] sm:$0xf]
      %v2669 = vld [vmem:[%s3 + $0x24] sm:$0xf]
      %v2670 = vld [vmem:[%s3 + $0x28] sm:$0xf]
      %v2671 = vld [vmem:[%s3 + $0x2c] sm:$0xf]
      %v2672 = vld [vmem:[%s3 + $0x30] sm:$0xf]
      %v2673 = vld [vmem:[%s3 + $0x34] sm:$0xf]
      %v2674 = vld [vmem:[%s3 + $0x38] sm:$0xf]
      %v2675 = vld [vmem:[%s3 + $0x3c] sm:$0xf]
      %v2676 = vld [vmem:[%s3 + $0x40] sm:$0xf]
      %v2677 = vld [vmem:[%s3 + $0x44] sm:$0xf]
      %v2678 = vld [vmem:[%s3 + $0x48] sm:$0xf]
      %v2679 = vld [vmem:[%s3 + $0x4c] sm:$0xf]
      %v2680 = vld [vmem:[%s3 + $0x50] sm:$0xf]
      %v2681 = vld [vmem:[%s3 + $0x54] sm:$0xf]
      %v2682 = vld [vmem:[%s3 + $0x58] sm:$0xf]
      %v2683 = vld [vmem:[%s3 + $0x5c] sm:$0xf]
      %v2684 = vld [vmem:[%s3 + $0x60] sm:$0xf]
      %v2685 = vld [vmem:[%s3 + $0x64] sm:$0xf]
      %v2686 = vld [vmem:[%s3 + $0x68] sm:$0xf]
      %v2687 = vld [vmem:[%s3 + $0x6c] sm:$0xf]
      %v2688 = vld [vmem:[%s3 + $0x70] sm:$0xf]
      %v2689 = vld [vmem:[%s3 + $0x74] sm:$0xf]
      %v2690 = vld [vmem:[%s3 + $0x78] sm:$0xf]
      %v2691 = vld [vmem:[%s3 + $0x7c] sm:$0xf]
      %v2692 = vld [vmem:[%s3 + $0x80] sm:$0xf]
      %v2693 = vld [vmem:[%s3 + $0x84] sm:$0xf]
      %v2694 = vld [vmem:[%s3 + $0x88] sm:$0xf]
      %v2695 = vld [vmem:[%s3 + $0x8c] sm:$0xf]
      %v2696 = vld [vmem:[%s3 + $0x90] sm:$0xf]
      %v2697 = vld [vmem:[%s3 + $0x94] sm:$0xf]
      %v2698 = vld [vmem:[%s3 + $0x98] sm:$0xf]
      %v2699 = vld [vmem:[%s3 + $0x9c] sm:$0xf]
      %v2700 = vld [vmem:[%s3 + $0xa0] sm:$0xf]
      %v2701 = vld [vmem:[%s3 + $0xa4] sm:$0xf]
      %v2702 = vld [vmem:[%s3 + $0xa8] sm:$0xf]
      %v2703 = vld [vmem:[%s3 + $0xac] sm:$0xf]
      %v2704 = vld [vmem:[%s3 + $0xb0] sm:$0xf]
      %v2705 = vld [vmem:[%s3 + $0xb4] sm:$0xf]
      %v2706 = vld [vmem:[%s3 + $0xb8] sm:$0xf]
      %v2707 = vld [vmem:[%s3 + $0xbc] sm:$0xf]
      %v2708 = vld [vmem:[%s3 + $0xc0] sm:$0xf]
      %v2709 = vld [vmem:[%s3 + $0xc4] sm:$0xf]
      %v2710 = vld [vmem:[%s3 + $0xc8] sm:$0xf]
      %v2711 = vld [vmem:[%s3 + $0xcc] sm:$0xf]
      %v2712 = vld [vmem:[%s3 + $0xd0] sm:$0xf]
      %v2713 = vld [vmem:[%s3 + $0xd4] sm:$0xf]
      %v2714 = vld [vmem:[%s3 + $0xd8] sm:$0xf]
      %v2715 = vld [vmem:[%s3 + $0xdc] sm:$0xf]
      %v2716 = vld [vmem:[%s3 + $0xe0] sm:$0xf]
      %v2717 = vld [vmem:[%s3 + $0xe4] sm:$0xf]
      %v2718 = vld [vmem:[%s3 + $0xe8] sm:$0xf]
      %v2719 = vld [vmem:[%s3 + $0xec] sm:$0xf]
      %v2720 = vld [vmem:[%s3 + $0xf0] sm:$0xf]
      %v2721 = vld [vmem:[%s3 + $0xf4] sm:$0xf]
      %v2722 = vld [vmem:[%s3 + $0xf8] sm:$0xf]
      %v2723 = vld [vmem:[%s3 + $0xfc] sm:$0xf]
      %v2724 = vld [vmem:[%s3 + $0x100] sm:$0xf]
      %v2725 = vld [vmem:[%s3 + $0x104] sm:$0xf]
      %v2726 = vld [vmem:[%s3 + $0x108] sm:$0xf]
      %v2727 = vld [vmem:[%s3 + $0x10c] sm:$0xf]
      %v2728 = vld [vmem:[%s3 + $0x110] sm:$0xf]
      %v2729 = vld [vmem:[%s3 + $0x114] sm:$0xf]
      %v2730 = vld [vmem:[%s3 + $0x118] sm:$0xf]
      %v2731 = vld [vmem:[%s3 + $0x11c] sm:$0xf]
      %v2732 = vld [vmem:[%s3 + $0x120] sm:$0xf]
      %v2733 = vld [vmem:[%s3 + $0x124] sm:$0xf]
      %v2734 = vld [vmem:[%s3 + $0x128] sm:$0xf]
      %v2735 = vld [vmem:[%s3 + $0x12c] sm:$0xf]
      %v2736 = vld [vmem:[%s3 + $0x130] sm:$0xf]
      %v2737 = vld [vmem:[%s3 + $0x134] sm:$0xf]
      %v2738 = vld [vmem:[%s3 + $0x138] sm:$0xf]
      %v2739 = vld [vmem:[%s3 + $0x13c] sm:$0xf]
      %v2740 = vld [vmem:[%s3 + $0x140] sm:$0xf]
      %v2741 = vld [vmem:[%s3 + $0x144] sm:$0xf]
      %v2742 = vld [vmem:[%s3 + $0x148] sm:$0xf]
      %v2743 = vld [vmem:[%s3 + $0x14c] sm:$0xf]
      %v2744 = vld [vmem:[%s3 + $0x150] sm:$0xf]
      %v2745 = vld [vmem:[%s3 + $0x154] sm:$0xf]
      %v2746 = vld [vmem:[%s3 + $0x158] sm:$0xf]
      %v2747 = vld [vmem:[%s3 + $0x15c] sm:$0xf]
      %v2748 = vld [vmem:[%s3 + $0x160] sm:$0xf]
      %v2749 = vld [vmem:[%s3 + $0x164] sm:$0xf]
      %v2750 = vld [vmem:[%s3 + $0x168] sm:$0xf]
      %v2751 = vld [vmem:[%s3 + $0x16c] sm:$0xf]
      %v2752 = vld [vmem:[%s3 + $0x170] sm:$0xf]
      %v2753 = vld [vmem:[%s3 + $0x174] sm:$0xf]
      %v2754 = vld [vmem:[%s3 + $0x178] sm:$0xf]
      %v2755 = vld [vmem:[%s3 + $0x17c] sm:$0xf]
      %v2756 = vld [vmem:[%s3 + $0x180] sm:$0xf]
      %v2757 = vld [vmem:[%s3 + $0x184] sm:$0xf]
      %v2758 = vld [vmem:[%s3 + $0x188] sm:$0xf]
      %v2759 = vld [vmem:[%s3 + $0x18c] sm:$0xf]
      %v2760 = vld [vmem:[%s3 + $0x190] sm:$0xf]
      %v2761 = vld [vmem:[%s3 + $0x194] sm:$0xf]
      %v2762 = vld [vmem:[%s3 + $0x198] sm:$0xf]
      %v2763 = vld [vmem:[%s3 + $0x19c] sm:$0xf]
      %v2764 = vld [vmem:[%s3 + $0x1a0] sm:$0xf]
      %v2765 = vld [vmem:[%s3 + $0x1a4] sm:$0xf]
      %v2766 = vld [vmem:[%s3 + $0x1a8] sm:$0xf]
      %v2767 = vld [vmem:[%s3 + $0x1ac] sm:$0xf]
      %v2768 = vld [vmem:[%s3 + $0x1b0] sm:$0xf]
      %v2769 = vld [vmem:[%s3 + $0x1b4] sm:$0xf]
      %v2770 = vld [vmem:[%s3 + $0x1b8] sm:$0xf]
      %v2771 = vld [vmem:[%s3 + $0x1bc] sm:$0xf]
      %v2772 = vld [vmem:[%s3 + $0x1c0] sm:$0xf]
      %v2773 = vld [vmem:[%s3 + $0x1c4] sm:$0xf]
      %v2774 = vld [vmem:[%s3 + $0x1c8] sm:$0xf]
      %v2775 = vld [vmem:[%s3 + $0x1cc] sm:$0xf]
      %v2776 = vld [vmem:[%s3 + $0x1d0] sm:$0xf]
      %v2777 = vld [vmem:[%s3 + $0x1d4] sm:$0xf]
      %v2778 = vld [vmem:[%s3 + $0x1d8] sm:$0xf]
      %v2779 = vld [vmem:[%s3 + $0x1dc] sm:$0xf]
      %v2780 = vld [vmem:[%s3 + $0x1e0] sm:$0xf]
      %v2781 = vld [vmem:[%s3 + $0x1e4] sm:$0xf]
      %v2782 = vld [vmem:[%s3 + $0x1e8] sm:$0xf]
      %v2783 = vld [vmem:[%s3 + $0x1ec] sm:$0xf]
      %v2784 = vld [vmem:[%s3 + $0x1f0] sm:$0xf]
      %v2785 = vld [vmem:[%s3 + $0x1f4] sm:$0xf]
      %v2786 = vld [vmem:[%s3 + $0x1f8] sm:$0xf]
      %v2787 = vld [vmem:[%s3 + $0x1fc] sm:$0xf]
      %v2788 = vld [vmem:[%s3 + $0x200] sm:$0xf]
      %v2789 = vld [vmem:[%s3 + $0x204] sm:$0xf]
      %v2790 = vld [vmem:[%s3 + $0x208] sm:$0xf]
      %v2791 = vld [vmem:[%s3 + $0x20c] sm:$0xf]
      %v2792 = vld [vmem:[%s3 + $0x210] sm:$0xf]
      %v2793 = vld [vmem:[%s3 + $0x214] sm:$0xf]
      %v2794 = vld [vmem:[%s3 + $0x218] sm:$0xf]
      %v2795 = vld [vmem:[%s3 + $0x21c] sm:$0xf]
      %v2796 = vld [vmem:[%s3 + $0x220] sm:$0xf]
      %v2797 = vld [vmem:[%s3 + $0x224] sm:$0xf]
      %v2798 = vld [vmem:[%s3 + $0x228] sm:$0xf]
      %v2799 = vld [vmem:[%s3 + $0x22c] sm:$0xf]
      %v2800 = vld [vmem:[%s3 + $0x230] sm:$0xf]
      %v2801 = vld [vmem:[%s3 + $0x234] sm:$0xf]
      %v2802 = vld [vmem:[%s3 + $0x238] sm:$0xf]
      %v2803 = vld [vmem:[%s3 + $0x23c] sm:$0xf]
      %v2948 = vunpack.c.l.b16 %v2660
      %v2949 = vunpack.c.l.b16 %v2661
      %v2950 = vunpack.c.l.b16 %v2662
      %v2951 = vunpack.c.l.b16 %v2663
      %v2952 = vunpack.c.l.b16 %v2664
      %v2953 = vunpack.c.l.b16 %v2665
      %v2954 = vunpack.c.l.b16 %v2666
      %v2955 = vunpack.c.l.b16 %v2667
      %v2956 = vunpack.c.l.b16 %v2668
      %v2957 = vunpack.c.l.b16 %v2669
      %v2958 = vunpack.c.l.b16 %v2670
      %v2959 = vunpack.c.l.b16 %v2671
      %v2960 = vunpack.c.l.b16 %v2672
      %v2961 = vunpack.c.l.b16 %v2673
      %v2962 = vunpack.c.l.b16 %v2674
      %v2963 = vunpack.c.l.b16 %v2675
      %v2964 = vunpack.c.l.b16 %v2676
      %v2965 = vunpack.c.l.b16 %v2677
      %v2966 = vunpack.c.l.b16 %v2678
      %v2967 = vunpack.c.l.b16 %v2679
      %v2968 = vunpack.c.l.b16 %v2680
      %v2969 = vunpack.c.l.b16 %v2681
      %v2970 = vunpack.c.l.b16 %v2682
      %v2971 = vunpack.c.l.b16 %v2683
      %v2972 = vunpack.c.l.b16 %v2684
      %v2973 = vunpack.c.l.b16 %v2685
      %v2974 = vunpack.c.l.b16 %v2686
      %v2975 = vunpack.c.l.b16 %v2687
      %v2976 = vunpack.c.l.b16 %v2688
      %v2977 = vunpack.c.l.b16 %v2689
      %v2978 = vunpack.c.l.b16 %v2690
      %v2979 = vunpack.c.l.b16 %v2691
      %v2980 = vunpack.c.l.b16 %v2692
      %v2981 = vunpack.c.l.b16 %v2693
      %v2982 = vunpack.c.l.b16 %v2694
      %v2983 = vunpack.c.l.b16 %v2695
      %v2984 = vunpack.c.l.b16 %v2696
      %v2985 = vunpack.c.l.b16 %v2697
      %v2986 = vunpack.c.l.b16 %v2698
      %v2987 = vunpack.c.l.b16 %v2699
      %v2988 = vunpack.c.l.b16 %v2700
      %v2989 = vunpack.c.l.b16 %v2701
      %v2990 = vunpack.c.l.b16 %v2702
      %v2991 = vunpack.c.l.b16 %v2703
      %v2992 = vunpack.c.l.b16 %v2704
      %v2993 = vunpack.c.l.b16 %v2705
      %v2994 = vunpack.c.l.b16 %v2706
      %v2995 = vunpack.c.l.b16 %v2707
      %v2996 = vunpack.c.l.b16 %v2708
      %v2997 = vunpack.c.l.b16 %v2709
      %v2998 = vunpack.c.l.b16 %v2710
      %v2999 = vunpack.c.l.b16 %v2711
      %v3000 = vunpack.c.l.b16 %v2712
      %v3001 = vunpack.c.l.b16 %v2713
      %v3002 = vunpack.c.l.b16 %v2714
      %v3003 = vunpack.c.l.b16 %v2715
      %v3004 = vunpack.c.l.b16 %v2716
      %v3005 = vunpack.c.l.b16 %v2717
      %v3006 = vunpack.c.l.b16 %v2718
      %v3007 = vunpack.c.l.b16 %v2719
      %v3008 = vunpack.c.l.b16 %v2720
      %v3009 = vunpack.c.l.b16 %v2721
      %v3010 = vunpack.c.l.b16 %v2722
      %v3011 = vunpack.c.l.b16 %v2723
      %v3012 = vunpack.c.l.b16 %v2724
      %v3013 = vunpack.c.l.b16 %v2725
      %v3014 = vunpack.c.l.b16 %v2726
      %v3015 = vunpack.c.l.b16 %v2727
      %v3016 = vunpack.c.l.b16 %v2728
      %v3017 = vunpack.c.l.b16 %v2729
      %v3018 = vunpack.c.l.b16 %v2730
      %v3019 = vunpack.c.l.b16 %v2731
      %v3020 = vunpack.c.l.b16 %v2732
      %v3021 = vunpack.c.l.b16 %v2733
      %v3022 = vunpack.c.l.b16 %v2734
      %v3023 = vunpack.c.l.b16 %v2735
      %v3024 = vunpack.c.l.b16 %v2736
      %v3025 = vunpack.c.l.b16 %v2737
      %v3026 = vunpack.c.l.b16 %v2738
      %v3027 = vunpack.c.l.b16 %v2739
      %v3028 = vunpack.c.l.b16 %v2740
      %v3029 = vunpack.c.l.b16 %v2741
      %v3030 = vunpack.c.l.b16 %v2742
      %v3031 = vunpack.c.l.b16 %v2743
      %v3032 = vunpack.c.l.b16 %v2744
      %v3033 = vunpack.c.l.b16 %v2745
      %v3034 = vunpack.c.l.b16 %v2746
      %v3035 = vunpack.c.l.b16 %v2747
      %v3036 = vunpack.c.l.b16 %v2748
      %v3037 = vunpack.c.l.b16 %v2749
      %v3038 = vunpack.c.l.b16 %v2750
      %v3039 = vunpack.c.l.b16 %v2751
      %v3040 = vunpack.c.l.b16 %v2752
      %v3041 = vunpack.c.l.b16 %v2753
      %v3042 = vunpack.c.l.b16 %v2754
      %v3043 = vunpack.c.l.b16 %v2755
      %v3044 = vunpack.c.l.b16 %v2756
      %v3045 = vunpack.c.l.b16 %v2757
      %v3046 = vunpack.c.l.b16 %v2758
      %v3047 = vunpack.c.l.b16 %v2759
      %v3048 = vunpack.c.l.b16 %v2760
      %v3049 = vunpack.c.l.b16 %v2761
      %v3050 = vunpack.c.l.b16 %v2762
      %v3051 = vunpack.c.l.b16 %v2763
      %v3052 = vunpack.c.l.b16 %v2764
      %v3053 = vunpack.c.l.b16 %v2765
      %v3054 = vunpack.c.l.b16 %v2766
      %v3055 = vunpack.c.l.b16 %v2767
      %v3056 = vunpack.c.l.b16 %v2768
      %v3057 = vunpack.c.l.b16 %v2769
      %v3058 = vunpack.c.l.b16 %v2770
      %v3059 = vunpack.c.l.b16 %v2771
      %v3060 = vunpack.c.l.b16 %v2772
      %v3061 = vunpack.c.l.b16 %v2773
      %v3062 = vunpack.c.l.b16 %v2774
      %v3063 = vunpack.c.l.b16 %v2775
      %v3064 = vunpack.c.l.b16 %v2776
      %v3065 = vunpack.c.l.b16 %v2777
      %v3066 = vunpack.c.l.b16 %v2778
      %v3067 = vunpack.c.l.b16 %v2779
      %v3068 = vunpack.c.l.b16 %v2780
      %v3069 = vunpack.c.l.b16 %v2781
      %v3070 = vunpack.c.l.b16 %v2782
      %v3071 = vunpack.c.l.b16 %v2783
      %v3072 = vunpack.c.l.b16 %v2784
      %v3073 = vunpack.c.l.b16 %v2785
      %v3074 = vunpack.c.l.b16 %v2786
      %v3075 = vunpack.c.l.b16 %v2787
      %v3076 = vunpack.c.l.b16 %v2788
      %v3077 = vunpack.c.l.b16 %v2789
      %v3078 = vunpack.c.l.b16 %v2790
      %v3079 = vunpack.c.l.b16 %v2791
      %v3080 = vunpack.c.l.b16 %v2792
      %v3081 = vunpack.c.l.b16 %v2793
      %v3082 = vunpack.c.l.b16 %v2794
      %v3083 = vunpack.c.l.b16 %v2795
      %v3084 = vunpack.c.l.b16 %v2796
      %v3085 = vunpack.c.l.b16 %v2797
      %v3086 = vunpack.c.l.b16 %v2798
      %v3087 = vunpack.c.l.b16 %v2799
      %v3088 = vunpack.c.l.b16 %v2800
      %v3089 = vunpack.c.l.b16 %v2801
      %v3090 = vunpack.c.l.b16 %v2802
      %v3091 = vunpack.c.l.b16 %v2803
      %v3092 = vpack.c.b16 %v2949, %v2948
      %v3093 = vpack.c.b16 %v2951, %v2950
      %v3094 = vpack.c.b16 %v2953, %v2952
      %v3095 = vpack.c.b16 %v2955, %v2954
      %v3096 = vpack.c.b16 %v2957, %v2956
      %v3097 = vpack.c.b16 %v2959, %v2958
      %v3098 = vpack.c.b16 %v2961, %v2960
      %v3099 = vpack.c.b16 %v2963, %v2962
      %v3100 = vpack.c.b16 %v2965, %v2964
      %v3101 = vpack.c.b16 %v2967, %v2966
      %v3102 = vpack.c.b16 %v2969, %v2968
      %v3103 = vpack.c.b16 %v2971, %v2970
      %v3104 = vpack.c.b16 %v2973, %v2972
      %v3105 = vpack.c.b16 %v2975, %v2974
      %v3106 = vpack.c.b16 %v2977, %v2976
      %v3107 = vpack.c.b16 %v2979, %v2978
      %v3108 = vpack.c.b16 %v2981, %v2980
      %v3109 = vpack.c.b16 %v2983, %v2982
      %v3110 = vpack.c.b16 %v2985, %v2984
      %v3111 = vpack.c.b16 %v2987, %v2986
      %v3112 = vpack.c.b16 %v2989, %v2988
      %v3113 = vpack.c.b16 %v2991, %v2990
      %v3114 = vpack.c.b16 %v2993, %v2992
      %v3115 = vpack.c.b16 %v2995, %v2994
      %v3116 = vpack.c.b16 %v2997, %v2996
      %v3117 = vpack.c.b16 %v2999, %v2998
      %v3118 = vpack.c.b16 %v3001, %v3000
      %v3119 = vpack.c.b16 %v3003, %v3002
      %v3120 = vpack.c.b16 %v3005, %v3004
      %v3121 = vpack.c.b16 %v3007, %v3006
      %v3122 = vpack.c.b16 %v3009, %v3008
      %v3123 = vpack.c.b16 %v3011, %v3010
      %v3124 = vpack.c.b16 %v3013, %v3012
      %v3125 = vpack.c.b16 %v3015, %v3014
      %v3126 = vpack.c.b16 %v3017, %v3016
      %v3127 = vpack.c.b16 %v3019, %v3018
      %v3128 = vpack.c.b16 %v3021, %v3020
      %v3129 = vpack.c.b16 %v3023, %v3022
      %v3130 = vpack.c.b16 %v3025, %v3024
      %v3131 = vpack.c.b16 %v3027, %v3026
      %v3132 = vpack.c.b16 %v3029, %v3028
      %v3133 = vpack.c.b16 %v3031, %v3030
      %v3134 = vpack.c.b16 %v3033, %v3032
      %v3135 = vpack.c.b16 %v3035, %v3034
      %v3136 = vpack.c.b16 %v3037, %v3036
      %v3137 = vpack.c.b16 %v3039, %v3038
      %v3138 = vpack.c.b16 %v3041, %v3040
      %v3139 = vpack.c.b16 %v3043, %v3042
      %v3140 = vpack.c.b16 %v3045, %v3044
      %v3141 = vpack.c.b16 %v3047, %v3046
      %v3142 = vpack.c.b16 %v3049, %v3048
      %v3143 = vpack.c.b16 %v3051, %v3050
      %v3144 = vpack.c.b16 %v3053, %v3052
      %v3145 = vpack.c.b16 %v3055, %v3054
      %v3146 = vpack.c.b16 %v3057, %v3056
      %v3147 = vpack.c.b16 %v3059, %v3058
      %v3148 = vpack.c.b16 %v3061, %v3060
      %v3149 = vpack.c.b16 %v3063, %v3062
      %v3150 = vpack.c.b16 %v3065, %v3064
      %v3151 = vpack.c.b16 %v3067, %v3066
      %v3152 = vpack.c.b16 %v3069, %v3068
      %v3153 = vpack.c.b16 %v3071, %v3070
      %v3154 = vpack.c.b16 %v3073, %v3072
      %v3155 = vpack.c.b16 %v3075, %v3074
      %v3156 = vpack.c.b16 %v3077, %v3076
      %v3157 = vpack.c.b16 %v3079, %v3078
      %v3158 = vpack.c.b16 %v3081, %v3080
      %v3159 = vpack.c.b16 %v3083, %v3082
      %v3160 = vpack.c.b16 %v3085, %v3084
      %v3161 = vpack.c.b16 %v3087, %v3086
      %v3162 = vpack.c.b16 %v3089, %v3088
      %v3163 = vpack.c.b16 %v3091, %v3090
      %3236 = vmatprep.subr.bf16.mxu0 0
      %3237 = vmatpush1.bf16.msra.mxu0 %v3099
      %3238 = vmatprep.subr.bf16.mxu0 0
      %3239 = vmatpush1.bf16.msra.mxu0 %v3098
      %3240 = vmatprep.subr.bf16.mxu0 0
      %3241 = vmatpush1.bf16.msra.mxu0 %v3097
      %3242 = vmatprep.subr.bf16.mxu0 0
      %3243 = vmatpush1.bf16.msra.mxu0 %v3096
      %3244 = vmatprep.subr.bf16.mxu0 0
      %3245 = vmatpush1.bf16.msra.mxu0 %v3095
      %3246 = vmatprep.subr.bf16.mxu0 0
      %3247 = vmatpush1.bf16.msra.mxu0 %v3094
      %3248 = vmatprep.subr.bf16.mxu0 0
      %3249 = vmatpush1.bf16.msra.mxu0 %v3093
      %3250 = vmatprep.subr.bf16.mxu0 0
      %3251 = vmatpush1.bf16.msra.mxu0 %v3092
      %3252 = vmatprep.subr.bf16.mxu0 0
      %3253 = vmatpush2.bf16.msra.mxu0 %v3107
      %3254 = vmatprep.subr.bf16.mxu0 0
      %3255 = vmatpush2.bf16.msra.mxu0 %v3106
      %3256 = vmatprep.subr.bf16.mxu0 0
      %3257 = vmatpush2.bf16.msra.mxu0 %v3105
      %3258 = vmatprep.subr.bf16.mxu0 0
      %3259 = vmatpush2.bf16.msra.mxu0 %v3104
      %3260 = vmatprep.subr.bf16.mxu0 0
      %3261 = vmatpush2.bf16.msra.mxu0 %v3103
      %3262 = vmatprep.subr.bf16.mxu0 0
      %3263 = vmatpush2.bf16.msra.mxu0 %v3102
      %3264 = vmatprep.subr.bf16.mxu0 0
      %3265 = vmatpush2.bf16.msra.mxu0 %v3101
      %3266 = vmatprep.subr.bf16.mxu0 0
      %3267 = vmatpush2.bf16.msra.mxu0 %v3100
      %3268 = vmatprep.mubr.bf16.mxu0 %v1187
      %3269 = vmatmul.mubr.bf16.gmra.mxu0 %v947
      %v3270 = vpop.f32.mrf.mxu0
      %v3271 = vadd.f32 0.0, %v3270
      %v3272 = vpop.f32.mrf.mxu0
      %v3273 = vpop.f32.mrf.mxu0
      %v3274 = vadd.f32 0.0, %v3273
      %v3275 = vpop.f32.mrf.mxu0
      %3276 = vmatprep.mubr.bf16.mxu0 %v1188
      %3277 = vmatmul.mubr.bf16.gmra.mxu0 %v948
      %v3278 = vpop.f32.mrf.mxu0
      %v3279 = vadd.f32 0.0, %v3278
      %v3280 = vpop.f32.mrf.mxu0
      %v3281 = vpop.f32.mrf.mxu0
      %v3282 = vadd.f32 0.0, %v3281
      %v3283 = vpop.f32.mrf.mxu0
      %3284 = vmatprep.mubr.bf16.mxu0 %v1189
      %3285 = vmatmul.mubr.bf16.gmra.mxu0 %v949
      %v3286 = vpop.f32.mrf.mxu0
      %v3287 = vadd.f32 0.0, %v3286
      %v3288 = vpop.f32.mrf.mxu0
      %v3289 = vpop.f32.mrf.mxu0
      %v3290 = vadd.f32 0.0, %v3289
      %v3291 = vpop.f32.mrf.mxu0
      %3292 = vmatprep.mubr.bf16.mxu0 %v1190
      %3293 = vmatmul.mubr.bf16.gmra.mxu0 %v950
      %v3294 = vpop.f32.mrf.mxu0
      %v3295 = vadd.f32 0.0, %v3294
      %v3296 = vpop.f32.mrf.mxu0
      %v3297 = vpop.f32.mrf.mxu0
      %v3298 = vadd.f32 0.0, %v3297
      %v3299 = vpop.f32.mrf.mxu0
      %3300 = vmatprep.mubr.bf16.mxu0 %v1191
      %3301 = vmatmul.mubr.bf16.gmra.mxu0 %v951
      %v3302 = vpop.f32.mrf.mxu0
      %v3303 = vadd.f32 0.0, %v3302
      %v3304 = vpop.f32.mrf.mxu0
      %v3305 = vpop.f32.mrf.mxu0
      %v3306 = vadd.f32 0.0, %v3305
      %v3307 = vpop.f32.mrf.mxu0
      %3308 = vmatprep.mubr.bf16.mxu0 %v1192
      %3309 = vmatmul.mubr.bf16.gmra.mxu0 %v952
      %v3310 = vpop.f32.mrf.mxu0
      %v3311 = vadd.f32 0.0, %v3310
      %v3312 = vpop.f32.mrf.mxu0
      %v3313 = vpop.f32.mrf.mxu0
      %v3314 = vadd.f32 0.0, %v3313
      %v3315 = vpop.f32.mrf.mxu0
      %3316 = vmatprep.mubr.bf16.mxu0 %v1193
      %3317 = vmatmul.mubr.bf16.gmra.mxu0 %v953
      %v3318 = vpop.f32.mrf.mxu0
      %v3319 = vadd.f32 0.0, %v3318
      %v3320 = vpop.f32.mrf.mxu0
      %v3321 = vpop.f32.mrf.mxu0
      %v3322 = vadd.f32 0.0, %v3321
      %v3323 = vpop.f32.mrf.mxu0
      %3324 = vmatprep.mubr.bf16.mxu0 %v1194
      %3325 = vmatmul.mubr.bf16.gmra.mxu0 %v954
      %v3326 = vpop.f32.mrf.mxu0
      %v3327 = vadd.f32 0.0, %v3326
      %v3328 = vpop.f32.mrf.mxu0
      %v3329 = vpop.f32.mrf.mxu0
      %v3330 = vadd.f32 0.0, %v3329
      %v3331 = vpop.f32.mrf.mxu0
      %3332 = vmatprep.mubr.bf16.mxu0 %v1195
      %3333 = vmatmul.mubr.bf16.gmra.mxu0 %v955
      %v3334 = vpop.f32.mrf.mxu0
      %v3335 = vadd.f32 0.0, %v3334
      %v3336 = vpop.f32.mrf.mxu0
      %v3337 = vpop.f32.mrf.mxu0
      %v3338 = vadd.f32 0.0, %v3337
      %v3339 = vpop.f32.mrf.mxu0
      %3340 = vmatprep.mubr.bf16.mxu0 %v1196
      %3341 = vmatmul.mubr.bf16.gmra.mxu0 %v956
      %v3342 = vpop.f32.mrf.mxu0
      %v3343 = vadd.f32 0.0, %v3342
      %v3344 = vpop.f32.mrf.mxu0
      %v3345 = vpop.f32.mrf.mxu0
      %v3346 = vadd.f32 0.0, %v3345
      %v3347 = vpop.f32.mrf.mxu0
      %3348 = vmatprep.mubr.bf16.mxu0 %v1197
      %3349 = vmatmul.mubr.bf16.gmra.mxu0 %v957
      %v3350 = vpop.f32.mrf.mxu0
      %v3351 = vadd.f32 0.0, %v3350
      %v3352 = vpop.f32.mrf.mxu0
      %v3353 = vpop.f32.mrf.mxu0
      %v3354 = vadd.f32 0.0, %v3353
      %v3355 = vpop.f32.mrf.mxu0
      %3356 = vmatprep.mubr.bf16.mxu0 %v1198
      %3357 = vmatmul.mubr.bf16.gmra.mxu0 %v958
      %v3358 = vpop.f32.mrf.mxu0
      %v3359 = vadd.f32 0.0, %v3358
      %v3360 = vpop.f32.mrf.mxu0
      %v3361 = vpop.f32.mrf.mxu0
      %v3362 = vadd.f32 0.0, %v3361
      %v3363 = vpop.f32.mrf.mxu0
      %3364 = vmatprep.mubr.bf16.mxu0 %v1199
      %3365 = vmatmul.mubr.bf16.gmra.mxu0 %v959
      %v3366 = vpop.f32.mrf.mxu0
      %v3367 = vadd.f32 0.0, %v3366
      %v3368 = vpop.f32.mrf.mxu0
      %v3369 = vpop.f32.mrf.mxu0
      %v3370 = vadd.f32 0.0, %v3369
      %v3371 = vpop.f32.mrf.mxu0
      %3372 = vmatprep.mubr.bf16.mxu0 %v1200
      %3373 = vmatmul.mubr.bf16.gmra.mxu0 %v960
      %v3374 = vpop.f32.mrf.mxu0
      %v3375 = vadd.f32 0.0, %v3374
      %v3376 = vpop.f32.mrf.mxu0
      %v3377 = vpop.f32.mrf.mxu0
      %v3378 = vadd.f32 0.0, %v3377
      %v3379 = vpop.f32.mrf.mxu0
      %3380 = vmatprep.mubr.bf16.mxu0 %v1201
      %3381 = vmatmul.mubr.bf16.gmra.mxu0 %v961
      %v3382 = vpop.f32.mrf.mxu0
      %v3383 = vadd.f32 0.0, %v3382
      %v3384 = vpop.f32.mrf.mxu0
      %v3385 = vpop.f32.mrf.mxu0
      %v3386 = vadd.f32 0.0, %v3385
      %v3387 = vpop.f32.mrf.mxu0
      %3388 = vmatprep.mubr.bf16.mxu0 %v1202
      %3389 = vmatmul.mubr.bf16.gmra.mxu0 %v962
      %v3390 = vpop.f32.mrf.mxu0
      %v3391 = vadd.f32 0.0, %v3390
      %v3392 = vpop.f32.mrf.mxu0
      %v3393 = vpop.f32.mrf.mxu0
      %v3394 = vadd.f32 0.0, %v3393
      %v3395 = vpop.f32.mrf.mxu0
      %3396 = vdwg.mxu0
      %3397 = vmatprep.subr.bf16.mxu0 0
      %3398 = vmatpush1.bf16.msra.mxu0 %v3115
      %3399 = vmatprep.subr.bf16.mxu0 0
      %3400 = vmatpush1.bf16.msra.mxu0 %v3114
      %3401 = vmatprep.subr.bf16.mxu0 0
      %3402 = vmatpush1.bf16.msra.mxu0 %v3113
      %3403 = vmatprep.subr.bf16.mxu0 0
      %3404 = vmatpush1.bf16.msra.mxu0 %v3112
      %3405 = vmatprep.subr.bf16.mxu0 0
      %3406 = vmatpush1.bf16.msra.mxu0 %v3111
      %3407 = vmatprep.subr.bf16.mxu0 0
      %3408 = vmatpush1.bf16.msra.mxu0 %v3110
      %3409 = vmatprep.subr.bf16.mxu0 0
      %3410 = vmatpush1.bf16.msra.mxu0 %v3109
      %3411 = vmatprep.subr.bf16.mxu0 0
      %3412 = vmatpush1.bf16.msra.mxu0 %v3108
      %3413 = vmatprep.subr.bf16.mxu0 0
      %3414 = vmatpush2.bf16.msra.mxu0 %v3123
      %3415 = vmatprep.subr.bf16.mxu0 0
      %3416 = vmatpush2.bf16.msra.mxu0 %v3122
      %3417 = vmatprep.subr.bf16.mxu0 0
      %3418 = vmatpush2.bf16.msra.mxu0 %v3121
      %3419 = vmatprep.subr.bf16.mxu0 0
      %3420 = vmatpush2.bf16.msra.mxu0 %v3120
      %3421 = vmatprep.subr.bf16.mxu0 0
      %3422 = vmatpush2.bf16.msra.mxu0 %v3119
      %3423 = vmatprep.subr.bf16.mxu0 0
      %3424 = vmatpush2.bf16.msra.mxu0 %v3118
      %3425 = vmatprep.subr.bf16.mxu0 0
      %3426 = vmatpush2.bf16.msra.mxu0 %v3117
      %3427 = vmatprep.subr.bf16.mxu0 0
      %3428 = vmatpush2.bf16.msra.mxu0 %v3116
      %3429 = vmatprep.mubr.bf16.mxu0 %v1796
      %3430 = vmatmul.mubr.bf16.gmra.mxu0 %v1524
      %v3431 = vpop.f32.mrf.mxu0
      %v3432 = vadd.f32 %v3271, %v3431
      %v3433 = vpop.f32.mrf.mxu0
      %v3434 = vpop.f32.mrf.mxu0
      %v3435 = vadd.f32 %v3274, %v3434
      %v3436 = vpop.f32.mrf.mxu0
      %3437 = vmatprep.mubr.bf16.mxu0 %v1797
      %3438 = vmatmul.mubr.bf16.gmra.mxu0 %v1525
      %v3439 = vpop.f32.mrf.mxu0
      %v3440 = vadd.f32 %v3279, %v3439
      %v3441 = vpop.f32.mrf.mxu0
      %v3442 = vpop.f32.mrf.mxu0
      %v3443 = vadd.f32 %v3282, %v3442
      %v3444 = vpop.f32.mrf.mxu0
      %3445 = vmatprep.mubr.bf16.mxu0 %v1798
      %3446 = vmatmul.mubr.bf16.gmra.mxu0 %v1526
      %v3447 = vpop.f32.mrf.mxu0
      %v3448 = vadd.f32 %v3287, %v3447
      %v3449 = vpop.f32.mrf.mxu0
      %v3450 = vpop.f32.mrf.mxu0
      %v3451 = vadd.f32 %v3290, %v3450
      %v3452 = vpop.f32.mrf.mxu0
      %3453 = vmatprep.mubr.bf16.mxu0 %v1799
      %3454 = vmatmul.mubr.bf16.gmra.mxu0 %v1527
      %v3455 = vpop.f32.mrf.mxu0
      %v3456 = vadd.f32 %v3295, %v3455
      %v3457 = vpop.f32.mrf.mxu0
      %v3458 = vpop.f32.mrf.mxu0
      %v3459 = vadd.f32 %v3298, %v3458
      %v3460 = vpop.f32.mrf.mxu0
      %3461 = vmatprep.mubr.bf16.mxu0 %v1800
      %3462 = vmatmul.mubr.bf16.gmra.mxu0 %v1528
      %v3463 = vpop.f32.mrf.mxu0
      %v3464 = vadd.f32 %v3303, %v3463
      %v3465 = vpop.f32.mrf.mxu0
      %v3466 = vpop.f32.mrf.mxu0
      %v3467 = vadd.f32 %v3306, %v3466
      %v3468 = vpop.f32.mrf.mxu0
      %3469 = vmatprep.mubr.bf16.mxu0 %v1801
      %3470 = vmatmul.mubr.bf16.gmra.mxu0 %v1529
      %v3471 = vpop.f32.mrf.mxu0
      %v3472 = vadd.f32 %v3311, %v3471
      %v3473 = vpop.f32.mrf.mxu0
      %v3474 = vpop.f32.mrf.mxu0
      %v3475 = vadd.f32 %v3314, %v3474
      %v3476 = vpop.f32.mrf.mxu0
      %3477 = vmatprep.mubr.bf16.mxu0 %v1802
      %3478 = vmatmul.mubr.bf16.gmra.mxu0 %v1530
      %v3479 = vpop.f32.mrf.mxu0
      %v3480 = vadd.f32 %v3319, %v3479
      %v3481 = vpop.f32.mrf.mxu0
      %v3482 = vpop.f32.mrf.mxu0
      %v3483 = vadd.f32 %v3322, %v3482
      %v3484 = vpop.f32.mrf.mxu0
      %3485 = vmatprep.mubr.bf16.mxu0 %v1803
      %3486 = vmatmul.mubr.bf16.gmra.mxu0 %v1531
      %v3487 = vpop.f32.mrf.mxu0
      %v3488 = vadd.f32 %v3327, %v3487
      %v3489 = vpop.f32.mrf.mxu0
      %v3490 = vpop.f32.mrf.mxu0
      %v3491 = vadd.f32 %v3330, %v3490
      %v3492 = vpop.f32.mrf.mxu0
      %3493 = vmatprep.mubr.bf16.mxu0 %v1804
      %3494 = vmatmul.mubr.bf16.gmra.mxu0 %v1532
      %v3495 = vpop.f32.mrf.mxu0
      %v3496 = vadd.f32 %v3335, %v3495
      %v3497 = vpop.f32.mrf.mxu0
      %v3498 = vpop.f32.mrf.mxu0
      %v3499 = vadd.f32 %v3338, %v3498
      %v3500 = vpop.f32.mrf.mxu0
      %3501 = vmatprep.mubr.bf16.mxu0 %v1805
      %3502 = vmatmul.mubr.bf16.gmra.mxu0 %v1533
      %v3503 = vpop.f32.mrf.mxu0
      %v3504 = vadd.f32 %v3343, %v3503
      %v3505 = vpop.f32.mrf.mxu0
      %v3506 = vpop.f32.mrf.mxu0
      %v3507 = vadd.f32 %v3346, %v3506
      %v3508 = vpop.f32.mrf.mxu0
      %3509 = vmatprep.mubr.bf16.mxu0 %v1806
      %3510 = vmatmul.mubr.bf16.gmra.mxu0 %v1534
      %v3511 = vpop.f32.mrf.mxu0
      %v3512 = vadd.f32 %v3351, %v3511
      %v3513 = vpop.f32.mrf.mxu0
      %v3514 = vpop.f32.mrf.mxu0
      %v3515 = vadd.f32 %v3354, %v3514
      %v3516 = vpop.f32.mrf.mxu0
      %3517 = vmatprep.mubr.bf16.mxu0 %v1807
      %3518 = vmatmul.mubr.bf16.gmra.mxu0 %v1535
      %v3519 = vpop.f32.mrf.mxu0
      %v3520 = vadd.f32 %v3359, %v3519
      %v3521 = vpop.f32.mrf.mxu0
      %v3522 = vpop.f32.mrf.mxu0
      %v3523 = vadd.f32 %v3362, %v3522
      %v3524 = vpop.f32.mrf.mxu0
      %3525 = vmatprep.mubr.bf16.mxu0 %v1808
      %3526 = vmatmul.mubr.bf16.gmra.mxu0 %v1536
      %v3527 = vpop.f32.mrf.mxu0
      %v3528 = vadd.f32 %v3367, %v3527
      %v3529 = vpop.f32.mrf.mxu0
      %v3530 = vpop.f32.mrf.mxu0
      %v3531 = vadd.f32 %v3370, %v3530
      %v3532 = vpop.f32.mrf.mxu0
      %3533 = vmatprep.mubr.bf16.mxu0 %v1809
      %3534 = vmatmul.mubr.bf16.gmra.mxu0 %v1537
      %v3535 = vpop.f32.mrf.mxu0
      %v3536 = vadd.f32 %v3375, %v3535
      %v3537 = vpop.f32.mrf.mxu0
      %v3538 = vpop.f32.mrf.mxu0
      %v3539 = vadd.f32 %v3378, %v3538
      %v3540 = vpop.f32.mrf.mxu0
      %3541 = vmatprep.mubr.bf16.mxu0 %v1810
      %3542 = vmatmul.mubr.bf16.gmra.mxu0 %v1538
      %v3543 = vpop.f32.mrf.mxu0
      %v3544 = vadd.f32 %v3383, %v3543
      %v3545 = vpop.f32.mrf.mxu0
      %v3546 = vpop.f32.mrf.mxu0
      %v3547 = vadd.f32 %v3386, %v3546
      %v3548 = vpop.f32.mrf.mxu0
      %3549 = vmatprep.mubr.bf16.mxu0 %v1811
      %3550 = vmatmul.mubr.bf16.gmra.mxu0 %v1539
      %v3551 = vpop.f32.mrf.mxu0
      %v3552 = vadd.f32 %v3391, %v3551
      %v3553 = vpop.f32.mrf.mxu0
      %v3554 = vpop.f32.mrf.mxu0
      %v3555 = vadd.f32 %v3394, %v3554
      %v3556 = vpop.f32.mrf.mxu0
      %3557 = vdwg.mxu0
      %3558 = vmatprep.subr.bf16.mxu0 0
      %3559 = vmatpush1.bf16.msra.mxu0 %v3131
      %3560 = vmatprep.subr.bf16.mxu0 0
      %3561 = vmatpush1.bf16.msra.mxu0 %v3130
      %3562 = vmatprep.subr.bf16.mxu0 0
      %3563 = vmatpush1.bf16.msra.mxu0 %v3129
      %3564 = vmatprep.subr.bf16.mxu0 0
      %3565 = vmatpush1.bf16.msra.mxu0 %v3128
      %3566 = vmatprep.subr.bf16.mxu0 0
      %3567 = vmatpush1.bf16.msra.mxu0 %v3127
      %3568 = vmatprep.subr.bf16.mxu0 0
      %3569 = vmatpush1.bf16.msra.mxu0 %v3126
      %3570 = vmatprep.subr.bf16.mxu0 0
      %3571 = vmatpush1.bf16.msra.mxu0 %v3125
      %3572 = vmatprep.subr.bf16.mxu0 0
      %3573 = vmatpush1.bf16.msra.mxu0 %v3124
      %3574 = vmatprep.subr.bf16.mxu0 0
      %3575 = vmatpush2.bf16.msra.mxu0 %v3139
      %3576 = vmatprep.subr.bf16.mxu0 0
      %3577 = vmatpush2.bf16.msra.mxu0 %v3138
      %3578 = vmatprep.subr.bf16.mxu0 0
      %3579 = vmatpush2.bf16.msra.mxu0 %v3137
      %3580 = vmatprep.subr.bf16.mxu0 0
      %3581 = vmatpush2.bf16.msra.mxu0 %v3136
      %3582 = vmatprep.subr.bf16.mxu0 0
      %3583 = vmatpush2.bf16.msra.mxu0 %v3135
      %3584 = vmatprep.subr.bf16.mxu0 0
      %3585 = vmatpush2.bf16.msra.mxu0 %v3134
      %3586 = vmatprep.subr.bf16.mxu0 0
      %3587 = vmatpush2.bf16.msra.mxu0 %v3133
      %3588 = vmatprep.subr.bf16.mxu0 0
      %3589 = vmatpush2.bf16.msra.mxu0 %v3132
      %3590 = vmatprep.mubr.bf16.mxu0 %v1988
      %3591 = vmatmul.mubr.bf16.gmra.mxu0 %v1812
      %v3592 = vpop.f32.mrf.mxu0
      %v3593 = vadd.f32 %v3432, %v3592
      %v3594 = vpop.f32.mrf.mxu0
      %v3595 = vpop.f32.mrf.mxu0
      %v3596 = vadd.f32 %v3435, %v3595
      %v3597 = vpop.f32.mrf.mxu0
      %3598 = vmatprep.mubr.bf16.mxu0 %v1989
      %3599 = vmatmul.mubr.bf16.gmra.mxu0 %v1813
      %v3600 = vpop.f32.mrf.mxu0
      %v3601 = vadd.f32 %v3440, %v3600
      %v3602 = vpop.f32.mrf.mxu0
      %v3603 = vpop.f32.mrf.mxu0
      %v3604 = vadd.f32 %v3443, %v3603
      %v3605 = vpop.f32.mrf.mxu0
      %3606 = vmatprep.mubr.bf16.mxu0 %v1990
      %3607 = vmatmul.mubr.bf16.gmra.mxu0 %v1814
      %v3608 = vpop.f32.mrf.mxu0
      %v3609 = vadd.f32 %v3448, %v3608
      %v3610 = vpop.f32.mrf.mxu0
      %v3611 = vpop.f32.mrf.mxu0
      %v3612 = vadd.f32 %v3451, %v3611
      %v3613 = vpop.f32.mrf.mxu0
      %3614 = vmatprep.mubr.bf16.mxu0 %v1991
      %3615 = vmatmul.mubr.bf16.gmra.mxu0 %v1815
      %v3616 = vpop.f32.mrf.mxu0
      %v3617 = vadd.f32 %v3456, %v3616
      %v3618 = vpop.f32.mrf.mxu0
      %v3619 = vpop.f32.mrf.mxu0
      %v3620 = vadd.f32 %v3459, %v3619
      %v3621 = vpop.f32.mrf.mxu0
      %3622 = vmatprep.mubr.bf16.mxu0 %v1992
      %3623 = vmatmul.mubr.bf16.gmra.mxu0 %v1816
      %v3624 = vpop.f32.mrf.mxu0
      %v3625 = vadd.f32 %v3464, %v3624
      %v3626 = vpop.f32.mrf.mxu0
      %v3627 = vpop.f32.mrf.mxu0
      %v3628 = vadd.f32 %v3467, %v3627
      %v3629 = vpop.f32.mrf.mxu0
      %3630 = vmatprep.mubr.bf16.mxu0 %v1993
      %3631 = vmatmul.mubr.bf16.gmra.mxu0 %v1817
      %v3632 = vpop.f32.mrf.mxu0
      %v3633 = vadd.f32 %v3472, %v3632
      %v3634 = vpop.f32.mrf.mxu0
      %v3635 = vpop.f32.mrf.mxu0
      %v3636 = vadd.f32 %v3475, %v3635
      %v3637 = vpop.f32.mrf.mxu0
      %3638 = vmatprep.mubr.bf16.mxu0 %v1994
      %3639 = vmatmul.mubr.bf16.gmra.mxu0 %v1818
      %v3640 = vpop.f32.mrf.mxu0
      %v3641 = vadd.f32 %v3480, %v3640
      %v3642 = vpop.f32.mrf.mxu0
      %v3643 = vpop.f32.mrf.mxu0
      %v3644 = vadd.f32 %v3483, %v3643
      %v3645 = vpop.f32.mrf.mxu0
      %3646 = vmatprep.mubr.bf16.mxu0 %v1995
      %3647 = vmatmul.mubr.bf16.gmra.mxu0 %v1819
      %v3648 = vpop.f32.mrf.mxu0
      %v3649 = vadd.f32 %v3488, %v3648
      %v3650 = vpop.f32.mrf.mxu0
      %v3651 = vpop.f32.mrf.mxu0
      %v3652 = vadd.f32 %v3491, %v3651
      %v3653 = vpop.f32.mrf.mxu0
      %3654 = vmatprep.mubr.bf16.mxu0 %v1996
      %3655 = vmatmul.mubr.bf16.gmra.mxu0 %v1820
      %v3656 = vpop.f32.mrf.mxu0
      %v3657 = vadd.f32 %v3496, %v3656
      %v3658 = vpop.f32.mrf.mxu0
      %v3659 = vpop.f32.mrf.mxu0
      %v3660 = vadd.f32 %v3499, %v3659
      %v3661 = vpop.f32.mrf.mxu0
      %3662 = vmatprep.mubr.bf16.mxu0 %v1997
      %3663 = vmatmul.mubr.bf16.gmra.mxu0 %v1821
      %v3664 = vpop.f32.mrf.mxu0
      %v3665 = vadd.f32 %v3504, %v3664
      %v3666 = vpop.f32.mrf.mxu0
      %v3667 = vpop.f32.mrf.mxu0
      %v3668 = vadd.f32 %v3507, %v3667
      %v3669 = vpop.f32.mrf.mxu0
      %3670 = vmatprep.mubr.bf16.mxu0 %v1998
      %3671 = vmatmul.mubr.bf16.gmra.mxu0 %v1822
      %v3672 = vpop.f32.mrf.mxu0
      %v3673 = vadd.f32 %v3512, %v3672
      %v3674 = vpop.f32.mrf.mxu0
      %v3675 = vpop.f32.mrf.mxu0
      %v3676 = vadd.f32 %v3515, %v3675
      %v3677 = vpop.f32.mrf.mxu0
      %3678 = vmatprep.mubr.bf16.mxu0 %v1999
      %3679 = vmatmul.mubr.bf16.gmra.mxu0 %v1823
      %v3680 = vpop.f32.mrf.mxu0
      %v3681 = vadd.f32 %v3520, %v3680
      %v3682 = vpop.f32.mrf.mxu0
      %v3683 = vpop.f32.mrf.mxu0
      %v3684 = vadd.f32 %v3523, %v3683
      %v3685 = vpop.f32.mrf.mxu0
      %3686 = vmatprep.mubr.bf16.mxu0 %v2000
      %3687 = vmatmul.mubr.bf16.gmra.mxu0 %v1824
      %v3688 = vpop.f32.mrf.mxu0
      %v3689 = vadd.f32 %v3528, %v3688
      %v3690 = vpop.f32.mrf.mxu0
      %v3691 = vpop.f32.mrf.mxu0
      %v3692 = vadd.f32 %v3531, %v3691
      %v3693 = vpop.f32.mrf.mxu0
      %3694 = vmatprep.mubr.bf16.mxu0 %v2001
      %3695 = vmatmul.mubr.bf16.gmra.mxu0 %v1825
      %v3696 = vpop.f32.mrf.mxu0
      %v3697 = vadd.f32 %v3536, %v3696
      %v3698 = vpop.f32.mrf.mxu0
      %v3699 = vpop.f32.mrf.mxu0
      %v3700 = vadd.f32 %v3539, %v3699
      %v3701 = vpop.f32.mrf.mxu0
      %3702 = vmatprep.mubr.bf16.mxu0 %v2002
      %3703 = vmatmul.mubr.bf16.gmra.mxu0 %v1826
      %v3704 = vpop.f32.mrf.mxu0
      %v3705 = vadd.f32 %v3544, %v3704
      %v3706 = vpop.f32.mrf.mxu0
      %v3707 = vpop.f32.mrf.mxu0
      %v3708 = vadd.f32 %v3547, %v3707
      %v3709 = vpop.f32.mrf.mxu0
      %3710 = vmatprep.mubr.bf16.mxu0 %v2003
      %3711 = vmatmul.mubr.bf16.gmra.mxu0 %v1827
      %v3712 = vpop.f32.mrf.mxu0
      %v3713 = vadd.f32 %v3552, %v3712
      %v3714 = vpop.f32.mrf.mxu0
      %v3715 = vpop.f32.mrf.mxu0
      %v3716 = vadd.f32 %v3555, %v3715
      %v3717 = vpop.f32.mrf.mxu0
      %3718 = vdwg.mxu0
      %3719 = vmatprep.subr.bf16.mxu0 0
      %3720 = vmatpush1.bf16.msra.mxu0 %v3147
      %3721 = vmatprep.subr.bf16.mxu0 0
      %3722 = vmatpush1.bf16.msra.mxu0 %v3146
      %3723 = vmatprep.subr.bf16.mxu0 0
      %3724 = vmatpush1.bf16.msra.mxu0 %v3145
      %3725 = vmatprep.subr.bf16.mxu0 0
      %3726 = vmatpush1.bf16.msra.mxu0 %v3144
      %3727 = vmatprep.subr.bf16.mxu0 0
      %3728 = vmatpush1.bf16.msra.mxu0 %v3143
      %3729 = vmatprep.subr.bf16.mxu0 0
      %3730 = vmatpush1.bf16.msra.mxu0 %v3142
      %3731 = vmatprep.subr.bf16.mxu0 0
      %3732 = vmatpush1.bf16.msra.mxu0 %v3141
      %3733 = vmatprep.subr.bf16.mxu0 0
      %3734 = vmatpush1.bf16.msra.mxu0 %v3140
      %3735 = vmatprep.subr.bf16.mxu0 0
      %3736 = vmatpush2.bf16.msra.mxu0 %v3155
      %3737 = vmatprep.subr.bf16.mxu0 0
      %3738 = vmatpush2.bf16.msra.mxu0 %v3154
      %3739 = vmatprep.subr.bf16.mxu0 0
      %3740 = vmatpush2.bf16.msra.mxu0 %v3153
      %3741 = vmatprep.subr.bf16.mxu0 0
      %3742 = vmatpush2.bf16.msra.mxu0 %v3152
      %3743 = vmatprep.subr.bf16.mxu0 0
      %3744 = vmatpush2.bf16.msra.mxu0 %v3151
      %3745 = vmatprep.subr.bf16.mxu0 0
      %3746 = vmatpush2.bf16.msra.mxu0 %v3150
      %3747 = vmatprep.subr.bf16.mxu0 0
      %3748 = vmatpush2.bf16.msra.mxu0 %v3149
      %3749 = vmatprep.subr.bf16.mxu0 0
      %3750 = vmatpush2.bf16.msra.mxu0 %v3148
      %3751 = vmatprep.mubr.bf16.mxu0 %v2468
      %3752 = vmatmul.mubr.bf16.gmra.mxu0 %v2292
      %v3753 = vpop.f32.mrf.mxu0
      %v3754 = vadd.f32 %v3593, %v3753
      %v3755 = vpop.f32.mrf.mxu0
      %v3756 = vpop.f32.mrf.mxu0
      %v3757 = vadd.f32 %v3596, %v3756
      %v3758 = vpop.f32.mrf.mxu0
      %3759 = vmatprep.mubr.bf16.mxu0 %v2469
      %3760 = vmatmul.mubr.bf16.gmra.mxu0 %v2293
      %v3761 = vpop.f32.mrf.mxu0
      %v3762 = vadd.f32 %v3601, %v3761
      %v3763 = vpop.f32.mrf.mxu0
      %v3764 = vpop.f32.mrf.mxu0
      %v3765 = vadd.f32 %v3604, %v3764
      %v3766 = vpop.f32.mrf.mxu0
      %3767 = vmatprep.mubr.bf16.mxu0 %v2470
      %3768 = vmatmul.mubr.bf16.gmra.mxu0 %v2294
      %v3769 = vpop.f32.mrf.mxu0
      %v3770 = vadd.f32 %v3609, %v3769
      %v3771 = vpop.f32.mrf.mxu0
      %v3772 = vpop.f32.mrf.mxu0
      %v3773 = vadd.f32 %v3612, %v3772
      %v3774 = vpop.f32.mrf.mxu0
      %3775 = vmatprep.mubr.bf16.mxu0 %v2471
      %3776 = vmatmul.mubr.bf16.gmra.mxu0 %v2295
      %v3777 = vpop.f32.mrf.mxu0
      %v3778 = vadd.f32 %v3617, %v3777
      %v3779 = vpop.f32.mrf.mxu0
      %v3780 = vpop.f32.mrf.mxu0
      %v3781 = vadd.f32 %v3620, %v3780
      %v3782 = vpop.f32.mrf.mxu0
      %3783 = vmatprep.mubr.bf16.mxu0 %v2472
      %3784 = vmatmul.mubr.bf16.gmra.mxu0 %v2296
      %v3785 = vpop.f32.mrf.mxu0
      %v3786 = vadd.f32 %v3625, %v3785
      %v3787 = vpop.f32.mrf.mxu0
      %v3788 = vpop.f32.mrf.mxu0
      %v3789 = vadd.f32 %v3628, %v3788
      %v3790 = vpop.f32.mrf.mxu0
      %3791 = vmatprep.mubr.bf16.mxu0 %v2473
      %3792 = vmatmul.mubr.bf16.gmra.mxu0 %v2297
      %v3793 = vpop.f32.mrf.mxu0
      %v3794 = vadd.f32 %v3633, %v3793
      %v3795 = vpop.f32.mrf.mxu0
      %v3796 = vpop.f32.mrf.mxu0
      %v3797 = vadd.f32 %v3636, %v3796
      %v3798 = vpop.f32.mrf.mxu0
      %3799 = vmatprep.mubr.bf16.mxu0 %v2474
      %3800 = vmatmul.mubr.bf16.gmra.mxu0 %v2298
      %v3801 = vpop.f32.mrf.mxu0
      %v3802 = vadd.f32 %v3641, %v3801
      %v3803 = vpop.f32.mrf.mxu0
      %v3804 = vpop.f32.mrf.mxu0
      %v3805 = vadd.f32 %v3644, %v3804
      %v3806 = vpop.f32.mrf.mxu0
      %3807 = vmatprep.mubr.bf16.mxu0 %v2475
      %3808 = vmatmul.mubr.bf16.gmra.mxu0 %v2299
      %v3809 = vpop.f32.mrf.mxu0
      %v3810 = vadd.f32 %v3649, %v3809
      %v3811 = vpop.f32.mrf.mxu0
      %v3812 = vpop.f32.mrf.mxu0
      %v3813 = vadd.f32 %v3652, %v3812
      %v3814 = vpop.f32.mrf.mxu0
      %3815 = vmatprep.mubr.bf16.mxu0 %v2476
      %3816 = vmatmul.mubr.bf16.gmra.mxu0 %v2300
      %v3817 = vpop.f32.mrf.mxu0
      %v3818 = vadd.f32 %v3657, %v3817
      %v3819 = vpop.f32.mrf.mxu0
      %v3820 = vpop.f32.mrf.mxu0
      %v3821 = vadd.f32 %v3660, %v3820
      %v3822 = vpop.f32.mrf.mxu0
      %3823 = vmatprep.mubr.bf16.mxu0 %v2477
      %3824 = vmatmul.mubr.bf16.gmra.mxu0 %v2301
      %v3825 = vpop.f32.mrf.mxu0
      %v3826 = vadd.f32 %v3665, %v3825
      %v3827 = vpop.f32.mrf.mxu0
      %v3828 = vpop.f32.mrf.mxu0
      %v3829 = vadd.f32 %v3668, %v3828
      %v3830 = vpop.f32.mrf.mxu0
      %3831 = vmatprep.mubr.bf16.mxu0 %v2478
      %3832 = vmatmul.mubr.bf16.gmra.mxu0 %v2302
      %v3833 = vpop.f32.mrf.mxu0
      %v3834 = vadd.f32 %v3673, %v3833
      %v3835 = vpop.f32.mrf.mxu0
      %v3836 = vpop.f32.mrf.mxu0
      %v3837 = vadd.f32 %v3676, %v3836
      %v3838 = vpop.f32.mrf.mxu0
      %3839 = vmatprep.mubr.bf16.mxu0 %v2479
      %3840 = vmatmul.mubr.bf16.gmra.mxu0 %v2303
      %v3841 = vpop.f32.mrf.mxu0
      %v3842 = vadd.f32 %v3681, %v3841
      %v3843 = vpop.f32.mrf.mxu0
      %v3844 = vpop.f32.mrf.mxu0
      %v3845 = vadd.f32 %v3684, %v3844
      %v3846 = vpop.f32.mrf.mxu0
      %3847 = vmatprep.mubr.bf16.mxu0 %v2480
      %3848 = vmatmul.mubr.bf16.gmra.mxu0 %v2304
      %v3849 = vpop.f32.mrf.mxu0
      %v3850 = vadd.f32 %v3689, %v3849
      %v3851 = vpop.f32.mrf.mxu0
      %v3852 = vpop.f32.mrf.mxu0
      %v3853 = vadd.f32 %v3692, %v3852
      %v3854 = vpop.f32.mrf.mxu0
      %3855 = vmatprep.mubr.bf16.mxu0 %v2481
      %3856 = vmatmul.mubr.bf16.gmra.mxu0 %v2305
      %v3857 = vpop.f32.mrf.mxu0
      %v3858 = vadd.f32 %v3697, %v3857
      %v3859 = vpop.f32.mrf.mxu0
      %v3860 = vpop.f32.mrf.mxu0
      %v3861 = vadd.f32 %v3700, %v3860
      %v3862 = vpop.f32.mrf.mxu0
      %3863 = vmatprep.mubr.bf16.mxu0 %v2482
      %3864 = vmatmul.mubr.bf16.gmra.mxu0 %v2306
      %v3865 = vpop.f32.mrf.mxu0
      %v3866 = vadd.f32 %v3705, %v3865
      %v3867 = vpop.f32.mrf.mxu0
      %v3868 = vpop.f32.mrf.mxu0
      %v3869 = vadd.f32 %v3708, %v3868
      %v3870 = vpop.f32.mrf.mxu0
      %3871 = vmatprep.mubr.bf16.mxu0 %v2483
      %3872 = vmatmul.mubr.bf16.gmra.mxu0 %v2307
      %v3873 = vpop.f32.mrf.mxu0
      %v3874 = vadd.f32 %v3713, %v3873
      %v3875 = vpop.f32.mrf.mxu0
      %v3876 = vpop.f32.mrf.mxu0
      %v3877 = vadd.f32 %v3716, %v3876
      %v3878 = vpop.f32.mrf.mxu0
      %3879 = vdwg.mxu0
      %3880 = vmatprep.subr.bf16.mxu0 0
      %3881 = vmatpush1.bf16.msra.mxu0 %v3163
      %3882 = vmatprep.subr.bf16.mxu0 0
      %3883 = vmatpush1.bf16.msra.mxu0 %v3162
      %3884 = vmatprep.subr.bf16.mxu0 0
      %3885 = vmatpush1.bf16.msra.mxu0 %v3161
      %3886 = vmatprep.subr.bf16.mxu0 0
      %3887 = vmatpush1.bf16.msra.mxu0 %v3160
      %3888 = vmatprep.subr.bf16.mxu0 0
      %3889 = vmatpush1.bf16.msra.mxu0 %v3159
      %3890 = vmatprep.subr.bf16.mxu0 0
      %3891 = vmatpush1.bf16.msra.mxu0 %v3158
      %3892 = vmatprep.subr.bf16.mxu0 0
      %3893 = vmatpush1.bf16.msra.mxu0 %v3157
      %3894 = vmatprep.subr.bf16.mxu0 0
      %3895 = vmatpush1.bf16.msra.mxu0 %v3156
      %3896 = vmatprep.subr.bf16.mxu0 0
      %3897 = vmatpush2.bf16.msra.mxu0 0
      %3898 = vmatprep.subr.bf16.mxu0 0
      %3899 = vmatpush2.bf16.msra.mxu0 0
      %3900 = vmatprep.subr.bf16.mxu0 0
      %3901 = vmatpush2.bf16.msra.mxu0 0
      %3902 = vmatprep.subr.bf16.mxu0 0
      %3903 = vmatpush2.bf16.msra.mxu0 0
      %3904 = vmatprep.subr.bf16.mxu0 0
      %3905 = vmatpush2.bf16.msra.mxu0 0
      %3906 = vmatprep.subr.bf16.mxu0 0
      %3907 = vmatpush2.bf16.msra.mxu0 0
      %3908 = vmatprep.subr.bf16.mxu0 0
      %3909 = vmatpush2.bf16.msra.mxu0 0
      %3910 = vmatprep.subr.bf16.mxu0 0
      %3911 = vmatpush2.bf16.msra.mxu0 0
      %3912 = vmatprep.mubr.bf16.mxu0 0
      %3913 = vmatmul.mubr.bf16.gmra.mxu0 %v2644
      %v3914 = vpop.f32.mrf.mxu0
      %v3915 = vadd.f32 %v3754, %v3914
      %v3916 = vpop.f32.mrf.mxu0
      %v3917 = vpop.f32.mrf.mxu0
      %v3918 = vadd.f32 %v3757, %v3917
      %v3919 = vpop.f32.mrf.mxu0
      %3920 = vmatprep.mubr.bf16.mxu0 0
      %3921 = vmatmul.mubr.bf16.gmra.mxu0 %v2645
      %v3922 = vpop.f32.mrf.mxu0
      %v3923 = vadd.f32 %v3762, %v3922
      %v3924 = vpop.f32.mrf.mxu0
      %v3925 = vpop.f32.mrf.mxu0
      %v3926 = vadd.f32 %v3765, %v3925
      %v3927 = vpop.f32.mrf.mxu0
      %3928 = vmatprep.mubr.bf16.mxu0 0
      %3929 = vmatmul.mubr.bf16.gmra.mxu0 %v2646
      %v3930 = vpop.f32.mrf.mxu0
      %v3931 = vadd.f32 %v3770, %v3930
      %v3932 = vpop.f32.mrf.mxu0
      %v3933 = vpop.f32.mrf.mxu0
      %v3934 = vadd.f32 %v3773, %v3933
      %v3935 = vpop.f32.mrf.mxu0
      %3936 = vmatprep.mubr.bf16.mxu0 0
      %3937 = vmatmul.mubr.bf16.gmra.mxu0 %v2647
      %v3938 = vpop.f32.mrf.mxu0
      %v3939 = vadd.f32 %v3778, %v3938
      %v3940 = vpop.f32.mrf.mxu0
      %v3941 = vpop.f32.mrf.mxu0
      %v3942 = vadd.f32 %v3781, %v3941
      %v3943 = vpop.f32.mrf.mxu0
      %3944 = vmatprep.mubr.bf16.mxu0 0
      %3945 = vmatmul.mubr.bf16.gmra.mxu0 %v2648
      %v3946 = vpop.f32.mrf.mxu0
      %v3947 = vadd.f32 %v3786, %v3946
      %v3948 = vpop.f32.mrf.mxu0
      %v3949 = vpop.f32.mrf.mxu0
      %v3950 = vadd.f32 %v3789, %v3949
      %v3951 = vpop.f32.mrf.mxu0
      %3952 = vmatprep.mubr.bf16.mxu0 0
      %3953 = vmatmul.mubr.bf16.gmra.mxu0 %v2649
      %v3954 = vpop.f32.mrf.mxu0
      %v3955 = vadd.f32 %v3794, %v3954
      %v3956 = vpop.f32.mrf.mxu0
      %v3957 = vpop.f32.mrf.mxu0
      %v3958 = vadd.f32 %v3797, %v3957
      %v3959 = vpop.f32.mrf.mxu0
      %3960 = vmatprep.mubr.bf16.mxu0 0
      %3961 = vmatmul.mubr.bf16.gmra.mxu0 %v2650
      %v3962 = vpop.f32.mrf.mxu0
      %v3963 = vadd.f32 %v3802, %v3962
      %v3964 = vpop.f32.mrf.mxu0
      %v3965 = vpop.f32.mrf.mxu0
      %v3966 = vadd.f32 %v3805, %v3965
      %v3967 = vpop.f32.mrf.mxu0
      %3968 = vmatprep.mubr.bf16.mxu0 0
      %3969 = vmatmul.mubr.bf16.gmra.mxu0 %v2651
      %v3970 = vpop.f32.mrf.mxu0
      %v3971 = vadd.f32 %v3810, %v3970
      %v3972 = vpop.f32.mrf.mxu0
      %v3973 = vpop.f32.mrf.mxu0
      %v3974 = vadd.f32 %v3813, %v3973
      %v3975 = vpop.f32.mrf.mxu0
      %3976 = vmatprep.mubr.bf16.mxu0 0
      %3977 = vmatmul.mubr.bf16.gmra.mxu0 %v2652
      %v3978 = vpop.f32.mrf.mxu0
      %v3979 = vadd.f32 %v3818, %v3978
      %v3980 = vpop.f32.mrf.mxu0
      %v3981 = vpop.f32.mrf.mxu0
      %v3982 = vadd.f32 %v3821, %v3981
      %v3983 = vpop.f32.mrf.mxu0
      %3984 = vmatprep.mubr.bf16.mxu0 0
      %3985 = vmatmul.mubr.bf16.gmra.mxu0 %v2653
      %v3986 = vpop.f32.mrf.mxu0
      %v3987 = vadd.f32 %v3826, %v3986
      %v3988 = vpop.f32.mrf.mxu0
      %v3989 = vpop.f32.mrf.mxu0
      %v3990 = vadd.f32 %v3829, %v3989
      %v3991 = vpop.f32.mrf.mxu0
      %3992 = vmatprep.mubr.bf16.mxu0 0
      %3993 = vmatmul.mubr.bf16.gmra.mxu0 %v2654
      %v3994 = vpop.f32.mrf.mxu0
      %v3995 = vadd.f32 %v3834, %v3994
      %v3996 = vpop.f32.mrf.mxu0
      %v3997 = vpop.f32.mrf.mxu0
      %v3998 = vadd.f32 %v3837, %v3997
      %v3999 = vpop.f32.mrf.mxu0
      %4000 = vmatprep.mubr.bf16.mxu0 0
      %4001 = vmatmul.mubr.bf16.gmra.mxu0 %v2655
      %v4002 = vpop.f32.mrf.mxu0
      %v4003 = vadd.f32 %v3842, %v4002
      %v4004 = vpop.f32.mrf.mxu0
      %v4005 = vpop.f32.mrf.mxu0
      %v4006 = vadd.f32 %v3845, %v4005
      %v4007 = vpop.f32.mrf.mxu0
      %4008 = vmatprep.mubr.bf16.mxu0 0
      %4009 = vmatmul.mubr.bf16.gmra.mxu0 %v2656
      %v4010 = vpop.f32.mrf.mxu0
      %v4011 = vadd.f32 %v3850, %v4010
      %v4012 = vpop.f32.mrf.mxu0
      %v4013 = vpop.f32.mrf.mxu0
      %v4014 = vadd.f32 %v3853, %v4013
      %v4015 = vpop.f32.mrf.mxu0
      %4016 = vmatprep.mubr.bf16.mxu0 0
      %4017 = vmatmul.mubr.bf16.gmra.mxu0 %v2657
      %v4018 = vpop.f32.mrf.mxu0
      %v4019 = vadd.f32 %v3858, %v4018
      %v4020 = vpop.f32.mrf.mxu0
      %v4021 = vpop.f32.mrf.mxu0
      %v4022 = vadd.f32 %v3861, %v4021
      %v4023 = vpop.f32.mrf.mxu0
      %4024 = vmatprep.mubr.bf16.mxu0 0
      %4025 = vmatmul.mubr.bf16.gmra.mxu0 %v2658
      %v4026 = vpop.f32.mrf.mxu0
      %v4027 = vadd.f32 %v3866, %v4026
      %v4028 = vpop.f32.mrf.mxu0
      %v4029 = vpop.f32.mrf.mxu0
      %v4030 = vadd.f32 %v3869, %v4029
      %v4031 = vpop.f32.mrf.mxu0
      %4032 = vmatprep.mubr.bf16.mxu0 0
      %4033 = vmatmul.mubr.bf16.gmra.mxu0 %v2659
      %v4034 = vpop.f32.mrf.mxu0
      %v4035 = vadd.f32 %v3874, %v4034
      %v4036 = vpop.f32.mrf.mxu0
      %v4037 = vpop.f32.mrf.mxu0
      %v4038 = vadd.f32 %v3877, %v4037
      %v4039 = vpop.f32.mrf.mxu0
      %4040 = vdwg.mxu0
      %4041 = vst [vmem:[%s224] sm:$0xff] %v3915
      %4042 = vst [vmem:[%s224 + $0x8] sm:$0xff] %v3918
      %4043 = vst [vmem:[%s224 + $0x10] sm:$0xff] %v3923
      %4044 = vst [vmem:[%s224 + $0x18] sm:$0xff] %v3926
      %4045 = vst [vmem:[%s224 + $0x20] sm:$0xff] %v3931
      %4046 = vst [vmem:[%s224 + $0x28] sm:$0xff] %v3934
      %4047 = vst [vmem:[%s224 + $0x30] sm:$0xff] %v3939
      %4048 = vst [vmem:[%s224 + $0x38] sm:$0xff] %v3942
      %4049 = vst [vmem:[%s224 + $0x40] sm:$0xff] %v3947
      %4050 = vst [vmem:[%s224 + $0x48] sm:$0xff] %v3950
      %4051 = vst [vmem:[%s224 + $0x50] sm:$0xff] %v3955
      %4052 = vst [vmem:[%s224 + $0x58] sm:$0xff] %v3958
      %4053 = vst [vmem:[%s224 + $0x60] sm:$0xff] %v3963
      %4054 = vst [vmem:[%s224 + $0x68] sm:$0xff] %v3966
      %4055 = vst [vmem:[%s224 + $0x70] sm:$0xff] %v3971
      %4056 = vst [vmem:[%s224 + $0x78] sm:$0xff] %v3974
      %4057 = vst [vmem:[%s224 + $0x80] sm:$0xff] %v3979
      %4058 = vst [vmem:[%s224 + $0x88] sm:$0xff] %v3982
      %4059 = vst [vmem:[%s224 + $0x90] sm:$0xff] %v3987
      %4060 = vst [vmem:[%s224 + $0x98] sm:$0xff] %v3990
      %4061 = vst [vmem:[%s224 + $0xa0] sm:$0xff] %v3995
      %4062 = vst [vmem:[%s224 + $0xa8] sm:$0xff] %v3998
      %4063 = vst [vmem:[%s224 + $0xb0] sm:$0xff] %v4003
      %4064 = vst [vmem:[%s224 + $0xb8] sm:$0xff] %v4006
      %4065 = vst [vmem:[%s224 + $0xc0] sm:$0xff] %v4011
      %4066 = vst [vmem:[%s224 + $0xc8] sm:$0xff] %v4014
      %4067 = vst [vmem:[%s224 + $0xd0] sm:$0xff] %v4019
      %4068 = vst [vmem:[%s224 + $0xd8] sm:$0xff] %v4022
      %4069 = vst [vmem:[%s224 + $0xe0] sm:$0xff] %v4027
      %4070 = vst [vmem:[%s224 + $0xe8] sm:$0xff] %v4030
      %4071 = vst [vmem:[%s224 + $0xf0] sm:$0xff] %v4035
      %4072 = vst [vmem:[%s224 + $0xf8] sm:$0xff] %v4038
      %p4073 = scmp.eq.s32.totalorder %s17, 0
      // Predicated region
      $region37: #{_lambda_.5} parent=35 // pred_check
        %p4074 = pneg %p4073
      $region38: #{_lambda_.5} parent=35 // pred_check_branch
        %4076 = sbr.rel (%p4074) target = $region40
      $region39: #{_lambda_.5} parent=35 // pred_region
        %4077 = vst [vmem:[%s5] sm:$0x3] 0.0
      $region40: #{_lambda_.5} parent=35 // pred_fallthru
        _
      %v4078 = vld [vmem:[%s5] sm:$0x3]
      %v4079 = vadd.f32 %v3915, %v3918
      %v4080 = vadd.f32 %v4079, %v3923
      %v4081 = vadd.f32 %v4080, %v3926
      %v4082 = vadd.f32 %v4081, %v3931
      %v4083 = vadd.f32 %v4082, %v3934
      %v4084 = vadd.f32 %v4083, %v3939
      %v4085 = vadd.f32 %v4084, %v3942
      %v4086 = vadd.f32 %v4085, %v3947
      %v4087 = vadd.f32 %v4086, %v3950
      %v4088 = vadd.f32 %v4087, %v3955
      %v4089 = vadd.f32 %v4088, %v3958
      %v4090 = vadd.f32 %v4089, %v3963
      %v4091 = vadd.f32 %v4090, %v3966
      %v4092 = vadd.f32 %v4091, %v3971
      %v4093 = vadd.f32 %v4092, %v3974
      %v4094 = vadd.f32 %v4093, %v3979
      %v4095 = vadd.f32 %v4094, %v3982
      %v4096 = vadd.f32 %v4095, %v3987
      %v4097 = vadd.f32 %v4096, %v3990
      %v4098 = vadd.f32 %v4097, %v3995
      %v4099 = vadd.f32 %v4098, %v3998
      %v4100 = vadd.f32 %v4099, %v4003
      %v4101 = vadd.f32 %v4100, %v4006
      %v4102 = vadd.f32 %v4101, %v4011
      %v4103 = vadd.f32 %v4102, %v4014
      %v4104 = vadd.f32 %v4103, %v4019
      %v4105 = vadd.f32 %v4104, %v4022
      %v4106 = vadd.f32 %v4105, %v4027
      %v4107 = vadd.f32 %v4106, %v4030
      %v4108 = vadd.f32 %v4107, %v4035
      %v4109 = vadd.f32 %v4108, %v4038
      %v4110 = vrot.slane %v4109, 4
      %v4111 = vadd.f32 %v4109, %v4110
      %v4112 = vrot.slane %v4111, 2
      %v4113 = vadd.f32 %v4111, %v4112
      %v4114 = vrot.slane %v4113, 1
      %v4115 = vadd.f32 %v4113, %v4114
      %v4116 = vmul.f32 %v3915, %v3915
      %v4117 = vmul.f32 %v3918, %v3918
      %v4118 = vmul.f32 %v3923, %v3923
      %v4119 = vmul.f32 %v3926, %v3926
      %v4120 = vmul.f32 %v3931, %v3931
      %v4121 = vmul.f32 %v3934, %v3934
      %v4122 = vmul.f32 %v3939, %v3939
      %v4123 = vmul.f32 %v3942, %v3942
      %v4124 = vmul.f32 %v3947, %v3947
      %v4125 = vmul.f32 %v3950, %v3950
      %v4126 = vmul.f32 %v3955, %v3955
      %v4127 = vmul.f32 %v3958, %v3958
      %v4128 = vmul.f32 %v3963, %v3963
      %v4129 = vmul.f32 %v3966, %v3966
      %v4130 = vmul.f32 %v3971, %v3971
      %v4131 = vmul.f32 %v3974, %v3974
      %v4132 = vmul.f32 %v3979, %v3979
      %v4133 = vmul.f32 %v3982, %v3982
      %v4134 = vmul.f32 %v3987, %v3987
      %v4135 = vmul.f32 %v3990, %v3990
      %v4136 = vmul.f32 %v3995, %v3995
      %v4137 = vmul.f32 %v3998, %v3998
      %v4138 = vmul.f32 %v4003, %v4003
      %v4139 = vmul.f32 %v4006, %v4006
      %v4140 = vmul.f32 %v4011, %v4011
      %v4141 = vmul.f32 %v4014, %v4014
      %v4142 = vmul.f32 %v4019, %v4019
      %v4143 = vmul.f32 %v4022, %v4022
      %v4144 = vmul.f32 %v4027, %v4027
      %v4145 = vmul.f32 %v4030, %v4030
      %v4146 = vmul.f32 %v4035, %v4035
      %v4147 = vmul.f32 %v4038, %v4038
      %v4148 = vadd.f32 %v4116, %v4117
      %v4149 = vadd.f32 %v4148, %v4118
      %v4150 = vadd.f32 %v4149, %v4119
      %v4151 = vadd.f32 %v4150, %v4120
      %v4152 = vadd.f32 %v4151, %v4121
      %v4153 = vadd.f32 %v4152, %v4122
      %v4154 = vadd.f32 %v4153, %v4123
      %v4155 = vadd.f32 %v4154, %v4124
      %v4156 = vadd.f32 %v4155, %v4125
      %v4157 = vadd.f32 %v4156, %v4126
      %v4158 = vadd.f32 %v4157, %v4127
      %v4159 = vadd.f32 %v4158, %v4128
      %v4160 = vadd.f32 %v4159, %v4129
      %v4161 = vadd.f32 %v4160, %v4130
      %v4162 = vadd.f32 %v4161, %v4131
      %v4163 = vadd.f32 %v4162, %v4132
      %v4164 = vadd.f32 %v4163, %v4133
      %v4165 = vadd.f32 %v4164, %v4134
      %v4166 = vadd.f32 %v4165, %v4135
      %v4167 = vadd.f32 %v4166, %v4136
      %v4168 = vadd.f32 %v4167, %v4137
      %v4169 = vadd.f32 %v4168, %v4138
      %v4170 = vadd.f32 %v4169, %v4139
      %v4171 = vadd.f32 %v4170, %v4140
      %v4172 = vadd.f32 %v4171, %v4141
      %v4173 = vadd.f32 %v4172, %v4142
      %v4174 = vadd.f32 %v4173, %v4143
      %v4175 = vadd.f32 %v4174, %v4144
      %v4176 = vadd.f32 %v4175, %v4145
      %v4177 = vadd.f32 %v4176, %v4146
      %v4178 = vadd.f32 %v4177, %v4147
      %v4179 = vrot.slane %v4178, 4
      %v4180 = vadd.f32 %v4178, %v4179
      %v4181 = vrot.slane %v4180, 2
      %v4182 = vadd.f32 %v4180, %v4181
      %v4183 = vrot.slane %v4182, 1
      %v4184 = vadd.f32 %v4182, %v4183
      %vm4185 = vcmask 1040384
      %v4186 = vsel %vm4185, %v4115, %v4184
      %v4187 = vadd.f32 %v4078, %v4186
      %4188 = vst [vmem:[%s5] sm:$0x3] %v4187
      %s4189 = smul.u32 32, %s17
      %p4190 = scmp.lt.s32.totalorder %s4189, 63
      %s4191 = scalar_select %p4190, %s4189, 63
      %s4192 = smul.addr %s4191, 8
      %s4193 = scalar_lea.vmem %s4, %s4192
      // Predicated region
      $region41: #{_lambda_.5} parent=35 // pred_check
        %p4194 = pneg %p124
      $region42: #{_lambda_.5} parent=35 // pred_check_branch
        %4196 = sbr.rel (%p4194) target = $region44
      $region43: #{_lambda_.5} parent=35 // pred_region
        %s4197 = smul.u32 32, %s17
      $region44: #{_lambda_.5} parent=35 // pred_fallthru
        _
      // Predicated region
      $region45: #{_lambda_.5} parent=35 // pred_check
        %p4198 = pneg %p145
      $region46: #{_lambda_.5} parent=35 // pred_check_branch
        %4200 = sbr.rel (%p4198) target = $region48
      $region47: #{_lambda_.5} parent=35 // pred_region
        _
      $region48: #{_lambda_.5} parent=35 // pred_fallthru
        _
      // Predicated region
      $region49: #{_lambda_.5} parent=35 // pred_check
        %p4201 = pneg %p145
      $region50: #{_lambda_.5} parent=35 // pred_check_branch
        %4203 = sbr.rel (%p4201) target = $region52
      $region51: #{_lambda_.5} parent=35 // pred_region
        _
      $region52: #{_lambda_.5} parent=35 // pred_fallthru
        _
    $region36: #{_lambda_.5} parent=5 // pred_fallthru
      _
    %p4204 = scmp.le.s32.totalorder 2, %s12
    // Predicated region
    $region53: #{_lambda_.5} parent=5 // pred_check
      %p4205 = pneg %p4204
    $region54: #{_lambda_.5} parent=5 // pred_check_branch
      %4207 = sbr.rel (%p4205) target = $region56
    $region55: #{_lambda_.5} parent=5 // pred_region
      %s4208 = ssub.s32 %s12, 2
      // Predicated region
      $region57: #{_lambda_.5} parent=55 // pred_check
        %p4209 = pneg %p130
      $region58: #{_lambda_.5} parent=55 // pred_check_branch
        %4211 = sbr.rel (%p4209) target = $region60
      $region59: #{_lambda_.5} parent=55 // pred_region
        %s4212 = smul.u32 32, %s18
        %p4213 = scmp.lt.s32.totalorder %s4212, 63
        %s4214 = scalar_select %p4213, %s4212, 63
        %s4215 = smul.addr %s4214, 8
        %s4216 = scalar_lea.vmem %s4, %s4215
      $region60: #{_lambda_.5} parent=55 // pred_fallthru
        _
    $region56: #{_lambda_.5} parent=5 // pred_fallthru
      _
  $region6: #{_lambda_.5} parent=0 // loop_footer
    %s16 = sadd.s32 1, %s12
  $region7: #{_lambda_.5} parent=0 // loop_footer_branch
    %11 = sbr.rel target = $region3
  $region8: #{_lambda_.5} parent=0 // loop_exit
    _

</llo_original>
